<compile_context>
chip_gen: v6e
topology: v6e:2x2x1
jax: 0.10.0
libtpu: 0.0.40
codegen_flags: <defaults>
</compile_context>

<pallas_src>
import functools

import jax
import jax.numpy as jnp
from jax.experimental import pallas as pl
from jax.experimental.pallas import tpu as pltpu


def _round_up(x, m):
    return (x + m - 1) // m * m


# --------------------------------------------------------------------------
# Fused VTN kernel: 3 x (3x3 'same' conv), leaky-relu on the first two layers.
# Grid over batch; per step the whole (small) image lives in VMEM.
# --------------------------------------------------------------------------
_COL0 = 8  # valid columns start at 8 so halo stores stay sublane-aligned


def _vtn_kernel(x_ref, w1_ref, b1_ref, w2_ref, b2_ref, wf_ref, bf_ref,
                flow_ref, h1_ref, h2_ref, *, H, W, hidden, slope):
    # x_ref:  (1, H+2, W+16, Cin) bf16, image at rows [1,H+1), cols [_COL0,_COL0+W)
    # h*_ref: VMEM scratch (H+2, W+16, hidden) bf16 (zero halo)
    # flow_ref: (1, H, W, 2) f32
    def conv3x3_same(a_pad, w_all, b, cout, act):
        # a_pad: (H+2, W+16, cin) bf16; w_all: (9, cin, cout) bf16; b: (1, cout) f32
        cin = a_pad.shape[-1]
        acc = jnp.zeros((H * W, cout), jnp.float32)
        for dy in range(3):
            for dx in range(3):
                patch = a_pad[dy:dy + H, _COL0 - 1 + dx:_COL0 - 1 + dx + W, :]
                acc = acc + jnp.dot(patch.reshape(H * W, cin),
                                    w_all[dy * 3 + dx],
                                    preferred_element_type=jnp.float32)
        acc = acc + b  # f32 bias add
        if act:
            # TODO(synk): reference VTN's LeakyReLU slope unknown; keeping 0.1 to
            # preserve the previous version's forward semantics (PyTorch default is 0.01).
            acc = jnp.where(acc > 0, acc, slope * acc)
        return acc  # (H*W, cout) f32

    x = x_ref[0]  # (H+2, W+16, Cin) bf16
    h1 = conv3x3_same(x, w1_ref[...], b1_ref[...], hidden, True)
    h1_ref[...] = jnp.zeros_like(h1_ref)
    h1_ref[1:H + 1, _COL0:_COL0 + W, :] = h1.reshape(H, W, hidden).astype(jnp.bfloat16)

    h2 = conv3x3_same(h1_ref[...], w2_ref[...], b2_ref[...], hidden, True)
    h2_ref[...] = jnp.zeros_like(h2_ref)
    h2_ref[1:H + 1, _COL0:_COL0 + W, :] = h2.reshape(H, W, hidden).astype(jnp.bfloat16)

    fl = conv3x3_same(h2_ref[...], wf_ref[...], bf_ref[...], 2, False)
    flow_ref[...] = fl.reshape(1, H, W, 2)


def vtn_deform(params, moving_nhwc, volume_nhwc):
    # TODO(synk): exact VTN encoder-decoder definition not provided; compact
    # 3-layer same-resolution conv net predicting a 2-channel flow (as before).
    B, H, W, _ = moving_nhwc.shape
    hidden = params["b1"].shape[0]
    cin = params["w1"].shape[2]
    WPAD = W + 16  # zero halo; valid cols at [_COL0, _COL0 + W)

    x = jnp.concatenate([moving_nhwc, volume_nhwc], axis=-1)          # (B,H,W,cin)
    xpad = jnp.pad(x, ((0, 0), (1, 1), (_COL0, WPAD - W - _COL0), (0, 0)))
    xpad = xpad.astype(jnp.bfloat16)

    w1 = params["w1"].reshape(9, cin, hidden).astype(jnp.bfloat16)
    w2 = params["w2"].reshape(9, hidden, hidden).astype(jnp.bfloat16)
    wf = params["wf"].reshape(9, hidden, 2).astype(jnp.bfloat16)
    b1 = params["b1"].reshape(1, hidden).astype(jnp.float32)
    b2 = params["b2"].reshape(1, hidden).astype(jnp.float32)
    bf = params["bf"].reshape(1, 2).astype(jnp.float32)

    flow = pl.pallas_call(
        functools.partial(_vtn_kernel, H=H, W=W, hidden=hidden, slope=0.1),
        grid=(B,),
        in_specs=[
            pl.BlockSpec((1, H + 2, WPAD, cin), lambda b: (b, 0, 0, 0)),
            pl.BlockSpec((9, cin, hidden), lambda b: (0, 0, 0)),
            pl.BlockSpec((1, hidden), lambda b: (0, 0)),
            pl.BlockSpec((9, hidden, hidden), lambda b: (0, 0, 0)),
            pl.BlockSpec((1, hidden), lambda b: (0, 0)),
            pl.BlockSpec((9, hidden, 2), lambda b: (0, 0, 0)),
            pl.BlockSpec((1, 2), lambda b: (0, 0)),
        ],
        out_specs=pl.BlockSpec((1, H, W, 2), lambda b: (b, 0, 0, 0)),
        out_shape=jax.ShapeDtypeStruct((B, H, W, 2), jnp.float32),
        scratch_shapes=[
            pltpu.VMEM((H + 2, WPAD, hidden), jnp.bfloat16),
            pltpu.VMEM((H + 2, WPAD, hidden), jnp.bfloat16),
        ],
        compiler_params=pltpu.CompilerParams(dimension_semantics=("parallel",)),
    )(xpad, w1, b1, w2, b2, wf, bf)
    return flow  # (B,H,W,2): channel 0 = dy, channel 1 = dx


# --------------------------------------------------------------------------
# Fused warp kernel: bilinear sample at (grid + flow), oob -> per-batch min.
# Grid over batch; gather done as an in-kernel one-hot weight reduction.
# --------------------------------------------------------------------------
def _warp_kernel(img_ref, sy_ref, sx_ref, o_ref, *, H, W, is_min):
    HW = H * W
    img = img_ref[0]   # (HW, 1) f32 source pixels
    sy = sy_ref[0]     # (1, HW) f32 sample row coords
    sx = sx_ref[0]     # (1, HW) f32 sample col coords

    oob = (sy < 0.0) | (sy > H - 1.0) | (sx < 0.0) | (sx > W - 1.0)
    syc = jnp.clip(sy, 0.0, H - 1.0)
    sxc = jnp.clip(sx, 0.0, W - 1.0)
    y0 = jnp.floor(syc)
    x0 = jnp.floor(sxc)
    y0i = y0.astype(jnp.int32)
    x0i = x0.astype(jnp.int32)
    y1i = jnp.minimum(y0i + 1, H - 1)
    x1i = jnp.minimum(x0i + 1, W - 1)
    wy = syc - y0
    wx = sxc - x0
    oy = 1.0 - wy
    ox = 1.0 - wx

    idx00 = y0i * W + x0i
    idx01 = y0i * W + x1i
    idx10 = y1i * W + x0i
    idx11 = y1i * W + x1i

    # TODO(synk): one-hot gather is O(HW^2); for large images tile the source
    # into bands and DMA them per output tile instead.
    src = jax.lax.broadcasted_iota(jnp.int32, (HW, HW), 0)   # source id on sublanes
    P = (jnp.where(src == idx00, oy * ox, 0.0)
         + jnp.where(src == idx01, oy * wx, 0.0)
         + jnp.where(src == idx10, wy * ox, 0.0)
         + jnp.where(src == idx11, wy * wx, 0.0))            # (HW_src, HW_out)
    sampled = jnp.sum(P * img, axis=0, keepdims=True)        # (1, HW_out)

    fill = jnp.min(img) if is_min else 0.0
    o_ref[0] = jnp.where(oob, fill, sampled)


def spatial_transform(moving_nhwc, flow_nhwc, is_min=True):
    """Bilinear warp: sample moving at (identity grid + flow)."""
    B, H, W, _ = moving_nhwc.shape
    HW = H * W
    img_col = moving_nhwc[..., 0].reshape(B, HW, 1).astype(jnp.float32)
    gy = jnp.arange(H, dtype=jnp.float32).reshape(1, H, 1)
    gx = jnp.arange(W, dtype=jnp.float32).reshape(1, 1, W)
    sy = (gy + flow_nhwc[..., 0]).reshape(B, 1, HW)
    sx = (gx + flow_nhwc[..., 1]).reshape(B, 1, HW)

    out = pl.pallas_call(
        functools.partial(_warp_kernel, H=H, W=W, is_min=is_min),
        grid=(B,),
        in_specs=[
            pl.BlockSpec((1, HW, 1), lambda b: (b, 0, 0)),
            pl.BlockSpec((1, 1, HW), lambda b: (b, 0, 0)),
            pl.BlockSpec((1, 1, HW), lambda b: (b, 0, 0)),
        ],
        out_specs=pl.BlockSpec((1, 1, HW), lambda b: (b, 0, 0)),
        out_shape=jax.ShapeDtypeStruct((B, 1, HW), jnp.float32),
        compiler_params=pltpu.CompilerParams(dimension_semantics=("parallel",)),
    )(img_col, sy, sx)
    return out.reshape(B, H, W, 1)


# --------------------------------------------------------------------------
# Loss kernels: single-pass tiled reductions with VMEM accumulators.
# --------------------------------------------------------------------------
def _corr_kernel(f_ref, m_ref, o_ref, sf, sm, sff, smm, sfm, *, n):
    i = pl.program_id(0)

    @pl.when(i == 0)
    def _():
        sf[...] = jnp.zeros_like(sf)
        sm[...] = jnp.zeros_like(sm)
        sff[...] = jnp.zeros_like(sff)
        smm[...] = jnp.zeros_like(smm)
        sfm[...] = jnp.zeros_like(sfm)

    f = f_ref[...]
    m = m_ref[...]
    sf[...] += jnp.sum(f, axis=1, keepdims=True)
    sm[...] += jnp.sum(m, axis=1, keepdims=True)
    sff[...] += jnp.sum(f * f, axis=1, keepdims=True)
    smm[...] += jnp.sum(m * m, axis=1, keepdims=True)
    sfm[...] += jnp.sum(f * m, axis=1, keepdims=True)

    @pl.when(i == pl.num_programs(0) - 1)
    def _():
        Sf = sf[...]
        Sm = sm[...]
        num = sfm[...] - Sf * Sm / n
        varf = sff[...] - Sf * Sf / n
        varm = smm[...] - Sm * Sm / n
        corr = num / jnp.sqrt(varf * varm + 1e-5)
        o_ref[...] = jnp.reshape(1.0 - jnp.mean(corr), (1, 1))


def corr_loss(fixed_nhwc, warped_nhwc):
    # TODO(synk): exact ImageLoss('corr') definition not provided; per-sample
    # Pearson correlation loss (1 - corr), averaged over batch (same as before).
    B = fixed_nhwc.shape[0]
    f = fixed_nhwc.reshape(B, -1).astype(jnp.float32)
    m = warped_nhwc.reshape(B, -1).astype(jnp.float32)
    n = f.shape[1]
    tn = min(_round_up(n, 128), 2048)
    npad = _round_up(n, tn)
    if npad != n:  # zero padding does not perturb any of the raw sums
        f = jnp.pad(f, ((0, 0), (0, npad - n)))
        m = jnp.pad(m, ((0, 0), (0, npad - n)))
    nt = npad // tn
    out = pl.pallas_call(
        functools.partial(_corr_kernel, n=float(n)),
        grid=(nt,),
        in_specs=[pl.BlockSpec((B, tn), lambda i: (0, i)),
                  pl.BlockSpec((B, tn), lambda i: (0, i))],
        out_specs=pl.BlockSpec((1, 1), lambda i: (0, 0)),
        out_shape=jax.ShapeDtypeStruct((1, 1), jnp.float32),
        scratch_shapes=[pltpu.VMEM((B, 1), jnp.float32) for _ in range(5)],
        compiler_params=pltpu.CompilerParams(dimension_semantics=("arbitrary",)),
    )(f, m)
    return out[0, 0]


def _mse_kernel(a_ref, b_ref, o_ref, acc_ref, *, n):
    i = pl.program_id(0)

    @pl.when(i == 0)
    def _():
        acc_ref[...] = jnp.zeros_like(acc_ref)

    d = a_ref[...] - b_ref[...]
    acc_ref[...] += jnp.sum(d * d)

    @pl.when(i == pl.num_programs(0) - 1)
    def _():
        o_ref[...] = acc_ref[...] / n


def mse_loss(a, b):
    n = a.size
    af = a.reshape(-1).astype(jnp.float32)
    bf = b.reshape(-1).astype(jnp.float32)
    per_row = _round_up(pl.cdiv(n, 8), 128)
    tc = min(per_row, 2048)
    per_row = _round_up(per_row, tc)
    total = 8 * per_row
    af = jnp.pad(af, (0, total - n)).reshape(8, per_row)
    bf = jnp.pad(bf, (0, total - n)).reshape(8, per_row)
    nt = per_row // tc
    out = pl.pallas_call(
        functools.partial(_mse_kernel, n=float(n)),
        grid=(nt,),
        in_specs=[pl.BlockSpec((8, tc), lambda i: (0, i)),
                  pl.BlockSpec((8, tc), lambda i: (0, i))],
        out_specs=pl.BlockSpec((1, 1), lambda i: (0, 0)),
        out_shape=jax.ShapeDtypeStruct((1, 1), jnp.float32),
        scratch_shapes=[pltpu.VMEM((1, 1), jnp.float32)],
        compiler_params=pltpu.CompilerParams(dimension_semantics=("arbitrary",)),
    )(af, bf)
    return out[0, 0]


# --------------------------------------------------------------------------
# Model glue
# --------------------------------------------------------------------------
def add_loss(loss_dict, new_loss_dict):
    if loss_dict is None:
        return dict(new_loss_dict)
    for name, val in new_loss_dict.items():
        if name in loss_dict:
            loss_dict[name] = loss_dict[name] + val
        else:
            loss_dict[name] = val
    return loss_dict


def simple_regnet_forward(params, moving_image, fixed_image, volume_per,
                          moving_mask, label_flow, flow_compute="add",
                          n_recursive=1, is_min=True):
    """Inputs are NCHW (like PyTorch); returns (warped NCHW, final_flow NCHW, loss_dict)."""
    del moving_mask  # is_box=False path: mask unused by the corr image loss
    moving = jnp.transpose(moving_image, (0, 2, 3, 1)).astype(jnp.float32)
    fixed = jnp.transpose(fixed_image, (0, 2, 3, 1)).astype(jnp.float32)
    volume = jnp.transpose(volume_per, (0, 2, 3, 1)).astype(jnp.float32)
    label = jnp.transpose(label_flow, (0, 2, 3, 1)).astype(jnp.float32)

    loss_dict = None
    flow_list = []
    for _ in range(n_recursive):
        for dparams in params["deforms"]:
            flow = vtn_deform(dparams, moving, volume)
            flow_list.append(flow)
            moving = spatial_transform(moving, flow, is_min=is_min)
            loss_dict = add_loss(loss_dict, {"corr": corr_loss(fixed, moving)})

    final_flow = jnp.zeros_like(flow_list[0])
    if flow_compute == "add":
        for f in flow_list:
            final_flow = final_flow + f
        loss_dict = add_loss(loss_dict, {"mse": mse_loss(final_flow, label)})
    elif flow_compute == "single":
        for f in flow_list:
            final_flow = final_flow + f
            loss_dict = add_loss(loss_dict, {"mse": mse_loss(f, label)})
    elif flow_compute == "add_step_by_step":
        for idx, f in enumerate(flow_list):
            weight = 0.25 * (idx + 1)
            final_flow = final_flow + f
            loss_dict = add_loss(loss_dict, {"mse": weight * mse_loss(final_flow, label)})

    warped_nchw = jnp.transpose(moving, (0, 3, 1, 2))
    flow_nchw = jnp.transpose(final_flow, (0, 3, 1, 2))
    return warped_nchw, flow_nchw, loss_dict


def init_params(key, in_channels=2, hidden=16, ndims=2, n_deform=1):
    deforms = []
    for d in range(n_deform):
        k = jax.random.fold_in(key, d)
        k1, k2, k3 = jax.random.split(k, 3)

        def he(kk, shape):
            fan_in = shape[0] * shape[1] * shape[2]
            return jax.random.normal(kk, shape, jnp.float32) * jnp.sqrt(2.0 / fan_in)

        deforms.append({
            "w1": he(k1, (3, 3, in_channels, hidden)),
            "b1": jnp.zeros((hidden,), jnp.float32),
            "w2": he(k2, (3, 3, hidden, hidden)),
            "b2": jnp.zeros((hidden,), jnp.float32),
            "wf": jax.random.normal(k3, (3, 3, hidden, ndims), jnp.float32) * 1e-3,
            "bf": jnp.zeros((ndims,), jnp.float32),
        })
    return {"deforms": deforms}


if __name__ == "__main__":
    key = jax.random.PRNGKey(0)
    kp, k1, k2, k3, k4, k5 = jax.random.split(key, 6)

    B, H, W = 2, 16, 16
    moving_image = jax.random.normal(k1, (B, 1, H, W), jnp.float32)
    fixed_image = jax.random.normal(k2, (B, 1, H, W), jnp.float32)
    volume_per = jax.random.normal(k3, (B, 1, H, W), jnp.float32)
    moving_mask = (jax.random.uniform(k4, (B, 1, H, W)) > 0.5).astype(jnp.float32)
    label_flow = jax.random.normal(k5, (B, 2, H, W), jnp.float32) * 0.1

    params = init_params(kp, in_channels=2, hidden=16, ndims=2, n_deform=1)

    fwd = jax.jit(simple_regnet_forward)
    warped, final_flow, loss_dict = fwd(params, moving_image, fixed_image,
                                        volume_per, moving_mask, label_flow)
    jax.block_until_ready((warped, final_flow, loss_dict))

    assert warped.shape == (B, 1, H, W)
    assert final_flow.shape == (B, 2, H, W)
    assert set(loss_dict.keys()) == {"corr", "mse"}
    print("KERNEL_OK")
</pallas_src>

<mosaic_0001>
module attributes {stable_mosaic.version = 11 : i64} {
  func.func @_vtn_kernel(%arg0: i32, %arg1: memref<1x18x32x2xbf16, #tpu.memory_space<vmem>>, %arg2: memref<9x2x16xbf16, #tpu.memory_space<vmem>>, %arg3: memref<1x16xf32, #tpu.memory_space<vmem>>, %arg4: memref<9x16x16xbf16, #tpu.memory_space<vmem>>, %arg5: memref<1x16xf32, #tpu.memory_space<vmem>>, %arg6: memref<9x16x2xbf16, #tpu.memory_space<vmem>>, %arg7: memref<1x2xf32, #tpu.memory_space<vmem>>, %arg8: memref<1x16x16x2xf32, #tpu.memory_space<vmem>>, %arg9: memref<18x32x16xbf16, #tpu.memory_space<vmem>>, %arg10: memref<18x32x16xbf16, #tpu.memory_space<vmem>>) attributes {dimension_semantics = [#tpu.dimension_semantics<parallel>], iteration_bounds = array<i64: 2>, scalar_prefetch = 0 : i64, scratch_operands = 2 : i64, tpu.core_type = #tpu.core_type<tc>, window_params = [{transform_indices = @transform_0, window_bounds = array<i64: 1, 18, 32, 2>}, {pipeline_mode = #tpu.pipeline_mode<synchronous>, transform_indices = @transform_1, window_bounds = array<i64: 9, 2, 16>}, {pipeline_mode = #tpu.pipeline_mode<synchronous>, transform_indices = @transform_2, window_bounds = array<i64: 1, 16>}, {pipeline_mode = #tpu.pipeline_mode<synchronous>, transform_indices = @transform_3, window_bounds = array<i64: 9, 16, 16>}, {pipeline_mode = #tpu.pipeline_mode<synchronous>, transform_indices = @transform_4, window_bounds = array<i64: 1, 16>}, {pipeline_mode = #tpu.pipeline_mode<synchronous>, transform_indices = @transform_5, window_bounds = array<i64: 9, 16, 2>}, {pipeline_mode = #tpu.pipeline_mode<synchronous>, transform_indices = @transform_6, window_bounds = array<i64: 1, 2>}, {transform_indices = @transform_7, window_bounds = array<i64: 1, 16, 16, 2>}]} {
    %c0 = arith.constant 0 : index
    %c0_0 = arith.constant 0 : index
    %c0_1 = arith.constant 0 : index
    %c0_2 = arith.constant 0 : index
    %0 = vector.load %arg1[%c0, %c0_0, %c0_1, %c0_2] : memref<1x18x32x2xbf16, #tpu.memory_space<vmem>>, vector<1x18x32x2xbf16>
    %1 = vector.shape_cast %0 : vector<1x18x32x2xbf16> to vector<18x32x2xbf16>
    %c0_3 = arith.constant 0 : index
    %c0_4 = arith.constant 0 : index
    %c0_5 = arith.constant 0 : index
    %2 = vector.load %arg2[%c0_3, %c0_4, %c0_5] : memref<9x2x16xbf16, #tpu.memory_space<vmem>>, vector<9x2x16xbf16>
    %c0_6 = arith.constant 0 : index
    %c0_7 = arith.constant 0 : index
    %3 = vector.load %arg3[%c0_6, %c0_7] : memref<1x16xf32, #tpu.memory_space<vmem>>, vector<1x16xf32>
    %cst = arith.constant 0.000000e+00 : f32
    %4 = vector.broadcast %cst : f32 to vector<256x16xf32>
    %5 = vector.extract_strided_slice %1 {offsets = [0, 7, 0], sizes = [16, 16, 2], strides = [1, 1, 1]} : vector<18x32x2xbf16> to vector<16x16x2xbf16>
    %6 = vector.shape_cast %5 : vector<16x16x2xbf16> to vector<256x2xbf16>
    %7 = vector.extract_strided_slice %2 {offsets = [0, 0, 0], sizes = [1, 2, 16], strides = [1, 1, 1]} : vector<9x2x16xbf16> to vector<1x2x16xbf16>
    %8 = vector.shape_cast %7 : vector<1x2x16xbf16> to vector<2x16xbf16>
    %cst_8 = arith.constant dense<0.000000e+00> : vector<256x16xf32>
    %9 = tpu.matmul %6, %8, %cst_8 {dimension_numbers = #tpu.dot_dimension_numbers<[1], [0], [0], [1], [0, 0, 1, 1], [], []>} : vector<256x2xbf16>, vector<2x16xbf16>, vector<256x16xf32> -> vector<256x16xf32>
    %10 = arith.addf %4, %9 : vector<256x16xf32>
    %11 = vector.extract_strided_slice %1 {offsets = [0, 8, 0], sizes = [16, 16, 2], strides = [1, 1, 1]} : vector<18x32x2xbf16> to vector<16x16x2xbf16>
    %12 = vector.shape_cast %11 : vector<16x16x2xbf16> to vector<256x2xbf16>
    %13 = vector.extract_strided_slice %2 {offsets = [1, 0, 0], sizes = [1, 2, 16], strides = [1, 1, 1]} : vector<9x2x16xbf16> to vector<1x2x16xbf16>
    %14 = vector.shape_cast %13 : vector<1x2x16xbf16> to vector<2x16xbf16>
    %cst_9 = arith.constant dense<0.000000e+00> : vector<256x16xf32>
    %15 = tpu.matmul %12, %14, %cst_9 {dimension_numbers = #tpu.dot_dimension_numbers<[1], [0], [0], [1], [0, 0, 1, 1], [], []>} : vector<256x2xbf16>, vector<2x16xbf16>, vector<256x16xf32> -> vector<256x16xf32>
    %16 = arith.addf %10, %15 : vector<256x16xf32>
    %17 = vector.extract_strided_slice %1 {offsets = [0, 9, 0], sizes = [16, 16, 2], strides = [1, 1, 1]} : vector<18x32x2xbf16> to vector<16x16x2xbf16>
    %18 = vector.shape_cast %17 : vector<16x16x2xbf16> to vector<256x2xbf16>
    %19 = vector.extract_strided_slice %2 {offsets = [2, 0, 0], sizes = [1, 2, 16], strides = [1, 1, 1]} : vector<9x2x16xbf16> to vector<1x2x16xbf16>
    %20 = vector.shape_cast %19 : vector<1x2x16xbf16> to vector<2x16xbf16>
    %cst_10 = arith.constant dense<0.000000e+00> : vector<256x16xf32>
    %21 = tpu.matmul %18, %20, %cst_10 {dimension_numbers = #tpu.dot_dimension_numbers<[1], [0], [0], [1], [0, 0, 1, 1], [], []>} : vector<256x2xbf16>, vector<2x16xbf16>, vector<256x16xf32> -> vector<256x16xf32>
    %22 = arith.addf %16, %21 : vector<256x16xf32>
    %23 = vector.extract_strided_slice %1 {offsets = [1, 7, 0], sizes = [16, 16, 2], strides = [1, 1, 1]} : vector<18x32x2xbf16> to vector<16x16x2xbf16>
    %24 = vector.shape_cast %23 : vector<16x16x2xbf16> to vector<256x2xbf16>
    %25 = vector.extract_strided_slice %2 {offsets = [3, 0, 0], sizes = [1, 2, 16], strides = [1, 1, 1]} : vector<9x2x16xbf16> to vector<1x2x16xbf16>
    %26 = vector.shape_cast %25 : vector<1x2x16xbf16> to vector<2x16xbf16>
    %cst_11 = arith.constant dense<0.000000e+00> : vector<256x16xf32>
    %27 = tpu.matmul %24, %26, %cst_11 {dimension_numbers = #tpu.dot_dimension_numbers<[1], [0], [0], [1], [0, 0, 1, 1], [], []>} : vector<256x2xbf16>, vector<2x16xbf16>, vector<256x16xf32> -> vector<256x16xf32>
    %28 = arith.addf %22, %27 : vector<256x16xf32>
    %29 = vector.extract_strided_slice %1 {offsets = [1, 8, 0], sizes = [16, 16, 2], strides = [1, 1, 1]} : vector<18x32x2xbf16> to vector<16x16x2xbf16>
    %30 = vector.shape_cast %29 : vector<16x16x2xbf16> to vector<256x2xbf16>
    %31 = vector.extract_strided_slice %2 {offsets = [4, 0, 0], sizes = [1, 2, 16], strides = [1, 1, 1]} : vector<9x2x16xbf16> to vector<1x2x16xbf16>
    %32 = vector.shape_cast %31 : vector<1x2x16xbf16> to vector<2x16xbf16>
    %cst_12 = arith.constant dense<0.000000e+00> : vector<256x16xf32>
    %33 = tpu.matmul %30, %32, %cst_12 {dimension_numbers = #tpu.dot_dimension_numbers<[1], [0], [0], [1], [0, 0, 1, 1], [], []>} : vector<256x2xbf16>, vector<2x16xbf16>, vector<256x16xf32> -> vector<256x16xf32>
    %34 = arith.addf %28, %33 : vector<256x16xf32>
    %35 = vector.extract_strided_slice %1 {offsets = [1, 9, 0], sizes = [16, 16, 2], strides = [1, 1, 1]} : vector<18x32x2xbf16> to vector<16x16x2xbf16>
    %36 = vector.shape_cast %35 : vector<16x16x2xbf16> to vector<256x2xbf16>
    %37 = vector.extract_strided_slice %2 {offsets = [5, 0, 0], sizes = [1, 2, 16], strides = [1, 1, 1]} : vector<9x2x16xbf16> to vector<1x2x16xbf16>
    %38 = vector.shape_cast %37 : vector<1x2x16xbf16> to vector<2x16xbf16>
    %cst_13 = arith.constant dense<0.000000e+00> : vector<256x16xf32>
    %39 = tpu.matmul %36, %38, %cst_13 {dimension_numbers = #tpu.dot_dimension_numbers<[1], [0], [0], [1], [0, 0, 1, 1], [], []>} : vector<256x2xbf16>, vector<2x16xbf16>, vector<256x16xf32> -> vector<256x16xf32>
    %40 = arith.addf %34, %39 : vector<256x16xf32>
    %41 = vector.extract_strided_slice %1 {offsets = [2, 7, 0], sizes = [16, 16, 2], strides = [1, 1, 1]} : vector<18x32x2xbf16> to vector<16x16x2xbf16>
    %42 = vector.shape_cast %41 : vector<16x16x2xbf16> to vector<256x2xbf16>
    %43 = vector.extract_strided_slice %2 {offsets = [6, 0, 0], sizes = [1, 2, 16], strides = [1, 1, 1]} : vector<9x2x16xbf16> to vector<1x2x16xbf16>
    %44 = vector.shape_cast %43 : vector<1x2x16xbf16> to vector<2x16xbf16>
    %cst_14 = arith.constant dense<0.000000e+00> : vector<256x16xf32>
    %45 = tpu.matmul %42, %44, %cst_14 {dimension_numbers = #tpu.dot_dimension_numbers<[1], [0], [0], [1], [0, 0, 1, 1], [], []>} : vector<256x2xbf16>, vector<2x16xbf16>, vector<256x16xf32> -> vector<256x16xf32>
    %46 = arith.addf %40, %45 : vector<256x16xf32>
    %47 = vector.extract_strided_slice %1 {offsets = [2, 8, 0], sizes = [16, 16, 2], strides = [1, 1, 1]} : vector<18x32x2xbf16> to vector<16x16x2xbf16>
    %48 = vector.shape_cast %47 : vector<16x16x2xbf16> to vector<256x2xbf16>
    %49 = vector.extract_strided_slice %2 {offsets = [7, 0, 0], sizes = [1, 2, 16], strides = [1, 1, 1]} : vector<9x2x16xbf16> to vector<1x2x16xbf16>
    %50 = vector.shape_cast %49 : vector<1x2x16xbf16> to vector<2x16xbf16>
    %cst_15 = arith.constant dense<0.000000e+00> : vector<256x16xf32>
    %51 = tpu.matmul %48, %50, %cst_15 {dimension_numbers = #tpu.dot_dimension_numbers<[1], [0], [0], [1], [0, 0, 1, 1], [], []>} : vector<256x2xbf16>, vector<2x16xbf16>, vector<256x16xf32> -> vector<256x16xf32>
    %52 = arith.addf %46, %51 : vector<256x16xf32>
    %53 = vector.extract_strided_slice %1 {offsets = [2, 9, 0], sizes = [16, 16, 2], strides = [1, 1, 1]} : vector<18x32x2xbf16> to vector<16x16x2xbf16>
    %54 = vector.shape_cast %53 : vector<16x16x2xbf16> to vector<256x2xbf16>
    %55 = vector.extract_strided_slice %2 {offsets = [8, 0, 0], sizes = [1, 2, 16], strides = [1, 1, 1]} : vector<9x2x16xbf16> to vector<1x2x16xbf16>
    %56 = vector.shape_cast %55 : vector<1x2x16xbf16> to vector<2x16xbf16>
    %cst_16 = arith.constant dense<0.000000e+00> : vector<256x16xf32>
    %57 = tpu.matmul %54, %56, %cst_16 {dimension_numbers = #tpu.dot_dimension_numbers<[1], [0], [0], [1], [0, 0, 1, 1], [], []>} : vector<256x2xbf16>, vector<2x16xbf16>, vector<256x16xf32> -> vector<256x16xf32>
    %58 = arith.addf %52, %57 : vector<256x16xf32>
    %59 = vector.broadcast %3 : vector<1x16xf32> to vector<256x16xf32>
    %60 = arith.addf %58, %59 : vector<256x16xf32>
    %cst_17 = arith.constant 0.000000e+00 : f32
    %61 = vector.broadcast %cst_17 : f32 to vector<256x16xf32>
    %62 = arith.cmpf ogt, %60, %61 : vector<256x16xf32>
    %cst_18 = arith.constant 1.000000e-01 : f32
    %63 = vector.broadcast %cst_18 : f32 to vector<256x16xf32>
    %64 = arith.mulf %63, %60 : vector<256x16xf32>
    %65 = arith.select %62, %60, %64 : vector<256x16xi1>, vector<256x16xf32>
    %cst_19 = arith.constant 0.000000e+00 : bf16
    %66 = vector.broadcast %cst_19 : bf16 to vector<18x32x16xbf16>
    %c0_20 = arith.constant 0 : index
    %c0_21 = arith.constant 0 : index
    %c0_22 = arith.constant 0 : index
    %67 = vector.load %arg9[%c0_20, %c0_21, %c0_22] : memref<18x32x16xbf16, #tpu.memory_space<vmem>>, vector<18x32x16xbf16>
    tpu.vector_store %arg9[%c0_20, %c0_21, %c0_22], %66 {strides = array<i32>} : memref<18x32x16xbf16, #tpu.memory_space<vmem>>, vector<18x32x16xbf16>,
    %68 = vector.shape_cast %65 : vector<256x16xf32> to vector<16x16x16xf32>
    %69 = arith.truncf %68 : vector<16x16x16xf32> to vector<16x16x16xbf16>
    %c1 = arith.constant 1 : index
    %c8 = arith.constant 8 : index
    %c0_23 = arith.constant 0 : index
    %70 = vector.load %arg9[%c1, %c8, %c0_23] : memref<18x32x16xbf16, #tpu.memory_space<vmem>>, vector<16x16x16xbf16>
    tpu.vector_store %arg9[%c1, %c8, %c0_23], %69 {strides = array<i32>} : memref<18x32x16xbf16, #tpu.memory_space<vmem>>, vector<16x16x16xbf16>,
    %c0_24 = arith.constant 0 : index
    %c0_25 = arith.constant 0 : index
    %c0_26 = arith.constant 0 : index
    %71 = vector.load %arg9[%c0_24, %c0_25, %c0_26] : memref<18x32x16xbf16, #tpu.memory_space<vmem>>, vector<18x32x16xbf16>
    %c0_27 = arith.constant 0 : index
    %c0_28 = arith.constant 0 : index
    %c0_29 = arith.constant 0 : index
    %72 = vector.load %arg4[%c0_27, %c0_28, %c0_29] : memref<9x16x16xbf16, #tpu.memory_space<vmem>>, vector<9x16x16xbf16>
    %c0_30 = arith.constant 0 : index
    %c0_31 = arith.constant 0 : index
    %73 = vector.load %arg5[%c0_30, %c0_31] : memref<1x16xf32, #tpu.memory_space<vmem>>, vector<1x16xf32>
    %cst_32 = arith.constant 0.000000e+00 : f32
    %74 = vector.broadcast %cst_32 : f32 to vector<256x16xf32>
    %75 = vector.extract_strided_slice %71 {offsets = [0, 7, 0], sizes = [16, 16, 16], strides = [1, 1, 1]} : vector<18x32x16xbf16> to vector<16x16x16xbf16>
    %76 = vector.shape_cast %75 : vector<16x16x16xbf16> to vector<256x16xbf16>
    %77 = vector.extract_strided_slice %72 {offsets = [0, 0, 0], sizes = [1, 16, 16], strides = [1, 1, 1]} : vector<9x16x16xbf16> to vector<1x16x16xbf16>
    %78 = vector.shape_cast %77 : vector<1x16x16xbf16> to vector<16x16xbf16>
    %cst_33 = arith.constant dense<0.000000e+00> : vector<256x16xf32>
    %79 = tpu.matmul %76, %78, %cst_33 {dimension_numbers = #tpu.dot_dimension_numbers<[1], [0], [0], [1], [0, 0, 1, 1], [], []>} : vector<256x16xbf16>, vector<16x16xbf16>, vector<256x16xf32> -> vector<256x16xf32>
    %80 = arith.addf %74, %79 : vector<256x16xf32>
    %81 = vector.extract_strided_slice %71 {offsets = [0, 8, 0], sizes = [16, 16, 16], strides = [1, 1, 1]} : vector<18x32x16xbf16> to vector<16x16x16xbf16>
    %82 = vector.shape_cast %81 : vector<16x16x16xbf16> to vector<256x16xbf16>
    %83 = vector.extract_strided_slice %72 {offsets = [1, 0, 0], sizes = [1, 16, 16], strides = [1, 1, 1]} : vector<9x16x16xbf16> to vector<1x16x16xbf16>
    %84 = vector.shape_cast %83 : vector<1x16x16xbf16> to vector<16x16xbf16>
    %cst_34 = arith.constant dense<0.000000e+00> : vector<256x16xf32>
    %85 = tpu.matmul %82, %84, %cst_34 {dimension_numbers = #tpu.dot_dimension_numbers<[1], [0], [0], [1], [0, 0, 1, 1], [], []>} : vector<256x16xbf16>, vector<16x16xbf16>, vector<256x16xf32> -> vector<256x16xf32>
    %86 = arith.addf %80, %85 : vector<256x16xf32>
    %87 = vector.extract_strided_slice %71 {offsets = [0, 9, 0], sizes = [16, 16, 16], strides = [1, 1, 1]} : vector<18x32x16xbf16> to vector<16x16x16xbf16>
    %88 = vector.shape_cast %87 : vector<16x16x16xbf16> to vector<256x16xbf16>
    %89 = vector.extract_strided_slice %72 {offsets = [2, 0, 0], sizes = [1, 16, 16], strides = [1, 1, 1]} : vector<9x16x16xbf16> to vector<1x16x16xbf16>
    %90 = vector.shape_cast %89 : vector<1x16x16xbf16> to vector<16x16xbf16>
    %cst_35 = arith.constant dense<0.000000e+00> : vector<256x16xf32>
    %91 = tpu.matmul %88, %90, %cst_35 {dimension_numbers = #tpu.dot_dimension_numbers<[1], [0], [0], [1], [0, 0, 1, 1], [], []>} : vector<256x16xbf16>, vector<16x16xbf16>, vector<256x16xf32> -> vector<256x16xf32>
    %92 = arith.addf %86, %91 : vector<256x16xf32>
    %93 = vector.extract_strided_slice %71 {offsets = [1, 7, 0], sizes = [16, 16, 16], strides = [1, 1, 1]} : vector<18x32x16xbf16> to vector<16x16x16xbf16>
    %94 = vector.shape_cast %93 : vector<16x16x16xbf16> to vector<256x16xbf16>
    %95 = vector.extract_strided_slice %72 {offsets = [3, 0, 0], sizes = [1, 16, 16], strides = [1, 1, 1]} : vector<9x16x16xbf16> to vector<1x16x16xbf16>
    %96 = vector.shape_cast %95 : vector<1x16x16xbf16> to vector<16x16xbf16>
    %cst_36 = arith.constant dense<0.000000e+00> : vector<256x16xf32>
    %97 = tpu.matmul %94, %96, %cst_36 {dimension_numbers = #tpu.dot_dimension_numbers<[1], [0], [0], [1], [0, 0, 1, 1], [], []>} : vector<256x16xbf16>, vector<16x16xbf16>, vector<256x16xf32> -> vector<256x16xf32>
    %98 = arith.addf %92, %97 : vector<256x16xf32>
    %99 = vector.extract_strided_slice %71 {offsets = [1, 8, 0], sizes = [16, 16, 16], strides = [1, 1, 1]} : vector<18x32x16xbf16> to vector<16x16x16xbf16>
    %100 = vector.shape_cast %99 : vector<16x16x16xbf16> to vector<256x16xbf16>
    %101 = vector.extract_strided_slice %72 {offsets = [4, 0, 0], sizes = [1, 16, 16], strides = [1, 1, 1]} : vector<9x16x16xbf16> to vector<1x16x16xbf16>
    %102 = vector.shape_cast %101 : vector<1x16x16xbf16> to vector<16x16xbf16>
    %cst_37 = arith.constant dense<0.000000e+00> : vector<256x16xf32>
    %103 = tpu.matmul %100, %102, %cst_37 {dimension_numbers = #tpu.dot_dimension_numbers<[1], [0], [0], [1], [0, 0, 1, 1], [], []>} : vector<256x16xbf16>, vector<16x16xbf16>, vector<256x16xf32> -> vector<256x16xf32>
    %104 = arith.addf %98, %103 : vector<256x16xf32>
    %105 = vector.extract_strided_slice %71 {offsets = [1, 9, 0], sizes = [16, 16, 16], strides = [1, 1, 1]} : vector<18x32x16xbf16> to vector<16x16x16xbf16>
    %106 = vector.shape_cast %105 : vector<16x16x16xbf16> to vector<256x16xbf16>
    %107 = vector.extract_strided_slice %72 {offsets = [5, 0, 0], sizes = [1, 16, 16], strides = [1, 1, 1]} : vector<9x16x16xbf16> to vector<1x16x16xbf16>
    %108 = vector.shape_cast %107 : vector<1x16x16xbf16> to vector<16x16xbf16>
    %cst_38 = arith.constant dense<0.000000e+00> : vector<256x16xf32>
    %109 = tpu.matmul %106, %108, %cst_38 {dimension_numbers = #tpu.dot_dimension_numbers<[1], [0], [0], [1], [0, 0, 1, 1], [], []>} : vector<256x16xbf16>, vector<16x16xbf16>, vector<256x16xf32> -> vector<256x16xf32>
    %110 = arith.addf %104, %109 : vector<256x16xf32>
    %111 = vector.extract_strided_slice %71 {offsets = [2, 7, 0], sizes = [16, 16, 16], strides = [1, 1, 1]} : vector<18x32x16xbf16> to vector<16x16x16xbf16>
    %112 = vector.shape_cast %111 : vector<16x16x16xbf16> to vector<256x16xbf16>
    %113 = vector.extract_strided_slice %72 {offsets = [6, 0, 0], sizes = [1, 16, 16], strides = [1, 1, 1]} : vector<9x16x16xbf16> to vector<1x16x16xbf16>
    %114 = vector.shape_cast %113 : vector<1x16x16xbf16> to vector<16x16xbf16>
    %cst_39 = arith.constant dense<0.000000e+00> : vector<256x16xf32>
    %115 = tpu.matmul %112, %114, %cst_39 {dimension_numbers = #tpu.dot_dimension_numbers<[1], [0], [0], [1], [0, 0, 1, 1], [], []>} : vector<256x16xbf16>, vector<16x16xbf16>, vector<256x16xf32> -> vector<256x16xf32>
    %116 = arith.addf %110, %115 : vector<256x16xf32>
    %117 = vector.extract_strided_slice %71 {offsets = [2, 8, 0], sizes = [16, 16, 16], strides = [1, 1, 1]} : vector<18x32x16xbf16> to vector<16x16x16xbf16>
    %118 = vector.shape_cast %117 : vector<16x16x16xbf16> to vector<256x16xbf16>
    %119 = vector.extract_strided_slice %72 {offsets = [7, 0, 0], sizes = [1, 16, 16], strides = [1, 1, 1]} : vector<9x16x16xbf16> to vector<1x16x16xbf16>
    %120 = vector.shape_cast %119 : vector<1x16x16xbf16> to vector<16x16xbf16>
    %cst_40 = arith.constant dense<0.000000e+00> : vector<256x16xf32>
    %121 = tpu.matmul %118, %120, %cst_40 {dimension_numbers = #tpu.dot_dimension_numbers<[1], [0], [0], [1], [0, 0, 1, 1], [], []>} : vector<256x16xbf16>, vector<16x16xbf16>, vector<256x16xf32> -> vector<256x16xf32>
    %122 = arith.addf %116, %121 : vector<256x16xf32>
    %123 = vector.extract_strided_slice %71 {offsets = [2, 9, 0], sizes = [16, 16, 16], strides = [1, 1, 1]} : vector<18x32x16xbf16> to vector<16x16x16xbf16>
    %124 = vector.shape_cast %123 : vector<16x16x16xbf16> to vector<256x16xbf16>
    %125 = vector.extract_strided_slice %72 {offsets = [8, 0, 0], sizes = [1, 16, 16], strides = [1, 1, 1]} : vector<9x16x16xbf16> to vector<1x16x16xbf16>
    %126 = vector.shape_cast %125 : vector<1x16x16xbf16> to vector<16x16xbf16>
    %cst_41 = arith.constant dense<0.000000e+00> : vector<256x16xf32>
    %127 = tpu.matmul %124, %126, %cst_41 {dimension_numbers = #tpu.dot_dimension_numbers<[1], [0], [0], [1], [0, 0, 1, 1], [], []>} : vector<256x16xbf16>, vector<16x16xbf16>, vector<256x16xf32> -> vector<256x16xf32>
    %128 = arith.addf %122, %127 : vector<256x16xf32>
    %129 = vector.broadcast %73 : vector<1x16xf32> to vector<256x16xf32>
    %130 = arith.addf %128, %129 : vector<256x16xf32>
    %cst_42 = arith.constant 0.000000e+00 : f32
    %131 = vector.broadcast %cst_42 : f32 to vector<256x16xf32>
    %132 = arith.cmpf ogt, %130, %131 : vector<256x16xf32>
    %cst_43 = arith.constant 1.000000e-01 : f32
    %133 = vector.broadcast %cst_43 : f32 to vector<256x16xf32>
    %134 = arith.mulf %133, %130 : vector<256x16xf32>
    %135 = arith.select %132, %130, %134 : vector<256x16xi1>, vector<256x16xf32>
    %cst_44 = arith.constant 0.000000e+00 : bf16
    %136 = vector.broadcast %cst_44 : bf16 to vector<18x32x16xbf16>
    %c0_45 = arith.constant 0 : index
    %c0_46 = arith.constant 0 : index
    %c0_47 = arith.constant 0 : index
    %137 = vector.load %arg10[%c0_45, %c0_46, %c0_47] : memref<18x32x16xbf16, #tpu.memory_space<vmem>>, vector<18x32x16xbf16>
    tpu.vector_store %arg10[%c0_45, %c0_46, %c0_47], %136 {strides = array<i32>} : memref<18x32x16xbf16, #tpu.memory_space<vmem>>, vector<18x32x16xbf16>,
    %138 = vector.shape_cast %135 : vector<256x16xf32> to vector<16x16x16xf32>
    %139 = arith.truncf %138 : vector<16x16x16xf32> to vector<16x16x16xbf16>
    %c1_48 = arith.constant 1 : index
    %c8_49 = arith.constant 8 : index
    %c0_50 = arith.constant 0 : index
    %140 = vector.load %arg10[%c1_48, %c8_49, %c0_50] : memref<18x32x16xbf16, #tpu.memory_space<vmem>>, vector<16x16x16xbf16>
    tpu.vector_store %arg10[%c1_48, %c8_49, %c0_50], %139 {strides = array<i32>} : memref<18x32x16xbf16, #tpu.memory_space<vmem>>, vector<16x16x16xbf16>,
    %c0_51 = arith.constant 0 : index
    %c0_52 = arith.constant 0 : index
    %c0_53 = arith.constant 0 : index
    %141 = vector.load %arg10[%c0_51, %c0_52, %c0_53] : memref<18x32x16xbf16, #tpu.memory_space<vmem>>, vector<18x32x16xbf16>
    %c0_54 = arith.constant 0 : index
    %c0_55 = arith.constant 0 : index
    %c0_56 = arith.constant 0 : index
    %142 = vector.load %arg6[%c0_54, %c0_55, %c0_56] : memref<9x16x2xbf16, #tpu.memory_space<vmem>>, vector<9x16x2xbf16>
    %c0_57 = arith.constant 0 : index
    %c0_58 = arith.constant 0 : index
    %143 = vector.load %arg7[%c0_57, %c0_58] : memref<1x2xf32, #tpu.memory_space<vmem>>, vector<1x2xf32>
    %cst_59 = arith.constant 0.000000e+00 : f32
    %144 = vector.broadcast %cst_59 : f32 to vector<256x2xf32>
    %145 = vector.extract_strided_slice %141 {offsets = [0, 7, 0], sizes = [16, 16, 16], strides = [1, 1, 1]} : vector<18x32x16xbf16> to vector<16x16x16xbf16>
    %146 = vector.shape_cast %145 : vector<16x16x16xbf16> to vector<256x16xbf16>
    %147 = vector.extract_strided_slice %142 {offsets = [0, 0, 0], sizes = [1, 16, 2], strides = [1, 1, 1]} : vector<9x16x2xbf16> to vector<1x16x2xbf16>
    %148 = vector.shape_cast %147 : vector<1x16x2xbf16> to vector<16x2xbf16>
    %cst_60 = arith.constant dense<0.000000e+00> : vector<256x2xf32>
    %149 = tpu.matmul %146, %148, %cst_60 {dimension_numbers = #tpu.dot_dimension_numbers<[1], [0], [0], [1], [0, 0, 1, 1], [], []>} : vector<256x16xbf16>, vector<16x2xbf16>, vector<256x2xf32> -> vector<256x2xf32>
    %150 = arith.addf %144, %149 : vector<256x2xf32>
    %151 = vector.extract_strided_slice %141 {offsets = [0, 8, 0], sizes = [16, 16, 16], strides = [1, 1, 1]} : vector<18x32x16xbf16> to vector<16x16x16xbf16>
    %152 = vector.shape_cast %151 : vector<16x16x16xbf16> to vector<256x16xbf16>
    %153 = vector.extract_strided_slice %142 {offsets = [1, 0, 0], sizes = [1, 16, 2], strides = [1, 1, 1]} : vector<9x16x2xbf16> to vector<1x16x2xbf16>
    %154 = vector.shape_cast %153 : vector<1x16x2xbf16> to vector<16x2xbf16>
    %cst_61 = arith.constant dense<0.000000e+00> : vector<256x2xf32>
    %155 = tpu.matmul %152, %154, %cst_61 {dimension_numbers = #tpu.dot_dimension_numbers<[1], [0], [0], [1], [0, 0, 1, 1], [], []>} : vector<256x16xbf16>, vector<16x2xbf16>, vector<256x2xf32> -> vector<256x2xf32>
    %156 = arith.addf %150, %155 : vector<256x2xf32>
    %157 = vector.extract_strided_slice %141 {offsets = [0, 9, 0], sizes = [16, 16, 16], strides = [1, 1, 1]} : vector<18x32x16xbf16> to vector<16x16x16xbf16>
    %158 = vector.shape_cast %157 : vector<16x16x16xbf16> to vector<256x16xbf16>
    %159 = vector.extract_strided_slice %142 {offsets = [2, 0, 0], sizes = [1, 16, 2], strides = [1, 1, 1]} : vector<9x16x2xbf16> to vector<1x16x2xbf16>
    %160 = vector.shape_cast %159 : vector<1x16x2xbf16> to vector<16x2xbf16>
    %cst_62 = arith.constant dense<0.000000e+00> : vector<256x2xf32>
    %161 = tpu.matmul %158, %160, %cst_62 {dimension_numbers = #tpu.dot_dimension_numbers<[1], [0], [0], [1], [0, 0, 1, 1], [], []>} : vector<256x16xbf16>, vector<16x2xbf16>, vector<256x2xf32> -> vector<256x2xf32>
    %162 = arith.addf %156, %161 : vector<256x2xf32>
    %163 = vector.extract_strided_slice %141 {offsets = [1, 7, 0], sizes = [16, 16, 16], strides = [1, 1, 1]} : vector<18x32x16xbf16> to vector<16x16x16xbf16>
    %164 = vector.shape_cast %163 : vector<16x16x16xbf16> to vector<256x16xbf16>
    %165 = vector.extract_strided_slice %142 {offsets = [3, 0, 0], sizes = [1, 16, 2], strides = [1, 1, 1]} : vector<9x16x2xbf16> to vector<1x16x2xbf16>
    %166 = vector.shape_cast %165 : vector<1x16x2xbf16> to vector<16x2xbf16>
    %cst_63 = arith.constant dense<0.000000e+00> : vector<256x2xf32>
    %167 = tpu.matmul %164, %166, %cst_63 {dimension_numbers = #tpu.dot_dimension_numbers<[1], [0], [0], [1], [0, 0, 1, 1], [], []>} : vector<256x16xbf16>, vector<16x2xbf16>, vector<256x2xf32> -> vector<256x2xf32>
    %168 = arith.addf %162, %167 : vector<256x2xf32>
    %169 = vector.extract_strided_slice %141 {offsets = [1, 8, 0], sizes = [16, 16, 16], strides = [1, 1, 1]} : vector<18x32x16xbf16> to vector<16x16x16xbf16>
    %170 = vector.shape_cast %169 : vector<16x16x16xbf16> to vector<256x16xbf16>
    %171 = vector.extract_strided_slice %142 {offsets = [4, 0, 0], sizes = [1, 16, 2], strides = [1, 1, 1]} : vector<9x16x2xbf16> to vector<1x16x2xbf16>
    %172 = vector.shape_cast %171 : vector<1x16x2xbf16> to vector<16x2xbf16>
    %cst_64 = arith.constant dense<0.000000e+00> : vector<256x2xf32>
    %173 = tpu.matmul %170, %172, %cst_64 {dimension_numbers = #tpu.dot_dimension_numbers<[1], [0], [0], [1], [0, 0, 1, 1], [], []>} : vector<256x16xbf16>, vector<16x2xbf16>, vector<256x2xf32> -> vector<256x2xf32>
    %174 = arith.addf %168, %173 : vector<256x2xf32>
    %175 = vector.extract_strided_slice %141 {offsets = [1, 9, 0], sizes = [16, 16, 16], strides = [1, 1, 1]} : vector<18x32x16xbf16> to vector<16x16x16xbf16>
    %176 = vector.shape_cast %175 : vector<16x16x16xbf16> to vector<256x16xbf16>
    %177 = vector.extract_strided_slice %142 {offsets = [5, 0, 0], sizes = [1, 16, 2], strides = [1, 1, 1]} : vector<9x16x2xbf16> to vector<1x16x2xbf16>
    %178 = vector.shape_cast %177 : vector<1x16x2xbf16> to vector<16x2xbf16>
    %cst_65 = arith.constant dense<0.000000e+00> : vector<256x2xf32>
    %179 = tpu.matmul %176, %178, %cst_65 {dimension_numbers = #tpu.dot_dimension_numbers<[1], [0], [0], [1], [0, 0, 1, 1], [], []>} : vector<256x16xbf16>, vector<16x2xbf16>, vector<256x2xf32> -> vector<256x2xf32>
    %180 = arith.addf %174, %179 : vector<256x2xf32>
    %181 = vector.extract_strided_slice %141 {offsets = [2, 7, 0], sizes = [16, 16, 16], strides = [1, 1, 1]} : vector<18x32x16xbf16> to vector<16x16x16xbf16>
    %182 = vector.shape_cast %181 : vector<16x16x16xbf16> to vector<256x16xbf16>
    %183 = vector.extract_strided_slice %142 {offsets = [6, 0, 0], sizes = [1, 16, 2], strides = [1, 1, 1]} : vector<9x16x2xbf16> to vector<1x16x2xbf16>
    %184 = vector.shape_cast %183 : vector<1x16x2xbf16> to vector<16x2xbf16>
    %cst_66 = arith.constant dense<0.000000e+00> : vector<256x2xf32>
    %185 = tpu.matmul %182, %184, %cst_66 {dimension_numbers = #tpu.dot_dimension_numbers<[1], [0], [0], [1], [0, 0, 1, 1], [], []>} : vector<256x16xbf16>, vector<16x2xbf16>, vector<256x2xf32> -> vector<256x2xf32>
    %186 = arith.addf %180, %185 : vector<256x2xf32>
    %187 = vector.extract_strided_slice %141 {offsets = [2, 8, 0], sizes = [16, 16, 16], strides = [1, 1, 1]} : vector<18x32x16xbf16> to vector<16x16x16xbf16>
    %188 = vector.shape_cast %187 : vector<16x16x16xbf16> to vector<256x16xbf16>
    %189 = vector.extract_strided_slice %142 {offsets = [7, 0, 0], sizes = [1, 16, 2], strides = [1, 1, 1]} : vector<9x16x2xbf16> to vector<1x16x2xbf16>
    %190 = vector.shape_cast %189 : vector<1x16x2xbf16> to vector<16x2xbf16>
    %cst_67 = arith.constant dense<0.000000e+00> : vector<256x2xf32>
    %191 = tpu.matmul %188, %190, %cst_67 {dimension_numbers = #tpu.dot_dimension_numbers<[1], [0], [0], [1], [0, 0, 1, 1], [], []>} : vector<256x16xbf16>, vector<16x2xbf16>, vector<256x2xf32> -> vector<256x2xf32>
    %192 = arith.addf %186, %191 : vector<256x2xf32>
    %193 = vector.extract_strided_slice %141 {offsets = [2, 9, 0], sizes = [16, 16, 16], strides = [1, 1, 1]} : vector<18x32x16xbf16> to vector<16x16x16xbf16>
    %194 = vector.shape_cast %193 : vector<16x16x16xbf16> to vector<256x16xbf16>
    %195 = vector.extract_strided_slice %142 {offsets = [8, 0, 0], sizes = [1, 16, 2], strides = [1, 1, 1]} : vector<9x16x2xbf16> to vector<1x16x2xbf16>
    %196 = vector.shape_cast %195 : vector<1x16x2xbf16> to vector<16x2xbf16>
    %cst_68 = arith.constant dense<0.000000e+00> : vector<256x2xf32>
    %197 = tpu.matmul %194, %196, %cst_68 {dimension_numbers = #tpu.dot_dimension_numbers<[1], [0], [0], [1], [0, 0, 1, 1], [], []>} : vector<256x16xbf16>, vector<16x2xbf16>, vector<256x2xf32> -> vector<256x2xf32>
    %198 = arith.addf %192, %197 : vector<256x2xf32>
    %199 = vector.broadcast %143 : vector<1x2xf32> to vector<256x2xf32>
    %200 = arith.addf %198, %199 : vector<256x2xf32>
    %201 = vector.shape_cast %200 : vector<256x2xf32> to vector<1x16x16x2xf32>
    %c0_69 = arith.constant 0 : index
    %c0_70 = arith.constant 0 : index
    %c0_71 = arith.constant 0 : index
    %c0_72 = arith.constant 0 : index
    %202 = vector.load %arg8[%c0_69, %c0_70, %c0_71, %c0_72] : memref<1x16x16x2xf32, #tpu.memory_space<vmem>>, vector<1x16x16x2xf32>
    tpu.vector_store %arg8[%c0_69, %c0_70, %c0_71, %c0_72], %201 {strides = array<i32>} : memref<1x16x16x2xf32, #tpu.memory_space<vmem>>, vector<1x16x16x2xf32>,
    return
  }
  func.func @transform_0(%arg0: i32) -> (i32, i32, i32, i32) {
    %c0_i32 = arith.constant 0 : i32
    %c0_i32_0 = arith.constant 0 : i32
    %c0_i32_1 = arith.constant 0 : i32
    %c0_i32_2 = arith.constant 0 : i32
    return %arg0, %c0_i32, %c0_i32_0, %c0_i32_1 : i32, i32, i32, i32
  }
  func.func @transform_1(%arg0: i32) -> (i32, i32, i32) {
    %c0_i32 = arith.constant 0 : i32
    %c0_i32_0 = arith.constant 0 : i32
    %c0_i32_1 = arith.constant 0 : i32
    %c0_i32_2 = arith.constant 0 : i32
    return %c0_i32, %c0_i32_0, %c0_i32_1 : i32, i32, i32
  }
  func.func @transform_2(%arg0: i32) -> (i32, i32) {
    %c0_i32 = arith.constant 0 : i32
    %c0_i32_0 = arith.constant 0 : i32
    %c0_i32_1 = arith.constant 0 : i32
    return %c0_i32, %c0_i32_0 : i32, i32
  }
  func.func @transform_3(%arg0: i32) -> (i32, i32, i32) {
    %c0_i32 = arith.constant 0 : i32
    %c0_i32_0 = arith.constant 0 : i32
    %c0_i32_1 = arith.constant 0 : i32
    %c0_i32_2 = arith.constant 0 : i32
    return %c0_i32, %c0_i32_0, %c0_i32_1 : i32, i32, i32
  }
  func.func @transform_4(%arg0: i32) -> (i32, i32) {
    %c0_i32 = arith.constant 0 : i32
    %c0_i32_0 = arith.constant 0 : i32
    %c0_i32_1 = arith.constant 0 : i32
    return %c0_i32, %c0_i32_0 : i32, i32
  }
  func.func @transform_5(%arg0: i32) -> (i32, i32, i32) {
    %c0_i32 = arith.constant 0 : i32
    %c0_i32_0 = arith.constant 0 : i32
    %c0_i32_1 = arith.constant 0 : i32
    %c0_i32_2 = arith.constant 0 : i32
    return %c0_i32, %c0_i32_0, %c0_i32_1 : i32, i32, i32
  }
  func.func @transform_6(%arg0: i32) -> (i32, i32) {
    %c0_i32 = arith.constant 0 : i32
    %c0_i32_0 = arith.constant 0 : i32
    %c0_i32_1 = arith.constant 0 : i32
    return %c0_i32, %c0_i32_0 : i32, i32
  }
  func.func @transform_7(%arg0: i32) -> (i32, i32, i32, i32) {
    %c0_i32 = arith.constant 0 : i32
    %c0_i32_0 = arith.constant 0 : i32
    %c0_i32_1 = arith.constant 0 : i32
    %c0_i32_2 = arith.constant 0 : i32
    return %arg0, %c0_i32, %c0_i32_0, %c0_i32_1 : i32, i32, i32, i32
  }
}

module attributes {stable_mosaic.version = 11 : i64} {
  func.func @_warp_kernel(%arg0: i32, %arg1: memref<1x256x1xf32, #tpu.memory_space<vmem>>, %arg2: memref<1x1x256xf32, #tpu.memory_space<vmem>>, %arg3: memref<1x1x256xf32, #tpu.memory_space<vmem>>, %arg4: memref<1x1x256xf32, #tpu.memory_space<vmem>>) attributes {dimension_semantics = [#tpu.dimension_semantics<parallel>], iteration_bounds = array<i64: 2>, scalar_prefetch = 0 : i64, scratch_operands = 0 : i64, tpu.core_type = #tpu.core_type<tc>, window_params = [{transform_indices = @transform_0, window_bounds = array<i64: 1, 256, 1>}, {transform_indices = @transform_1, window_bounds = array<i64: 1, 1, 256>}, {transform_indices = @transform_2, window_bounds = array<i64: 1, 1, 256>}, {transform_indices = @transform_3, window_bounds = array<i64: 1, 1, 256>}]} {
    %c0 = arith.constant 0 : index
    %c0_0 = arith.constant 0 : index
    %c0_1 = arith.constant 0 : index
    %0 = vector.load %arg1[%c0, %c0_0, %c0_1] : memref<1x256x1xf32, #tpu.memory_space<vmem>>, vector<1x256x1xf32>
    %1 = vector.shape_cast %0 : vector<1x256x1xf32> to vector<256x1xf32>
    %c0_2 = arith.constant 0 : index
    %c0_3 = arith.constant 0 : index
    %c0_4 = arith.constant 0 : index
    %2 = vector.load %arg2[%c0_2, %c0_3, %c0_4] : memref<1x1x256xf32, #tpu.memory_space<vmem>>, vector<1x1x256xf32>
    %3 = vector.shape_cast %2 : vector<1x1x256xf32> to vector<1x256xf32>
    %c0_5 = arith.constant 0 : index
    %c0_6 = arith.constant 0 : index
    %c0_7 = arith.constant 0 : index
    %4 = vector.load %arg3[%c0_5, %c0_6, %c0_7] : memref<1x1x256xf32, #tpu.memory_space<vmem>>, vector<1x1x256xf32>
    %5 = vector.shape_cast %4 : vector<1x1x256xf32> to vector<1x256xf32>
    %cst = arith.constant 0.000000e+00 : f32
    %6 = vector.broadcast %cst : f32 to vector<1x256xf32>
    %7 = arith.cmpf olt, %3, %6 : vector<1x256xf32>
    %cst_8 = arith.constant 1.500000e+01 : f32
    %8 = vector.broadcast %cst_8 : f32 to vector<1x256xf32>
    %9 = arith.cmpf ogt, %3, %8 : vector<1x256xf32>
    %10 = arith.ori %7, %9 : vector<1x256xi1>
    %cst_9 = arith.constant 0.000000e+00 : f32
    %11 = vector.broadcast %cst_9 : f32 to vector<1x256xf32>
    %12 = arith.cmpf olt, %5, %11 : vector<1x256xf32>
    %13 = arith.ori %10, %12 : vector<1x256xi1>
    %cst_10 = arith.constant 1.500000e+01 : f32
    %14 = vector.broadcast %cst_10 : f32 to vector<1x256xf32>
    %15 = arith.cmpf ogt, %5, %14 : vector<1x256xf32>
    %16 = arith.ori %13, %15 : vector<1x256xi1>
    %cst_11 = arith.constant 0.000000e+00 : f32
    %cst_12 = arith.constant 1.500000e+01 : f32
    %17 = vector.broadcast %cst_11 : f32 to vector<1x256xf32>
    %18 = arith.maximumf %17, %3 : vector<1x256xf32>
    %19 = vector.broadcast %cst_12 : f32 to vector<1x256xf32>
    %20 = arith.minimumf %19, %18 : vector<1x256xf32>
    %cst_13 = arith.constant 0.000000e+00 : f32
    %cst_14 = arith.constant 1.500000e+01 : f32
    %21 = vector.broadcast %cst_13 : f32 to vector<1x256xf32>
    %22 = arith.maximumf %21, %5 : vector<1x256xf32>
    %23 = vector.broadcast %cst_14 : f32 to vector<1x256xf32>
    %24 = arith.minimumf %23, %22 : vector<1x256xf32>
    %25 = math.floor %20 : vector<1x256xf32>
    %26 = math.floor %24 : vector<1x256xf32>
    %27 = arith.fptosi %25 : vector<1x256xf32> to vector<1x256xi32>
    %28 = arith.fptosi %26 : vector<1x256xf32> to vector<1x256xi32>
    %c1_i32 = arith.constant 1 : i32
    %29 = vector.broadcast %c1_i32 : i32 to vector<1x256xi32>
    %30 = arith.addi %27, %29 : vector<1x256xi32>
    %c15_i32 = arith.constant 15 : i32
    %31 = vector.broadcast %c15_i32 : i32 to vector<1x256xi32>
    %32 = arith.minsi %30, %31 : vector<1x256xi32>
    %c1_i32_15 = arith.constant 1 : i32
    %33 = vector.broadcast %c1_i32_15 : i32 to vector<1x256xi32>
    %34 = arith.addi %28, %33 : vector<1x256xi32>
    %c15_i32_16 = arith.constant 15 : i32
    %35 = vector.broadcast %c15_i32_16 : i32 to vector<1x256xi32>
    %36 = arith.minsi %34, %35 : vector<1x256xi32>
    %37 = arith.subf %20, %25 : vector<1x256xf32>
    %38 = arith.subf %24, %26 : vector<1x256xf32>
    %cst_17 = arith.constant 1.000000e+00 : f32
    %39 = vector.broadcast %cst_17 : f32 to vector<1x256xf32>
    %40 = arith.subf %39, %37 : vector<1x256xf32>
    %cst_18 = arith.constant 1.000000e+00 : f32
    %41 = vector.broadcast %cst_18 : f32 to vector<1x256xf32>
    %42 = arith.subf %41, %38 : vector<1x256xf32>
    %c16_i32 = arith.constant 16 : i32
    %43 = vector.broadcast %c16_i32 : i32 to vector<1x256xi32>
    %44 = arith.muli %27, %43 : vector<1x256xi32>
    %45 = arith.addi %44, %28 : vector<1x256xi32>
    %c16_i32_19 = arith.constant 16 : i32
    %46 = vector.broadcast %c16_i32_19 : i32 to vector<1x256xi32>
    %47 = arith.muli %27, %46 : vector<1x256xi32>
    %48 = arith.addi %47, %36 : vector<1x256xi32>
    %c16_i32_20 = arith.constant 16 : i32
    %49 = vector.broadcast %c16_i32_20 : i32 to vector<1x256xi32>
    %50 = arith.muli %32, %49 : vector<1x256xi32>
    %51 = arith.addi %50, %28 : vector<1x256xi32>
    %c16_i32_21 = arith.constant 16 : i32
    %52 = vector.broadcast %c16_i32_21 : i32 to vector<1x256xi32>
    %53 = arith.muli %32, %52 : vector<1x256xi32>
    %54 = arith.addi %53, %36 : vector<1x256xi32>
    %55 = tpu.iota {dimensions = array<i32: 0>} : vector<256x256xi32>
    %56 = vector.broadcast %45 : vector<1x256xi32> to vector<256x256xi32>
    %57 = arith.cmpi eq, %55, %56 : vector<256x256xi32>
    %58 = arith.mulf %40, %42 : vector<1x256xf32>
    %cst_22 = arith.constant 0.000000e+00 : f32
    %59 = vector.shape_cast %58 : vector<1x256xf32> to vector<1x256xf32>
    %60 = vector.broadcast %59 : vector<1x256xf32> to vector<256x256xf32>
    %61 = vector.broadcast %cst_22 : f32 to vector<256x256xf32>
    %62 = arith.select %57, %60, %61 : vector<256x256xi1>, vector<256x256xf32>
    %63 = vector.broadcast %48 : vector<1x256xi32> to vector<256x256xi32>
    %64 = arith.cmpi eq, %55, %63 : vector<256x256xi32>
    %65 = arith.mulf %40, %38 : vector<1x256xf32>
    %cst_23 = arith.constant 0.000000e+00 : f32
    %66 = vector.shape_cast %65 : vector<1x256xf32> to vector<1x256xf32>
    %67 = vector.broadcast %66 : vector<1x256xf32> to vector<256x256xf32>
    %68 = vector.broadcast %cst_23 : f32 to vector<256x256xf32>
    %69 = arith.select %64, %67, %68 : vector<256x256xi1>, vector<256x256xf32>
    %70 = arith.addf %62, %69 : vector<256x256xf32>
    %71 = vector.broadcast %51 : vector<1x256xi32> to vector<256x256xi32>
    %72 = arith.cmpi eq, %55, %71 : vector<256x256xi32>
    %73 = arith.mulf %37, %42 : vector<1x256xf32>
    %cst_24 = arith.constant 0.000000e+00 : f32
    %74 = vector.shape_cast %73 : vector<1x256xf32> to vector<1x256xf32>
    %75 = vector.broadcast %74 : vector<1x256xf32> to vector<256x256xf32>
    %76 = vector.broadcast %cst_24 : f32 to vector<256x256xf32>
    %77 = arith.select %72, %75, %76 : vector<256x256xi1>, vector<256x256xf32>
    %78 = arith.addf %70, %77 : vector<256x256xf32>
    %79 = vector.broadcast %54 : vector<1x256xi32> to vector<256x256xi32>
    %80 = arith.cmpi eq, %55, %79 : vector<256x256xi32>
    %81 = arith.mulf %37, %38 : vector<1x256xf32>
    %cst_25 = arith.constant 0.000000e+00 : f32
    %82 = vector.shape_cast %81 : vector<1x256xf32> to vector<1x256xf32>
    %83 = vector.broadcast %82 : vector<1x256xf32> to vector<256x256xf32>
    %84 = vector.broadcast %cst_25 : f32 to vector<256x256xf32>
    %85 = arith.select %80, %83, %84 : vector<256x256xi1>, vector<256x256xf32>
    %86 = arith.addf %78, %85 : vector<256x256xf32>
    %87 = vector.broadcast %1 : vector<256x1xf32> to vector<256x256xf32>
    %88 = arith.mulf %86, %87 : vector<256x256xf32>
    %cst_26 = arith.constant dense<0.000000e+00> : vector<256xf32>
    %89 = vector.multi_reduction <add>, %88, %cst_26 [0] : vector<256x256xf32> to vector<256xf32>
    %90 = vector.shape_cast %89 : vector<256xf32> to vector<1x256xf32>
    %91 = vector.shape_cast %1 : vector<256x1xf32> to vector<1x256x1xf32>
    %cst_27 = arith.constant dense<0x7F800000> : vector<1xf32>
    %92 = vector.multi_reduction <minimumf>, %91, %cst_27 [1, 2] : vector<1x256x1xf32> to vector<1xf32>
    %93 = vector.shape_cast %92 : vector<1xf32> to vector<1x1x1xf32>
    %94 = vector.extract %93[0, 0, 0] : f32 from vector<1x1x1xf32>
    %95 = vector.broadcast %94 : f32 to vector<1x256xf32>
    %96 = arith.select %16, %95, %90 : vector<1x256xi1>, vector<1x256xf32>
    %c0_28 = arith.constant 0 : index
    %c0_29 = arith.constant 0 : index
    %c0_30 = arith.constant 0 : index
    %97 = vector.load %arg4[%c0_28, %c0_29, %c0_30] : memref<1x1x256xf32, #tpu.memory_space<vmem>>, vector<1x1x256xf32>
    %98 = vector.shape_cast %97 : vector<1x1x256xf32> to vector<1x256xf32>
    %99 = vector.shape_cast %96 : vector<1x256xf32> to vector<1x1x256xf32>
    tpu.vector_store %arg4[%c0_28, %c0_29, %c0_30], %99 {strides = array<i32>} : memref<1x1x256xf32, #tpu.memory_space<vmem>>, vector<1x1x256xf32>,
    return
  }
  func.func @transform_0(%arg0: i32) -> (i32, i32, i32) {
    %c0_i32 = arith.constant 0 : i32
    %c0_i32_0 = arith.constant 0 : i32
    %c0_i32_1 = arith.constant 0 : i32
    return %arg0, %c0_i32, %c0_i32_0 : i32, i32, i32
  }
  func.func @transform_1(%arg0: i32) -> (i32, i32, i32) {
    %c0_i32 = arith.constant 0 : i32
    %c0_i32_0 = arith.constant 0 : i32
    %c0_i32_1 = arith.constant 0 : i32
    return %arg0, %c0_i32, %c0_i32_0 : i32, i32, i32
  }
  func.func @transform_2(%arg0: i32) -> (i32, i32, i32) {
    %c0_i32 = arith.constant 0 : i32
    %c0_i32_0 = arith.constant 0 : i32
    %c0_i32_1 = arith.constant 0 : i32
    return %arg0, %c0_i32, %c0_i32_0 : i32, i32, i32
  }
  func.func @transform_3(%arg0: i32) -> (i32, i32, i32) {
    %c0_i32 = arith.constant 0 : i32
    %c0_i32_0 = arith.constant 0 : i32
    %c0_i32_1 = arith.constant 0 : i32
    return %arg0, %c0_i32, %c0_i32_0 : i32, i32, i32
  }
}

module attributes {stable_mosaic.version = 11 : i64} {
  func.func @_corr_kernel(%arg0: i32, %arg1: memref<2x256xf32, #tpu.memory_space<vmem>>, %arg2: memref<2x256xf32, #tpu.memory_space<vmem>>, %arg3: memref<1x1xf32, #tpu.memory_space<vmem>>, %arg4: memref<2x1xf32, #tpu.memory_space<vmem>>, %arg5: memref<2x1xf32, #tpu.memory_space<vmem>>, %arg6: memref<2x1xf32, #tpu.memory_space<vmem>>, %arg7: memref<2x1xf32, #tpu.memory_space<vmem>>, %arg8: memref<2x1xf32, #tpu.memory_space<vmem>>) attributes {dimension_semantics = [#tpu.dimension_semantics<arbitrary>], iteration_bounds = array<i64: 1>, scalar_prefetch = 0 : i64, scratch_operands = 5 : i64, tpu.core_type = #tpu.core_type<tc>, window_params = [{transform_indices = @transform_0, window_bounds = array<i64: 2, 256>}, {transform_indices = @transform_1, window_bounds = array<i64: 2, 256>}, {pipeline_mode = #tpu.pipeline_mode<synchronous>, transform_indices = @transform_2, window_bounds = array<i64: 1, 1>}]} {
    %c0_i32 = arith.constant 0 : i32
    %0 = arith.cmpi eq, %arg0, %c0_i32 : i32
    %1 = arith.extui %0 : i1 to i32
    %c0_i32_0 = arith.constant 0 : i32
    %2 = arith.cmpi ne, %1, %c0_i32_0 : i32
    scf.if %2 {
      %cst_30 = arith.constant 0.000000e+00 : f32
      %36 = vector.broadcast %cst_30 : f32 to vector<2x1xf32>
      %c0_31 = arith.constant 0 : index
      %c0_32 = arith.constant 0 : index
      %37 = vector.load %arg4[%c0_31, %c0_32] : memref<2x1xf32, #tpu.memory_space<vmem>>, vector<2x1xf32>
      tpu.vector_store %arg4[%c0_31, %c0_32], %36 {strides = array<i32>} : memref<2x1xf32, #tpu.memory_space<vmem>>, vector<2x1xf32>,
      %cst_33 = arith.constant 0.000000e+00 : f32
      %38 = vector.broadcast %cst_33 : f32 to vector<2x1xf32>
      %c0_34 = arith.constant 0 : index
      %c0_35 = arith.constant 0 : index
      %39 = vector.load %arg5[%c0_34, %c0_35] : memref<2x1xf32, #tpu.memory_space<vmem>>, vector<2x1xf32>
      tpu.vector_store %arg5[%c0_34, %c0_35], %38 {strides = array<i32>} : memref<2x1xf32, #tpu.memory_space<vmem>>, vector<2x1xf32>,
      %cst_36 = arith.constant 0.000000e+00 : f32
      %40 = vector.broadcast %cst_36 : f32 to vector<2x1xf32>
      %c0_37 = arith.constant 0 : index
      %c0_38 = arith.constant 0 : index
      %41 = vector.load %arg6[%c0_37, %c0_38] : memref<2x1xf32, #tpu.memory_space<vmem>>, vector<2x1xf32>
      tpu.vector_store %arg6[%c0_37, %c0_38], %40 {strides = array<i32>} : memref<2x1xf32, #tpu.memory_space<vmem>>, vector<2x1xf32>,
      %cst_39 = arith.constant 0.000000e+00 : f32
      %42 = vector.broadcast %cst_39 : f32 to vector<2x1xf32>
      %c0_40 = arith.constant 0 : index
      %c0_41 = arith.constant 0 : index
      %43 = vector.load %arg7[%c0_40, %c0_41] : memref<2x1xf32, #tpu.memory_space<vmem>>, vector<2x1xf32>
      tpu.vector_store %arg7[%c0_40, %c0_41], %42 {strides = array<i32>} : memref<2x1xf32, #tpu.memory_space<vmem>>, vector<2x1xf32>,
      %cst_42 = arith.constant 0.000000e+00 : f32
      %44 = vector.broadcast %cst_42 : f32 to vector<2x1xf32>
      %c0_43 = arith.constant 0 : index
      %c0_44 = arith.constant 0 : index
      %45 = vector.load %arg8[%c0_43, %c0_44] : memref<2x1xf32, #tpu.memory_space<vmem>>, vector<2x1xf32>
      tpu.vector_store %arg8[%c0_43, %c0_44], %44 {strides = array<i32>} : memref<2x1xf32, #tpu.memory_space<vmem>>, vector<2x1xf32>,
    } else {
    }
    %c0 = arith.constant 0 : index
    %c0_1 = arith.constant 0 : index
    %3 = vector.load %arg1[%c0, %c0_1] : memref<2x256xf32, #tpu.memory_space<vmem>>, vector<2x256xf32>
    %c0_2 = arith.constant 0 : index
    %c0_3 = arith.constant 0 : index
    %4 = vector.load %arg2[%c0_2, %c0_3] : memref<2x256xf32, #tpu.memory_space<vmem>>, vector<2x256xf32>
    %c0_4 = arith.constant 0 : index
    %c0_5 = arith.constant 0 : index
    %5 = vector.load %arg4[%c0_4, %c0_5] : memref<2x1xf32, #tpu.memory_space<vmem>>, vector<2x1xf32>
    %cst = arith.constant dense<0.000000e+00> : vector<2xf32>
    %6 = vector.multi_reduction <add>, %3, %cst [1] : vector<2x256xf32> to vector<2xf32>
    %7 = vector.shape_cast %6 : vector<2xf32> to vector<2x1xf32>
    %8 = arith.addf %5, %7 : vector<2x1xf32>
    %c0_6 = arith.constant 0 : index
    %c0_7 = arith.constant 0 : index
    %9 = vector.load %arg4[%c0_6, %c0_7] : memref<2x1xf32, #tpu.memory_space<vmem>>, vector<2x1xf32>
    tpu.vector_store %arg4[%c0_6, %c0_7], %8 {strides = array<i32>} : memref<2x1xf32, #tpu.memory_space<vmem>>, vector<2x1xf32>,
    %c0_8 = arith.constant 0 : index
    %c0_9 = arith.constant 0 : index
    %10 = vector.load %arg5[%c0_8, %c0_9] : memref<2x1xf32, #tpu.memory_space<vmem>>, vector<2x1xf32>
    %cst_10 = arith.constant dense<0.000000e+00> : vector<2xf32>
    %11 = vector.multi_reduction <add>, %4, %cst_10 [1] : vector<2x256xf32> to vector<2xf32>
    %12 = vector.shape_cast %11 : vector<2xf32> to vector<2x1xf32>
    %13 = arith.addf %10, %12 : vector<2x1xf32>
    %c0_11 = arith.constant 0 : index
    %c0_12 = arith.constant 0 : index
    %14 = vector.load %arg5[%c0_11, %c0_12] : memref<2x1xf32, #tpu.memory_space<vmem>>, vector<2x1xf32>
    tpu.vector_store %arg5[%c0_11, %c0_12], %13 {strides = array<i32>} : memref<2x1xf32, #tpu.memory_space<vmem>>, vector<2x1xf32>,
    %c0_13 = arith.constant 0 : index
    %c0_14 = arith.constant 0 : index
    %15 = vector.load %arg6[%c0_13, %c0_14] : memref<2x1xf32, #tpu.memory_space<vmem>>, vector<2x1xf32>
    %16 = arith.mulf %3, %3 : vector<2x256xf32>
    %cst_15 = arith.constant dense<0.000000e+00> : vector<2xf32>
    %17 = vector.multi_reduction <add>, %16, %cst_15 [1] : vector<2x256xf32> to vector<2xf32>
    %18 = vector.shape_cast %17 : vector<2xf32> to vector<2x1xf32>
    %19 = arith.addf %15, %18 : vector<2x1xf32>
    %c0_16 = arith.constant 0 : index
    %c0_17 = arith.constant 0 : index
    %20 = vector.load %arg6[%c0_16, %c0_17] : memref<2x1xf32, #tpu.memory_space<vmem>>, vector<2x1xf32>
    tpu.vector_store %arg6[%c0_16, %c0_17], %19 {strides = array<i32>} : memref<2x1xf32, #tpu.memory_space<vmem>>, vector<2x1xf32>,
    %c0_18 = arith.constant 0 : index
    %c0_19 = arith.constant 0 : index
    %21 = vector.load %arg7[%c0_18, %c0_19] : memref<2x1xf32, #tpu.memory_space<vmem>>, vector<2x1xf32>
    %22 = arith.mulf %4, %4 : vector<2x256xf32>
    %cst_20 = arith.constant dense<0.000000e+00> : vector<2xf32>
    %23 = vector.multi_reduction <add>, %22, %cst_20 [1] : vector<2x256xf32> to vector<2xf32>
    %24 = vector.shape_cast %23 : vector<2xf32> to vector<2x1xf32>
    %25 = arith.addf %21, %24 : vector<2x1xf32>
    %c0_21 = arith.constant 0 : index
    %c0_22 = arith.constant 0 : index
    %26 = vector.load %arg7[%c0_21, %c0_22] : memref<2x1xf32, #tpu.memory_space<vmem>>, vector<2x1xf32>
    tpu.vector_store %arg7[%c0_21, %c0_22], %25 {strides = array<i32>} : memref<2x1xf32, #tpu.memory_space<vmem>>, vector<2x1xf32>,
    %c0_23 = arith.constant 0 : index
    %c0_24 = arith.constant 0 : index
    %27 = vector.load %arg8[%c0_23, %c0_24] : memref<2x1xf32, #tpu.memory_space<vmem>>, vector<2x1xf32>
    %28 = arith.mulf %3, %4 : vector<2x256xf32>
    %cst_25 = arith.constant dense<0.000000e+00> : vector<2xf32>
    %29 = vector.multi_reduction <add>, %28, %cst_25 [1] : vector<2x256xf32> to vector<2xf32>
    %30 = vector.shape_cast %29 : vector<2xf32> to vector<2x1xf32>
    %31 = arith.addf %27, %30 : vector<2x1xf32>
    %c0_26 = arith.constant 0 : index
    %c0_27 = arith.constant 0 : index
    %32 = vector.load %arg8[%c0_26, %c0_27] : memref<2x1xf32, #tpu.memory_space<vmem>>, vector<2x1xf32>
    tpu.vector_store %arg8[%c0_26, %c0_27], %31 {strides = array<i32>} : memref<2x1xf32, #tpu.memory_space<vmem>>, vector<2x1xf32>,
    %c0_i32_28 = arith.constant 0 : i32
    %33 = arith.cmpi eq, %arg0, %c0_i32_28 : i32
    %34 = arith.extui %33 : i1 to i32
    %c0_i32_29 = arith.constant 0 : i32
    %35 = arith.cmpi ne, %34, %c0_i32_29 : i32
    scf.if %35 {
      %c0_30 = arith.constant 0 : index
      %c0_31 = arith.constant 0 : index
      %36 = vector.load %arg4[%c0_30, %c0_31] : memref<2x1xf32, #tpu.memory_space<vmem>>, vector<2x1xf32>
      %c0_32 = arith.constant 0 : index
      %c0_33 = arith.constant 0 : index
      %37 = vector.load %arg5[%c0_32, %c0_33] : memref<2x1xf32, #tpu.memory_space<vmem>>, vector<2x1xf32>
      %c0_34 = arith.constant 0 : index
      %c0_35 = arith.constant 0 : index
      %38 = vector.load %arg8[%c0_34, %c0_35] : memref<2x1xf32, #tpu.memory_space<vmem>>, vector<2x1xf32>
      %39 = arith.mulf %36, %37 : vector<2x1xf32>
      %cst_36 = arith.constant 2.560000e+02 : f32
      %40 = vector.broadcast %cst_36 : f32 to vector<2x1xf32>
      %41 = arith.divf %39, %40 : vector<2x1xf32>
      %42 = arith.subf %38, %41 : vector<2x1xf32>
      %c0_37 = arith.constant 0 : index
      %c0_38 = arith.constant 0 : index
      %43 = vector.load %arg6[%c0_37, %c0_38] : memref<2x1xf32, #tpu.memory_space<vmem>>, vector<2x1xf32>
      %44 = arith.mulf %36, %36 : vector<2x1xf32>
      %cst_39 = arith.constant 2.560000e+02 : f32
      %45 = vector.broadcast %cst_39 : f32 to vector<2x1xf32>
      %46 = arith.divf %44, %45 : vector<2x1xf32>
      %47 = arith.subf %43, %46 : vector<2x1xf32>
      %c0_40 = arith.constant 0 : index
      %c0_41 = arith.constant 0 : index
      %48 = vector.load %arg7[%c0_40, %c0_41] : memref<2x1xf32, #tpu.memory_space<vmem>>, vector<2x1xf32>
      %49 = arith.mulf %37, %37 : vector<2x1xf32>
      %cst_42 = arith.constant 2.560000e+02 : f32
      %50 = vector.broadcast %cst_42 : f32 to vector<2x1xf32>
      %51 = arith.divf %49, %50 : vector<2x1xf32>
      %52 = arith.subf %48, %51 : vector<2x1xf32>
      %53 = arith.mulf %47, %52 : vector<2x1xf32>
      %cst_43 = arith.constant 9.99999974E-6 : f32
      %54 = vector.broadcast %cst_43 : f32 to vector<2x1xf32>
      %55 = arith.addf %53, %54 : vector<2x1xf32>
      %56 = math.sqrt %55 : vector<2x1xf32>
      %57 = arith.divf %42, %56 : vector<2x1xf32>
      %58 = vector.shape_cast %57 : vector<2x1xf32> to vector<1x2x1xf32>
      %cst_44 = arith.constant dense<0.000000e+00> : vector<1xf32>
      %59 = vector.multi_reduction <add>, %58, %cst_44 [1, 2] : vector<1x2x1xf32> to vector<1xf32>
      %60 = vector.shape_cast %59 : vector<1xf32> to vector<1x1x1xf32>
      %61 = vector.extract %60[0, 0, 0] : f32 from vector<1x1x1xf32>
      %cst_45 = arith.constant 2.000000e+00 : f32
      %62 = arith.divf %61, %cst_45 : f32
      %cst_46 = arith.constant 1.000000e+00 : f32
      %63 = arith.subf %cst_46, %62 : f32
      %64 = vector.broadcast %63 : f32 to vector<1x1xf32>
      %c0_47 = arith.constant 0 : index
      %c0_48 = arith.constant 0 : index
      %65 = vector.load %arg3[%c0_47, %c0_48] : memref<1x1xf32, #tpu.memory_space<vmem>>, vector<1x1xf32>
      tpu.vector_store %arg3[%c0_47, %c0_48], %64 {strides = array<i32>} : memref<1x1xf32, #tpu.memory_space<vmem>>, vector<1x1xf32>,
    } else {
    }
    return
  }
  func.func @transform_0(%arg0: i32) -> (i32, i32) {
    %c0_i32 = arith.constant 0 : i32
    %c0_i32_0 = arith.constant 0 : i32
    return %c0_i32, %arg0 : i32, i32
  }
  func.func @transform_1(%arg0: i32) -> (i32, i32) {
    %c0_i32 = arith.constant 0 : i32
    %c0_i32_0 = arith.constant 0 : i32
    return %c0_i32, %arg0 : i32, i32
  }
  func.func @transform_2(%arg0: i32) -> (i32, i32) {
    %c0_i32 = arith.constant 0 : i32
    %c0_i32_0 = arith.constant 0 : i32
    %c0_i32_1 = arith.constant 0 : i32
    return %c0_i32, %c0_i32_0 : i32, i32
  }
}

module attributes {stable_mosaic.version = 11 : i64} {
  func.func @_mse_kernel(%arg0: i32, %arg1: memref<8x128xf32, #tpu.memory_space<vmem>>, %arg2: memref<8x128xf32, #tpu.memory_space<vmem>>, %arg3: memref<1x1xf32, #tpu.memory_space<vmem>>, %arg4: memref<1x1xf32, #tpu.memory_space<vmem>>) attributes {dimension_semantics = [#tpu.dimension_semantics<arbitrary>], iteration_bounds = array<i64: 1>, scalar_prefetch = 0 : i64, scratch_operands = 1 : i64, tpu.core_type = #tpu.core_type<tc>, window_params = [{transform_indices = @transform_0, window_bounds = array<i64: 8, 128>}, {transform_indices = @transform_1, window_bounds = array<i64: 8, 128>}, {pipeline_mode = #tpu.pipeline_mode<synchronous>, transform_indices = @transform_2, window_bounds = array<i64: 1, 1>}]} {
    %c0_i32 = arith.constant 0 : i32
    %0 = arith.cmpi eq, %arg0, %c0_i32 : i32
    %1 = arith.extui %0 : i1 to i32
    %c0_i32_0 = arith.constant 0 : i32
    %2 = arith.cmpi ne, %1, %c0_i32_0 : i32
    scf.if %2 {
      %cst_10 = arith.constant 0.000000e+00 : f32
      %18 = vector.broadcast %cst_10 : f32 to vector<1x1xf32>
      %c0_11 = arith.constant 0 : index
      %c0_12 = arith.constant 0 : index
      %19 = vector.load %arg4[%c0_11, %c0_12] : memref<1x1xf32, #tpu.memory_space<vmem>>, vector<1x1xf32>
      tpu.vector_store %arg4[%c0_11, %c0_12], %18 {strides = array<i32>} : memref<1x1xf32, #tpu.memory_space<vmem>>, vector<1x1xf32>,
    } else {
    }
    %c0 = arith.constant 0 : index
    %c0_1 = arith.constant 0 : index
    %3 = vector.load %arg1[%c0, %c0_1] : memref<8x128xf32, #tpu.memory_space<vmem>>, vector<8x128xf32>
    %c0_2 = arith.constant 0 : index
    %c0_3 = arith.constant 0 : index
    %4 = vector.load %arg2[%c0_2, %c0_3] : memref<8x128xf32, #tpu.memory_space<vmem>>, vector<8x128xf32>
    %5 = arith.subf %3, %4 : vector<8x128xf32>
    %c0_4 = arith.constant 0 : index
    %c0_5 = arith.constant 0 : index
    %6 = vector.load %arg4[%c0_4, %c0_5] : memref<1x1xf32, #tpu.memory_space<vmem>>, vector<1x1xf32>
    %7 = arith.mulf %5, %5 : vector<8x128xf32>
    %8 = vector.shape_cast %7 : vector<8x128xf32> to vector<1x8x128xf32>
    %cst = arith.constant dense<0.000000e+00> : vector<1xf32>
    %9 = vector.multi_reduction <add>, %8, %cst [1, 2] : vector<1x8x128xf32> to vector<1xf32>
    %10 = vector.shape_cast %9 : vector<1xf32> to vector<1x1x1xf32>
    %11 = vector.extract %10[0, 0, 0] : f32 from vector<1x1x1xf32>
    %12 = vector.broadcast %11 : f32 to vector<1x1xf32>
    %13 = arith.addf %6, %12 : vector<1x1xf32>
    %c0_6 = arith.constant 0 : index
    %c0_7 = arith.constant 0 : index
    %14 = vector.load %arg4[%c0_6, %c0_7] : memref<1x1xf32, #tpu.memory_space<vmem>>, vector<1x1xf32>
    tpu.vector_store %arg4[%c0_6, %c0_7], %13 {strides = array<i32>} : memref<1x1xf32, #tpu.memory_space<vmem>>, vector<1x1xf32>,
    %c0_i32_8 = arith.constant 0 : i32
    %15 = arith.cmpi eq, %arg0, %c0_i32_8 : i32
    %16 = arith.extui %15 : i1 to i32
    %c0_i32_9 = arith.constant 0 : i32
    %17 = arith.cmpi ne, %16, %c0_i32_9 : i32
    scf.if %17 {
      %c0_10 = arith.constant 0 : index
      %c0_11 = arith.constant 0 : index
      %18 = vector.load %arg4[%c0_10, %c0_11] : memref<1x1xf32, #tpu.memory_space<vmem>>, vector<1x1xf32>
      %cst_12 = arith.constant 1.024000e+03 : f32
      %19 = vector.broadcast %cst_12 : f32 to vector<1x1xf32>
      %20 = arith.divf %18, %19 : vector<1x1xf32>
      %c0_13 = arith.constant 0 : index
      %c0_14 = arith.constant 0 : index
      %21 = vector.load %arg3[%c0_13, %c0_14] : memref<1x1xf32, #tpu.memory_space<vmem>>, vector<1x1xf32>
      tpu.vector_store %arg3[%c0_13, %c0_14], %20 {strides = array<i32>} : memref<1x1xf32, #tpu.memory_space<vmem>>, vector<1x1xf32>,
    } else {
    }
    return
  }
  func.func @transform_0(%arg0: i32) -> (i32, i32) {
    %c0_i32 = arith.constant 0 : i32
    %c0_i32_0 = arith.constant 0 : i32
    return %c0_i32, %arg0 : i32, i32
  }
  func.func @transform_1(%arg0: i32) -> (i32, i32) {
    %c0_i32 = arith.constant 0 : i32
    %c0_i32_0 = arith.constant 0 : i32
    return %c0_i32, %arg0 : i32, i32
  }
  func.func @transform_2(%arg0: i32) -> (i32, i32) {
    %c0_i32 = arith.constant 0 : i32
    %c0_i32_0 = arith.constant 0 : i32
    %c0_i32_1 = arith.constant 0 : i32
    return %c0_i32, %c0_i32_0 : i32, i32
  }
}

</mosaic_0001>

<llo_original>
// kernel: simple_regnet_forward.6
$region0: #{simple_regnet_forward.6}
  #allocation0 [shape = 'u32[]', space=smem, size = 0x4, offset = 0x4, fixed_abs, tag = 'smem constant byte address 0x4 - core index']
  #allocation1 [shape = 'u32[144,128]{1,0:T(1,128)}', space=vmem, size = 0x12000, scoped, tag = 'internal scratch']
  #allocation2 [shape = 'f32[2,1]{1,0:T(2,128)}', space=vmem, size = 0x400, scoped, tag = 'scratch operand']
  #allocation3 [shape = 'f32[2,1]{1,0:T(2,128)}', space=vmem, size = 0x400, scoped, tag = 'scratch operand']
  #allocation4 [shape = 'f32[2,1]{1,0:T(2,128)}', space=vmem, size = 0x400, scoped, tag = 'scratch operand']
  #allocation5 [shape = 'f32[2,1]{1,0:T(2,128)}', space=vmem, size = 0x400, scoped, tag = 'scratch operand']
  #allocation6 [shape = 'f32[2,1]{1,0:T(2,128)}', space=vmem, size = 0x400, scoped, tag = 'scratch operand']
  %s0 = inlined_call_operand.vmem [shape: f32[2,256], index: 0, kind: input, shape index: {}]
  %s1 = inlined_call_operand.vmem [shape: f32[2,256], index: 1, kind: input, shape index: {}]
  %s2 = inlined_call_operand.hbm [shape: f32[1,1], index: 2, kind: output, shape index: {}]
  %s3 = sld [smem:[#allocation0]]
  $region26: #{simple_regnet_forward.6} parent=0
    _
  %s5 = ssub.s32 1, %s3
  %s6 = scalar_select 0, %s5, %s3
  $region1: #{simple_regnet_forward.6} parent=0
    #allocation7 [shape = 'u8[512]{0}', space=vmem, size = 0x400, scoped, tag = 'output window, operand 0, single buffered']
    #allocation8 [shape = 's32[1]{0}', space=sflag, size = 0x4, scoped, tag = 'scoped memory for simple_regnet_forward.6']
    %7 = vsyncpa [#allocation8], 0
    // Predicated region
    $region2: #{simple_regnet_forward.6} parent=1 // pred_check
      _
    $region3: #{simple_regnet_forward.6} parent=1 // pred_check_branch
      %9 = sbr.rel (0) target = $region5
    $region4: #{simple_regnet_forward.6} parent=1 // pred_region
      _
    $region5: #{simple_regnet_forward.6} parent=1 // pred_fallthru
      _
    // Predicated region
    $region6: #{simple_regnet_forward.6} parent=1 // pred_check
      _
    $region7: #{simple_regnet_forward.6} parent=1 // pred_check_branch
      %11 = sbr.rel (0) target = $region9
    $region8: #{simple_regnet_forward.6} parent=1 // pred_region
      _
    $region9: #{simple_regnet_forward.6} parent=1 // pred_fallthru
      _
    %p12 = scmp.eq.s32.totalorder 0, 0
    // Predicated region
    $region10: #{simple_regnet_forward.6} parent=1 // pred_check
      %p13 = pneg %p12
    $region11: #{simple_regnet_forward.6} parent=1 // pred_check_branch
      %15 = sbr.rel (%p13) target = $region13
    $region12: #{simple_regnet_forward.6} parent=1 // pred_region
      %vm16 = vcmask 1024
      %17 = vst.msk [vmem:[#allocation2] sm:$0x3] %vm16, 0.0
      %18 = vst.msk [vmem:[#allocation3] sm:$0x3] %vm16, 0.0
      %19 = vst.msk [vmem:[#allocation4] sm:$0x3] %vm16, 0.0
      %20 = vst.msk [vmem:[#allocation5] sm:$0x3] %vm16, 0.0
      %21 = vst.msk [vmem:[#allocation6] sm:$0x3] %vm16, 0.0
    $region13: #{simple_regnet_forward.6} parent=1 // pred_fallthru
      _
    %v22 = vld [vmem:[%s0] sm:$0xf]
    %v23 = vld [vmem:[%s1] sm:$0xf]
    %v24 = vld [vmem:[#allocation2] sm:$0x3]
    %v27 = vunpack.c.l.s4 1983009808
    %v28 = vunpack.c.0.s8 %v27
    %v29 = vlaneseq
    %v30 = vshrl.u32 %v29, 7
    %v31 = vsub.s32 %v28, %v30
    %v32 = vrot.slane %v22, %v31
    %v33 = vcombine.high %v32, %v32
    %vm36 = vcmask 1041408
    %v37 = vsel %vm36, %v32, 0.0
    %v38 = vsel %vm36, %v33, 0.0
    %v39 = vadd.f32 %v37, %v38
    %40 = vadd.xlane.f32.xlu0 %v39
    %v41 = vpop.xlane.xlu0 %40
    %v42 = vadd.f32 %v24, %v41
    %vm43 = vcmask 1024
    %44 = vst.msk [vmem:[#allocation2] sm:$0x3] %vm43, %v42
    %v45 = vld [vmem:[#allocation3] sm:$0x3]
    %v48 = vunpack.c.l.s4 1983009808
    %v49 = vunpack.c.0.s8 %v48
    %v50 = vlaneseq
    %v51 = vshrl.u32 %v50, 7
    %v52 = vsub.s32 %v49, %v51
    %v53 = vrot.slane %v23, %v52
    %v54 = vcombine.high %v53, %v53
    %v57 = vsel %vm36, %v53, 0.0
    %v58 = vsel %vm36, %v54, 0.0
    %v59 = vadd.f32 %v57, %v58
    %60 = vadd.xlane.f32.xlu0 %v59
    %v61 = vpop.xlane.xlu0 %60
    %v62 = vadd.f32 %v45, %v61
    %63 = vst.msk [vmem:[#allocation3] sm:$0x3] %vm43, %v62
    %v64 = vld [vmem:[#allocation4] sm:$0x3]
    %v65 = vmul.f32 %v22, %v22
    %v68 = vunpack.c.l.s4 1983009808
    %v69 = vunpack.c.0.s8 %v68
    %v70 = vlaneseq
    %v71 = vshrl.u32 %v70, 7
    %v72 = vsub.s32 %v69, %v71
    %v73 = vrot.slane %v65, %v72
    %v74 = vcombine.high %v73, %v73
    %v77 = vsel %vm36, %v73, 0.0
    %v78 = vsel %vm36, %v74, 0.0
    %v79 = vadd.f32 %v77, %v78
    %80 = vadd.xlane.f32.xlu0 %v79
    %v81 = vpop.xlane.xlu0 %80
    %v82 = vadd.f32 %v64, %v81
    %83 = vst.msk [vmem:[#allocation4] sm:$0x3] %vm43, %v82
    %v84 = vld [vmem:[#allocation5] sm:$0x3]
    %v85 = vmul.f32 %v23, %v23
    %v88 = vunpack.c.l.s4 1983009808
    %v89 = vunpack.c.0.s8 %v88
    %v90 = vlaneseq
    %v91 = vshrl.u32 %v90, 7
    %v92 = vsub.s32 %v89, %v91
    %v93 = vrot.slane %v85, %v92
    %v94 = vcombine.high %v93, %v93
    %v97 = vsel %vm36, %v93, 0.0
    %v98 = vsel %vm36, %v94, 0.0
    %v99 = vadd.f32 %v97, %v98
    %100 = vadd.xlane.f32.xlu0 %v99
    %v101 = vpop.xlane.xlu0 %100
    %v102 = vadd.f32 %v84, %v101
    %103 = vst.msk [vmem:[#allocation5] sm:$0x3] %vm43, %v102
    %v104 = vld [vmem:[#allocation6] sm:$0x3]
    %v105 = vmul.f32 %v22, %v23
    %v108 = vunpack.c.l.s4 1983009808
    %v109 = vunpack.c.0.s8 %v108
    %v110 = vlaneseq
    %v111 = vshrl.u32 %v110, 7
    %v112 = vsub.s32 %v109, %v111
    %v113 = vrot.slane %v105, %v112
    %v114 = vcombine.high %v113, %v113
    %v117 = vsel %vm36, %v113, 0.0
    %v118 = vsel %vm36, %v114, 0.0
    %v119 = vadd.f32 %v117, %v118
    %120 = vadd.xlane.f32.xlu0 %v119
    %v121 = vpop.xlane.xlu0 %120
    %v122 = vadd.f32 %v104, %v121
    %123 = vst.msk [vmem:[#allocation6] sm:$0x3] %vm43, %v122
    // Predicated region
    $region14: #{simple_regnet_forward.6} parent=1 // pred_check
      %p124 = pneg %p12
    $region15: #{simple_regnet_forward.6} parent=1 // pred_check_branch
      %126 = sbr.rel (%p124) target = $region17
    $region16: #{simple_regnet_forward.6} parent=1 // pred_region
      %v127 = vld [vmem:[#allocation2] sm:$0x3]
      %v128 = vld [vmem:[#allocation3] sm:$0x3]
      %v129 = vld [vmem:[#allocation6] sm:$0x3]
      %v130 = vmul.f32 %v127, %v128
      %v131 = vrcp.pop 256.0
      %v132 = vmul.f32 %v130, %v131
      %v133 = vsub.f32 %v129, %v132
      %v134 = vld [vmem:[#allocation4] sm:$0x3]
      %v135 = vmul.f32 %v127, %v127
      %v136 = vmul.f32 %v135, %v131
      %v137 = vsub.f32 %v134, %v136
      %v138 = vld [vmem:[#allocation5] sm:$0x3]
      %v139 = vmul.f32 %v128, %v128
      %v140 = vmul.f32 %v139, %v131
      %v141 = vsub.f32 %v138, %v140
      %v142 = vmul.f32 %v137, %v141
      %v143 = vadd.f32 %v142, 1e-05
      %v144 = vrsqrt.pop %v143
      %v145 = vmul.f32 %v143, %v144
      %vm146 = vcmp.eq.f32.partialorder %v143, inf
      %v147 = vsel %vm146, %v143, %v145
      %vm148 = vcmp.eq.f32.partialorder %v143, 0.0
      %v149 = vand.u32 %v143, 2147483648
      %v150 = vsel %vm148, %v149, %v147
      %v151 = vrcp.pop %v150
      %v152 = vmul.f32 %v133, %v151
      %v153 = vsel %vm43, %v152, 0.0
      %154 = vadd.xlane.f32.xlu0 %v153
      %v155 = vpop.xlane.xlu0 %154
      %v156 = vrot.slane %v155, 4
      %v157 = vadd.f32 %v155, %v156
      %v158 = vrot.slane %v157, 2
      %v159 = vadd.f32 %v157, %v158
      %v160 = vrot.slane %v159, 1
      %v161 = vadd.f32 %v159, %v160
      %s162 = vtos %v161
      %v163 = vrcp.pop 2.0
      %s164 = vtos %v163
      %s165 = smul.f32 %s162, %s164
      %s166 = ssub.f32 1.0, %s165
      %v167 = vstv %s166
      %vm168 = vcmask 0
      %169 = vst.msk [vmem:[#allocation7] sm:$0x1] %vm168, %v167
    $region17: #{simple_regnet_forward.6} parent=1 // pred_fallthru
      _
    // Predicated region
    $region18: #{simple_regnet_forward.6} parent=1 // pred_check
      _
    $region19: #{simple_regnet_forward.6} parent=1 // pred_check_branch
      %171 = sbr.rel (0) target = $region21
    $region20: #{simple_regnet_forward.6} parent=1 // pred_region
      %s173 = ssub.s32 16, 16
      %174 = vsyncadd [#allocation8], %s173
      %s176 = sshll.u32 [#allocation7], 4
      %s177 = int_to_ptr.vmem [resolvable:$true] %s176
      %179 = dma.vmem_to_hbm [thread:$0]  %s177, 16, %s2, [#allocation8]
    $region21: #{simple_regnet_forward.6} parent=1 // pred_fallthru
      _
    // Predicated region
    $region22: #{simple_regnet_forward.6} parent=1 // pred_check
      _
    $region23: #{simple_regnet_forward.6} parent=1 // pred_check_branch
      %181 = sbr.rel (0) target = $region25
    $region24: #{simple_regnet_forward.6} parent=1 // pred_region
      %182 = dma.done [#allocation8], 16
    $region25: #{simple_regnet_forward.6} parent=1 // pred_fallthru
      _
    %183 = vsyncpa [#allocation8], 1

// kernel: simple_regnet_forward.5
$region0: #{simple_regnet_forward.5}
  #allocation0 [shape = 'u32[]', space=smem, size = 0x4, offset = 0x4, fixed_abs, tag = 'smem constant byte address 0x4 - core index']
  #allocation1 [shape = 'u32[144,128]{1,0:T(1,128)}', space=vmem, size = 0x12000, scoped, tag = 'internal scratch']
  %s0 = inlined_call_operand.vmem [shape: f32[2,256,1], index: 0, kind: input, shape index: {}]
  %s1 = inlined_call_operand.vmem [shape: f32[2,1,256], index: 1, kind: input, shape index: {}]
  %s2 = inlined_call_operand.vmem [shape: f32[2,1,256], index: 2, kind: input, shape index: {}]
  %s3 = inlined_call_operand.vmem [shape: f32[2,1,256], index: 3, kind: output, shape index: {}]
  %s4 = sld [smem:[#allocation0]]
  $region45: #{simple_regnet_forward.5} parent=0
    _
  %s6 = ssub.s32 1, %s4
  %s7 = scalar_select 0, %s6, %s4
  loop: start=0, step=1, limit=4
  $region2: #{simple_regnet_forward.5} parent=0 // loop_pre_header
    _
  $region3: #{simple_regnet_forward.5} parent=0 // loop_header
    %s9 = sphi 0, %s13
    %p10 = scmp.ge.s32.totalorder %s9, 4
    %s19 = sphi 0, %s21
    %s22 = sphi 0, %s19
    %s23 = sphi 0, %s22
    %s39 = sphi 0, %s23
    %s45 = sphi 0, %s47
    %s48 = sphi 0, %s45
    %s49 = sphi 0, %s48
    %s65 = sphi 0, %s49
    %s71 = sphi 0, %s73
    %s74 = sphi 0, %s71
    %s75 = sphi 0, %s74
    %s91 = sphi 0, %s75
    %s97 = sphi 0, %s99
    %s100 = sphi 0, %s97
    %s101 = sphi 0, %s100
    %s117 = sphi 0, %s101
  $region4: #{simple_regnet_forward.5} parent=0 // loop_header_branch
    %12 = sbr.rel (%p10) target = $region8
  $region5: #{simple_regnet_forward.5} parent=0 // loop_body
    %s14 = ssub.s32 %s9, 1
    %s15 = ssub.s32 %s9, 2
    %s16 = sadd.s32 %s9, 1
    %s17 = ssub.s32 %s9, %s16
    %p18 = scmp.eq.s32.totalorder %s17, 0
    %s20 = sadd.s32 %s19, 1
    %s21 = scalar_select %p18, %s19, %s20
    %p24 = pneg %p18
    %p25 = scmp.eq.s32.totalorder %s9, 1
    %p26 = por %p24, %p25
    %p27 = scmp.ne.s32.totalorder %s19, %s22
    %p28 = scmp.eq.s32.totalorder %s9, 0
    %p29 = por %p27, %p28
    %p30 = scmp.ne.s32.totalorder %s19, %s22
    %p31 = scmp.eq.s32.totalorder %s14, 1
    %p32 = por %p30, %p31
    %p33 = scmp.ne.s32.totalorder %s22, %s23
    %p34 = scmp.eq.s32.totalorder %s14, 0
    %p35 = por %p33, %p34
    %p36 = scmp.ne.s32.totalorder %s22, %s23
    %p37 = scmp.eq.s32.totalorder %s15, 1
    %p38 = por %p36, %p37
    %p40 = scmp.ne.s32.totalorder %s23, %s39
    %p41 = scmp.eq.s32.totalorder %s15, 0
    %p42 = por %p40, %p41
    %s43 = ssub.s32 %s9, %s16
    %p44 = scmp.eq.s32.totalorder %s43, 0
    %s46 = sadd.s32 %s45, 1
    %s47 = scalar_select %p44, %s45, %s46
    %p50 = pneg %p44
    %p51 = scmp.eq.s32.totalorder %s9, 1
    %p52 = por %p50, %p51
    %p53 = scmp.ne.s32.totalorder %s45, %s48
    %p54 = scmp.eq.s32.totalorder %s9, 0
    %p55 = por %p53, %p54
    %p56 = scmp.ne.s32.totalorder %s45, %s48
    %p57 = scmp.eq.s32.totalorder %s14, 1
    %p58 = por %p56, %p57
    %p59 = scmp.ne.s32.totalorder %s48, %s49
    %p60 = scmp.eq.s32.totalorder %s14, 0
    %p61 = por %p59, %p60
    %p62 = scmp.ne.s32.totalorder %s48, %s49
    %p63 = scmp.eq.s32.totalorder %s15, 1
    %p64 = por %p62, %p63
    %p66 = scmp.ne.s32.totalorder %s49, %s65
    %p67 = scmp.eq.s32.totalorder %s15, 0
    %p68 = por %p66, %p67
    %s69 = ssub.s32 %s9, %s16
    %p70 = scmp.eq.s32.totalorder %s69, 0
    %s72 = sadd.s32 %s71, 1
    %s73 = scalar_select %p70, %s71, %s72
    %p76 = pneg %p70
    %p77 = scmp.eq.s32.totalorder %s9, 1
    %p78 = por %p76, %p77
    %p79 = scmp.ne.s32.totalorder %s71, %s74
    %p80 = scmp.eq.s32.totalorder %s9, 0
    %p81 = por %p79, %p80
    %p82 = scmp.ne.s32.totalorder %s71, %s74
    %p83 = scmp.eq.s32.totalorder %s14, 1
    %p84 = por %p82, %p83
    %p85 = scmp.ne.s32.totalorder %s74, %s75
    %p86 = scmp.eq.s32.totalorder %s14, 0
    %p87 = por %p85, %p86
    %p88 = scmp.ne.s32.totalorder %s74, %s75
    %p89 = scmp.eq.s32.totalorder %s15, 1
    %p90 = por %p88, %p89
    %p92 = scmp.ne.s32.totalorder %s75, %s91
    %p93 = scmp.eq.s32.totalorder %s15, 0
    %p94 = por %p92, %p93
    %s95 = ssub.s32 %s9, %s16
    %p96 = scmp.eq.s32.totalorder %s95, 0
    %s98 = sadd.s32 %s97, 1
    %s99 = scalar_select %p96, %s97, %s98
    %p102 = pneg %p96
    %p103 = scmp.eq.s32.totalorder %s9, 1
    %p104 = por %p102, %p103
    %p105 = scmp.ne.s32.totalorder %s97, %s100
    %p106 = scmp.eq.s32.totalorder %s9, 0
    %p107 = por %p105, %p106
    %p108 = scmp.ne.s32.totalorder %s97, %s100
    %p109 = scmp.eq.s32.totalorder %s14, 1
    %p110 = por %p108, %p109
    %p111 = scmp.ne.s32.totalorder %s100, %s101
    %p112 = scmp.eq.s32.totalorder %s14, 0
    %p113 = por %p111, %p112
    %p114 = scmp.ne.s32.totalorder %s100, %s101
    %p115 = scmp.eq.s32.totalorder %s15, 1
    %p116 = por %p114, %p115
    %p118 = scmp.ne.s32.totalorder %s101, %s117
    %p119 = scmp.eq.s32.totalorder %s15, 0
    %p120 = por %p118, %p119
    %p121 = scmp.le.s32.totalorder 1, %s9
    %p122 = scmp.lt.s32.totalorder %s9, 3
    %p123 = pnand %p121, %p122
    %p124 = pneg %p123
    // Predicated region
    $region9: #{simple_regnet_forward.5} parent=5 // pred_check
      _
    $region10: #{simple_regnet_forward.5} parent=5 // pred_check_branch
      %126 = sbr.rel (%p123) target = $region12
    $region11: #{simple_regnet_forward.5} parent=5 // pred_region
      %s127 = ssub.s32 %s9, 1
    $region12: #{simple_regnet_forward.5} parent=5 // pred_fallthru
      _
    %p128 = scmp.lt.s32.totalorder %s9, 2
    // Predicated region
    $region13: #{simple_regnet_forward.5} parent=5 // pred_check
      %p129 = pneg %p128
    $region14: #{simple_regnet_forward.5} parent=5 // pred_check_branch
      %131 = sbr.rel (%p129) target = $region16
    $region15: #{simple_regnet_forward.5} parent=5 // pred_region
      // Predicated region
      $region17: #{simple_regnet_forward.5} parent=15 // pred_check
        %p132 = pneg %p29
      $region18: #{simple_regnet_forward.5} parent=15 // pred_check_branch
        %134 = sbr.rel (%p132) target = $region20
      $region19: #{simple_regnet_forward.5} parent=15 // pred_region
        %p135 = scmp.lt.s32.totalorder %s9, 1
        %s136 = scalar_select %p135, %s9, 1
        %s137 = smul.addr %s136, 32
        %s138 = smul.addr %s137, 8
        %s139 = scalar_lea.vmem %s0, %s138
      $region20: #{simple_regnet_forward.5} parent=15 // pred_fallthru
        _
      // Predicated region
      $region21: #{simple_regnet_forward.5} parent=15 // pred_check
        %p140 = pneg %p55
      $region22: #{simple_regnet_forward.5} parent=15 // pred_check_branch
        %142 = sbr.rel (%p140) target = $region24
      $region23: #{simple_regnet_forward.5} parent=15 // pred_region
        %p143 = scmp.lt.s32.totalorder %s9, 1
        %s144 = scalar_select %p143, %s9, 1
        %s145 = smul.addr %s144, 2
        %s146 = scalar_lea.vmem %s1, %s145
      $region24: #{simple_regnet_forward.5} parent=15 // pred_fallthru
        _
      // Predicated region
      $region25: #{simple_regnet_forward.5} parent=15 // pred_check
        %p147 = pneg %p81
      $region26: #{simple_regnet_forward.5} parent=15 // pred_check_branch
        %149 = sbr.rel (%p147) target = $region28
      $region27: #{simple_regnet_forward.5} parent=15 // pred_region
        %p150 = scmp.lt.s32.totalorder %s9, 1
        %s151 = scalar_select %p150, %s9, 1
        %s152 = smul.addr %s151, 2
        %s153 = scalar_lea.vmem %s2, %s152
      $region28: #{simple_regnet_forward.5} parent=15 // pred_fallthru
        _
    $region16: #{simple_regnet_forward.5} parent=5 // pred_fallthru
      _
    %p154 = scmp.le.s32.totalorder 1, %s9
    %p155 = scmp.lt.s32.totalorder %s9, 3
    %p156 = pnand %p154, %p155
    %p157 = pneg %p156
    // Predicated region
    $region29: #{simple_regnet_forward.5} parent=5 // pred_check
      _
    $region30: #{simple_regnet_forward.5} parent=5 // pred_check_branch
      %159 = sbr.rel (%p156) target = $region32
    $region31: #{simple_regnet_forward.5} parent=5 // pred_region
      %s160 = ssub.s32 %s9, 1
      %p161 = scmp.lt.s32.totalorder %s14, 1
      %s162 = scalar_select %p161, %s14, 1
      %s163 = smul.addr %s162, 32
      %s164 = smul.addr %s163, 8
      %s165 = scalar_lea.vmem %s0, %s164
      %p166 = pneg %p35
      %p167 = pneg %p32
      %p168 = scmp.lt.s32.totalorder %s14, 1
      %s169 = scalar_select %p168, %s14, 1
      %s170 = smul.addr %s169, 2
      %s171 = scalar_lea.vmem %s1, %s170
      %p172 = pneg %p61
      %p173 = pneg %p58
      %p174 = scmp.lt.s32.totalorder %s14, 1
      %s175 = scalar_select %p174, %s14, 1
      %s176 = smul.addr %s175, 2
      %s177 = scalar_lea.vmem %s2, %s176
      %p178 = pneg %p87
      %p179 = pneg %p84
      %p180 = pneg %p113
      %p181 = pneg %p110
      %p182 = scmp.lt.s32.totalorder %s14, 1
      %s183 = scalar_select %p182, %s14, 1
      %s184 = smul.addr %s183, 2
      %s185 = scalar_lea.vmem %s3, %s184
      %p186 = scmp.lt.s32.totalorder %s14, 1
      %s187 = scalar_select %p186, %s14, 1
      %s188 = smul.addr %s187, 32
      %s189 = smul.addr %s188, 8
      %s190 = scalar_lea.vmem %s0, %s189
      %p191 = scmp.lt.s32.totalorder %s14, 1
      %s192 = scalar_select %p191, %s14, 1
      %s193 = smul.addr %s192, 2
      %s194 = scalar_lea.vmem %s1, %s193
      %p195 = scmp.lt.s32.totalorder %s14, 1
      %s196 = scalar_select %p195, %s14, 1
      %s197 = smul.addr %s196, 2
      %s198 = scalar_lea.vmem %s2, %s197
      %p199 = scmp.lt.s32.totalorder %s14, 1
      %s200 = scalar_select %p199, %s14, 1
      %s201 = smul.addr %s200, 2
      %s202 = scalar_lea.vmem %s3, %s201
      %v203 = vld [vmem:[%s190] sm:$0xff]
      %v204 = vld [vmem:[%s190 + $0x8] sm:$0xff]
      %v205 = vld [vmem:[%s190 + $0x10] sm:$0xff]
      %v206 = vld [vmem:[%s190 + $0x18] sm:$0xff]
      %v207 = vld [vmem:[%s190 + $0x20] sm:$0xff]
      %v208 = vld [vmem:[%s190 + $0x28] sm:$0xff]
      %v209 = vld [vmem:[%s190 + $0x30] sm:$0xff]
      %v210 = vld [vmem:[%s190 + $0x38] sm:$0xff]
      %v211 = vld [vmem:[%s190 + $0x40] sm:$0xff]
      %v212 = vld [vmem:[%s190 + $0x48] sm:$0xff]
      %v213 = vld [vmem:[%s190 + $0x50] sm:$0xff]
      %v214 = vld [vmem:[%s190 + $0x58] sm:$0xff]
      %v215 = vld [vmem:[%s190 + $0x60] sm:$0xff]
      %v216 = vld [vmem:[%s190 + $0x68] sm:$0xff]
      %v217 = vld [vmem:[%s190 + $0x70] sm:$0xff]
      %v218 = vld [vmem:[%s190 + $0x78] sm:$0xff]
      %v219 = vld [vmem:[%s190 + $0x80] sm:$0xff]
      %v220 = vld [vmem:[%s190 + $0x88] sm:$0xff]
      %v221 = vld [vmem:[%s190 + $0x90] sm:$0xff]
      %v222 = vld [vmem:[%s190 + $0x98] sm:$0xff]
      %v223 = vld [vmem:[%s190 + $0xa0] sm:$0xff]
      %v224 = vld [vmem:[%s190 + $0xa8] sm:$0xff]
      %v225 = vld [vmem:[%s190 + $0xb0] sm:$0xff]
      %v226 = vld [vmem:[%s190 + $0xb8] sm:$0xff]
      %v227 = vld [vmem:[%s190 + $0xc0] sm:$0xff]
      %v228 = vld [vmem:[%s190 + $0xc8] sm:$0xff]
      %v229 = vld [vmem:[%s190 + $0xd0] sm:$0xff]
      %v230 = vld [vmem:[%s190 + $0xd8] sm:$0xff]
      %v231 = vld [vmem:[%s190 + $0xe0] sm:$0xff]
      %v232 = vld [vmem:[%s190 + $0xe8] sm:$0xff]
      %v233 = vld [vmem:[%s190 + $0xf0] sm:$0xff]
      %v234 = vld [vmem:[%s190 + $0xf8] sm:$0xff]
      %v235 = vld [vmem:[%s194] sm:$0x3]
      %v236 = vld [vmem:[%s198] sm:$0x3]
      %vm237 = vcmp.lt.f32.partialorder %v235, 0.0
      %vm238 = vcmp.gt.f32.partialorder %v235, 15.0
      %vm239 = vmor %vm237, %vm238
      %vm240 = vcmp.lt.f32.partialorder %v236, 0.0
      %vm241 = vmor %vm239, %vm240
      %vm242 = vcmp.gt.f32.partialorder %v236, 15.0
      %vm243 = vmor %vm241, %vm242
      %v244 = vmax.f32 %v235, 0.0
      %v245 = vmin.f32 %v244, 15.0
      %v246 = vmax.f32 %v236, 0.0
      %v247 = vmin.f32 %v246, 15.0
      %v248 = vfloor.f32 %v245
      %v249 = vfloor.f32 %v247
      %v250 = vcvt.f32.s32.to.zero.pseudo %v248
      %v251 = vcvt.f32.s32.to.zero.pseudo %v249
      %v252 = vadd.s32 %v250, 1
      %vm253 = vcmp.lt.s32.totalorder %v252, 15
      %v254 = vsel %vm253, %v252, 15
      %v255 = vadd.s32 %v251, 1
      %vm256 = vcmp.lt.s32.totalorder %v255, 15
      %v257 = vsel %vm256, %v255, 15
      %v258 = vsub.f32 %v245, %v248
      %v259 = vsub.f32 %v247, %v249
      %v260 = vsub.f32 1.0, %v258
      %v261 = vsub.f32 1.0, %v259
      %v262 = vmul.u32 %v250, 16
      %v263 = vadd.s32 %v262, %v251
      %v264 = vadd.s32 %v262, %v257
      %v265 = vmul.u32 %v254, 16
      %v266 = vadd.s32 %v265, %v251
      %v267 = vadd.s32 %v265, %v257
      %v268 = vlaneseq
      %v269 = vshrl.u32 %v268, 7
      %v270 = vadd.s32 %v269, 8
      %v271 = vadd.s32 %v269, 16
      %v272 = vadd.s32 %v269, 24
      %v273 = vadd.s32 %v269, 32
      %v274 = vadd.s32 %v269, 40
      %v275 = vadd.s32 %v269, 48
      %v276 = vadd.s32 %v269, 56
      %v277 = vadd.s32 %v269, 64
      %v278 = vadd.s32 %v269, 72
      %v279 = vadd.s32 %v269, 80
      %v280 = vadd.s32 %v269, 88
      %v281 = vadd.s32 %v269, 96
      %v282 = vadd.s32 %v269, 104
      %v283 = vadd.s32 %v269, 112
      %v284 = vadd.s32 %v269, 120
      %v285 = vadd.s32 %v269, 128
      %v286 = vadd.s32 %v269, 136
      %v287 = vadd.s32 %v269, 144
      %v288 = vadd.s32 %v269, 152
      %v289 = vadd.s32 %v269, 160
      %v290 = vadd.s32 %v269, 168
      %v291 = vadd.s32 %v269, 176
      %v292 = vadd.s32 %v269, 184
      %v293 = vadd.s32 %v269, 192
      %v294 = vadd.s32 %v269, 200
      %v295 = vadd.s32 %v269, 208
      %v296 = vadd.s32 %v269, 216
      %v297 = vadd.s32 %v269, 224
      %v298 = vadd.s32 %v269, 232
      %v299 = vadd.s32 %v269, 240
      %v300 = vadd.s32 %v269, 248
      %v301 = vlaneseq
      %v302 = vshrl.u32 %v301, 7
      %v303 = vsub.s32 0, %v302
      %v304 = vrot.slane %v263, %v303
      %v305 = vlaneseq
      %v306 = vshrl.u32 %v305, 7
      %v307 = vsub.s32 1, %v306
      %v308 = vrot.slane %v263, %v307
      %vm309 = vcmp.eq.s32.totalorder %v269, %v304
      %vm310 = vcmp.eq.s32.totalorder %v269, %v308
      %vm311 = vcmp.eq.s32.totalorder %v270, %v304
      %vm312 = vcmp.eq.s32.totalorder %v270, %v308
      %vm313 = vcmp.eq.s32.totalorder %v271, %v304
      %vm314 = vcmp.eq.s32.totalorder %v271, %v308
      %vm315 = vcmp.eq.s32.totalorder %v272, %v304
      %vm316 = vcmp.eq.s32.totalorder %v272, %v308
      %vm317 = vcmp.eq.s32.totalorder %v273, %v304
      %vm318 = vcmp.eq.s32.totalorder %v273, %v308
      %vm319 = vcmp.eq.s32.totalorder %v274, %v304
      %vm320 = vcmp.eq.s32.totalorder %v274, %v308
      %vm321 = vcmp.eq.s32.totalorder %v275, %v304
      %vm322 = vcmp.eq.s32.totalorder %v275, %v308
      %vm323 = vcmp.eq.s32.totalorder %v276, %v304
      %vm324 = vcmp.eq.s32.totalorder %v276, %v308
      %vm325 = vcmp.eq.s32.totalorder %v277, %v304
      %vm326 = vcmp.eq.s32.totalorder %v277, %v308
      %vm327 = vcmp.eq.s32.totalorder %v278, %v304
      %vm328 = vcmp.eq.s32.totalorder %v278, %v308
      %vm329 = vcmp.eq.s32.totalorder %v279, %v304
      %vm330 = vcmp.eq.s32.totalorder %v279, %v308
      %vm331 = vcmp.eq.s32.totalorder %v280, %v304
      %vm332 = vcmp.eq.s32.totalorder %v280, %v308
      %vm333 = vcmp.eq.s32.totalorder %v281, %v304
      %vm334 = vcmp.eq.s32.totalorder %v281, %v308
      %vm335 = vcmp.eq.s32.totalorder %v282, %v304
      %vm336 = vcmp.eq.s32.totalorder %v282, %v308
      %vm337 = vcmp.eq.s32.totalorder %v283, %v304
      %vm338 = vcmp.eq.s32.totalorder %v283, %v308
      %vm339 = vcmp.eq.s32.totalorder %v284, %v304
      %vm340 = vcmp.eq.s32.totalorder %v284, %v308
      %vm341 = vcmp.eq.s32.totalorder %v285, %v304
      %vm342 = vcmp.eq.s32.totalorder %v285, %v308
      %vm343 = vcmp.eq.s32.totalorder %v286, %v304
      %vm344 = vcmp.eq.s32.totalorder %v286, %v308
      %vm345 = vcmp.eq.s32.totalorder %v287, %v304
      %vm346 = vcmp.eq.s32.totalorder %v287, %v308
      %vm347 = vcmp.eq.s32.totalorder %v288, %v304
      %vm348 = vcmp.eq.s32.totalorder %v288, %v308
      %vm349 = vcmp.eq.s32.totalorder %v289, %v304
      %vm350 = vcmp.eq.s32.totalorder %v289, %v308
      %vm351 = vcmp.eq.s32.totalorder %v290, %v304
      %vm352 = vcmp.eq.s32.totalorder %v290, %v308
      %vm353 = vcmp.eq.s32.totalorder %v291, %v304
      %vm354 = vcmp.eq.s32.totalorder %v291, %v308
      %vm355 = vcmp.eq.s32.totalorder %v292, %v304
      %vm356 = vcmp.eq.s32.totalorder %v292, %v308
      %vm357 = vcmp.eq.s32.totalorder %v293, %v304
      %vm358 = vcmp.eq.s32.totalorder %v293, %v308
      %vm359 = vcmp.eq.s32.totalorder %v294, %v304
      %vm360 = vcmp.eq.s32.totalorder %v294, %v308
      %vm361 = vcmp.eq.s32.totalorder %v295, %v304
      %vm362 = vcmp.eq.s32.totalorder %v295, %v308
      %vm363 = vcmp.eq.s32.totalorder %v296, %v304
      %vm364 = vcmp.eq.s32.totalorder %v296, %v308
      %vm365 = vcmp.eq.s32.totalorder %v297, %v304
      %vm366 = vcmp.eq.s32.totalorder %v297, %v308
      %vm367 = vcmp.eq.s32.totalorder %v298, %v304
      %vm368 = vcmp.eq.s32.totalorder %v298, %v308
      %vm369 = vcmp.eq.s32.totalorder %v299, %v304
      %vm370 = vcmp.eq.s32.totalorder %v299, %v308
      %vm371 = vcmp.eq.s32.totalorder %v300, %v304
      %vm372 = vcmp.eq.s32.totalorder %v300, %v308
      %v373 = vmul.f32 %v260, %v261
      %v375 = vlaneseq
      %v376 = vshrl.u32 %v375, 7
      %v377 = vsub.s32 0, %v376
      %v378 = vrot.slane %v373, %v377
      %v379 = vlaneseq
      %v380 = vshrl.u32 %v379, 7
      %v381 = vsub.s32 1, %v380
      %v382 = vrot.slane %v373, %v381
      %v385 = vsel %vm309, %v378, 0.0
      %v386 = vsel %vm310, %v382, 0.0
      %v387 = vsel %vm311, %v378, 0.0
      %v388 = vsel %vm312, %v382, 0.0
      %v389 = vsel %vm313, %v378, 0.0
      %v390 = vsel %vm314, %v382, 0.0
      %v391 = vsel %vm315, %v378, 0.0
      %v392 = vsel %vm316, %v382, 0.0
      %v393 = vsel %vm317, %v378, 0.0
      %v394 = vsel %vm318, %v382, 0.0
      %v395 = vsel %vm319, %v378, 0.0
      %v396 = vsel %vm320, %v382, 0.0
      %v397 = vsel %vm321, %v378, 0.0
      %v398 = vsel %vm322, %v382, 0.0
      %v399 = vsel %vm323, %v378, 0.0
      %v400 = vsel %vm324, %v382, 0.0
      %v401 = vsel %vm325, %v378, 0.0
      %v402 = vsel %vm326, %v382, 0.0
      %v403 = vsel %vm327, %v378, 0.0
      %v404 = vsel %vm328, %v382, 0.0
      %v405 = vsel %vm329, %v378, 0.0
      %v406 = vsel %vm330, %v382, 0.0
      %v407 = vsel %vm331, %v378, 0.0
      %v408 = vsel %vm332, %v382, 0.0
      %v409 = vsel %vm333, %v378, 0.0
      %v410 = vsel %vm334, %v382, 0.0
      %v411 = vsel %vm335, %v378, 0.0
      %v412 = vsel %vm336, %v382, 0.0
      %v413 = vsel %vm337, %v378, 0.0
      %v414 = vsel %vm338, %v382, 0.0
      %v415 = vsel %vm339, %v378, 0.0
      %v416 = vsel %vm340, %v382, 0.0
      %v417 = vsel %vm341, %v378, 0.0
      %v418 = vsel %vm342, %v382, 0.0
      %v419 = vsel %vm343, %v378, 0.0
      %v420 = vsel %vm344, %v382, 0.0
      %v421 = vsel %vm345, %v378, 0.0
      %v422 = vsel %vm346, %v382, 0.0
      %v423 = vsel %vm347, %v378, 0.0
      %v424 = vsel %vm348, %v382, 0.0
      %v425 = vsel %vm349, %v378, 0.0
      %v426 = vsel %vm350, %v382, 0.0
      %v427 = vsel %vm351, %v378, 0.0
      %v428 = vsel %vm352, %v382, 0.0
      %v429 = vsel %vm353, %v378, 0.0
      %v430 = vsel %vm354, %v382, 0.0
      %v431 = vsel %vm355, %v378, 0.0
      %v432 = vsel %vm356, %v382, 0.0
      %v433 = vsel %vm357, %v378, 0.0
      %v434 = vsel %vm358, %v382, 0.0
      %v435 = vsel %vm359, %v378, 0.0
      %v436 = vsel %vm360, %v382, 0.0
      %v437 = vsel %vm361, %v378, 0.0
      %v438 = vsel %vm362, %v382, 0.0
      %v439 = vsel %vm363, %v378, 0.0
      %v440 = vsel %vm364, %v382, 0.0
      %v441 = vsel %vm365, %v378, 0.0
      %v442 = vsel %vm366, %v382, 0.0
      %v443 = vsel %vm367, %v378, 0.0
      %v444 = vsel %vm368, %v382, 0.0
      %v445 = vsel %vm369, %v378, 0.0
      %v446 = vsel %vm370, %v382, 0.0
      %v447 = vsel %vm371, %v378, 0.0
      %v448 = vsel %vm372, %v382, 0.0
      %v449 = vlaneseq
      %v450 = vshrl.u32 %v449, 7
      %v451 = vsub.s32 0, %v450
      %v452 = vrot.slane %v264, %v451
      %v453 = vlaneseq
      %v454 = vshrl.u32 %v453, 7
      %v455 = vsub.s32 1, %v454
      %v456 = vrot.slane %v264, %v455
      %vm457 = vcmp.eq.s32.totalorder %v269, %v452
      %vm458 = vcmp.eq.s32.totalorder %v269, %v456
      %vm459 = vcmp.eq.s32.totalorder %v270, %v452
      %vm460 = vcmp.eq.s32.totalorder %v270, %v456
      %vm461 = vcmp.eq.s32.totalorder %v271, %v452
      %vm462 = vcmp.eq.s32.totalorder %v271, %v456
      %vm463 = vcmp.eq.s32.totalorder %v272, %v452
      %vm464 = vcmp.eq.s32.totalorder %v272, %v456
      %vm465 = vcmp.eq.s32.totalorder %v273, %v452
      %vm466 = vcmp.eq.s32.totalorder %v273, %v456
      %vm467 = vcmp.eq.s32.totalorder %v274, %v452
      %vm468 = vcmp.eq.s32.totalorder %v274, %v456
      %vm469 = vcmp.eq.s32.totalorder %v275, %v452
      %vm470 = vcmp.eq.s32.totalorder %v275, %v456
      %vm471 = vcmp.eq.s32.totalorder %v276, %v452
      %vm472 = vcmp.eq.s32.totalorder %v276, %v456
      %vm473 = vcmp.eq.s32.totalorder %v277, %v452
      %vm474 = vcmp.eq.s32.totalorder %v277, %v456
      %vm475 = vcmp.eq.s32.totalorder %v278, %v452
      %vm476 = vcmp.eq.s32.totalorder %v278, %v456
      %vm477 = vcmp.eq.s32.totalorder %v279, %v452
      %vm478 = vcmp.eq.s32.totalorder %v279, %v456
      %vm479 = vcmp.eq.s32.totalorder %v280, %v452
      %vm480 = vcmp.eq.s32.totalorder %v280, %v456
      %vm481 = vcmp.eq.s32.totalorder %v281, %v452
      %vm482 = vcmp.eq.s32.totalorder %v281, %v456
      %vm483 = vcmp.eq.s32.totalorder %v282, %v452
      %vm484 = vcmp.eq.s32.totalorder %v282, %v456
      %vm485 = vcmp.eq.s32.totalorder %v283, %v452
      %vm486 = vcmp.eq.s32.totalorder %v283, %v456
      %vm487 = vcmp.eq.s32.totalorder %v284, %v452
      %vm488 = vcmp.eq.s32.totalorder %v284, %v456
      %vm489 = vcmp.eq.s32.totalorder %v285, %v452
      %vm490 = vcmp.eq.s32.totalorder %v285, %v456
      %vm491 = vcmp.eq.s32.totalorder %v286, %v452
      %vm492 = vcmp.eq.s32.totalorder %v286, %v456
      %vm493 = vcmp.eq.s32.totalorder %v287, %v452
      %vm494 = vcmp.eq.s32.totalorder %v287, %v456
      %vm495 = vcmp.eq.s32.totalorder %v288, %v452
      %vm496 = vcmp.eq.s32.totalorder %v288, %v456
      %vm497 = vcmp.eq.s32.totalorder %v289, %v452
      %vm498 = vcmp.eq.s32.totalorder %v289, %v456
      %vm499 = vcmp.eq.s32.totalorder %v290, %v452
      %vm500 = vcmp.eq.s32.totalorder %v290, %v456
      %vm501 = vcmp.eq.s32.totalorder %v291, %v452
      %vm502 = vcmp.eq.s32.totalorder %v291, %v456
      %vm503 = vcmp.eq.s32.totalorder %v292, %v452
      %vm504 = vcmp.eq.s32.totalorder %v292, %v456
      %vm505 = vcmp.eq.s32.totalorder %v293, %v452
      %vm506 = vcmp.eq.s32.totalorder %v293, %v456
      %vm507 = vcmp.eq.s32.totalorder %v294, %v452
      %vm508 = vcmp.eq.s32.totalorder %v294, %v456
      %vm509 = vcmp.eq.s32.totalorder %v295, %v452
      %vm510 = vcmp.eq.s32.totalorder %v295, %v456
      %vm511 = vcmp.eq.s32.totalorder %v296, %v452
      %vm512 = vcmp.eq.s32.totalorder %v296, %v456
      %vm513 = vcmp.eq.s32.totalorder %v297, %v452
      %vm514 = vcmp.eq.s32.totalorder %v297, %v456
      %vm515 = vcmp.eq.s32.totalorder %v298, %v452
      %vm516 = vcmp.eq.s32.totalorder %v298, %v456
      %vm517 = vcmp.eq.s32.totalorder %v299, %v452
      %vm518 = vcmp.eq.s32.totalorder %v299, %v456
      %vm519 = vcmp.eq.s32.totalorder %v300, %v452
      %vm520 = vcmp.eq.s32.totalorder %v300, %v456
      %v521 = vmul.f32 %v260, %v259
      %v523 = vlaneseq
      %v524 = vshrl.u32 %v523, 7
      %v525 = vsub.s32 0, %v524
      %v526 = vrot.slane %v521, %v525
      %v527 = vlaneseq
      %v528 = vshrl.u32 %v527, 7
      %v529 = vsub.s32 1, %v528
      %v530 = vrot.slane %v521, %v529
      %v533 = vsel %vm457, %v526, 0.0
      %v534 = vsel %vm458, %v530, 0.0
      %v535 = vsel %vm459, %v526, 0.0
      %v536 = vsel %vm460, %v530, 0.0
      %v537 = vsel %vm461, %v526, 0.0
      %v538 = vsel %vm462, %v530, 0.0
      %v539 = vsel %vm463, %v526, 0.0
      %v540 = vsel %vm464, %v530, 0.0
      %v541 = vsel %vm465, %v526, 0.0
      %v542 = vsel %vm466, %v530, 0.0
      %v543 = vsel %vm467, %v526, 0.0
      %v544 = vsel %vm468, %v530, 0.0
      %v545 = vsel %vm469, %v526, 0.0
      %v546 = vsel %vm470, %v530, 0.0
      %v547 = vsel %vm471, %v526, 0.0
      %v548 = vsel %vm472, %v530, 0.0
      %v549 = vsel %vm473, %v526, 0.0
      %v550 = vsel %vm474, %v530, 0.0
      %v551 = vsel %vm475, %v526, 0.0
      %v552 = vsel %vm476, %v530, 0.0
      %v553 = vsel %vm477, %v526, 0.0
      %v554 = vsel %vm478, %v530, 0.0
      %v555 = vsel %vm479, %v526, 0.0
      %v556 = vsel %vm480, %v530, 0.0
      %v557 = vsel %vm481, %v526, 0.0
      %v558 = vsel %vm482, %v530, 0.0
      %v559 = vsel %vm483, %v526, 0.0
      %v560 = vsel %vm484, %v530, 0.0
      %v561 = vsel %vm485, %v526, 0.0
      %v562 = vsel %vm486, %v530, 0.0
      %v563 = vsel %vm487, %v526, 0.0
      %v564 = vsel %vm488, %v530, 0.0
      %v565 = vsel %vm489, %v526, 0.0
      %v566 = vsel %vm490, %v530, 0.0
      %v567 = vsel %vm491, %v526, 0.0
      %v568 = vsel %vm492, %v530, 0.0
      %v569 = vsel %vm493, %v526, 0.0
      %v570 = vsel %vm494, %v530, 0.0
      %v571 = vsel %vm495, %v526, 0.0
      %v572 = vsel %vm496, %v530, 0.0
      %v573 = vsel %vm497, %v526, 0.0
      %v574 = vsel %vm498, %v530, 0.0
      %v575 = vsel %vm499, %v526, 0.0
      %v576 = vsel %vm500, %v530, 0.0
      %v577 = vsel %vm501, %v526, 0.0
      %v578 = vsel %vm502, %v530, 0.0
      %v579 = vsel %vm503, %v526, 0.0
      %v580 = vsel %vm504, %v530, 0.0
      %v581 = vsel %vm505, %v526, 0.0
      %v582 = vsel %vm506, %v530, 0.0
      %v583 = vsel %vm507, %v526, 0.0
      %v584 = vsel %vm508, %v530, 0.0
      %v585 = vsel %vm509, %v526, 0.0
      %v586 = vsel %vm510, %v530, 0.0
      %v587 = vsel %vm511, %v526, 0.0
      %v588 = vsel %vm512, %v530, 0.0
      %v589 = vsel %vm513, %v526, 0.0
      %v590 = vsel %vm514, %v530, 0.0
      %v591 = vsel %vm515, %v526, 0.0
      %v592 = vsel %vm516, %v530, 0.0
      %v593 = vsel %vm517, %v526, 0.0
      %v594 = vsel %vm518, %v530, 0.0
      %v595 = vsel %vm519, %v526, 0.0
      %v596 = vsel %vm520, %v530, 0.0
      %v597 = vadd.f32 %v385, %v533
      %v598 = vadd.f32 %v386, %v534
      %v599 = vadd.f32 %v387, %v535
      %v600 = vadd.f32 %v388, %v536
      %v601 = vadd.f32 %v389, %v537
      %v602 = vadd.f32 %v390, %v538
      %v603 = vadd.f32 %v391, %v539
      %v604 = vadd.f32 %v392, %v540
      %v605 = vadd.f32 %v393, %v541
      %v606 = vadd.f32 %v394, %v542
      %v607 = vadd.f32 %v395, %v543
      %v608 = vadd.f32 %v396, %v544
      %v609 = vadd.f32 %v397, %v545
      %v610 = vadd.f32 %v398, %v546
      %v611 = vadd.f32 %v399, %v547
      %v612 = vadd.f32 %v400, %v548
      %v613 = vadd.f32 %v401, %v549
      %v614 = vadd.f32 %v402, %v550
      %v615 = vadd.f32 %v403, %v551
      %v616 = vadd.f32 %v404, %v552
      %v617 = vadd.f32 %v405, %v553
      %v618 = vadd.f32 %v406, %v554
      %v619 = vadd.f32 %v407, %v555
      %v620 = vadd.f32 %v408, %v556
      %v621 = vadd.f32 %v409, %v557
      %v622 = vadd.f32 %v410, %v558
      %v623 = vadd.f32 %v411, %v559
      %v624 = vadd.f32 %v412, %v560
      %v625 = vadd.f32 %v413, %v561
      %v626 = vadd.f32 %v414, %v562
      %v627 = vadd.f32 %v415, %v563
      %v628 = vadd.f32 %v416, %v564
      %v629 = vadd.f32 %v417, %v565
      %v630 = vadd.f32 %v418, %v566
      %v631 = vadd.f32 %v419, %v567
      %v632 = vadd.f32 %v420, %v568
      %v633 = vadd.f32 %v421, %v569
      %v634 = vadd.f32 %v422, %v570
      %v635 = vadd.f32 %v423, %v571
      %v636 = vadd.f32 %v424, %v572
      %v637 = vadd.f32 %v425, %v573
      %v638 = vadd.f32 %v426, %v574
      %v639 = vadd.f32 %v427, %v575
      %v640 = vadd.f32 %v428, %v576
      %v641 = vadd.f32 %v429, %v577
      %v642 = vadd.f32 %v430, %v578
      %v643 = vadd.f32 %v431, %v579
      %v644 = vadd.f32 %v432, %v580
      %v645 = vadd.f32 %v433, %v581
      %v646 = vadd.f32 %v434, %v582
      %v647 = vadd.f32 %v435, %v583
      %v648 = vadd.f32 %v436, %v584
      %v649 = vadd.f32 %v437, %v585
      %v650 = vadd.f32 %v438, %v586
      %v651 = vadd.f32 %v439, %v587
      %v652 = vadd.f32 %v440, %v588
      %v653 = vadd.f32 %v441, %v589
      %v654 = vadd.f32 %v442, %v590
      %v655 = vadd.f32 %v443, %v591
      %v656 = vadd.f32 %v444, %v592
      %v657 = vadd.f32 %v445, %v593
      %v658 = vadd.f32 %v446, %v594
      %v659 = vadd.f32 %v447, %v595
      %v660 = vadd.f32 %v448, %v596
      %v661 = vlaneseq
      %v662 = vshrl.u32 %v661, 7
      %v663 = vsub.s32 0, %v662
      %v664 = vrot.slane %v266, %v663
      %v665 = vlaneseq
      %v666 = vshrl.u32 %v665, 7
      %v667 = vsub.s32 1, %v666
      %v668 = vrot.slane %v266, %v667
      %vm669 = vcmp.eq.s32.totalorder %v269, %v664
      %vm670 = vcmp.eq.s32.totalorder %v269, %v668
      %vm671 = vcmp.eq.s32.totalorder %v270, %v664
      %vm672 = vcmp.eq.s32.totalorder %v270, %v668
      %vm673 = vcmp.eq.s32.totalorder %v271, %v664
      %vm674 = vcmp.eq.s32.totalorder %v271, %v668
      %vm675 = vcmp.eq.s32.totalorder %v272, %v664
      %vm676 = vcmp.eq.s32.totalorder %v272, %v668
      %vm677 = vcmp.eq.s32.totalorder %v273, %v664
      %vm678 = vcmp.eq.s32.totalorder %v273, %v668
      %vm679 = vcmp.eq.s32.totalorder %v274, %v664
      %vm680 = vcmp.eq.s32.totalorder %v274, %v668
      %vm681 = vcmp.eq.s32.totalorder %v275, %v664
      %vm682 = vcmp.eq.s32.totalorder %v275, %v668
      %vm683 = vcmp.eq.s32.totalorder %v276, %v664
      %vm684 = vcmp.eq.s32.totalorder %v276, %v668
      %vm685 = vcmp.eq.s32.totalorder %v277, %v664
      %vm686 = vcmp.eq.s32.totalorder %v277, %v668
      %vm687 = vcmp.eq.s32.totalorder %v278, %v664
      %vm688 = vcmp.eq.s32.totalorder %v278, %v668
      %vm689 = vcmp.eq.s32.totalorder %v279, %v664
      %vm690 = vcmp.eq.s32.totalorder %v279, %v668
      %vm691 = vcmp.eq.s32.totalorder %v280, %v664
      %vm692 = vcmp.eq.s32.totalorder %v280, %v668
      %vm693 = vcmp.eq.s32.totalorder %v281, %v664
      %vm694 = vcmp.eq.s32.totalorder %v281, %v668
      %vm695 = vcmp.eq.s32.totalorder %v282, %v664
      %vm696 = vcmp.eq.s32.totalorder %v282, %v668
      %vm697 = vcmp.eq.s32.totalorder %v283, %v664
      %vm698 = vcmp.eq.s32.totalorder %v283, %v668
      %vm699 = vcmp.eq.s32.totalorder %v284, %v664
      %vm700 = vcmp.eq.s32.totalorder %v284, %v668
      %vm701 = vcmp.eq.s32.totalorder %v285, %v664
      %vm702 = vcmp.eq.s32.totalorder %v285, %v668
      %vm703 = vcmp.eq.s32.totalorder %v286, %v664
      %vm704 = vcmp.eq.s32.totalorder %v286, %v668
      %vm705 = vcmp.eq.s32.totalorder %v287, %v664
      %vm706 = vcmp.eq.s32.totalorder %v287, %v668
      %vm707 = vcmp.eq.s32.totalorder %v288, %v664
      %vm708 = vcmp.eq.s32.totalorder %v288, %v668
      %vm709 = vcmp.eq.s32.totalorder %v289, %v664
      %vm710 = vcmp.eq.s32.totalorder %v289, %v668
      %vm711 = vcmp.eq.s32.totalorder %v290, %v664
      %vm712 = vcmp.eq.s32.totalorder %v290, %v668
      %vm713 = vcmp.eq.s32.totalorder %v291, %v664
      %vm714 = vcmp.eq.s32.totalorder %v291, %v668
      %vm715 = vcmp.eq.s32.totalorder %v292, %v664
      %vm716 = vcmp.eq.s32.totalorder %v292, %v668
      %vm717 = vcmp.eq.s32.totalorder %v293, %v664
      %vm718 = vcmp.eq.s32.totalorder %v293, %v668
      %vm719 = vcmp.eq.s32.totalorder %v294, %v664
      %vm720 = vcmp.eq.s32.totalorder %v294, %v668
      %vm721 = vcmp.eq.s32.totalorder %v295, %v664
      %vm722 = vcmp.eq.s32.totalorder %v295, %v668
      %vm723 = vcmp.eq.s32.totalorder %v296, %v664
      %vm724 = vcmp.eq.s32.totalorder %v296, %v668
      %vm725 = vcmp.eq.s32.totalorder %v297, %v664
      %vm726 = vcmp.eq.s32.totalorder %v297, %v668
      %vm727 = vcmp.eq.s32.totalorder %v298, %v664
      %vm728 = vcmp.eq.s32.totalorder %v298, %v668
      %vm729 = vcmp.eq.s32.totalorder %v299, %v664
      %vm730 = vcmp.eq.s32.totalorder %v299, %v668
      %vm731 = vcmp.eq.s32.totalorder %v300, %v664
      %vm732 = vcmp.eq.s32.totalorder %v300, %v668
      %v733 = vmul.f32 %v258, %v261
      %v735 = vlaneseq
      %v736 = vshrl.u32 %v735, 7
      %v737 = vsub.s32 0, %v736
      %v738 = vrot.slane %v733, %v737
      %v739 = vlaneseq
      %v740 = vshrl.u32 %v739, 7
      %v741 = vsub.s32 1, %v740
      %v742 = vrot.slane %v733, %v741
      %v745 = vsel %vm669, %v738, 0.0
      %v746 = vsel %vm670, %v742, 0.0
      %v747 = vsel %vm671, %v738, 0.0
      %v748 = vsel %vm672, %v742, 0.0
      %v749 = vsel %vm673, %v738, 0.0
      %v750 = vsel %vm674, %v742, 0.0
      %v751 = vsel %vm675, %v738, 0.0
      %v752 = vsel %vm676, %v742, 0.0
      %v753 = vsel %vm677, %v738, 0.0
      %v754 = vsel %vm678, %v742, 0.0
      %v755 = vsel %vm679, %v738, 0.0
      %v756 = vsel %vm680, %v742, 0.0
      %v757 = vsel %vm681, %v738, 0.0
      %v758 = vsel %vm682, %v742, 0.0
      %v759 = vsel %vm683, %v738, 0.0
      %v760 = vsel %vm684, %v742, 0.0
      %v761 = vsel %vm685, %v738, 0.0
      %v762 = vsel %vm686, %v742, 0.0
      %v763 = vsel %vm687, %v738, 0.0
      %v764 = vsel %vm688, %v742, 0.0
      %v765 = vsel %vm689, %v738, 0.0
      %v766 = vsel %vm690, %v742, 0.0
      %v767 = vsel %vm691, %v738, 0.0
      %v768 = vsel %vm692, %v742, 0.0
      %v769 = vsel %vm693, %v738, 0.0
      %v770 = vsel %vm694, %v742, 0.0
      %v771 = vsel %vm695, %v738, 0.0
      %v772 = vsel %vm696, %v742, 0.0
      %v773 = vsel %vm697, %v738, 0.0
      %v774 = vsel %vm698, %v742, 0.0
      %v775 = vsel %vm699, %v738, 0.0
      %v776 = vsel %vm700, %v742, 0.0
      %v777 = vsel %vm701, %v738, 0.0
      %v778 = vsel %vm702, %v742, 0.0
      %v779 = vsel %vm703, %v738, 0.0
      %v780 = vsel %vm704, %v742, 0.0
      %v781 = vsel %vm705, %v738, 0.0
      %v782 = vsel %vm706, %v742, 0.0
      %v783 = vsel %vm707, %v738, 0.0
      %v784 = vsel %vm708, %v742, 0.0
      %v785 = vsel %vm709, %v738, 0.0
      %v786 = vsel %vm710, %v742, 0.0
      %v787 = vsel %vm711, %v738, 0.0
      %v788 = vsel %vm712, %v742, 0.0
      %v789 = vsel %vm713, %v738, 0.0
      %v790 = vsel %vm714, %v742, 0.0
      %v791 = vsel %vm715, %v738, 0.0
      %v792 = vsel %vm716, %v742, 0.0
      %v793 = vsel %vm717, %v738, 0.0
      %v794 = vsel %vm718, %v742, 0.0
      %v795 = vsel %vm719, %v738, 0.0
      %v796 = vsel %vm720, %v742, 0.0
      %v797 = vsel %vm721, %v738, 0.0
      %v798 = vsel %vm722, %v742, 0.0
      %v799 = vsel %vm723, %v738, 0.0
      %v800 = vsel %vm724, %v742, 0.0
      %v801 = vsel %vm725, %v738, 0.0
      %v802 = vsel %vm726, %v742, 0.0
      %v803 = vsel %vm727, %v738, 0.0
      %v804 = vsel %vm728, %v742, 0.0
      %v805 = vsel %vm729, %v738, 0.0
      %v806 = vsel %vm730, %v742, 0.0
      %v807 = vsel %vm731, %v738, 0.0
      %v808 = vsel %vm732, %v742, 0.0
      %v809 = vadd.f32 %v597, %v745
      %v810 = vadd.f32 %v598, %v746
      %v811 = vadd.f32 %v599, %v747
      %v812 = vadd.f32 %v600, %v748
      %v813 = vadd.f32 %v601, %v749
      %v814 = vadd.f32 %v602, %v750
      %v815 = vadd.f32 %v603, %v751
      %v816 = vadd.f32 %v604, %v752
      %v817 = vadd.f32 %v605, %v753
      %v818 = vadd.f32 %v606, %v754
      %v819 = vadd.f32 %v607, %v755
      %v820 = vadd.f32 %v608, %v756
      %v821 = vadd.f32 %v609, %v757
      %v822 = vadd.f32 %v610, %v758
      %v823 = vadd.f32 %v611, %v759
      %v824 = vadd.f32 %v612, %v760
      %v825 = vadd.f32 %v613, %v761
      %v826 = vadd.f32 %v614, %v762
      %v827 = vadd.f32 %v615, %v763
      %v828 = vadd.f32 %v616, %v764
      %v829 = vadd.f32 %v617, %v765
      %v830 = vadd.f32 %v618, %v766
      %v831 = vadd.f32 %v619, %v767
      %v832 = vadd.f32 %v620, %v768
      %v833 = vadd.f32 %v621, %v769
      %v834 = vadd.f32 %v622, %v770
      %v835 = vadd.f32 %v623, %v771
      %v836 = vadd.f32 %v624, %v772
      %v837 = vadd.f32 %v625, %v773
      %v838 = vadd.f32 %v626, %v774
      %v839 = vadd.f32 %v627, %v775
      %v840 = vadd.f32 %v628, %v776
      %v841 = vadd.f32 %v629, %v777
      %v842 = vadd.f32 %v630, %v778
      %v843 = vadd.f32 %v631, %v779
      %v844 = vadd.f32 %v632, %v780
      %v845 = vadd.f32 %v633, %v781
      %v846 = vadd.f32 %v634, %v782
      %v847 = vadd.f32 %v635, %v783
      %v848 = vadd.f32 %v636, %v784
      %v849 = vadd.f32 %v637, %v785
      %v850 = vadd.f32 %v638, %v786
      %v851 = vadd.f32 %v639, %v787
      %v852 = vadd.f32 %v640, %v788
      %v853 = vadd.f32 %v641, %v789
      %v854 = vadd.f32 %v642, %v790
      %v855 = vadd.f32 %v643, %v791
      %v856 = vadd.f32 %v644, %v792
      %v857 = vadd.f32 %v645, %v793
      %v858 = vadd.f32 %v646, %v794
      %v859 = vadd.f32 %v647, %v795
      %v860 = vadd.f32 %v648, %v796
      %v861 = vadd.f32 %v649, %v797
      %v862 = vadd.f32 %v650, %v798
      %v863 = vadd.f32 %v651, %v799
      %v864 = vadd.f32 %v652, %v800
      %v865 = vadd.f32 %v653, %v801
      %v866 = vadd.f32 %v654, %v802
      %v867 = vadd.f32 %v655, %v803
      %v868 = vadd.f32 %v656, %v804
      %v869 = vadd.f32 %v657, %v805
      %v870 = vadd.f32 %v658, %v806
      %v871 = vadd.f32 %v659, %v807
      %v872 = vadd.f32 %v660, %v808
      %v873 = vlaneseq
      %v874 = vshrl.u32 %v873, 7
      %v875 = vsub.s32 0, %v874
      %v876 = vrot.slane %v267, %v875
      %v877 = vlaneseq
      %v878 = vshrl.u32 %v877, 7
      %v879 = vsub.s32 1, %v878
      %v880 = vrot.slane %v267, %v879
      %vm881 = vcmp.eq.s32.totalorder %v269, %v876
      %vm882 = vcmp.eq.s32.totalorder %v269, %v880
      %vm883 = vcmp.eq.s32.totalorder %v270, %v876
      %vm884 = vcmp.eq.s32.totalorder %v270, %v880
      %vm885 = vcmp.eq.s32.totalorder %v271, %v876
      %vm886 = vcmp.eq.s32.totalorder %v271, %v880
      %vm887 = vcmp.eq.s32.totalorder %v272, %v876
      %vm888 = vcmp.eq.s32.totalorder %v272, %v880
      %vm889 = vcmp.eq.s32.totalorder %v273, %v876
      %vm890 = vcmp.eq.s32.totalorder %v273, %v880
      %vm891 = vcmp.eq.s32.totalorder %v274, %v876
      %vm892 = vcmp.eq.s32.totalorder %v274, %v880
      %vm893 = vcmp.eq.s32.totalorder %v275, %v876
      %vm894 = vcmp.eq.s32.totalorder %v275, %v880
      %vm895 = vcmp.eq.s32.totalorder %v276, %v876
      %vm896 = vcmp.eq.s32.totalorder %v276, %v880
      %vm897 = vcmp.eq.s32.totalorder %v277, %v876
      %vm898 = vcmp.eq.s32.totalorder %v277, %v880
      %vm899 = vcmp.eq.s32.totalorder %v278, %v876
      %vm900 = vcmp.eq.s32.totalorder %v278, %v880
      %vm901 = vcmp.eq.s32.totalorder %v279, %v876
      %vm902 = vcmp.eq.s32.totalorder %v279, %v880
      %vm903 = vcmp.eq.s32.totalorder %v280, %v876
      %vm904 = vcmp.eq.s32.totalorder %v280, %v880
      %vm905 = vcmp.eq.s32.totalorder %v281, %v876
      %vm906 = vcmp.eq.s32.totalorder %v281, %v880
      %vm907 = vcmp.eq.s32.totalorder %v282, %v876
      %vm908 = vcmp.eq.s32.totalorder %v282, %v880
      %vm909 = vcmp.eq.s32.totalorder %v283, %v876
      %vm910 = vcmp.eq.s32.totalorder %v283, %v880
      %vm911 = vcmp.eq.s32.totalorder %v284, %v876
      %vm912 = vcmp.eq.s32.totalorder %v284, %v880
      %vm913 = vcmp.eq.s32.totalorder %v285, %v876
      %vm914 = vcmp.eq.s32.totalorder %v285, %v880
      %vm915 = vcmp.eq.s32.totalorder %v286, %v876
      %vm916 = vcmp.eq.s32.totalorder %v286, %v880
      %vm917 = vcmp.eq.s32.totalorder %v287, %v876
      %vm918 = vcmp.eq.s32.totalorder %v287, %v880
      %vm919 = vcmp.eq.s32.totalorder %v288, %v876
      %vm920 = vcmp.eq.s32.totalorder %v288, %v880
      %vm921 = vcmp.eq.s32.totalorder %v289, %v876
      %vm922 = vcmp.eq.s32.totalorder %v289, %v880
      %vm923 = vcmp.eq.s32.totalorder %v290, %v876
      %vm924 = vcmp.eq.s32.totalorder %v290, %v880
      %vm925 = vcmp.eq.s32.totalorder %v291, %v876
      %vm926 = vcmp.eq.s32.totalorder %v291, %v880
      %vm927 = vcmp.eq.s32.totalorder %v292, %v876
      %vm928 = vcmp.eq.s32.totalorder %v292, %v880
      %vm929 = vcmp.eq.s32.totalorder %v293, %v876
      %vm930 = vcmp.eq.s32.totalorder %v293, %v880
      %vm931 = vcmp.eq.s32.totalorder %v294, %v876
      %vm932 = vcmp.eq.s32.totalorder %v294, %v880
      %vm933 = vcmp.eq.s32.totalorder %v295, %v876
      %vm934 = vcmp.eq.s32.totalorder %v295, %v880
      %vm935 = vcmp.eq.s32.totalorder %v296, %v876
      %vm936 = vcmp.eq.s32.totalorder %v296, %v880
      %vm937 = vcmp.eq.s32.totalorder %v297, %v876
      %vm938 = vcmp.eq.s32.totalorder %v297, %v880
      %vm939 = vcmp.eq.s32.totalorder %v298, %v876
      %vm940 = vcmp.eq.s32.totalorder %v298, %v880
      %vm941 = vcmp.eq.s32.totalorder %v299, %v876
      %vm942 = vcmp.eq.s32.totalorder %v299, %v880
      %vm943 = vcmp.eq.s32.totalorder %v300, %v876
      %vm944 = vcmp.eq.s32.totalorder %v300, %v880
      %v945 = vmul.f32 %v258, %v259
      %v947 = vlaneseq
      %v948 = vshrl.u32 %v947, 7
      %v949 = vsub.s32 0, %v948
      %v950 = vrot.slane %v945, %v949
      %v951 = vlaneseq
      %v952 = vshrl.u32 %v951, 7
      %v953 = vsub.s32 1, %v952
      %v954 = vrot.slane %v945, %v953
      %v957 = vsel %vm881, %v950, 0.0
      %v958 = vsel %vm882, %v954, 0.0
      %v959 = vsel %vm883, %v950, 0.0
      %v960 = vsel %vm884, %v954, 0.0
      %v961 = vsel %vm885, %v950, 0.0
      %v962 = vsel %vm886, %v954, 0.0
      %v963 = vsel %vm887, %v950, 0.0
      %v964 = vsel %vm888, %v954, 0.0
      %v965 = vsel %vm889, %v950, 0.0
      %v966 = vsel %vm890, %v954, 0.0
      %v967 = vsel %vm891, %v950, 0.0
      %v968 = vsel %vm892, %v954, 0.0
      %v969 = vsel %vm893, %v950, 0.0
      %v970 = vsel %vm894, %v954, 0.0
      %v971 = vsel %vm895, %v950, 0.0
      %v972 = vsel %vm896, %v954, 0.0
      %v973 = vsel %vm897, %v950, 0.0
      %v974 = vsel %vm898, %v954, 0.0
      %v975 = vsel %vm899, %v950, 0.0
      %v976 = vsel %vm900, %v954, 0.0
      %v977 = vsel %vm901, %v950, 0.0
      %v978 = vsel %vm902, %v954, 0.0
      %v979 = vsel %vm903, %v950, 0.0
      %v980 = vsel %vm904, %v954, 0.0
      %v981 = vsel %vm905, %v950, 0.0
      %v982 = vsel %vm906, %v954, 0.0
      %v983 = vsel %vm907, %v950, 0.0
      %v984 = vsel %vm908, %v954, 0.0
      %v985 = vsel %vm909, %v950, 0.0
      %v986 = vsel %vm910, %v954, 0.0
      %v987 = vsel %vm911, %v950, 0.0
      %v988 = vsel %vm912, %v954, 0.0
      %v989 = vsel %vm913, %v950, 0.0
      %v990 = vsel %vm914, %v954, 0.0
      %v991 = vsel %vm915, %v950, 0.0
      %v992 = vsel %vm916, %v954, 0.0
      %v993 = vsel %vm917, %v950, 0.0
      %v994 = vsel %vm918, %v954, 0.0
      %v995 = vsel %vm919, %v950, 0.0
      %v996 = vsel %vm920, %v954, 0.0
      %v997 = vsel %vm921, %v950, 0.0
      %v998 = vsel %vm922, %v954, 0.0
      %v999 = vsel %vm923, %v950, 0.0
      %v1000 = vsel %vm924, %v954, 0.0
      %v1001 = vsel %vm925, %v950, 0.0
      %v1002 = vsel %vm926, %v954, 0.0
      %v1003 = vsel %vm927, %v950, 0.0
      %v1004 = vsel %vm928, %v954, 0.0
      %v1005 = vsel %vm929, %v950, 0.0
      %v1006 = vsel %vm930, %v954, 0.0
      %v1007 = vsel %vm931, %v950, 0.0
      %v1008 = vsel %vm932, %v954, 0.0
      %v1009 = vsel %vm933, %v950, 0.0
      %v1010 = vsel %vm934, %v954, 0.0
      %v1011 = vsel %vm935, %v950, 0.0
      %v1012 = vsel %vm936, %v954, 0.0
      %v1013 = vsel %vm937, %v950, 0.0
      %v1014 = vsel %vm938, %v954, 0.0
      %v1015 = vsel %vm939, %v950, 0.0
      %v1016 = vsel %vm940, %v954, 0.0
      %v1017 = vsel %vm941, %v950, 0.0
      %v1018 = vsel %vm942, %v954, 0.0
      %v1019 = vsel %vm943, %v950, 0.0
      %v1020 = vsel %vm944, %v954, 0.0
      %v1021 = vadd.f32 %v809, %v957
      %v1022 = vadd.f32 %v810, %v958
      %v1023 = vadd.f32 %v811, %v959
      %v1024 = vadd.f32 %v812, %v960
      %v1025 = vadd.f32 %v813, %v961
      %v1026 = vadd.f32 %v814, %v962
      %v1027 = vadd.f32 %v815, %v963
      %v1028 = vadd.f32 %v816, %v964
      %v1029 = vadd.f32 %v817, %v965
      %v1030 = vadd.f32 %v818, %v966
      %v1031 = vadd.f32 %v819, %v967
      %v1032 = vadd.f32 %v820, %v968
      %v1033 = vadd.f32 %v821, %v969
      %v1034 = vadd.f32 %v822, %v970
      %v1035 = vadd.f32 %v823, %v971
      %v1036 = vadd.f32 %v824, %v972
      %v1037 = vadd.f32 %v825, %v973
      %v1038 = vadd.f32 %v826, %v974
      %v1039 = vadd.f32 %v827, %v975
      %v1040 = vadd.f32 %v828, %v976
      %v1041 = vadd.f32 %v829, %v977
      %v1042 = vadd.f32 %v830, %v978
      %v1043 = vadd.f32 %v831, %v979
      %v1044 = vadd.f32 %v832, %v980
      %v1045 = vadd.f32 %v833, %v981
      %v1046 = vadd.f32 %v834, %v982
      %v1047 = vadd.f32 %v835, %v983
      %v1048 = vadd.f32 %v836, %v984
      %v1049 = vadd.f32 %v837, %v985
      %v1050 = vadd.f32 %v838, %v986
      %v1051 = vadd.f32 %v839, %v987
      %v1052 = vadd.f32 %v840, %v988
      %v1053 = vadd.f32 %v841, %v989
      %v1054 = vadd.f32 %v842, %v990
      %v1055 = vadd.f32 %v843, %v991
      %v1056 = vadd.f32 %v844, %v992
      %v1057 = vadd.f32 %v845, %v993
      %v1058 = vadd.f32 %v846, %v994
      %v1059 = vadd.f32 %v847, %v995
      %v1060 = vadd.f32 %v848, %v996
      %v1061 = vadd.f32 %v849, %v997
      %v1062 = vadd.f32 %v850, %v998
      %v1063 = vadd.f32 %v851, %v999
      %v1064 = vadd.f32 %v852, %v1000
      %v1065 = vadd.f32 %v853, %v1001
      %v1066 = vadd.f32 %v854, %v1002
      %v1067 = vadd.f32 %v855, %v1003
      %v1068 = vadd.f32 %v856, %v1004
      %v1069 = vadd.f32 %v857, %v1005
      %v1070 = vadd.f32 %v858, %v1006
      %v1071 = vadd.f32 %v859, %v1007
      %v1072 = vadd.f32 %v860, %v1008
      %v1073 = vadd.f32 %v861, %v1009
      %v1074 = vadd.f32 %v862, %v1010
      %v1075 = vadd.f32 %v863, %v1011
      %v1076 = vadd.f32 %v864, %v1012
      %v1077 = vadd.f32 %v865, %v1013
      %v1078 = vadd.f32 %v866, %v1014
      %v1079 = vadd.f32 %v867, %v1015
      %v1080 = vadd.f32 %v868, %v1016
      %v1081 = vadd.f32 %v869, %v1017
      %v1082 = vadd.f32 %v870, %v1018
      %v1083 = vadd.f32 %v871, %v1019
      %v1084 = vadd.f32 %v872, %v1020
      %1086 = vset.pattern.permute.xlu0 0
      %1087 = vperm.xlu0 %1086, %v203
      %v1088 = vpop.permute.xlu0 %1087
      %1091 = vset.pattern.permute.xlu0 0
      %1092 = vperm.xlu0 %1091, %v204
      %v1093 = vpop.permute.xlu0 %1092
      %1096 = vset.pattern.permute.xlu0 0
      %1097 = vperm.xlu0 %1096, %v205
      %v1098 = vpop.permute.xlu0 %1097
      %1101 = vset.pattern.permute.xlu0 0
      %1102 = vperm.xlu0 %1101, %v206
      %v1103 = vpop.permute.xlu0 %1102
      %1106 = vset.pattern.permute.xlu0 0
      %1107 = vperm.xlu0 %1106, %v207
      %v1108 = vpop.permute.xlu0 %1107
      %1111 = vset.pattern.permute.xlu0 0
      %1112 = vperm.xlu0 %1111, %v208
      %v1113 = vpop.permute.xlu0 %1112
      %1116 = vset.pattern.permute.xlu0 0
      %1117 = vperm.xlu0 %1116, %v209
      %v1118 = vpop.permute.xlu0 %1117
      %1121 = vset.pattern.permute.xlu0 0
      %1122 = vperm.xlu0 %1121, %v210
      %v1123 = vpop.permute.xlu0 %1122
      %1126 = vset.pattern.permute.xlu0 0
      %1127 = vperm.xlu0 %1126, %v211
      %v1128 = vpop.permute.xlu0 %1127
      %1131 = vset.pattern.permute.xlu0 0
      %1132 = vperm.xlu0 %1131, %v212
      %v1133 = vpop.permute.xlu0 %1132
      %1136 = vset.pattern.permute.xlu0 0
      %1137 = vperm.xlu0 %1136, %v213
      %v1138 = vpop.permute.xlu0 %1137
      %1141 = vset.pattern.permute.xlu0 0
      %1142 = vperm.xlu0 %1141, %v214
      %v1143 = vpop.permute.xlu0 %1142
      %1146 = vset.pattern.permute.xlu0 0
      %1147 = vperm.xlu0 %1146, %v215
      %v1148 = vpop.permute.xlu0 %1147
      %1151 = vset.pattern.permute.xlu0 0
      %1152 = vperm.xlu0 %1151, %v216
      %v1153 = vpop.permute.xlu0 %1152
      %1156 = vset.pattern.permute.xlu0 0
      %1157 = vperm.xlu0 %1156, %v217
      %v1158 = vpop.permute.xlu0 %1157
      %1161 = vset.pattern.permute.xlu0 0
      %1162 = vperm.xlu0 %1161, %v218
      %v1163 = vpop.permute.xlu0 %1162
      %1166 = vset.pattern.permute.xlu0 0
      %1167 = vperm.xlu0 %1166, %v219
      %v1168 = vpop.permute.xlu0 %1167
      %1171 = vset.pattern.permute.xlu0 0
      %1172 = vperm.xlu0 %1171, %v220
      %v1173 = vpop.permute.xlu0 %1172
      %1176 = vset.pattern.permute.xlu0 0
      %1177 = vperm.xlu0 %1176, %v221
      %v1178 = vpop.permute.xlu0 %1177
      %1181 = vset.pattern.permute.xlu0 0
      %1182 = vperm.xlu0 %1181, %v222
      %v1183 = vpop.permute.xlu0 %1182
      %1186 = vset.pattern.permute.xlu0 0
      %1187 = vperm.xlu0 %1186, %v223
      %v1188 = vpop.permute.xlu0 %1187
      %1191 = vset.pattern.permute.xlu0 0
      %1192 = vperm.xlu0 %1191, %v224
      %v1193 = vpop.permute.xlu0 %1192
      %1196 = vset.pattern.permute.xlu0 0
      %1197 = vperm.xlu0 %1196, %v225
      %v1198 = vpop.permute.xlu0 %1197
      %1201 = vset.pattern.permute.xlu0 0
      %1202 = vperm.xlu0 %1201, %v226
      %v1203 = vpop.permute.xlu0 %1202
      %1206 = vset.pattern.permute.xlu0 0
      %1207 = vperm.xlu0 %1206, %v227
      %v1208 = vpop.permute.xlu0 %1207
      %1211 = vset.pattern.permute.xlu0 0
      %1212 = vperm.xlu0 %1211, %v228
      %v1213 = vpop.permute.xlu0 %1212
      %1216 = vset.pattern.permute.xlu0 0
      %1217 = vperm.xlu0 %1216, %v229
      %v1218 = vpop.permute.xlu0 %1217
      %1221 = vset.pattern.permute.xlu0 0
      %1222 = vperm.xlu0 %1221, %v230
      %v1223 = vpop.permute.xlu0 %1222
      %1226 = vset.pattern.permute.xlu0 0
      %1227 = vperm.xlu0 %1226, %v231
      %v1228 = vpop.permute.xlu0 %1227
      %1231 = vset.pattern.permute.xlu0 0
      %1232 = vperm.xlu0 %1231, %v232
      %v1233 = vpop.permute.xlu0 %1232
      %1236 = vset.pattern.permute.xlu0 0
      %1237 = vperm.xlu0 %1236, %v233
      %v1238 = vpop.permute.xlu0 %1237
      %1241 = vset.pattern.permute.xlu0 0
      %1242 = vperm.xlu0 %1241, %v234
      %v1243 = vpop.permute.xlu0 %1242
      %v1245 = vmul.f32 %v1021, %v1088
      %v1246 = vmul.f32 %v1022, %v1088
      %v1247 = vmul.f32 %v1023, %v1093
      %v1248 = vmul.f32 %v1024, %v1093
      %v1249 = vmul.f32 %v1025, %v1098
      %v1250 = vmul.f32 %v1026, %v1098
      %v1251 = vmul.f32 %v1027, %v1103
      %v1252 = vmul.f32 %v1028, %v1103
      %v1253 = vmul.f32 %v1029, %v1108
      %v1254 = vmul.f32 %v1030, %v1108
      %v1255 = vmul.f32 %v1031, %v1113
      %v1256 = vmul.f32 %v1032, %v1113
      %v1257 = vmul.f32 %v1033, %v1118
      %v1258 = vmul.f32 %v1034, %v1118
      %v1259 = vmul.f32 %v1035, %v1123
      %v1260 = vmul.f32 %v1036, %v1123
      %v1261 = vmul.f32 %v1037, %v1128
      %v1262 = vmul.f32 %v1038, %v1128
      %v1263 = vmul.f32 %v1039, %v1133
      %v1264 = vmul.f32 %v1040, %v1133
      %v1265 = vmul.f32 %v1041, %v1138
      %v1266 = vmul.f32 %v1042, %v1138
      %v1267 = vmul.f32 %v1043, %v1143
      %v1268 = vmul.f32 %v1044, %v1143
      %v1269 = vmul.f32 %v1045, %v1148
      %v1270 = vmul.f32 %v1046, %v1148
      %v1271 = vmul.f32 %v1047, %v1153
      %v1272 = vmul.f32 %v1048, %v1153
      %v1273 = vmul.f32 %v1049, %v1158
      %v1274 = vmul.f32 %v1050, %v1158
      %v1275 = vmul.f32 %v1051, %v1163
      %v1276 = vmul.f32 %v1052, %v1163
      %v1277 = vmul.f32 %v1053, %v1168
      %v1278 = vmul.f32 %v1054, %v1168
      %v1279 = vmul.f32 %v1055, %v1173
      %v1280 = vmul.f32 %v1056, %v1173
      %v1281 = vmul.f32 %v1057, %v1178
      %v1282 = vmul.f32 %v1058, %v1178
      %v1283 = vmul.f32 %v1059, %v1183
      %v1284 = vmul.f32 %v1060, %v1183
      %v1285 = vmul.f32 %v1061, %v1188
      %v1286 = vmul.f32 %v1062, %v1188
      %v1287 = vmul.f32 %v1063, %v1193
      %v1288 = vmul.f32 %v1064, %v1193
      %v1289 = vmul.f32 %v1065, %v1198
      %v1290 = vmul.f32 %v1066, %v1198
      %v1291 = vmul.f32 %v1067, %v1203
      %v1292 = vmul.f32 %v1068, %v1203
      %v1293 = vmul.f32 %v1069, %v1208
      %v1294 = vmul.f32 %v1070, %v1208
      %v1295 = vmul.f32 %v1071, %v1213
      %v1296 = vmul.f32 %v1072, %v1213
      %v1297 = vmul.f32 %v1073, %v1218
      %v1298 = vmul.f32 %v1074, %v1218
      %v1299 = vmul.f32 %v1075, %v1223
      %v1300 = vmul.f32 %v1076, %v1223
      %v1301 = vmul.f32 %v1077, %v1228
      %v1302 = vmul.f32 %v1078, %v1228
      %v1303 = vmul.f32 %v1079, %v1233
      %v1304 = vmul.f32 %v1080, %v1233
      %v1305 = vmul.f32 %v1081, %v1238
      %v1306 = vmul.f32 %v1082, %v1238
      %v1307 = vmul.f32 %v1083, %v1243
      %v1308 = vmul.f32 %v1084, %v1243
      %v1309 = vadd.f32 %v1245, %v1247
      %v1310 = vadd.f32 %v1309, %v1249
      %v1311 = vadd.f32 %v1310, %v1251
      %v1312 = vadd.f32 %v1311, %v1253
      %v1313 = vadd.f32 %v1312, %v1255
      %v1314 = vadd.f32 %v1313, %v1257
      %v1315 = vadd.f32 %v1314, %v1259
      %v1316 = vadd.f32 %v1315, %v1261
      %v1317 = vadd.f32 %v1316, %v1263
      %v1318 = vadd.f32 %v1317, %v1265
      %v1319 = vadd.f32 %v1318, %v1267
      %v1320 = vadd.f32 %v1319, %v1269
      %v1321 = vadd.f32 %v1320, %v1271
      %v1322 = vadd.f32 %v1321, %v1273
      %v1323 = vadd.f32 %v1322, %v1275
      %v1324 = vadd.f32 %v1323, %v1277
      %v1325 = vadd.f32 %v1324, %v1279
      %v1326 = vadd.f32 %v1325, %v1281
      %v1327 = vadd.f32 %v1326, %v1283
      %v1328 = vadd.f32 %v1327, %v1285
      %v1329 = vadd.f32 %v1328, %v1287
      %v1330 = vadd.f32 %v1329, %v1289
      %v1331 = vadd.f32 %v1330, %v1291
      %v1332 = vadd.f32 %v1331, %v1293
      %v1333 = vadd.f32 %v1332, %v1295
      %v1334 = vadd.f32 %v1333, %v1297
      %v1335 = vadd.f32 %v1334, %v1299
      %v1336 = vadd.f32 %v1335, %v1301
      %v1337 = vadd.f32 %v1336, %v1303
      %v1338 = vadd.f32 %v1337, %v1305
      %v1339 = vadd.f32 %v1338, %v1307
      %v1340 = vrot.slane %v1339, 4
      %v1341 = vadd.f32 %v1339, %v1340
      %v1342 = vrot.slane %v1341, 2
      %v1343 = vadd.f32 %v1341, %v1342
      %v1344 = vrot.slane %v1343, 1
      %v1345 = vadd.f32 %v1343, %v1344
      %v1346 = vadd.f32 %v1246, %v1248
      %v1347 = vadd.f32 %v1346, %v1250
      %v1348 = vadd.f32 %v1347, %v1252
      %v1349 = vadd.f32 %v1348, %v1254
      %v1350 = vadd.f32 %v1349, %v1256
      %v1351 = vadd.f32 %v1350, %v1258
      %v1352 = vadd.f32 %v1351, %v1260
      %v1353 = vadd.f32 %v1352, %v1262
      %v1354 = vadd.f32 %v1353, %v1264
      %v1355 = vadd.f32 %v1354, %v1266
      %v1356 = vadd.f32 %v1355, %v1268
      %v1357 = vadd.f32 %v1356, %v1270
      %v1358 = vadd.f32 %v1357, %v1272
      %v1359 = vadd.f32 %v1358, %v1274
      %v1360 = vadd.f32 %v1359, %v1276
      %v1361 = vadd.f32 %v1360, %v1278
      %v1362 = vadd.f32 %v1361, %v1280
      %v1363 = vadd.f32 %v1362, %v1282
      %v1364 = vadd.f32 %v1363, %v1284
      %v1365 = vadd.f32 %v1364, %v1286
      %v1366 = vadd.f32 %v1365, %v1288
      %v1367 = vadd.f32 %v1366, %v1290
      %v1368 = vadd.f32 %v1367, %v1292
      %v1369 = vadd.f32 %v1368, %v1294
      %v1370 = vadd.f32 %v1369, %v1296
      %v1371 = vadd.f32 %v1370, %v1298
      %v1372 = vadd.f32 %v1371, %v1300
      %v1373 = vadd.f32 %v1372, %v1302
      %v1374 = vadd.f32 %v1373, %v1304
      %v1375 = vadd.f32 %v1374, %v1306
      %v1376 = vadd.f32 %v1375, %v1308
      %v1377 = vrot.slane %v1376, 4
      %v1378 = vadd.f32 %v1376, %v1377
      %v1379 = vrot.slane %v1378, 2
      %v1380 = vadd.f32 %v1378, %v1379
      %v1381 = vrot.slane %v1380, 1
      %v1382 = vadd.f32 %v1380, %v1381
      %vm1383 = vcmask 7168
      %v1384 = vsel %vm1383, %v203, inf
      %v1385 = vsel %vm1383, %v204, inf
      %v1386 = vsel %vm1383, %v205, inf
      %v1387 = vsel %vm1383, %v206, inf
      %v1388 = vsel %vm1383, %v207, inf
      %v1389 = vmin.f32 %v1384, %v1388
      %v1390 = vsel %vm1383, %v208, inf
      %v1391 = vmin.f32 %v1385, %v1390
      %v1392 = vsel %vm1383, %v209, inf
      %v1393 = vmin.f32 %v1386, %v1392
      %v1394 = vsel %vm1383, %v210, inf
      %v1395 = vmin.f32 %v1387, %v1394
      %v1396 = vsel %vm1383, %v211, inf
      %v1397 = vmin.f32 %v1389, %v1396
      %v1398 = vsel %vm1383, %v212, inf
      %v1399 = vmin.f32 %v1391, %v1398
      %v1400 = vsel %vm1383, %v213, inf
      %v1401 = vmin.f32 %v1393, %v1400
      %v1402 = vsel %vm1383, %v214, inf
      %v1403 = vmin.f32 %v1395, %v1402
      %v1404 = vsel %vm1383, %v215, inf
      %v1405 = vmin.f32 %v1397, %v1404
      %v1406 = vsel %vm1383, %v216, inf
      %v1407 = vmin.f32 %v1399, %v1406
      %v1408 = vsel %vm1383, %v217, inf
      %v1409 = vmin.f32 %v1401, %v1408
      %v1410 = vsel %vm1383, %v218, inf
      %v1411 = vmin.f32 %v1403, %v1410
      %v1412 = vsel %vm1383, %v219, inf
      %v1413 = vmin.f32 %v1405, %v1412
      %v1414 = vsel %vm1383, %v220, inf
      %v1415 = vmin.f32 %v1407, %v1414
      %v1416 = vsel %vm1383, %v221, inf
      %v1417 = vmin.f32 %v1409, %v1416
      %v1418 = vsel %vm1383, %v222, inf
      %v1419 = vmin.f32 %v1411, %v1418
      %v1420 = vsel %vm1383, %v223, inf
      %v1421 = vmin.f32 %v1413, %v1420
      %v1422 = vsel %vm1383, %v224, inf
      %v1423 = vmin.f32 %v1415, %v1422
      %v1424 = vsel %vm1383, %v225, inf
      %v1425 = vmin.f32 %v1417, %v1424
      %v1426 = vsel %vm1383, %v226, inf
      %v1427 = vmin.f32 %v1419, %v1426
      %v1428 = vsel %vm1383, %v227, inf
      %v1429 = vmin.f32 %v1421, %v1428
      %v1430 = vsel %vm1383, %v228, inf
      %v1431 = vmin.f32 %v1423, %v1430
      %v1432 = vsel %vm1383, %v229, inf
      %v1433 = vmin.f32 %v1425, %v1432
      %v1434 = vsel %vm1383, %v230, inf
      %v1435 = vmin.f32 %v1427, %v1434
      %v1436 = vsel %vm1383, %v231, inf
      %v1437 = vmin.f32 %v1429, %v1436
      %v1438 = vsel %vm1383, %v232, inf
      %v1439 = vmin.f32 %v1431, %v1438
      %v1440 = vsel %vm1383, %v233, inf
      %v1441 = vmin.f32 %v1433, %v1440
      %v1442 = vsel %vm1383, %v234, inf
      %v1443 = vmin.f32 %v1435, %v1442
      %v1444 = vmin.f32 %v1437, %v1439
      %v1445 = vmin.f32 %v1441, %v1443
      %v1446 = vmin.f32 %v1444, %v1445
      %1447 = vmin.xlane.f32.xlu0 %v1446
      %v1448 = vpop.xlane.xlu0 %1447
      %v1449 = vrot.slane %v1448, 4
      %v1450 = vmin.f32 %v1448, %v1449
      %v1451 = vrot.slane %v1450, 2
      %v1452 = vmin.f32 %v1450, %v1451
      %v1453 = vrot.slane %v1452, 1
      %v1454 = vmin.f32 %v1452, %v1453
      %s1455 = vtos %v1454
      %v1456 = vstv %s1455
      %v1459 = vcombine.low %v1345, %v1382
      %v1461 = vunpack.c.l.s4 1966171168
      %v1462 = vunpack.c.0.s8 %v1461
      %v1463 = vlaneseq
      %v1464 = vshrl.u32 %v1463, 7
      %v1465 = vsub.s32 %v1462, %v1464
      %v1466 = vrot.slane %v1459, %v1465
      %v1468 = vunpack.c.l.s4 1966171168
      %v1469 = vunpack.c.0.s8 %v1468
      %v1470 = vlaneseq
      %v1471 = vshrl.u32 %v1470, 7
      %v1472 = vsub.s32 %v1469, %v1471
      %v1473 = vrot.slane %v1466, %v1472
      %v1475 = vsel %vm243, %v1456, %v1473
      %v1476 = vlaneseq
      %vm1477 = vcmp.ge.s32.totalorder %v1476, 0
      %vm1478 = vcmp.lt.s32.totalorder %v1476, 256
      %vm1479 = vmand %vm1477, %vm1478
      %1480 = vst.msk [vmem:[%s202] sm:$0x3] %vm1479, %v1475
      %p1481 = scmp.lt.s32.totalorder %s14, 1
      %s1482 = scalar_select %p1481, %s14, 1
      %s1483 = smul.addr %s1482, 2
      %s1484 = scalar_lea.vmem %s3, %s1483
      // Predicated region
      $region33: #{simple_regnet_forward.5} parent=31 // pred_check
        %p1485 = pneg %p110
      $region34: #{simple_regnet_forward.5} parent=31 // pred_check_branch
        %1487 = sbr.rel (%p1485) target = $region36
      $region35: #{simple_regnet_forward.5} parent=31 // pred_region
        _
      $region36: #{simple_regnet_forward.5} parent=31 // pred_fallthru
        _
    $region32: #{simple_regnet_forward.5} parent=5 // pred_fallthru
      _
    %p1488 = scmp.le.s32.totalorder 2, %s9
    // Predicated region
    $region37: #{simple_regnet_forward.5} parent=5 // pred_check
      %p1489 = pneg %p1488
    $region38: #{simple_regnet_forward.5} parent=5 // pred_check_branch
      %1491 = sbr.rel (%p1489) target = $region40
    $region39: #{simple_regnet_forward.5} parent=5 // pred_region
      %s1492 = ssub.s32 %s9, 2
      // Predicated region
      $region41: #{simple_regnet_forward.5} parent=39 // pred_check
        %p1493 = pneg %p116
      $region42: #{simple_regnet_forward.5} parent=39 // pred_check_branch
        %1495 = sbr.rel (%p1493) target = $region44
      $region43: #{simple_regnet_forward.5} parent=39 // pred_region
        %p1496 = scmp.lt.s32.totalorder %s15, 1
        %s1497 = scalar_select %p1496, %s15, 1
        %s1498 = smul.addr %s1497, 2
        %s1499 = scalar_lea.vmem %s3, %s1498
      $region44: #{simple_regnet_forward.5} parent=39 // pred_fallthru
        _
    $region40: #{simple_regnet_forward.5} parent=5 // pred_fallthru
      _
  $region6: #{simple_regnet_forward.5} parent=0 // loop_footer
    %s13 = sadd.s32 1, %s9
  $region7: #{simple_regnet_forward.5} parent=0 // loop_footer_branch
    %8 = sbr.rel target = $region3
  $region8: #{simple_regnet_forward.5} parent=0 // loop_exit
    _

// kernel: simple_regnet_forward.7
$region0: #{simple_regnet_forward.7}
  #allocation0 [shape = 'u32[]', space=smem, size = 0x4, offset = 0x4, fixed_abs, tag = 'smem constant byte address 0x4 - core index']
  #allocation1 [shape = 'u32[144,128]{1,0:T(1,128)}', space=vmem, size = 0x12000, scoped, tag = 'internal scratch']
  #allocation2 [shape = 'f32[1,1]{1,0:T(1,128)}', space=vmem, size = 0x200, scoped, tag = 'scratch operand']
  %s0 = inlined_call_operand.vmem [shape: f32[8,128], index: 0, kind: input, shape index: {}]
  %s1 = inlined_call_operand.vmem [shape: f32[8,128], index: 1, kind: input, shape index: {}]
  %s2 = inlined_call_operand.hbm [shape: f32[1,1], index: 2, kind: output, shape index: {}]
  %s3 = sld [smem:[#allocation0]]
  $region26: #{simple_regnet_forward.7} parent=0
    _
  %s5 = ssub.s32 1, %s3
  %s6 = scalar_select 0, %s5, %s3
  $region1: #{simple_regnet_forward.7} parent=0
    #allocation3 [shape = 'u8[512]{0}', space=vmem, size = 0x400, scoped, tag = 'output window, operand 0, single buffered']
    #allocation4 [shape = 's32[1]{0}', space=sflag, size = 0x4, scoped, tag = 'scoped memory for simple_regnet_forward.7']
    %7 = vsyncpa [#allocation4], 0
    // Predicated region
    $region2: #{simple_regnet_forward.7} parent=1 // pred_check
      _
    $region3: #{simple_regnet_forward.7} parent=1 // pred_check_branch
      %9 = sbr.rel (0) target = $region5
    $region4: #{simple_regnet_forward.7} parent=1 // pred_region
      _
    $region5: #{simple_regnet_forward.7} parent=1 // pred_fallthru
      _
    // Predicated region
    $region6: #{simple_regnet_forward.7} parent=1 // pred_check
      _
    $region7: #{simple_regnet_forward.7} parent=1 // pred_check_branch
      %11 = sbr.rel (0) target = $region9
    $region8: #{simple_regnet_forward.7} parent=1 // pred_region
      _
    $region9: #{simple_regnet_forward.7} parent=1 // pred_fallthru
      _
    %p12 = scmp.eq.s32.totalorder 0, 0
    // Predicated region
    $region10: #{simple_regnet_forward.7} parent=1 // pred_check
      %p13 = pneg %p12
    $region11: #{simple_regnet_forward.7} parent=1 // pred_check_branch
      %15 = sbr.rel (%p13) target = $region13
    $region12: #{simple_regnet_forward.7} parent=1 // pred_region
      %vm16 = vcmask 0
      %17 = vst.msk [vmem:[#allocation2] sm:$0x1] %vm16, 0.0
    $region13: #{simple_regnet_forward.7} parent=1 // pred_fallthru
      _
    %v18 = vld [vmem:[%s0] sm:$0xff]
    %v19 = vld [vmem:[%s1] sm:$0xff]
    %v20 = vsub.f32 %v18, %v19
    %v21 = vld [vmem:[#allocation2] sm:$0x1]
    %v22 = vmul.f32 %v20, %v20
    %23 = vadd.xlane.f32.xlu0 %v22
    %v24 = vpop.xlane.xlu0 %23
    %v25 = vrot.slane %v24, 4
    %v26 = vadd.f32 %v24, %v25
    %v27 = vrot.slane %v26, 2
    %v28 = vadd.f32 %v26, %v27
    %v29 = vrot.slane %v28, 1
    %v30 = vadd.f32 %v28, %v29
    %s31 = vtos %v30
    %v32 = vstv %s31
    %v33 = vadd.f32 %v21, %v32
    %vm34 = vcmask 0
    %35 = vst.msk [vmem:[#allocation2] sm:$0x1] %vm34, %v33
    // Predicated region
    $region14: #{simple_regnet_forward.7} parent=1 // pred_check
      %p36 = pneg %p12
    $region15: #{simple_regnet_forward.7} parent=1 // pred_check_branch
      %38 = sbr.rel (%p36) target = $region17
    $region16: #{simple_regnet_forward.7} parent=1 // pred_region
      %v39 = vld [vmem:[#allocation2] sm:$0x1]
      %v40 = vrcp.pop 1024.0
      %v41 = vmul.f32 %v39, %v40
      %42 = vst.msk [vmem:[#allocation3] sm:$0x1] %vm34, %v41
    $region17: #{simple_regnet_forward.7} parent=1 // pred_fallthru
      _
    // Predicated region
    $region18: #{simple_regnet_forward.7} parent=1 // pred_check
      _
    $region19: #{simple_regnet_forward.7} parent=1 // pred_check_branch
      %44 = sbr.rel (0) target = $region21
    $region20: #{simple_regnet_forward.7} parent=1 // pred_region
      %s46 = ssub.s32 16, 16
      %47 = vsyncadd [#allocation4], %s46
      %s49 = sshll.u32 [#allocation3], 4
      %s50 = int_to_ptr.vmem [resolvable:$true] %s49
      %52 = dma.vmem_to_hbm [thread:$0]  %s50, 16, %s2, [#allocation4]
    $region21: #{simple_regnet_forward.7} parent=1 // pred_fallthru
      _
    // Predicated region
    $region22: #{simple_regnet_forward.7} parent=1 // pred_check
      _
    $region23: #{simple_regnet_forward.7} parent=1 // pred_check_branch
      %54 = sbr.rel (0) target = $region25
    $region24: #{simple_regnet_forward.7} parent=1 // pred_region
      %55 = dma.done [#allocation4], 16
    $region25: #{simple_regnet_forward.7} parent=1 // pred_fallthru
      _
    %56 = vsyncpa [#allocation4], 1

// kernel: simple_regnet_forward.4
$region0: #{simple_regnet_forward.4}
  #allocation0 [shape = 'u32[]', space=smem, size = 0x4, offset = 0x4, fixed_abs, tag = 'smem constant byte address 0x4 - core index']
  #allocation1 [shape = 'u32[144,128]{1,0:T(1,128)}', space=vmem, size = 0x12000, scoped, tag = 'internal scratch']
  #allocation2 [shape = 'bf16[18,32,16]{2,1,0:T(8,128)(2,1)}', space=vmem, size = 0x24000, scoped, tag = 'scratch operand']
  #allocation3 [shape = 'bf16[18,32,16]{2,1,0:T(8,128)(2,1)}', space=vmem, size = 0x24000, scoped, tag = 'scratch operand']
  %s0 = inlined_call_operand.vmem [shape: bf16[2,18,32,2], index: 0, kind: input, shape index: {}]
  %s1 = inlined_call_operand.vmem [shape: bf16[9,2,16], index: 1, kind: input, shape index: {}]
  %s2 = inlined_call_operand.vmem [shape: f32[1,16], index: 2, kind: input, shape index: {}]
  %s3 = inlined_call_operand.vmem [shape: bf16[9,16,16], index: 3, kind: input, shape index: {}]
  %s4 = inlined_call_operand.vmem [shape: f32[1,16], index: 4, kind: input, shape index: {}]
  %s5 = inlined_call_operand.vmem [shape: bf16[9,16,2], index: 5, kind: input, shape index: {}]
  %s6 = inlined_call_operand.vmem [shape: f32[1,2], index: 6, kind: input, shape index: {}]
  %s7 = inlined_call_operand.vmem [shape: f32[2,16,16,2], index: 7, kind: output, shape index: {}]
  %s8 = sld [smem:[#allocation0]]
  $region61: #{simple_regnet_forward.4} parent=0
    _
  %s10 = ssub.s32 1, %s8
  %s11 = scalar_select 0, %s10, %s8
  loop: start=0, step=1, limit=4
  $region2: #{simple_regnet_forward.4} parent=0 // loop_pre_header
    _
  $region3: #{simple_regnet_forward.4} parent=0 // loop_header
    %s13 = sphi 0, %s17
    %p14 = scmp.ge.s32.totalorder %s13, 4
    %s23 = sphi 0, %s25
    %s26 = sphi 0, %s23
    %s27 = sphi 0, %s26
    %s43 = sphi 0, %s27
    %s47 = sphi 0, %s47
    %s49 = sphi 0, %s47
    %s50 = sphi 0, %s49
    %s64 = sphi 0, %s50
    %s68 = sphi 0, %s68
    %s70 = sphi 0, %s68
    %s71 = sphi 0, %s70
    %s85 = sphi 0, %s71
    %s89 = sphi 0, %s89
    %s91 = sphi 0, %s89
    %s92 = sphi 0, %s91
    %s106 = sphi 0, %s92
    %s110 = sphi 0, %s110
    %s112 = sphi 0, %s110
    %s113 = sphi 0, %s112
    %s127 = sphi 0, %s113
    %s131 = sphi 0, %s131
    %s133 = sphi 0, %s131
    %s134 = sphi 0, %s133
    %s148 = sphi 0, %s134
    %s152 = sphi 0, %s152
    %s154 = sphi 0, %s152
    %s155 = sphi 0, %s154
    %s169 = sphi 0, %s155
    %s175 = sphi 0, %s177
    %s178 = sphi 0, %s175
    %s179 = sphi 0, %s178
    %s195 = sphi 0, %s179
  $region4: #{simple_regnet_forward.4} parent=0 // loop_header_branch
    %16 = sbr.rel (%p14) target = $region8
  $region5: #{simple_regnet_forward.4} parent=0 // loop_body
    %s18 = ssub.s32 %s13, 1
    %s19 = ssub.s32 %s13, 2
    %s20 = sadd.s32 %s13, 1
    %s21 = ssub.s32 %s13, %s20
    %p22 = scmp.eq.s32.totalorder %s21, 0
    %s24 = sadd.s32 %s23, 1
    %s25 = scalar_select %p22, %s23, %s24
    %p28 = pneg %p22
    %p29 = scmp.eq.s32.totalorder %s13, 1
    %p30 = por %p28, %p29
    %p31 = scmp.ne.s32.totalorder %s23, %s26
    %p32 = scmp.eq.s32.totalorder %s13, 0
    %p33 = por %p31, %p32
    %p34 = scmp.ne.s32.totalorder %s23, %s26
    %p35 = scmp.eq.s32.totalorder %s18, 1
    %p36 = por %p34, %p35
    %p37 = scmp.ne.s32.totalorder %s26, %s27
    %p38 = scmp.eq.s32.totalorder %s18, 0
    %p39 = por %p37, %p38
    %p40 = scmp.ne.s32.totalorder %s26, %s27
    %p41 = scmp.eq.s32.totalorder %s19, 1
    %p42 = por %p40, %p41
    %p44 = scmp.ne.s32.totalorder %s27, %s43
    %p45 = scmp.eq.s32.totalorder %s19, 0
    %p46 = por %p44, %p45
    %s48 = sadd.s32 %s47, 1
    %p51 = scmp.eq.s32.totalorder %s13, 1
    %p52 = scmp.ne.s32.totalorder %s47, %s49
    %p53 = scmp.eq.s32.totalorder %s13, 0
    %p54 = por %p52, %p53
    %p55 = scmp.ne.s32.totalorder %s47, %s49
    %p56 = scmp.eq.s32.totalorder %s18, 1
    %p57 = por %p55, %p56
    %p58 = scmp.ne.s32.totalorder %s49, %s50
    %p59 = scmp.eq.s32.totalorder %s18, 0
    %p60 = por %p58, %p59
    %p61 = scmp.ne.s32.totalorder %s49, %s50
    %p62 = scmp.eq.s32.totalorder %s19, 1
    %p63 = por %p61, %p62
    %p65 = scmp.ne.s32.totalorder %s50, %s64
    %p66 = scmp.eq.s32.totalorder %s19, 0
    %p67 = por %p65, %p66
    %s69 = sadd.s32 %s68, 1
    %p72 = scmp.eq.s32.totalorder %s13, 1
    %p73 = scmp.ne.s32.totalorder %s68, %s70
    %p74 = scmp.eq.s32.totalorder %s13, 0
    %p75 = por %p73, %p74
    %p76 = scmp.ne.s32.totalorder %s68, %s70
    %p77 = scmp.eq.s32.totalorder %s18, 1
    %p78 = por %p76, %p77
    %p79 = scmp.ne.s32.totalorder %s70, %s71
    %p80 = scmp.eq.s32.totalorder %s18, 0
    %p81 = por %p79, %p80
    %p82 = scmp.ne.s32.totalorder %s70, %s71
    %p83 = scmp.eq.s32.totalorder %s19, 1
    %p84 = por %p82, %p83
    %p86 = scmp.ne.s32.totalorder %s71, %s85
    %p87 = scmp.eq.s32.totalorder %s19, 0
    %p88 = por %p86, %p87
    %s90 = sadd.s32 %s89, 1
    %p93 = scmp.eq.s32.totalorder %s13, 1
    %p94 = scmp.ne.s32.totalorder %s89, %s91
    %p95 = scmp.eq.s32.totalorder %s13, 0
    %p96 = por %p94, %p95
    %p97 = scmp.ne.s32.totalorder %s89, %s91
    %p98 = scmp.eq.s32.totalorder %s18, 1
    %p99 = por %p97, %p98
    %p100 = scmp.ne.s32.totalorder %s91, %s92
    %p101 = scmp.eq.s32.totalorder %s18, 0
    %p102 = por %p100, %p101
    %p103 = scmp.ne.s32.totalorder %s91, %s92
    %p104 = scmp.eq.s32.totalorder %s19, 1
    %p105 = por %p103, %p104
    %p107 = scmp.ne.s32.totalorder %s92, %s106
    %p108 = scmp.eq.s32.totalorder %s19, 0
    %p109 = por %p107, %p108
    %s111 = sadd.s32 %s110, 1
    %p114 = scmp.eq.s32.totalorder %s13, 1
    %p115 = scmp.ne.s32.totalorder %s110, %s112
    %p116 = scmp.eq.s32.totalorder %s13, 0
    %p117 = por %p115, %p116
    %p118 = scmp.ne.s32.totalorder %s110, %s112
    %p119 = scmp.eq.s32.totalorder %s18, 1
    %p120 = por %p118, %p119
    %p121 = scmp.ne.s32.totalorder %s112, %s113
    %p122 = scmp.eq.s32.totalorder %s18, 0
    %p123 = por %p121, %p122
    %p124 = scmp.ne.s32.totalorder %s112, %s113
    %p125 = scmp.eq.s32.totalorder %s19, 1
    %p126 = por %p124, %p125
    %p128 = scmp.ne.s32.totalorder %s113, %s127
    %p129 = scmp.eq.s32.totalorder %s19, 0
    %p130 = por %p128, %p129
    %s132 = sadd.s32 %s131, 1
    %p135 = scmp.eq.s32.totalorder %s13, 1
    %p136 = scmp.ne.s32.totalorder %s131, %s133
    %p137 = scmp.eq.s32.totalorder %s13, 0
    %p138 = por %p136, %p137
    %p139 = scmp.ne.s32.totalorder %s131, %s133
    %p140 = scmp.eq.s32.totalorder %s18, 1
    %p141 = por %p139, %p140
    %p142 = scmp.ne.s32.totalorder %s133, %s134
    %p143 = scmp.eq.s32.totalorder %s18, 0
    %p144 = por %p142, %p143
    %p145 = scmp.ne.s32.totalorder %s133, %s134
    %p146 = scmp.eq.s32.totalorder %s19, 1
    %p147 = por %p145, %p146
    %p149 = scmp.ne.s32.totalorder %s134, %s148
    %p150 = scmp.eq.s32.totalorder %s19, 0
    %p151 = por %p149, %p150
    %s153 = sadd.s32 %s152, 1
    %p156 = scmp.eq.s32.totalorder %s13, 1
    %p157 = scmp.ne.s32.totalorder %s152, %s154
    %p158 = scmp.eq.s32.totalorder %s13, 0
    %p159 = por %p157, %p158
    %p160 = scmp.ne.s32.totalorder %s152, %s154
    %p161 = scmp.eq.s32.totalorder %s18, 1
    %p162 = por %p160, %p161
    %p163 = scmp.ne.s32.totalorder %s154, %s155
    %p164 = scmp.eq.s32.totalorder %s18, 0
    %p165 = por %p163, %p164
    %p166 = scmp.ne.s32.totalorder %s154, %s155
    %p167 = scmp.eq.s32.totalorder %s19, 1
    %p168 = por %p166, %p167
    %p170 = scmp.ne.s32.totalorder %s155, %s169
    %p171 = scmp.eq.s32.totalorder %s19, 0
    %p172 = por %p170, %p171
    %s173 = ssub.s32 %s13, %s20
    %p174 = scmp.eq.s32.totalorder %s173, 0
    %s176 = sadd.s32 %s175, 1
    %s177 = scalar_select %p174, %s175, %s176
    %p180 = pneg %p174
    %p181 = scmp.eq.s32.totalorder %s13, 1
    %p182 = por %p180, %p181
    %p183 = scmp.ne.s32.totalorder %s175, %s178
    %p184 = scmp.eq.s32.totalorder %s13, 0
    %p185 = por %p183, %p184
    %p186 = scmp.ne.s32.totalorder %s175, %s178
    %p187 = scmp.eq.s32.totalorder %s18, 1
    %p188 = por %p186, %p187
    %p189 = scmp.ne.s32.totalorder %s178, %s179
    %p190 = scmp.eq.s32.totalorder %s18, 0
    %p191 = por %p189, %p190
    %p192 = scmp.ne.s32.totalorder %s178, %s179
    %p193 = scmp.eq.s32.totalorder %s19, 1
    %p194 = por %p192, %p193
    %p196 = scmp.ne.s32.totalorder %s179, %s195
    %p197 = scmp.eq.s32.totalorder %s19, 0
    %p198 = por %p196, %p197
    %p199 = scmp.le.s32.totalorder 1, %s13
    %p200 = scmp.lt.s32.totalorder %s13, 3
    %p201 = pnand %p199, %p200
    %p202 = pneg %p201
    // Predicated region
    $region9: #{simple_regnet_forward.4} parent=5 // pred_check
      _
    $region10: #{simple_regnet_forward.4} parent=5 // pred_check_branch
      %204 = sbr.rel (%p201) target = $region12
    $region11: #{simple_regnet_forward.4} parent=5 // pred_region
      %s205 = ssub.s32 %s13, 1
      // Predicated region
      $region13: #{simple_regnet_forward.4} parent=11 // pred_check
        %p206 = pneg %p60
      $region14: #{simple_regnet_forward.4} parent=11 // pred_check_branch
        %208 = sbr.rel (%p206) target = $region16
      $region15: #{simple_regnet_forward.4} parent=11 // pred_region
        _
      $region16: #{simple_regnet_forward.4} parent=11 // pred_fallthru
        _
      // Predicated region
      $region17: #{simple_regnet_forward.4} parent=11 // pred_check
        %p209 = pneg %p81
      $region18: #{simple_regnet_forward.4} parent=11 // pred_check_branch
        %211 = sbr.rel (%p209) target = $region20
      $region19: #{simple_regnet_forward.4} parent=11 // pred_region
        _
      $region20: #{simple_regnet_forward.4} parent=11 // pred_fallthru
        _
      // Predicated region
      $region21: #{simple_regnet_forward.4} parent=11 // pred_check
        %p212 = pneg %p102
      $region22: #{simple_regnet_forward.4} parent=11 // pred_check_branch
        %214 = sbr.rel (%p212) target = $region24
      $region23: #{simple_regnet_forward.4} parent=11 // pred_region
        _
      $region24: #{simple_regnet_forward.4} parent=11 // pred_fallthru
        _
      // Predicated region
      $region25: #{simple_regnet_forward.4} parent=11 // pred_check
        %p215 = pneg %p123
      $region26: #{simple_regnet_forward.4} parent=11 // pred_check_branch
        %217 = sbr.rel (%p215) target = $region28
      $region27: #{simple_regnet_forward.4} parent=11 // pred_region
        _
      $region28: #{simple_regnet_forward.4} parent=11 // pred_fallthru
        _
      // Predicated region
      $region29: #{simple_regnet_forward.4} parent=11 // pred_check
        %p218 = pneg %p144
      $region30: #{simple_regnet_forward.4} parent=11 // pred_check_branch
        %220 = sbr.rel (%p218) target = $region32
      $region31: #{simple_regnet_forward.4} parent=11 // pred_region
        _
      $region32: #{simple_regnet_forward.4} parent=11 // pred_fallthru
        _
      // Predicated region
      $region33: #{simple_regnet_forward.4} parent=11 // pred_check
        %p221 = pneg %p165
      $region34: #{simple_regnet_forward.4} parent=11 // pred_check_branch
        %223 = sbr.rel (%p221) target = $region36
      $region35: #{simple_regnet_forward.4} parent=11 // pred_region
        _
      $region36: #{simple_regnet_forward.4} parent=11 // pred_fallthru
        _
    $region12: #{simple_regnet_forward.4} parent=5 // pred_fallthru
      _
    %p224 = scmp.lt.s32.totalorder %s13, 2
    // Predicated region
    $region37: #{simple_regnet_forward.4} parent=5 // pred_check
      %p225 = pneg %p224
    $region38: #{simple_regnet_forward.4} parent=5 // pred_check_branch
      %227 = sbr.rel (%p225) target = $region40
    $region39: #{simple_regnet_forward.4} parent=5 // pred_region
      // Predicated region
      $region41: #{simple_regnet_forward.4} parent=39 // pred_check
        %p228 = pneg %p33
      $region42: #{simple_regnet_forward.4} parent=39 // pred_check_branch
        %230 = sbr.rel (%p228) target = $region44
      $region43: #{simple_regnet_forward.4} parent=39 // pred_region
        %p231 = scmp.lt.s32.totalorder %s13, 1
        %s232 = scalar_select %p231, %s13, 1
        %s233 = smul.addr %s232, 72
        %s234 = smul.addr %s233, 4
        %s235 = scalar_lea.vmem %s0, %s234
      $region44: #{simple_regnet_forward.4} parent=39 // pred_fallthru
        _
    $region40: #{simple_regnet_forward.4} parent=5 // pred_fallthru
      _
    %p236 = scmp.le.s32.totalorder 1, %s13
    %p237 = scmp.lt.s32.totalorder %s13, 3
    %p238 = pnand %p236, %p237
    %p239 = pneg %p238
    // Predicated region
    $region45: #{simple_regnet_forward.4} parent=5 // pred_check
      _
    $region46: #{simple_regnet_forward.4} parent=5 // pred_check_branch
      %241 = sbr.rel (%p238) target = $region48
    $region47: #{simple_regnet_forward.4} parent=5 // pred_region
      %s242 = ssub.s32 %s13, 1
      %p243 = scmp.lt.s32.totalorder %s18, 1
      %s244 = scalar_select %p243, %s18, 1
      %s245 = smul.addr %s244, 72
      %s246 = smul.addr %s245, 4
      %s247 = scalar_lea.vmem %s0, %s246
      %p248 = pneg %p39
      %p249 = pneg %p36
      %p250 = pneg %p60
      %p251 = pneg %p57
      %p252 = pneg %p81
      %p253 = pneg %p78
      %p254 = pneg %p102
      %p255 = pneg %p99
      %p256 = pneg %p123
      %p257 = pneg %p120
      %p258 = pneg %p144
      %p259 = pneg %p141
      %p260 = pneg %p165
      %p261 = pneg %p162
      %p262 = pneg %p191
      %p263 = pneg %p188
      %p264 = scmp.lt.s32.totalorder %s18, 1
      %s265 = scalar_select %p264, %s18, 1
      %s266 = smul.addr %s265, 32
      %s267 = smul.addr %s266, 8
      %s268 = scalar_lea.vmem %s7, %s267
      %p269 = scmp.lt.s32.totalorder %s18, 1
      %s270 = scalar_select %p269, %s18, 1
      %s271 = smul.addr %s270, 72
      %s272 = smul.addr %s271, 4
      %s273 = scalar_lea.vmem %s0, %s272
      %p274 = scmp.lt.s32.totalorder %s18, 1
      %s275 = scalar_select %p274, %s18, 1
      %s276 = smul.addr %s275, 32
      %s277 = smul.addr %s276, 8
      %s278 = scalar_lea.vmem %s7, %s277
      %v280 = vld [vmem:[%s273] sm:$0xf]
      %v281 = vld [vmem:[%s273 + $0x4] sm:$0xf]
      %v282 = vld [vmem:[%s273 + $0x8] sm:$0xf]
      %v283 = vld [vmem:[%s273 + $0xc] sm:$0xf]
      %v284 = vld [vmem:[%s273 + $0x10] sm:$0xf]
      %v285 = vld [vmem:[%s273 + $0x14] sm:$0xf]
      %v286 = vld [vmem:[%s273 + $0x18] sm:$0xf]
      %v287 = vld [vmem:[%s273 + $0x1c] sm:$0xf]
      %v288 = vld [vmem:[%s273 + $0x20] sm:$0xf]
      %v289 = vld [vmem:[%s273 + $0x24] sm:$0xf]
      %v290 = vld [vmem:[%s273 + $0x28] sm:$0xf]
      %v291 = vld [vmem:[%s273 + $0x2c] sm:$0xf]
      %v292 = vld [vmem:[%s273 + $0x30] sm:$0xf]
      %v293 = vld [vmem:[%s273 + $0x34] sm:$0xf]
      %v294 = vld [vmem:[%s273 + $0x38] sm:$0xf]
      %v295 = vld [vmem:[%s273 + $0x3c] sm:$0xf]
      %v296 = vld [vmem:[%s273 + $0x40] sm:$0xf]
      %v297 = vld [vmem:[%s273 + $0x44] sm:$0xf]
      %v298 = vld [vmem:[%s273 + $0x48] sm:$0xf]
      %v299 = vld [vmem:[%s273 + $0x4c] sm:$0xf]
      %v300 = vld [vmem:[%s273 + $0x50] sm:$0xf]
      %v301 = vld [vmem:[%s273 + $0x54] sm:$0xf]
      %v302 = vld [vmem:[%s273 + $0x58] sm:$0xf]
      %v303 = vld [vmem:[%s273 + $0x5c] sm:$0xf]
      %v304 = vld [vmem:[%s273 + $0x60] sm:$0xf]
      %v305 = vld [vmem:[%s273 + $0x64] sm:$0xf]
      %v306 = vld [vmem:[%s273 + $0x68] sm:$0xf]
      %v307 = vld [vmem:[%s273 + $0x6c] sm:$0xf]
      %v308 = vld [vmem:[%s273 + $0x70] sm:$0xf]
      %v309 = vld [vmem:[%s273 + $0x74] sm:$0xf]
      %v310 = vld [vmem:[%s273 + $0x78] sm:$0xf]
      %v311 = vld [vmem:[%s273 + $0x7c] sm:$0xf]
      %v312 = vld [vmem:[%s273 + $0x80] sm:$0xf]
      %v313 = vld [vmem:[%s273 + $0x84] sm:$0xf]
      %v314 = vld [vmem:[%s273 + $0x88] sm:$0xf]
      %v315 = vld [vmem:[%s273 + $0x8c] sm:$0xf]
      %v316 = vld [vmem:[%s273 + $0x90] sm:$0xf]
      %v317 = vld [vmem:[%s273 + $0x94] sm:$0xf]
      %v318 = vld [vmem:[%s273 + $0x98] sm:$0xf]
      %v319 = vld [vmem:[%s273 + $0x9c] sm:$0xf]
      %v320 = vld [vmem:[%s273 + $0xa0] sm:$0xf]
      %v321 = vld [vmem:[%s273 + $0xa4] sm:$0xf]
      %v322 = vld [vmem:[%s273 + $0xa8] sm:$0xf]
      %v323 = vld [vmem:[%s273 + $0xac] sm:$0xf]
      %v324 = vld [vmem:[%s273 + $0xb0] sm:$0xf]
      %v325 = vld [vmem:[%s273 + $0xb4] sm:$0xf]
      %v326 = vld [vmem:[%s273 + $0xb8] sm:$0xf]
      %v327 = vld [vmem:[%s273 + $0xbc] sm:$0xf]
      %v328 = vld [vmem:[%s273 + $0xc0] sm:$0xf]
      %v329 = vld [vmem:[%s273 + $0xc4] sm:$0xf]
      %v330 = vld [vmem:[%s273 + $0xc8] sm:$0xf]
      %v331 = vld [vmem:[%s273 + $0xcc] sm:$0xf]
      %v332 = vld [vmem:[%s273 + $0xd0] sm:$0xf]
      %v333 = vld [vmem:[%s273 + $0xd4] sm:$0xf]
      %v334 = vld [vmem:[%s273 + $0xd8] sm:$0xf]
      %v335 = vld [vmem:[%s273 + $0xdc] sm:$0xf]
      %v336 = vld [vmem:[%s273 + $0xe0] sm:$0xf]
      %v337 = vld [vmem:[%s273 + $0xe4] sm:$0xf]
      %v338 = vld [vmem:[%s273 + $0xe8] sm:$0xf]
      %v339 = vld [vmem:[%s273 + $0xec] sm:$0xf]
      %v340 = vld [vmem:[%s273 + $0xf0] sm:$0xf]
      %v341 = vld [vmem:[%s273 + $0xf4] sm:$0xf]
      %v342 = vld [vmem:[%s273 + $0xf8] sm:$0xf]
      %v343 = vld [vmem:[%s273 + $0xfc] sm:$0xf]
      %v344 = vld [vmem:[%s273 + $0x100] sm:$0xf]
      %v345 = vld [vmem:[%s273 + $0x104] sm:$0xf]
      %v346 = vld [vmem:[%s273 + $0x108] sm:$0xf]
      %v347 = vld [vmem:[%s273 + $0x10c] sm:$0xf]
      %v348 = vld [vmem:[%s273 + $0x110] sm:$0xf]
      %v349 = vld [vmem:[%s273 + $0x114] sm:$0xf]
      %v350 = vld [vmem:[%s273 + $0x118] sm:$0xf]
      %v351 = vld [vmem:[%s273 + $0x11c] sm:$0xf]
      %v352 = vld [vmem:[%s1] sm:$0x1]
      %v353 = vld [vmem:[%s1 + $0x1] sm:$0x1]
      %v354 = vld [vmem:[%s1 + $0x2] sm:$0x1]
      %v355 = vld [vmem:[%s1 + $0x3] sm:$0x1]
      %v356 = vld [vmem:[%s1 + $0x4] sm:$0x1]
      %v357 = vld [vmem:[%s1 + $0x5] sm:$0x1]
      %v358 = vld [vmem:[%s1 + $0x6] sm:$0x1]
      %v359 = vld [vmem:[%s1 + $0x7] sm:$0x1]
      %v360 = vld [vmem:[%s1 + $0x8] sm:$0x1]
      %v361 = vld [vmem:[%s2] sm:$0x1]
      %vm362 = vsmask.f32 256
      %vm363 = vsmask.f32 4368
      %vm364 = vmor %vm362, %vm363
      %v366 = vshrl.u32 %v280, 16
      %v368 = vrot.slane %v366, 7
      %v369 = vrot.slane %v368, 4
      %v371 = vshrl.u32 %v281, 16
      %v373 = vrot.slane %v371, 7
      %v374 = vshll.u32 %v281, 16
      %v376 = vor.u32 %v373, %v374
      %v377 = vsel %vm364, %v369, %v376
      %v378 = vrot.slane %v373, 4
      %v380 = vshrl.u32 %v282, 16
      %v382 = vrot.slane %v380, 7
      %v383 = vshll.u32 %v282, 16
      %v385 = vor.u32 %v382, %v383
      %v386 = vsel %vm364, %v378, %v385
      %v388 = vshrl.u32 %v284, 16
      %v390 = vrot.slane %v388, 7
      %v391 = vrot.slane %v390, 4
      %v393 = vshrl.u32 %v285, 16
      %v395 = vrot.slane %v393, 7
      %v396 = vshll.u32 %v285, 16
      %v398 = vor.u32 %v395, %v396
      %v399 = vsel %vm364, %v391, %v398
      %v400 = vrot.slane %v395, 4
      %v402 = vshrl.u32 %v286, 16
      %v404 = vrot.slane %v402, 7
      %v405 = vshll.u32 %v286, 16
      %v407 = vor.u32 %v404, %v405
      %v408 = vsel %vm364, %v400, %v407
      %v410 = vshrl.u32 %v288, 16
      %v412 = vrot.slane %v410, 7
      %v413 = vrot.slane %v412, 4
      %v415 = vshrl.u32 %v289, 16
      %v417 = vrot.slane %v415, 7
      %v418 = vshll.u32 %v289, 16
      %v420 = vor.u32 %v417, %v418
      %v421 = vsel %vm364, %v413, %v420
      %v422 = vrot.slane %v417, 4
      %v424 = vshrl.u32 %v290, 16
      %v426 = vrot.slane %v424, 7
      %v427 = vshll.u32 %v290, 16
      %v429 = vor.u32 %v426, %v427
      %v430 = vsel %vm364, %v422, %v429
      %v432 = vshrl.u32 %v292, 16
      %v434 = vrot.slane %v432, 7
      %v435 = vrot.slane %v434, 4
      %v437 = vshrl.u32 %v293, 16
      %v439 = vrot.slane %v437, 7
      %v440 = vshll.u32 %v293, 16
      %v442 = vor.u32 %v439, %v440
      %v443 = vsel %vm364, %v435, %v442
      %v444 = vrot.slane %v439, 4
      %v446 = vshrl.u32 %v294, 16
      %v448 = vrot.slane %v446, 7
      %v449 = vshll.u32 %v294, 16
      %v451 = vor.u32 %v448, %v449
      %v452 = vsel %vm364, %v444, %v451
      %v454 = vshrl.u32 %v296, 16
      %v456 = vrot.slane %v454, 7
      %v457 = vrot.slane %v456, 4
      %v459 = vshrl.u32 %v297, 16
      %v461 = vrot.slane %v459, 7
      %v462 = vshll.u32 %v297, 16
      %v464 = vor.u32 %v461, %v462
      %v465 = vsel %vm364, %v457, %v464
      %v466 = vrot.slane %v461, 4
      %v468 = vshrl.u32 %v298, 16
      %v470 = vrot.slane %v468, 7
      %v471 = vshll.u32 %v298, 16
      %v473 = vor.u32 %v470, %v471
      %v474 = vsel %vm364, %v466, %v473
      %v476 = vshrl.u32 %v300, 16
      %v478 = vrot.slane %v476, 7
      %v479 = vrot.slane %v478, 4
      %v481 = vshrl.u32 %v301, 16
      %v483 = vrot.slane %v481, 7
      %v484 = vshll.u32 %v301, 16
      %v486 = vor.u32 %v483, %v484
      %v487 = vsel %vm364, %v479, %v486
      %v488 = vrot.slane %v483, 4
      %v490 = vshrl.u32 %v302, 16
      %v492 = vrot.slane %v490, 7
      %v493 = vshll.u32 %v302, 16
      %v495 = vor.u32 %v492, %v493
      %v496 = vsel %vm364, %v488, %v495
      %v498 = vshrl.u32 %v304, 16
      %v500 = vrot.slane %v498, 7
      %v501 = vrot.slane %v500, 4
      %v503 = vshrl.u32 %v305, 16
      %v505 = vrot.slane %v503, 7
      %v506 = vshll.u32 %v305, 16
      %v508 = vor.u32 %v505, %v506
      %v509 = vsel %vm364, %v501, %v508
      %v510 = vrot.slane %v505, 4
      %v512 = vshrl.u32 %v306, 16
      %v514 = vrot.slane %v512, 7
      %v515 = vshll.u32 %v306, 16
      %v517 = vor.u32 %v514, %v515
      %v518 = vsel %vm364, %v510, %v517
      %v520 = vshrl.u32 %v308, 16
      %v522 = vrot.slane %v520, 7
      %v523 = vrot.slane %v522, 4
      %v525 = vshrl.u32 %v309, 16
      %v527 = vrot.slane %v525, 7
      %v528 = vshll.u32 %v309, 16
      %v530 = vor.u32 %v527, %v528
      %v531 = vsel %vm364, %v523, %v530
      %v532 = vrot.slane %v527, 4
      %v534 = vshrl.u32 %v310, 16
      %v536 = vrot.slane %v534, 7
      %v537 = vshll.u32 %v310, 16
      %v539 = vor.u32 %v536, %v537
      %v540 = vsel %vm364, %v532, %v539
      %v542 = vshrl.u32 %v312, 16
      %v544 = vrot.slane %v542, 7
      %v545 = vrot.slane %v544, 4
      %v547 = vshrl.u32 %v313, 16
      %v549 = vrot.slane %v547, 7
      %v550 = vshll.u32 %v313, 16
      %v552 = vor.u32 %v549, %v550
      %v553 = vsel %vm364, %v545, %v552
      %v554 = vrot.slane %v549, 4
      %v556 = vshrl.u32 %v314, 16
      %v558 = vrot.slane %v556, 7
      %v559 = vshll.u32 %v314, 16
      %v561 = vor.u32 %v558, %v559
      %v562 = vsel %vm364, %v554, %v561
      %v564 = vshrl.u32 %v316, 16
      %v566 = vrot.slane %v564, 7
      %v567 = vrot.slane %v566, 4
      %v569 = vshrl.u32 %v317, 16
      %v571 = vrot.slane %v569, 7
      %v572 = vshll.u32 %v317, 16
      %v574 = vor.u32 %v571, %v572
      %v575 = vsel %vm364, %v567, %v574
      %v576 = vrot.slane %v571, 4
      %v578 = vshrl.u32 %v318, 16
      %v580 = vrot.slane %v578, 7
      %v581 = vshll.u32 %v318, 16
      %v583 = vor.u32 %v580, %v581
      %v584 = vsel %vm364, %v576, %v583
      %v586 = vshrl.u32 %v320, 16
      %v588 = vrot.slane %v586, 7
      %v589 = vrot.slane %v588, 4
      %v591 = vshrl.u32 %v321, 16
      %v593 = vrot.slane %v591, 7
      %v594 = vshll.u32 %v321, 16
      %v596 = vor.u32 %v593, %v594
      %v597 = vsel %vm364, %v589, %v596
      %v598 = vrot.slane %v593, 4
      %v600 = vshrl.u32 %v322, 16
      %v602 = vrot.slane %v600, 7
      %v603 = vshll.u32 %v322, 16
      %v605 = vor.u32 %v602, %v603
      %v606 = vsel %vm364, %v598, %v605
      %v608 = vshrl.u32 %v324, 16
      %v610 = vrot.slane %v608, 7
      %v611 = vrot.slane %v610, 4
      %v613 = vshrl.u32 %v325, 16
      %v615 = vrot.slane %v613, 7
      %v616 = vshll.u32 %v325, 16
      %v618 = vor.u32 %v615, %v616
      %v619 = vsel %vm364, %v611, %v618
      %v620 = vrot.slane %v615, 4
      %v622 = vshrl.u32 %v326, 16
      %v624 = vrot.slane %v622, 7
      %v625 = vshll.u32 %v326, 16
      %v627 = vor.u32 %v624, %v625
      %v628 = vsel %vm364, %v620, %v627
      %v630 = vshrl.u32 %v328, 16
      %v632 = vrot.slane %v630, 7
      %v633 = vrot.slane %v632, 4
      %v635 = vshrl.u32 %v329, 16
      %v637 = vrot.slane %v635, 7
      %v638 = vshll.u32 %v329, 16
      %v640 = vor.u32 %v637, %v638
      %v641 = vsel %vm364, %v633, %v640
      %v642 = vrot.slane %v637, 4
      %v644 = vshrl.u32 %v330, 16
      %v646 = vrot.slane %v644, 7
      %v647 = vshll.u32 %v330, 16
      %v649 = vor.u32 %v646, %v647
      %v650 = vsel %vm364, %v642, %v649
      %v652 = vshrl.u32 %v332, 16
      %v654 = vrot.slane %v652, 7
      %v655 = vrot.slane %v654, 4
      %v657 = vshrl.u32 %v333, 16
      %v659 = vrot.slane %v657, 7
      %v660 = vshll.u32 %v333, 16
      %v662 = vor.u32 %v659, %v660
      %v663 = vsel %vm364, %v655, %v662
      %v664 = vrot.slane %v659, 4
      %v666 = vshrl.u32 %v334, 16
      %v668 = vrot.slane %v666, 7
      %v669 = vshll.u32 %v334, 16
      %v671 = vor.u32 %v668, %v669
      %v672 = vsel %vm364, %v664, %v671
      %v674 = vshrl.u32 %v336, 16
      %v676 = vrot.slane %v674, 7
      %v677 = vrot.slane %v676, 4
      %v679 = vshrl.u32 %v337, 16
      %v681 = vrot.slane %v679, 7
      %v682 = vshll.u32 %v337, 16
      %v684 = vor.u32 %v681, %v682
      %v685 = vsel %vm364, %v677, %v684
      %v686 = vrot.slane %v681, 4
      %v688 = vshrl.u32 %v338, 16
      %v690 = vrot.slane %v688, 7
      %v691 = vshll.u32 %v338, 16
      %v693 = vor.u32 %v690, %v691
      %v694 = vsel %vm364, %v686, %v693
      %v696 = vshrl.u32 %v340, 16
      %v698 = vrot.slane %v696, 7
      %v699 = vrot.slane %v698, 4
      %v701 = vshrl.u32 %v341, 16
      %v703 = vrot.slane %v701, 7
      %v704 = vshll.u32 %v341, 16
      %v706 = vor.u32 %v703, %v704
      %v707 = vsel %vm364, %v699, %v706
      %v708 = vrot.slane %v703, 4
      %v710 = vshrl.u32 %v342, 16
      %v712 = vrot.slane %v710, 7
      %v713 = vshll.u32 %v342, 16
      %v715 = vor.u32 %v712, %v713
      %v716 = vsel %vm364, %v708, %v715
      %v749 = vunpack.c.l.b16 %v281
      %v750 = vunpack.c.l.b16 %v282
      %v751 = vunpack.c.l.b16 %v285
      %v752 = vunpack.c.l.b16 %v286
      %v753 = vunpack.c.l.b16 %v289
      %v754 = vunpack.c.l.b16 %v290
      %v755 = vunpack.c.l.b16 %v293
      %v756 = vunpack.c.l.b16 %v294
      %v757 = vunpack.c.l.b16 %v297
      %v758 = vunpack.c.l.b16 %v298
      %v759 = vunpack.c.l.b16 %v301
      %v760 = vunpack.c.l.b16 %v302
      %v761 = vunpack.c.l.b16 %v305
      %v762 = vunpack.c.l.b16 %v306
      %v763 = vunpack.c.l.b16 %v309
      %v764 = vunpack.c.l.b16 %v310
      %v765 = vunpack.c.l.b16 %v313
      %v766 = vunpack.c.l.b16 %v314
      %v767 = vunpack.c.l.b16 %v317
      %v768 = vunpack.c.l.b16 %v318
      %v769 = vunpack.c.l.b16 %v321
      %v770 = vunpack.c.l.b16 %v322
      %v771 = vunpack.c.l.b16 %v325
      %v772 = vunpack.c.l.b16 %v326
      %v773 = vunpack.c.l.b16 %v329
      %v774 = vunpack.c.l.b16 %v330
      %v775 = vunpack.c.l.b16 %v333
      %v776 = vunpack.c.l.b16 %v334
      %v777 = vunpack.c.l.b16 %v337
      %v778 = vunpack.c.l.b16 %v338
      %v779 = vunpack.c.l.b16 %v341
      %v780 = vunpack.c.l.b16 %v342
      %v781 = vpack.c.b16 %v750, %v749
      %v782 = vpack.c.b16 %v752, %v751
      %v783 = vpack.c.b16 %v754, %v753
      %v784 = vpack.c.b16 %v756, %v755
      %v785 = vpack.c.b16 %v758, %v757
      %v786 = vpack.c.b16 %v760, %v759
      %v787 = vpack.c.b16 %v762, %v761
      %v788 = vpack.c.b16 %v764, %v763
      %v789 = vpack.c.b16 %v766, %v765
      %v790 = vpack.c.b16 %v768, %v767
      %v791 = vpack.c.b16 %v770, %v769
      %v792 = vpack.c.b16 %v772, %v771
      %v793 = vpack.c.b16 %v774, %v773
      %v794 = vpack.c.b16 %v776, %v775
      %v795 = vpack.c.b16 %v778, %v777
      %v796 = vpack.c.b16 %v780, %v779
      %vm797 = vcmask 15360
      %v799 = vsel %vm797, %v781, 0
      %v802 = vsel %vm797, %v782, 0
      %v805 = vsel %vm797, %v783, 0
      %v808 = vsel %vm797, %v784, 0
      %v811 = vsel %vm797, %v785, 0
      %v814 = vsel %vm797, %v786, 0
      %v817 = vsel %vm797, %v787, 0
      %v820 = vsel %vm797, %v788, 0
      %v823 = vsel %vm797, %v789, 0
      %v826 = vsel %vm797, %v790, 0
      %v829 = vsel %vm797, %v791, 0
      %v832 = vsel %vm797, %v792, 0
      %v835 = vsel %vm797, %v793, 0
      %v838 = vsel %vm797, %v794, 0
      %v841 = vsel %vm797, %v795, 0
      %v844 = vsel %vm797, %v796, 0
      %vm846 = vcmask 1040384
      %v848 = vsel %vm846, %v353, 0
      %850 = vmatprep.subr.bf16.mxu0 0
      %851 = vmatpush1.bf16.msra.mxu0 0
      %852 = vmatprep.subr.bf16.mxu0 0
      %853 = vmatpush1.bf16.msra.mxu0 0
      %854 = vmatprep.subr.bf16.mxu0 0
      %855 = vmatpush1.bf16.msra.mxu0 0
      %856 = vmatprep.subr.bf16.mxu0 0
      %857 = vmatpush1.bf16.msra.mxu0 0
      %858 = vmatprep.subr.bf16.mxu0 0
      %859 = vmatpush1.bf16.msra.mxu0 0
      %860 = vmatprep.subr.bf16.mxu0 0
      %861 = vmatpush1.bf16.msra.mxu0 0
      %862 = vmatprep.subr.bf16.mxu0 0
      %863 = vmatpush1.bf16.msra.mxu0 0
      %864 = vmatprep.subr.bf16.mxu0 0
      %865 = vmatpush1.bf16.msra.mxu0 %v848
      %866 = vmatprep.subr.bf16.mxu0 0
      %867 = vmatpush2.bf16.msra.mxu0 0
      %868 = vmatprep.subr.bf16.mxu0 0
      %869 = vmatpush2.bf16.msra.mxu0 0
      %870 = vmatprep.subr.bf16.mxu0 0
      %871 = vmatpush2.bf16.msra.mxu0 0
      %872 = vmatprep.subr.bf16.mxu0 0
      %873 = vmatpush2.bf16.msra.mxu0 0
      %874 = vmatprep.subr.bf16.mxu0 0
      %875 = vmatpush2.bf16.msra.mxu0 0
      %876 = vmatprep.subr.bf16.mxu0 0
      %877 = vmatpush2.bf16.msra.mxu0 0
      %878 = vmatprep.subr.bf16.mxu0 0
      %879 = vmatpush2.bf16.msra.mxu0 0
      %880 = vmatprep.subr.bf16.mxu0 0
      %881 = vmatpush2.bf16.msra.mxu0 0
      %882 = vmatprep.mubr.bf16.mxu0 0
      %883 = vmatmul.mubr.bf16.gmra.mxu0 %v799
      %v884 = vpop.f32.mrf.mxu0
      %v885 = vadd.f32 0.0, %v884
      %v886 = vpop.f32.mrf.mxu0
      %v887 = vpop.f32.mrf.mxu0
      %v888 = vadd.f32 0.0, %v887
      %v889 = vpop.f32.mrf.mxu0
      %890 = vmatprep.mubr.bf16.mxu0 0
      %891 = vmatmul.mubr.bf16.gmra.mxu0 %v802
      %v892 = vpop.f32.mrf.mxu0
      %v893 = vadd.f32 0.0, %v892
      %v894 = vpop.f32.mrf.mxu0
      %v895 = vpop.f32.mrf.mxu0
      %v896 = vadd.f32 0.0, %v895
      %v897 = vpop.f32.mrf.mxu0
      %898 = vmatprep.mubr.bf16.mxu0 0
      %899 = vmatmul.mubr.bf16.gmra.mxu0 %v805
      %v900 = vpop.f32.mrf.mxu0
      %v901 = vadd.f32 0.0, %v900
      %v902 = vpop.f32.mrf.mxu0
      %v903 = vpop.f32.mrf.mxu0
      %v904 = vadd.f32 0.0, %v903
      %v905 = vpop.f32.mrf.mxu0
      %906 = vmatprep.mubr.bf16.mxu0 0
      %907 = vmatmul.mubr.bf16.gmra.mxu0 %v808
      %v908 = vpop.f32.mrf.mxu0
      %v909 = vadd.f32 0.0, %v908
      %v910 = vpop.f32.mrf.mxu0
      %v911 = vpop.f32.mrf.mxu0
      %v912 = vadd.f32 0.0, %v911
      %v913 = vpop.f32.mrf.mxu0
      %914 = vmatprep.mubr.bf16.mxu0 0
      %915 = vmatmul.mubr.bf16.gmra.mxu0 %v811
      %v916 = vpop.f32.mrf.mxu0
      %v917 = vadd.f32 0.0, %v916
      %v918 = vpop.f32.mrf.mxu0
      %v919 = vpop.f32.mrf.mxu0
      %v920 = vadd.f32 0.0, %v919
      %v921 = vpop.f32.mrf.mxu0
      %922 = vmatprep.mubr.bf16.mxu0 0
      %923 = vmatmul.mubr.bf16.gmra.mxu0 %v814
      %v924 = vpop.f32.mrf.mxu0
      %v925 = vadd.f32 0.0, %v924
      %v926 = vpop.f32.mrf.mxu0
      %v927 = vpop.f32.mrf.mxu0
      %v928 = vadd.f32 0.0, %v927
      %v929 = vpop.f32.mrf.mxu0
      %930 = vmatprep.mubr.bf16.mxu0 0
      %931 = vmatmul.mubr.bf16.gmra.mxu0 %v817
      %v932 = vpop.f32.mrf.mxu0
      %v933 = vadd.f32 0.0, %v932
      %v934 = vpop.f32.mrf.mxu0
      %v935 = vpop.f32.mrf.mxu0
      %v936 = vadd.f32 0.0, %v935
      %v937 = vpop.f32.mrf.mxu0
      %938 = vmatprep.mubr.bf16.mxu0 0
      %939 = vmatmul.mubr.bf16.gmra.mxu0 %v820
      %v940 = vpop.f32.mrf.mxu0
      %v941 = vadd.f32 0.0, %v940
      %v942 = vpop.f32.mrf.mxu0
      %v943 = vpop.f32.mrf.mxu0
      %v944 = vadd.f32 0.0, %v943
      %v945 = vpop.f32.mrf.mxu0
      %946 = vmatprep.mubr.bf16.mxu0 0
      %947 = vmatmul.mubr.bf16.gmra.mxu0 %v823
      %v948 = vpop.f32.mrf.mxu0
      %v949 = vadd.f32 0.0, %v948
      %v950 = vpop.f32.mrf.mxu0
      %v951 = vpop.f32.mrf.mxu0
      %v952 = vadd.f32 0.0, %v951
      %v953 = vpop.f32.mrf.mxu0
      %954 = vmatprep.mubr.bf16.mxu0 0
      %955 = vmatmul.mubr.bf16.gmra.mxu0 %v826
      %v956 = vpop.f32.mrf.mxu0
      %v957 = vadd.f32 0.0, %v956
      %v958 = vpop.f32.mrf.mxu0
      %v959 = vpop.f32.mrf.mxu0
      %v960 = vadd.f32 0.0, %v959
      %v961 = vpop.f32.mrf.mxu0
      %962 = vmatprep.mubr.bf16.mxu0 0
      %963 = vmatmul.mubr.bf16.gmra.mxu0 %v829
      %v964 = vpop.f32.mrf.mxu0
      %v965 = vadd.f32 0.0, %v964
      %v966 = vpop.f32.mrf.mxu0
      %v967 = vpop.f32.mrf.mxu0
      %v968 = vadd.f32 0.0, %v967
      %v969 = vpop.f32.mrf.mxu0
      %970 = vmatprep.mubr.bf16.mxu0 0
      %971 = vmatmul.mubr.bf16.gmra.mxu0 %v832
      %v972 = vpop.f32.mrf.mxu0
      %v973 = vadd.f32 0.0, %v972
      %v974 = vpop.f32.mrf.mxu0
      %v975 = vpop.f32.mrf.mxu0
      %v976 = vadd.f32 0.0, %v975
      %v977 = vpop.f32.mrf.mxu0
      %978 = vmatprep.mubr.bf16.mxu0 0
      %979 = vmatmul.mubr.bf16.gmra.mxu0 %v835
      %v980 = vpop.f32.mrf.mxu0
      %v981 = vadd.f32 0.0, %v980
      %v982 = vpop.f32.mrf.mxu0
      %v983 = vpop.f32.mrf.mxu0
      %v984 = vadd.f32 0.0, %v983
      %v985 = vpop.f32.mrf.mxu0
      %986 = vmatprep.mubr.bf16.mxu0 0
      %987 = vmatmul.mubr.bf16.gmra.mxu0 %v838
      %v988 = vpop.f32.mrf.mxu0
      %v989 = vadd.f32 0.0, %v988
      %v990 = vpop.f32.mrf.mxu0
      %v991 = vpop.f32.mrf.mxu0
      %v992 = vadd.f32 0.0, %v991
      %v993 = vpop.f32.mrf.mxu0
      %994 = vmatprep.mubr.bf16.mxu0 0
      %995 = vmatmul.mubr.bf16.gmra.mxu0 %v841
      %v996 = vpop.f32.mrf.mxu0
      %v997 = vadd.f32 0.0, %v996
      %v998 = vpop.f32.mrf.mxu0
      %v999 = vpop.f32.mrf.mxu0
      %v1000 = vadd.f32 0.0, %v999
      %v1001 = vpop.f32.mrf.mxu0
      %1002 = vmatprep.mubr.bf16.mxu0 0
      %1003 = vmatmul.mubr.bf16.gmra.mxu0 %v844
      %v1004 = vpop.f32.mrf.mxu0
      %v1005 = vadd.f32 0.0, %v1004
      %v1006 = vpop.f32.mrf.mxu0
      %v1007 = vpop.f32.mrf.mxu0
      %v1008 = vadd.f32 0.0, %v1007
      %v1009 = vpop.f32.mrf.mxu0
      %1010 = vdwg.mxu0
      %v1011 = vunpack.c.l.b16 %v377
      %v1012 = vunpack.c.l.b16 %v386
      %v1013 = vunpack.c.l.b16 %v399
      %v1014 = vunpack.c.l.b16 %v408
      %v1015 = vunpack.c.l.b16 %v421
      %v1016 = vunpack.c.l.b16 %v430
      %v1017 = vunpack.c.l.b16 %v443
      %v1018 = vunpack.c.l.b16 %v452
      %v1019 = vunpack.c.l.b16 %v465
      %v1020 = vunpack.c.l.b16 %v474
      %v1021 = vunpack.c.l.b16 %v487
      %v1022 = vunpack.c.l.b16 %v496
      %v1023 = vunpack.c.l.b16 %v509
      %v1024 = vunpack.c.l.b16 %v518
      %v1025 = vunpack.c.l.b16 %v531
      %v1026 = vunpack.c.l.b16 %v540
      %v1027 = vunpack.c.l.b16 %v553
      %v1028 = vunpack.c.l.b16 %v562
      %v1029 = vunpack.c.l.b16 %v575
      %v1030 = vunpack.c.l.b16 %v584
      %v1031 = vunpack.c.l.b16 %v597
      %v1032 = vunpack.c.l.b16 %v606
      %v1033 = vunpack.c.l.b16 %v619
      %v1034 = vunpack.c.l.b16 %v628
      %v1035 = vunpack.c.l.b16 %v641
      %v1036 = vunpack.c.l.b16 %v650
      %v1037 = vunpack.c.l.b16 %v663
      %v1038 = vunpack.c.l.b16 %v672
      %v1039 = vunpack.c.l.b16 %v685
      %v1040 = vunpack.c.l.b16 %v694
      %v1041 = vunpack.c.l.b16 %v707
      %v1042 = vunpack.c.l.b16 %v716
      %v1043 = vpack.c.b16 %v1012, %v1011
      %v1044 = vpack.c.b16 %v1014, %v1013
      %v1045 = vpack.c.b16 %v1016, %v1015
      %v1046 = vpack.c.b16 %v1018, %v1017
      %v1047 = vpack.c.b16 %v1020, %v1019
      %v1048 = vpack.c.b16 %v1022, %v1021
      %v1049 = vpack.c.b16 %v1024, %v1023
      %v1050 = vpack.c.b16 %v1026, %v1025
      %v1051 = vpack.c.b16 %v1028, %v1027
      %v1052 = vpack.c.b16 %v1030, %v1029
      %v1053 = vpack.c.b16 %v1032, %v1031
      %v1054 = vpack.c.b16 %v1034, %v1033
      %v1055 = vpack.c.b16 %v1036, %v1035
      %v1056 = vpack.c.b16 %v1038, %v1037
      %v1057 = vpack.c.b16 %v1040, %v1039
      %v1058 = vpack.c.b16 %v1042, %v1041
      %v1060 = vsel %vm797, %v1043, 0
      %v1063 = vsel %vm797, %v1044, 0
      %v1066 = vsel %vm797, %v1045, 0
      %v1069 = vsel %vm797, %v1046, 0
      %v1072 = vsel %vm797, %v1047, 0
      %v1075 = vsel %vm797, %v1048, 0
      %v1078 = vsel %vm797, %v1049, 0
      %v1081 = vsel %vm797, %v1050, 0
      %v1084 = vsel %vm797, %v1051, 0
      %v1087 = vsel %vm797, %v1052, 0
      %v1090 = vsel %vm797, %v1053, 0
      %v1093 = vsel %vm797, %v1054, 0
      %v1096 = vsel %vm797, %v1055, 0
      %v1099 = vsel %vm797, %v1056, 0
      %v1102 = vsel %vm797, %v1057, 0
      %v1105 = vsel %vm797, %v1058, 0
      %v1108 = vsel %vm846, %v352, 0
      %1110 = vmatprep.subr.bf16.mxu0 0
      %1111 = vmatpush1.bf16.msra.mxu0 0
      %1112 = vmatprep.subr.bf16.mxu0 0
      %1113 = vmatpush1.bf16.msra.mxu0 0
      %1114 = vmatprep.subr.bf16.mxu0 0
      %1115 = vmatpush1.bf16.msra.mxu0 0
      %1116 = vmatprep.subr.bf16.mxu0 0
      %1117 = vmatpush1.bf16.msra.mxu0 0
      %1118 = vmatprep.subr.bf16.mxu0 0
      %1119 = vmatpush1.bf16.msra.mxu0 0
      %1120 = vmatprep.subr.bf16.mxu0 0
      %1121 = vmatpush1.bf16.msra.mxu0 0
      %1122 = vmatprep.subr.bf16.mxu0 0
      %1123 = vmatpush1.bf16.msra.mxu0 0
      %1124 = vmatprep.subr.bf16.mxu0 0
      %1125 = vmatpush1.bf16.msra.mxu0 %v1108
      %1126 = vmatprep.subr.bf16.mxu0 0
      %1127 = vmatpush2.bf16.msra.mxu0 0
      %1128 = vmatprep.subr.bf16.mxu0 0
      %1129 = vmatpush2.bf16.msra.mxu0 0
      %1130 = vmatprep.subr.bf16.mxu0 0
      %1131 = vmatpush2.bf16.msra.mxu0 0
      %1132 = vmatprep.subr.bf16.mxu0 0
      %1133 = vmatpush2.bf16.msra.mxu0 0
      %1134 = vmatprep.subr.bf16.mxu0 0
      %1135 = vmatpush2.bf16.msra.mxu0 0
      %1136 = vmatprep.subr.bf16.mxu0 0
      %1137 = vmatpush2.bf16.msra.mxu0 0
      %1138 = vmatprep.subr.bf16.mxu0 0
      %1139 = vmatpush2.bf16.msra.mxu0 0
      %1140 = vmatprep.subr.bf16.mxu0 0
      %1141 = vmatpush2.bf16.msra.mxu0 0
      %1142 = vmatprep.mubr.bf16.mxu0 0
      %1143 = vmatmul.mubr.bf16.gmra.mxu0 %v1060
      %v1144 = vpop.f32.mrf.mxu0
      %v1145 = vadd.f32 %v885, %v1144
      %v1146 = vpop.f32.mrf.mxu0
      %v1147 = vpop.f32.mrf.mxu0
      %v1148 = vadd.f32 %v888, %v1147
      %v1149 = vpop.f32.mrf.mxu0
      %1150 = vmatprep.mubr.bf16.mxu0 0
      %1151 = vmatmul.mubr.bf16.gmra.mxu0 %v1063
      %v1152 = vpop.f32.mrf.mxu0
      %v1153 = vadd.f32 %v893, %v1152
      %v1154 = vpop.f32.mrf.mxu0
      %v1155 = vpop.f32.mrf.mxu0
      %v1156 = vadd.f32 %v896, %v1155
      %v1157 = vpop.f32.mrf.mxu0
      %1158 = vmatprep.mubr.bf16.mxu0 0
      %1159 = vmatmul.mubr.bf16.gmra.mxu0 %v1066
      %v1160 = vpop.f32.mrf.mxu0
      %v1161 = vadd.f32 %v901, %v1160
      %v1162 = vpop.f32.mrf.mxu0
      %v1163 = vpop.f32.mrf.mxu0
      %v1164 = vadd.f32 %v904, %v1163
      %v1165 = vpop.f32.mrf.mxu0
      %1166 = vmatprep.mubr.bf16.mxu0 0
      %1167 = vmatmul.mubr.bf16.gmra.mxu0 %v1069
      %v1168 = vpop.f32.mrf.mxu0
      %v1169 = vadd.f32 %v909, %v1168
      %v1170 = vpop.f32.mrf.mxu0
      %v1171 = vpop.f32.mrf.mxu0
      %v1172 = vadd.f32 %v912, %v1171
      %v1173 = vpop.f32.mrf.mxu0
      %1174 = vmatprep.mubr.bf16.mxu0 0
      %1175 = vmatmul.mubr.bf16.gmra.mxu0 %v1072
      %v1176 = vpop.f32.mrf.mxu0
      %v1177 = vadd.f32 %v917, %v1176
      %v1178 = vpop.f32.mrf.mxu0
      %v1179 = vpop.f32.mrf.mxu0
      %v1180 = vadd.f32 %v920, %v1179
      %v1181 = vpop.f32.mrf.mxu0
      %1182 = vmatprep.mubr.bf16.mxu0 0
      %1183 = vmatmul.mubr.bf16.gmra.mxu0 %v1075
      %v1184 = vpop.f32.mrf.mxu0
      %v1185 = vadd.f32 %v925, %v1184
      %v1186 = vpop.f32.mrf.mxu0
      %v1187 = vpop.f32.mrf.mxu0
      %v1188 = vadd.f32 %v928, %v1187
      %v1189 = vpop.f32.mrf.mxu0
      %1190 = vmatprep.mubr.bf16.mxu0 0
      %1191 = vmatmul.mubr.bf16.gmra.mxu0 %v1078
      %v1192 = vpop.f32.mrf.mxu0
      %v1193 = vadd.f32 %v933, %v1192
      %v1194 = vpop.f32.mrf.mxu0
      %v1195 = vpop.f32.mrf.mxu0
      %v1196 = vadd.f32 %v936, %v1195
      %v1197 = vpop.f32.mrf.mxu0
      %1198 = vmatprep.mubr.bf16.mxu0 0
      %1199 = vmatmul.mubr.bf16.gmra.mxu0 %v1081
      %v1200 = vpop.f32.mrf.mxu0
      %v1201 = vadd.f32 %v941, %v1200
      %v1202 = vpop.f32.mrf.mxu0
      %v1203 = vpop.f32.mrf.mxu0
      %v1204 = vadd.f32 %v944, %v1203
      %v1205 = vpop.f32.mrf.mxu0
      %1206 = vmatprep.mubr.bf16.mxu0 0
      %1207 = vmatmul.mubr.bf16.gmra.mxu0 %v1084
      %v1208 = vpop.f32.mrf.mxu0
      %v1209 = vadd.f32 %v949, %v1208
      %v1210 = vpop.f32.mrf.mxu0
      %v1211 = vpop.f32.mrf.mxu0
      %v1212 = vadd.f32 %v952, %v1211
      %v1213 = vpop.f32.mrf.mxu0
      %1214 = vmatprep.mubr.bf16.mxu0 0
      %1215 = vmatmul.mubr.bf16.gmra.mxu0 %v1087
      %v1216 = vpop.f32.mrf.mxu0
      %v1217 = vadd.f32 %v957, %v1216
      %v1218 = vpop.f32.mrf.mxu0
      %v1219 = vpop.f32.mrf.mxu0
      %v1220 = vadd.f32 %v960, %v1219
      %v1221 = vpop.f32.mrf.mxu0
      %1222 = vmatprep.mubr.bf16.mxu0 0
      %1223 = vmatmul.mubr.bf16.gmra.mxu0 %v1090
      %v1224 = vpop.f32.mrf.mxu0
      %v1225 = vadd.f32 %v965, %v1224
      %v1226 = vpop.f32.mrf.mxu0
      %v1227 = vpop.f32.mrf.mxu0
      %v1228 = vadd.f32 %v968, %v1227
      %v1229 = vpop.f32.mrf.mxu0
      %1230 = vmatprep.mubr.bf16.mxu0 0
      %1231 = vmatmul.mubr.bf16.gmra.mxu0 %v1093
      %v1232 = vpop.f32.mrf.mxu0
      %v1233 = vadd.f32 %v973, %v1232
      %v1234 = vpop.f32.mrf.mxu0
      %v1235 = vpop.f32.mrf.mxu0
      %v1236 = vadd.f32 %v976, %v1235
      %v1237 = vpop.f32.mrf.mxu0
      %1238 = vmatprep.mubr.bf16.mxu0 0
      %1239 = vmatmul.mubr.bf16.gmra.mxu0 %v1096
      %v1240 = vpop.f32.mrf.mxu0
      %v1241 = vadd.f32 %v981, %v1240
      %v1242 = vpop.f32.mrf.mxu0
      %v1243 = vpop.f32.mrf.mxu0
      %v1244 = vadd.f32 %v984, %v1243
      %v1245 = vpop.f32.mrf.mxu0
      %1246 = vmatprep.mubr.bf16.mxu0 0
      %1247 = vmatmul.mubr.bf16.gmra.mxu0 %v1099
      %v1248 = vpop.f32.mrf.mxu0
      %v1249 = vadd.f32 %v989, %v1248
      %v1250 = vpop.f32.mrf.mxu0
      %v1251 = vpop.f32.mrf.mxu0
      %v1252 = vadd.f32 %v992, %v1251
      %v1253 = vpop.f32.mrf.mxu0
      %1254 = vmatprep.mubr.bf16.mxu0 0
      %1255 = vmatmul.mubr.bf16.gmra.mxu0 %v1102
      %v1256 = vpop.f32.mrf.mxu0
      %v1257 = vadd.f32 %v997, %v1256
      %v1258 = vpop.f32.mrf.mxu0
      %v1259 = vpop.f32.mrf.mxu0
      %v1260 = vadd.f32 %v1000, %v1259
      %v1261 = vpop.f32.mrf.mxu0
      %1262 = vmatprep.mubr.bf16.mxu0 0
      %1263 = vmatmul.mubr.bf16.gmra.mxu0 %v1105
      %v1264 = vpop.f32.mrf.mxu0
      %v1265 = vadd.f32 %v1005, %v1264
      %v1266 = vpop.f32.mrf.mxu0
      %v1267 = vpop.f32.mrf.mxu0
      %v1268 = vadd.f32 %v1008, %v1267
      %v1269 = vpop.f32.mrf.mxu0
      %1270 = vdwg.mxu0
      %vm1271 = vsmask.f32 3328
      %vm1272 = vsmask.f32 7440
      %vm1273 = vmor %vm1271, %vm1272
      %v1274 = vrot.slane %v371, 4
      %v1275 = vrot.slane %v374, 5
      %v1276 = vor.u32 %v1274, %v1275
      %v1277 = vrot.slane %v1276, 4
      %v1278 = vrot.slane %v383, 5
      %v1279 = vsel %vm1273, %v1277, %v1278
      %v1280 = vrot.slane %v380, 4
      %v1281 = vor.u32 %v1280, %v1278
      %v1282 = vrot.slane %v1281, 4
      %v1284 = vshll.u32 %v283, 16
      %v1286 = vrot.slane %v1284, 5
      %v1287 = vsel %vm1273, %v1282, %v1286
      %v1288 = vrot.slane %v393, 4
      %v1289 = vrot.slane %v396, 5
      %v1290 = vor.u32 %v1288, %v1289
      %v1291 = vrot.slane %v1290, 4
      %v1292 = vrot.slane %v405, 5
      %v1293 = vsel %vm1273, %v1291, %v1292
      %v1294 = vrot.slane %v402, 4
      %v1295 = vor.u32 %v1294, %v1292
      %v1296 = vrot.slane %v1295, 4
      %v1298 = vshll.u32 %v287, 16
      %v1300 = vrot.slane %v1298, 5
      %v1301 = vsel %vm1273, %v1296, %v1300
      %v1302 = vrot.slane %v415, 4
      %v1303 = vrot.slane %v418, 5
      %v1304 = vor.u32 %v1302, %v1303
      %v1305 = vrot.slane %v1304, 4
      %v1306 = vrot.slane %v427, 5
      %v1307 = vsel %vm1273, %v1305, %v1306
      %v1308 = vrot.slane %v424, 4
      %v1309 = vor.u32 %v1308, %v1306
      %v1310 = vrot.slane %v1309, 4
      %v1312 = vshll.u32 %v291, 16
      %v1314 = vrot.slane %v1312, 5
      %v1315 = vsel %vm1273, %v1310, %v1314
      %v1316 = vrot.slane %v437, 4
      %v1317 = vrot.slane %v440, 5
      %v1318 = vor.u32 %v1316, %v1317
      %v1319 = vrot.slane %v1318, 4
      %v1320 = vrot.slane %v449, 5
      %v1321 = vsel %vm1273, %v1319, %v1320
      %v1322 = vrot.slane %v446, 4
      %v1323 = vor.u32 %v1322, %v1320
      %v1324 = vrot.slane %v1323, 4
      %v1326 = vshll.u32 %v295, 16
      %v1328 = vrot.slane %v1326, 5
      %v1329 = vsel %vm1273, %v1324, %v1328
      %v1330 = vrot.slane %v459, 4
      %v1331 = vrot.slane %v462, 5
      %v1332 = vor.u32 %v1330, %v1331
      %v1333 = vrot.slane %v1332, 4
      %v1334 = vrot.slane %v471, 5
      %v1335 = vsel %vm1273, %v1333, %v1334
      %v1336 = vrot.slane %v468, 4
      %v1337 = vor.u32 %v1336, %v1334
      %v1338 = vrot.slane %v1337, 4
      %v1340 = vshll.u32 %v299, 16
      %v1342 = vrot.slane %v1340, 5
      %v1343 = vsel %vm1273, %v1338, %v1342
      %v1344 = vrot.slane %v481, 4
      %v1345 = vrot.slane %v484, 5
      %v1346 = vor.u32 %v1344, %v1345
      %v1347 = vrot.slane %v1346, 4
      %v1348 = vrot.slane %v493, 5
      %v1349 = vsel %vm1273, %v1347, %v1348
      %v1350 = vrot.slane %v490, 4
      %v1351 = vor.u32 %v1350, %v1348
      %v1352 = vrot.slane %v1351, 4
      %v1354 = vshll.u32 %v303, 16
      %v1356 = vrot.slane %v1354, 5
      %v1357 = vsel %vm1273, %v1352, %v1356
      %v1358 = vrot.slane %v503, 4
      %v1359 = vrot.slane %v506, 5
      %v1360 = vor.u32 %v1358, %v1359
      %v1361 = vrot.slane %v1360, 4
      %v1362 = vrot.slane %v515, 5
      %v1363 = vsel %vm1273, %v1361, %v1362
      %v1364 = vrot.slane %v512, 4
      %v1365 = vor.u32 %v1364, %v1362
      %v1366 = vrot.slane %v1365, 4
      %v1368 = vshll.u32 %v307, 16
      %v1370 = vrot.slane %v1368, 5
      %v1371 = vsel %vm1273, %v1366, %v1370
      %v1372 = vrot.slane %v525, 4
      %v1373 = vrot.slane %v528, 5
      %v1374 = vor.u32 %v1372, %v1373
      %v1375 = vrot.slane %v1374, 4
      %v1376 = vrot.slane %v537, 5
      %v1377 = vsel %vm1273, %v1375, %v1376
      %v1378 = vrot.slane %v534, 4
      %v1379 = vor.u32 %v1378, %v1376
      %v1380 = vrot.slane %v1379, 4
      %v1382 = vshll.u32 %v311, 16
      %v1384 = vrot.slane %v1382, 5
      %v1385 = vsel %vm1273, %v1380, %v1384
      %v1386 = vrot.slane %v547, 4
      %v1387 = vrot.slane %v550, 5
      %v1388 = vor.u32 %v1386, %v1387
      %v1389 = vrot.slane %v1388, 4
      %v1390 = vrot.slane %v559, 5
      %v1391 = vsel %vm1273, %v1389, %v1390
      %v1392 = vrot.slane %v556, 4
      %v1393 = vor.u32 %v1392, %v1390
      %v1394 = vrot.slane %v1393, 4
      %v1396 = vshll.u32 %v315, 16
      %v1398 = vrot.slane %v1396, 5
      %v1399 = vsel %vm1273, %v1394, %v1398
      %v1400 = vrot.slane %v569, 4
      %v1401 = vrot.slane %v572, 5
      %v1402 = vor.u32 %v1400, %v1401
      %v1403 = vrot.slane %v1402, 4
      %v1404 = vrot.slane %v581, 5
      %v1405 = vsel %vm1273, %v1403, %v1404
      %v1406 = vrot.slane %v578, 4
      %v1407 = vor.u32 %v1406, %v1404
      %v1408 = vrot.slane %v1407, 4
      %v1410 = vshll.u32 %v319, 16
      %v1412 = vrot.slane %v1410, 5
      %v1413 = vsel %vm1273, %v1408, %v1412
      %v1414 = vrot.slane %v591, 4
      %v1415 = vrot.slane %v594, 5
      %v1416 = vor.u32 %v1414, %v1415
      %v1417 = vrot.slane %v1416, 4
      %v1418 = vrot.slane %v603, 5
      %v1419 = vsel %vm1273, %v1417, %v1418
      %v1420 = vrot.slane %v600, 4
      %v1421 = vor.u32 %v1420, %v1418
      %v1422 = vrot.slane %v1421, 4
      %v1424 = vshll.u32 %v323, 16
      %v1426 = vrot.slane %v1424, 5
      %v1427 = vsel %vm1273, %v1422, %v1426
      %v1428 = vrot.slane %v613, 4
      %v1429 = vrot.slane %v616, 5
      %v1430 = vor.u32 %v1428, %v1429
      %v1431 = vrot.slane %v1430, 4
      %v1432 = vrot.slane %v625, 5
      %v1433 = vsel %vm1273, %v1431, %v1432
      %v1434 = vrot.slane %v622, 4
      %v1435 = vor.u32 %v1434, %v1432
      %v1436 = vrot.slane %v1435, 4
      %v1438 = vshll.u32 %v327, 16
      %v1440 = vrot.slane %v1438, 5
      %v1441 = vsel %vm1273, %v1436, %v1440
      %v1442 = vrot.slane %v635, 4
      %v1443 = vrot.slane %v638, 5
      %v1444 = vor.u32 %v1442, %v1443
      %v1445 = vrot.slane %v1444, 4
      %v1446 = vrot.slane %v647, 5
      %v1447 = vsel %vm1273, %v1445, %v1446
      %v1448 = vrot.slane %v644, 4
      %v1449 = vor.u32 %v1448, %v1446
      %v1450 = vrot.slane %v1449, 4
      %v1452 = vshll.u32 %v331, 16
      %v1454 = vrot.slane %v1452, 5
      %v1455 = vsel %vm1273, %v1450, %v1454
      %v1456 = vrot.slane %v657, 4
      %v1457 = vrot.slane %v660, 5
      %v1458 = vor.u32 %v1456, %v1457
      %v1459 = vrot.slane %v1458, 4
      %v1460 = vrot.slane %v669, 5
      %v1461 = vsel %vm1273, %v1459, %v1460
      %v1462 = vrot.slane %v666, 4
      %v1463 = vor.u32 %v1462, %v1460
      %v1464 = vrot.slane %v1463, 4
      %v1466 = vshll.u32 %v335, 16
      %v1468 = vrot.slane %v1466, 5
      %v1469 = vsel %vm1273, %v1464, %v1468
      %v1470 = vrot.slane %v679, 4
      %v1471 = vrot.slane %v682, 5
      %v1472 = vor.u32 %v1470, %v1471
      %v1473 = vrot.slane %v1472, 4
      %v1474 = vrot.slane %v691, 5
      %v1475 = vsel %vm1273, %v1473, %v1474
      %v1476 = vrot.slane %v688, 4
      %v1477 = vor.u32 %v1476, %v1474
      %v1478 = vrot.slane %v1477, 4
      %v1480 = vshll.u32 %v339, 16
      %v1482 = vrot.slane %v1480, 5
      %v1483 = vsel %vm1273, %v1478, %v1482
      %v1484 = vrot.slane %v701, 4
      %v1485 = vrot.slane %v704, 5
      %v1486 = vor.u32 %v1484, %v1485
      %v1487 = vrot.slane %v1486, 4
      %v1488 = vrot.slane %v713, 5
      %v1489 = vsel %vm1273, %v1487, %v1488
      %v1490 = vrot.slane %v710, 4
      %v1491 = vor.u32 %v1490, %v1488
      %v1492 = vrot.slane %v1491, 4
      %v1494 = vshll.u32 %v343, 16
      %v1496 = vrot.slane %v1494, 5
      %v1497 = vsel %vm1273, %v1492, %v1496
      %v1498 = vunpack.c.l.b16 %v1279
      %v1499 = vunpack.c.l.b16 %v1287
      %v1500 = vunpack.c.l.b16 %v1293
      %v1501 = vunpack.c.l.b16 %v1301
      %v1502 = vunpack.c.l.b16 %v1307
      %v1503 = vunpack.c.l.b16 %v1315
      %v1504 = vunpack.c.l.b16 %v1321
      %v1505 = vunpack.c.l.b16 %v1329
      %v1506 = vunpack.c.l.b16 %v1335
      %v1507 = vunpack.c.l.b16 %v1343
      %v1508 = vunpack.c.l.b16 %v1349
      %v1509 = vunpack.c.l.b16 %v1357
      %v1510 = vunpack.c.l.b16 %v1363
      %v1511 = vunpack.c.l.b16 %v1371
      %v1512 = vunpack.c.l.b16 %v1377
      %v1513 = vunpack.c.l.b16 %v1385
      %v1514 = vunpack.c.l.b16 %v1391
      %v1515 = vunpack.c.l.b16 %v1399
      %v1516 = vunpack.c.l.b16 %v1405
      %v1517 = vunpack.c.l.b16 %v1413
      %v1518 = vunpack.c.l.b16 %v1419
      %v1519 = vunpack.c.l.b16 %v1427
      %v1520 = vunpack.c.l.b16 %v1433
      %v1521 = vunpack.c.l.b16 %v1441
      %v1522 = vunpack.c.l.b16 %v1447
      %v1523 = vunpack.c.l.b16 %v1455
      %v1524 = vunpack.c.l.b16 %v1461
      %v1525 = vunpack.c.l.b16 %v1469
      %v1526 = vunpack.c.l.b16 %v1475
      %v1527 = vunpack.c.l.b16 %v1483
      %v1528 = vunpack.c.l.b16 %v1489
      %v1529 = vunpack.c.l.b16 %v1497
      %v1530 = vpack.c.b16 %v1499, %v1498
      %v1531 = vpack.c.b16 %v1501, %v1500
      %v1532 = vpack.c.b16 %v1503, %v1502
      %v1533 = vpack.c.b16 %v1505, %v1504
      %v1534 = vpack.c.b16 %v1507, %v1506
      %v1535 = vpack.c.b16 %v1509, %v1508
      %v1536 = vpack.c.b16 %v1511, %v1510
      %v1537 = vpack.c.b16 %v1513, %v1512
      %v1538 = vpack.c.b16 %v1515, %v1514
      %v1539 = vpack.c.b16 %v1517, %v1516
      %v1540 = vpack.c.b16 %v1519, %v1518
      %v1541 = vpack.c.b16 %v1521, %v1520
      %v1542 = vpack.c.b16 %v1523, %v1522
      %v1543 = vpack.c.b16 %v1525, %v1524
      %v1544 = vpack.c.b16 %v1527, %v1526
      %v1545 = vpack.c.b16 %v1529, %v1528
      %v1547 = vsel %vm797, %v1530, 0
      %v1550 = vsel %vm797, %v1531, 0
      %v1553 = vsel %vm797, %v1532, 0
      %v1556 = vsel %vm797, %v1533, 0
      %v1559 = vsel %vm797, %v1534, 0
      %v1562 = vsel %vm797, %v1535, 0
      %v1565 = vsel %vm797, %v1536, 0
      %v1568 = vsel %vm797, %v1537, 0
      %v1571 = vsel %vm797, %v1538, 0
      %v1574 = vsel %vm797, %v1539, 0
      %v1577 = vsel %vm797, %v1540, 0
      %v1580 = vsel %vm797, %v1541, 0
      %v1583 = vsel %vm797, %v1542, 0
      %v1586 = vsel %vm797, %v1543, 0
      %v1589 = vsel %vm797, %v1544, 0
      %v1592 = vsel %vm797, %v1545, 0
      %v1595 = vsel %vm846, %v354, 0
      %1597 = vmatprep.subr.bf16.mxu0 0
      %1598 = vmatpush1.bf16.msra.mxu0 0
      %1599 = vmatprep.subr.bf16.mxu0 0
      %1600 = vmatpush1.bf16.msra.mxu0 0
      %1601 = vmatprep.subr.bf16.mxu0 0
      %1602 = vmatpush1.bf16.msra.mxu0 0
      %1603 = vmatprep.subr.bf16.mxu0 0
      %1604 = vmatpush1.bf16.msra.mxu0 0
      %1605 = vmatprep.subr.bf16.mxu0 0
      %1606 = vmatpush1.bf16.msra.mxu0 0
      %1607 = vmatprep.subr.bf16.mxu0 0
      %1608 = vmatpush1.bf16.msra.mxu0 0
      %1609 = vmatprep.subr.bf16.mxu0 0
      %1610 = vmatpush1.bf16.msra.mxu0 0
      %1611 = vmatprep.subr.bf16.mxu0 0
      %1612 = vmatpush1.bf16.msra.mxu0 %v1595
      %1613 = vmatprep.subr.bf16.mxu0 0
      %1614 = vmatpush2.bf16.msra.mxu0 0
      %1615 = vmatprep.subr.bf16.mxu0 0
      %1616 = vmatpush2.bf16.msra.mxu0 0
      %1617 = vmatprep.subr.bf16.mxu0 0
      %1618 = vmatpush2.bf16.msra.mxu0 0
      %1619 = vmatprep.subr.bf16.mxu0 0
      %1620 = vmatpush2.bf16.msra.mxu0 0
      %1621 = vmatprep.subr.bf16.mxu0 0
      %1622 = vmatpush2.bf16.msra.mxu0 0
      %1623 = vmatprep.subr.bf16.mxu0 0
      %1624 = vmatpush2.bf16.msra.mxu0 0
      %1625 = vmatprep.subr.bf16.mxu0 0
      %1626 = vmatpush2.bf16.msra.mxu0 0
      %1627 = vmatprep.subr.bf16.mxu0 0
      %1628 = vmatpush2.bf16.msra.mxu0 0
      %1629 = vmatprep.mubr.bf16.mxu0 0
      %1630 = vmatmul.mubr.bf16.gmra.mxu0 %v1547
      %v1631 = vpop.f32.mrf.mxu0
      %v1632 = vadd.f32 0.0, %v1631
      %v1633 = vpop.f32.mrf.mxu0
      %v1634 = vpop.f32.mrf.mxu0
      %v1635 = vadd.f32 0.0, %v1634
      %v1636 = vpop.f32.mrf.mxu0
      %1637 = vmatprep.mubr.bf16.mxu0 0
      %1638 = vmatmul.mubr.bf16.gmra.mxu0 %v1550
      %v1639 = vpop.f32.mrf.mxu0
      %v1640 = vadd.f32 0.0, %v1639
      %v1641 = vpop.f32.mrf.mxu0
      %v1642 = vpop.f32.mrf.mxu0
      %v1643 = vadd.f32 0.0, %v1642
      %v1644 = vpop.f32.mrf.mxu0
      %1645 = vmatprep.mubr.bf16.mxu0 0
      %1646 = vmatmul.mubr.bf16.gmra.mxu0 %v1553
      %v1647 = vpop.f32.mrf.mxu0
      %v1648 = vadd.f32 0.0, %v1647
      %v1649 = vpop.f32.mrf.mxu0
      %v1650 = vpop.f32.mrf.mxu0
      %v1651 = vadd.f32 0.0, %v1650
      %v1652 = vpop.f32.mrf.mxu0
      %1653 = vmatprep.mubr.bf16.mxu0 0
      %1654 = vmatmul.mubr.bf16.gmra.mxu0 %v1556
      %v1655 = vpop.f32.mrf.mxu0
      %v1656 = vadd.f32 0.0, %v1655
      %v1657 = vpop.f32.mrf.mxu0
      %v1658 = vpop.f32.mrf.mxu0
      %v1659 = vadd.f32 0.0, %v1658
      %v1660 = vpop.f32.mrf.mxu0
      %1661 = vmatprep.mubr.bf16.mxu0 0
      %1662 = vmatmul.mubr.bf16.gmra.mxu0 %v1559
      %v1663 = vpop.f32.mrf.mxu0
      %v1664 = vadd.f32 0.0, %v1663
      %v1665 = vpop.f32.mrf.mxu0
      %v1666 = vpop.f32.mrf.mxu0
      %v1667 = vadd.f32 0.0, %v1666
      %v1668 = vpop.f32.mrf.mxu0
      %1669 = vmatprep.mubr.bf16.mxu0 0
      %1670 = vmatmul.mubr.bf16.gmra.mxu0 %v1562
      %v1671 = vpop.f32.mrf.mxu0
      %v1672 = vadd.f32 0.0, %v1671
      %v1673 = vpop.f32.mrf.mxu0
      %v1674 = vpop.f32.mrf.mxu0
      %v1675 = vadd.f32 0.0, %v1674
      %v1676 = vpop.f32.mrf.mxu0
      %1677 = vmatprep.mubr.bf16.mxu0 0
      %1678 = vmatmul.mubr.bf16.gmra.mxu0 %v1565
      %v1679 = vpop.f32.mrf.mxu0
      %v1680 = vadd.f32 0.0, %v1679
      %v1681 = vpop.f32.mrf.mxu0
      %v1682 = vpop.f32.mrf.mxu0
      %v1683 = vadd.f32 0.0, %v1682
      %v1684 = vpop.f32.mrf.mxu0
      %1685 = vmatprep.mubr.bf16.mxu0 0
      %1686 = vmatmul.mubr.bf16.gmra.mxu0 %v1568
      %v1687 = vpop.f32.mrf.mxu0
      %v1688 = vadd.f32 0.0, %v1687
      %v1689 = vpop.f32.mrf.mxu0
      %v1690 = vpop.f32.mrf.mxu0
      %v1691 = vadd.f32 0.0, %v1690
      %v1692 = vpop.f32.mrf.mxu0
      %1693 = vmatprep.mubr.bf16.mxu0 0
      %1694 = vmatmul.mubr.bf16.gmra.mxu0 %v1571
      %v1695 = vpop.f32.mrf.mxu0
      %v1696 = vadd.f32 0.0, %v1695
      %v1697 = vpop.f32.mrf.mxu0
      %v1698 = vpop.f32.mrf.mxu0
      %v1699 = vadd.f32 0.0, %v1698
      %v1700 = vpop.f32.mrf.mxu0
      %1701 = vmatprep.mubr.bf16.mxu0 0
      %1702 = vmatmul.mubr.bf16.gmra.mxu0 %v1574
      %v1703 = vpop.f32.mrf.mxu0
      %v1704 = vadd.f32 0.0, %v1703
      %v1705 = vpop.f32.mrf.mxu0
      %v1706 = vpop.f32.mrf.mxu0
      %v1707 = vadd.f32 0.0, %v1706
      %v1708 = vpop.f32.mrf.mxu0
      %1709 = vmatprep.mubr.bf16.mxu0 0
      %1710 = vmatmul.mubr.bf16.gmra.mxu0 %v1577
      %v1711 = vpop.f32.mrf.mxu0
      %v1712 = vadd.f32 0.0, %v1711
      %v1713 = vpop.f32.mrf.mxu0
      %v1714 = vpop.f32.mrf.mxu0
      %v1715 = vadd.f32 0.0, %v1714
      %v1716 = vpop.f32.mrf.mxu0
      %1717 = vmatprep.mubr.bf16.mxu0 0
      %1718 = vmatmul.mubr.bf16.gmra.mxu0 %v1580
      %v1719 = vpop.f32.mrf.mxu0
      %v1720 = vadd.f32 0.0, %v1719
      %v1721 = vpop.f32.mrf.mxu0
      %v1722 = vpop.f32.mrf.mxu0
      %v1723 = vadd.f32 0.0, %v1722
      %v1724 = vpop.f32.mrf.mxu0
      %1725 = vmatprep.mubr.bf16.mxu0 0
      %1726 = vmatmul.mubr.bf16.gmra.mxu0 %v1583
      %v1727 = vpop.f32.mrf.mxu0
      %v1728 = vadd.f32 0.0, %v1727
      %v1729 = vpop.f32.mrf.mxu0
      %v1730 = vpop.f32.mrf.mxu0
      %v1731 = vadd.f32 0.0, %v1730
      %v1732 = vpop.f32.mrf.mxu0
      %1733 = vmatprep.mubr.bf16.mxu0 0
      %1734 = vmatmul.mubr.bf16.gmra.mxu0 %v1586
      %v1735 = vpop.f32.mrf.mxu0
      %v1736 = vadd.f32 0.0, %v1735
      %v1737 = vpop.f32.mrf.mxu0
      %v1738 = vpop.f32.mrf.mxu0
      %v1739 = vadd.f32 0.0, %v1738
      %v1740 = vpop.f32.mrf.mxu0
      %1741 = vmatprep.mubr.bf16.mxu0 0
      %1742 = vmatmul.mubr.bf16.gmra.mxu0 %v1589
      %v1743 = vpop.f32.mrf.mxu0
      %v1744 = vadd.f32 0.0, %v1743
      %v1745 = vpop.f32.mrf.mxu0
      %v1746 = vpop.f32.mrf.mxu0
      %v1747 = vadd.f32 0.0, %v1746
      %v1748 = vpop.f32.mrf.mxu0
      %1749 = vmatprep.mubr.bf16.mxu0 0
      %1750 = vmatmul.mubr.bf16.gmra.mxu0 %v1592
      %v1751 = vpop.f32.mrf.mxu0
      %v1752 = vadd.f32 0.0, %v1751
      %v1753 = vpop.f32.mrf.mxu0
      %v1754 = vpop.f32.mrf.mxu0
      %v1755 = vadd.f32 0.0, %v1754
      %v1756 = vpop.f32.mrf.mxu0
      %1757 = vdwg.mxu0
      %v1758 = vadd.f32 %v1145, %v1632
      %v1759 = vadd.f32 %v1148, %v1635
      %v1760 = vadd.f32 %v1153, %v1640
      %v1761 = vadd.f32 %v1156, %v1643
      %v1762 = vadd.f32 %v1161, %v1648
      %v1763 = vadd.f32 %v1164, %v1651
      %v1764 = vadd.f32 %v1169, %v1656
      %v1765 = vadd.f32 %v1172, %v1659
      %v1766 = vadd.f32 %v1177, %v1664
      %v1767 = vadd.f32 %v1180, %v1667
      %v1768 = vadd.f32 %v1185, %v1672
      %v1769 = vadd.f32 %v1188, %v1675
      %v1770 = vadd.f32 %v1193, %v1680
      %v1771 = vadd.f32 %v1196, %v1683
      %v1772 = vadd.f32 %v1201, %v1688
      %v1773 = vadd.f32 %v1204, %v1691
      %v1774 = vadd.f32 %v1209, %v1696
      %v1775 = vadd.f32 %v1212, %v1699
      %v1776 = vadd.f32 %v1217, %v1704
      %v1777 = vadd.f32 %v1220, %v1707
      %v1778 = vadd.f32 %v1225, %v1712
      %v1779 = vadd.f32 %v1228, %v1715
      %v1780 = vadd.f32 %v1233, %v1720
      %v1781 = vadd.f32 %v1236, %v1723
      %v1782 = vadd.f32 %v1241, %v1728
      %v1783 = vadd.f32 %v1244, %v1731
      %v1784 = vadd.f32 %v1249, %v1736
      %v1785 = vadd.f32 %v1252, %v1739
      %v1786 = vadd.f32 %v1257, %v1744
      %v1787 = vadd.f32 %v1260, %v1747
      %v1788 = vadd.f32 %v1265, %v1752
      %v1789 = vadd.f32 %v1268, %v1755
      %v1791 = vshrl.u32 %v344, 16
      %v1793 = vrot.slane %v1791, 7
      %v1794 = vrot.slane %v1793, 4
      %v1796 = vshrl.u32 %v345, 16
      %v1798 = vrot.slane %v1796, 7
      %v1799 = vshll.u32 %v345, 16
      %v1801 = vor.u32 %v1798, %v1799
      %v1802 = vsel %vm364, %v1794, %v1801
      %v1803 = vrot.slane %v1798, 4
      %v1805 = vshrl.u32 %v346, 16
      %v1807 = vrot.slane %v1805, 7
      %v1808 = vshll.u32 %v346, 16
      %v1810 = vor.u32 %v1807, %v1808
      %v1811 = vsel %vm364, %v1803, %v1810
      %v1812 = vunpack.c.l.b16 %v1802
      %v1813 = vunpack.c.l.b16 %v1811
      %v1814 = vpack.c.b16 %v1813, %v1812
      %v1816 = vsel %vm797, %v1814, 0
      %v1819 = vsel %vm846, %v355, 0
      %1821 = vmatprep.subr.bf16.mxu0 0
      %1822 = vmatpush1.bf16.msra.mxu0 0
      %1823 = vmatprep.subr.bf16.mxu0 0
      %1824 = vmatpush1.bf16.msra.mxu0 0
      %1825 = vmatprep.subr.bf16.mxu0 0
      %1826 = vmatpush1.bf16.msra.mxu0 0
      %1827 = vmatprep.subr.bf16.mxu0 0
      %1828 = vmatpush1.bf16.msra.mxu0 0
      %1829 = vmatprep.subr.bf16.mxu0 0
      %1830 = vmatpush1.bf16.msra.mxu0 0
      %1831 = vmatprep.subr.bf16.mxu0 0
      %1832 = vmatpush1.bf16.msra.mxu0 0
      %1833 = vmatprep.subr.bf16.mxu0 0
      %1834 = vmatpush1.bf16.msra.mxu0 0
      %1835 = vmatprep.subr.bf16.mxu0 0
      %1836 = vmatpush1.bf16.msra.mxu0 %v1819
      %1837 = vmatprep.subr.bf16.mxu0 0
      %1838 = vmatpush2.bf16.msra.mxu0 0
      %1839 = vmatprep.subr.bf16.mxu0 0
      %1840 = vmatpush2.bf16.msra.mxu0 0
      %1841 = vmatprep.subr.bf16.mxu0 0
      %1842 = vmatpush2.bf16.msra.mxu0 0
      %1843 = vmatprep.subr.bf16.mxu0 0
      %1844 = vmatpush2.bf16.msra.mxu0 0
      %1845 = vmatprep.subr.bf16.mxu0 0
      %1846 = vmatpush2.bf16.msra.mxu0 0
      %1847 = vmatprep.subr.bf16.mxu0 0
      %1848 = vmatpush2.bf16.msra.mxu0 0
      %1849 = vmatprep.subr.bf16.mxu0 0
      %1850 = vmatpush2.bf16.msra.mxu0 0
      %1851 = vmatprep.subr.bf16.mxu0 0
      %1852 = vmatpush2.bf16.msra.mxu0 0
      %1853 = vmatprep.mubr.bf16.mxu0 0
      %1854 = vmatmul.mubr.bf16.gmra.mxu0 %v1063
      %v1855 = vpop.f32.mrf.mxu0
      %v1856 = vadd.f32 0.0, %v1855
      %v1857 = vpop.f32.mrf.mxu0
      %v1858 = vpop.f32.mrf.mxu0
      %v1859 = vadd.f32 0.0, %v1858
      %v1860 = vpop.f32.mrf.mxu0
      %1861 = vmatprep.mubr.bf16.mxu0 0
      %1862 = vmatmul.mubr.bf16.gmra.mxu0 %v1066
      %v1863 = vpop.f32.mrf.mxu0
      %v1864 = vadd.f32 0.0, %v1863
      %v1865 = vpop.f32.mrf.mxu0
      %v1866 = vpop.f32.mrf.mxu0
      %v1867 = vadd.f32 0.0, %v1866
      %v1868 = vpop.f32.mrf.mxu0
      %1869 = vmatprep.mubr.bf16.mxu0 0
      %1870 = vmatmul.mubr.bf16.gmra.mxu0 %v1069
      %v1871 = vpop.f32.mrf.mxu0
      %v1872 = vadd.f32 0.0, %v1871
      %v1873 = vpop.f32.mrf.mxu0
      %v1874 = vpop.f32.mrf.mxu0
      %v1875 = vadd.f32 0.0, %v1874
      %v1876 = vpop.f32.mrf.mxu0
      %1877 = vmatprep.mubr.bf16.mxu0 0
      %1878 = vmatmul.mubr.bf16.gmra.mxu0 %v1072
      %v1879 = vpop.f32.mrf.mxu0
      %v1880 = vadd.f32 0.0, %v1879
      %v1881 = vpop.f32.mrf.mxu0
      %v1882 = vpop.f32.mrf.mxu0
      %v1883 = vadd.f32 0.0, %v1882
      %v1884 = vpop.f32.mrf.mxu0
      %1885 = vmatprep.mubr.bf16.mxu0 0
      %1886 = vmatmul.mubr.bf16.gmra.mxu0 %v1075
      %v1887 = vpop.f32.mrf.mxu0
      %v1888 = vadd.f32 0.0, %v1887
      %v1889 = vpop.f32.mrf.mxu0
      %v1890 = vpop.f32.mrf.mxu0
      %v1891 = vadd.f32 0.0, %v1890
      %v1892 = vpop.f32.mrf.mxu0
      %1893 = vmatprep.mubr.bf16.mxu0 0
      %1894 = vmatmul.mubr.bf16.gmra.mxu0 %v1078
      %v1895 = vpop.f32.mrf.mxu0
      %v1896 = vadd.f32 0.0, %v1895
      %v1897 = vpop.f32.mrf.mxu0
      %v1898 = vpop.f32.mrf.mxu0
      %v1899 = vadd.f32 0.0, %v1898
      %v1900 = vpop.f32.mrf.mxu0
      %1901 = vmatprep.mubr.bf16.mxu0 0
      %1902 = vmatmul.mubr.bf16.gmra.mxu0 %v1081
      %v1903 = vpop.f32.mrf.mxu0
      %v1904 = vadd.f32 0.0, %v1903
      %v1905 = vpop.f32.mrf.mxu0
      %v1906 = vpop.f32.mrf.mxu0
      %v1907 = vadd.f32 0.0, %v1906
      %v1908 = vpop.f32.mrf.mxu0
      %1909 = vmatprep.mubr.bf16.mxu0 0
      %1910 = vmatmul.mubr.bf16.gmra.mxu0 %v1084
      %v1911 = vpop.f32.mrf.mxu0
      %v1912 = vadd.f32 0.0, %v1911
      %v1913 = vpop.f32.mrf.mxu0
      %v1914 = vpop.f32.mrf.mxu0
      %v1915 = vadd.f32 0.0, %v1914
      %v1916 = vpop.f32.mrf.mxu0
      %1917 = vmatprep.mubr.bf16.mxu0 0
      %1918 = vmatmul.mubr.bf16.gmra.mxu0 %v1087
      %v1919 = vpop.f32.mrf.mxu0
      %v1920 = vadd.f32 0.0, %v1919
      %v1921 = vpop.f32.mrf.mxu0
      %v1922 = vpop.f32.mrf.mxu0
      %v1923 = vadd.f32 0.0, %v1922
      %v1924 = vpop.f32.mrf.mxu0
      %1925 = vmatprep.mubr.bf16.mxu0 0
      %1926 = vmatmul.mubr.bf16.gmra.mxu0 %v1090
      %v1927 = vpop.f32.mrf.mxu0
      %v1928 = vadd.f32 0.0, %v1927
      %v1929 = vpop.f32.mrf.mxu0
      %v1930 = vpop.f32.mrf.mxu0
      %v1931 = vadd.f32 0.0, %v1930
      %v1932 = vpop.f32.mrf.mxu0
      %1933 = vmatprep.mubr.bf16.mxu0 0
      %1934 = vmatmul.mubr.bf16.gmra.mxu0 %v1093
      %v1935 = vpop.f32.mrf.mxu0
      %v1936 = vadd.f32 0.0, %v1935
      %v1937 = vpop.f32.mrf.mxu0
      %v1938 = vpop.f32.mrf.mxu0
      %v1939 = vadd.f32 0.0, %v1938
      %v1940 = vpop.f32.mrf.mxu0
      %1941 = vmatprep.mubr.bf16.mxu0 0
      %1942 = vmatmul.mubr.bf16.gmra.mxu0 %v1096
      %v1943 = vpop.f32.mrf.mxu0
      %v1944 = vadd.f32 0.0, %v1943
      %v1945 = vpop.f32.mrf.mxu0
      %v1946 = vpop.f32.mrf.mxu0
      %v1947 = vadd.f32 0.0, %v1946
      %v1948 = vpop.f32.mrf.mxu0
      %1949 = vmatprep.mubr.bf16.mxu0 0
      %1950 = vmatmul.mubr.bf16.gmra.mxu0 %v1099
      %v1951 = vpop.f32.mrf.mxu0
      %v1952 = vadd.f32 0.0, %v1951
      %v1953 = vpop.f32.mrf.mxu0
      %v1954 = vpop.f32.mrf.mxu0
      %v1955 = vadd.f32 0.0, %v1954
      %v1956 = vpop.f32.mrf.mxu0
      %1957 = vmatprep.mubr.bf16.mxu0 0
      %1958 = vmatmul.mubr.bf16.gmra.mxu0 %v1102
      %v1959 = vpop.f32.mrf.mxu0
      %v1960 = vadd.f32 0.0, %v1959
      %v1961 = vpop.f32.mrf.mxu0
      %v1962 = vpop.f32.mrf.mxu0
      %v1963 = vadd.f32 0.0, %v1962
      %v1964 = vpop.f32.mrf.mxu0
      %1965 = vmatprep.mubr.bf16.mxu0 0
      %1966 = vmatmul.mubr.bf16.gmra.mxu0 %v1105
      %v1967 = vpop.f32.mrf.mxu0
      %v1968 = vadd.f32 0.0, %v1967
      %v1969 = vpop.f32.mrf.mxu0
      %v1970 = vpop.f32.mrf.mxu0
      %v1971 = vadd.f32 0.0, %v1970
      %v1972 = vpop.f32.mrf.mxu0
      %1973 = vmatprep.mubr.bf16.mxu0 0
      %1974 = vmatmul.mubr.bf16.gmra.mxu0 %v1816
      %v1975 = vpop.f32.mrf.mxu0
      %v1976 = vadd.f32 0.0, %v1975
      %v1977 = vpop.f32.mrf.mxu0
      %v1978 = vpop.f32.mrf.mxu0
      %v1979 = vadd.f32 0.0, %v1978
      %v1980 = vpop.f32.mrf.mxu0
      %1981 = vdwg.mxu0
      %v1982 = vadd.f32 %v1758, %v1856
      %v1983 = vadd.f32 %v1759, %v1859
      %v1984 = vadd.f32 %v1760, %v1864
      %v1985 = vadd.f32 %v1761, %v1867
      %v1986 = vadd.f32 %v1762, %v1872
      %v1987 = vadd.f32 %v1763, %v1875
      %v1988 = vadd.f32 %v1764, %v1880
      %v1989 = vadd.f32 %v1765, %v1883
      %v1990 = vadd.f32 %v1766, %v1888
      %v1991 = vadd.f32 %v1767, %v1891
      %v1992 = vadd.f32 %v1768, %v1896
      %v1993 = vadd.f32 %v1769, %v1899
      %v1994 = vadd.f32 %v1770, %v1904
      %v1995 = vadd.f32 %v1771, %v1907
      %v1996 = vadd.f32 %v1772, %v1912
      %v1997 = vadd.f32 %v1773, %v1915
      %v1998 = vadd.f32 %v1774, %v1920
      %v1999 = vadd.f32 %v1775, %v1923
      %v2000 = vadd.f32 %v1776, %v1928
      %v2001 = vadd.f32 %v1777, %v1931
      %v2002 = vadd.f32 %v1778, %v1936
      %v2003 = vadd.f32 %v1779, %v1939
      %v2004 = vadd.f32 %v1780, %v1944
      %v2005 = vadd.f32 %v1781, %v1947
      %v2006 = vadd.f32 %v1782, %v1952
      %v2007 = vadd.f32 %v1783, %v1955
      %v2008 = vadd.f32 %v1784, %v1960
      %v2009 = vadd.f32 %v1785, %v1963
      %v2010 = vadd.f32 %v1786, %v1968
      %v2011 = vadd.f32 %v1787, %v1971
      %v2012 = vadd.f32 %v1788, %v1976
      %v2013 = vadd.f32 %v1789, %v1979
      %v2016 = vunpack.c.l.b16 %v345
      %v2017 = vunpack.c.l.b16 %v346
      %v2018 = vpack.c.b16 %v2017, %v2016
      %v2020 = vsel %vm797, %v2018, 0
      %v2023 = vsel %vm846, %v356, 0
      %2025 = vmatprep.subr.bf16.mxu0 0
      %2026 = vmatpush1.bf16.msra.mxu0 0
      %2027 = vmatprep.subr.bf16.mxu0 0
      %2028 = vmatpush1.bf16.msra.mxu0 0
      %2029 = vmatprep.subr.bf16.mxu0 0
      %2030 = vmatpush1.bf16.msra.mxu0 0
      %2031 = vmatprep.subr.bf16.mxu0 0
      %2032 = vmatpush1.bf16.msra.mxu0 0
      %2033 = vmatprep.subr.bf16.mxu0 0
      %2034 = vmatpush1.bf16.msra.mxu0 0
      %2035 = vmatprep.subr.bf16.mxu0 0
      %2036 = vmatpush1.bf16.msra.mxu0 0
      %2037 = vmatprep.subr.bf16.mxu0 0
      %2038 = vmatpush1.bf16.msra.mxu0 0
      %2039 = vmatprep.subr.bf16.mxu0 0
      %2040 = vmatpush1.bf16.msra.mxu0 %v2023
      %2041 = vmatprep.subr.bf16.mxu0 0
      %2042 = vmatpush2.bf16.msra.mxu0 0
      %2043 = vmatprep.subr.bf16.mxu0 0
      %2044 = vmatpush2.bf16.msra.mxu0 0
      %2045 = vmatprep.subr.bf16.mxu0 0
      %2046 = vmatpush2.bf16.msra.mxu0 0
      %2047 = vmatprep.subr.bf16.mxu0 0
      %2048 = vmatpush2.bf16.msra.mxu0 0
      %2049 = vmatprep.subr.bf16.mxu0 0
      %2050 = vmatpush2.bf16.msra.mxu0 0
      %2051 = vmatprep.subr.bf16.mxu0 0
      %2052 = vmatpush2.bf16.msra.mxu0 0
      %2053 = vmatprep.subr.bf16.mxu0 0
      %2054 = vmatpush2.bf16.msra.mxu0 0
      %2055 = vmatprep.subr.bf16.mxu0 0
      %2056 = vmatpush2.bf16.msra.mxu0 0
      %2057 = vmatprep.mubr.bf16.mxu0 0
      %2058 = vmatmul.mubr.bf16.gmra.mxu0 %v802
      %v2059 = vpop.f32.mrf.mxu0
      %v2060 = vadd.f32 0.0, %v2059
      %v2061 = vpop.f32.mrf.mxu0
      %v2062 = vpop.f32.mrf.mxu0
      %v2063 = vadd.f32 0.0, %v2062
      %v2064 = vpop.f32.mrf.mxu0
      %2065 = vmatprep.mubr.bf16.mxu0 0
      %2066 = vmatmul.mubr.bf16.gmra.mxu0 %v805
      %v2067 = vpop.f32.mrf.mxu0
      %v2068 = vadd.f32 0.0, %v2067
      %v2069 = vpop.f32.mrf.mxu0
      %v2070 = vpop.f32.mrf.mxu0
      %v2071 = vadd.f32 0.0, %v2070
      %v2072 = vpop.f32.mrf.mxu0
      %2073 = vmatprep.mubr.bf16.mxu0 0
      %2074 = vmatmul.mubr.bf16.gmra.mxu0 %v808
      %v2075 = vpop.f32.mrf.mxu0
      %v2076 = vadd.f32 0.0, %v2075
      %v2077 = vpop.f32.mrf.mxu0
      %v2078 = vpop.f32.mrf.mxu0
      %v2079 = vadd.f32 0.0, %v2078
      %v2080 = vpop.f32.mrf.mxu0
      %2081 = vmatprep.mubr.bf16.mxu0 0
      %2082 = vmatmul.mubr.bf16.gmra.mxu0 %v811
      %v2083 = vpop.f32.mrf.mxu0
      %v2084 = vadd.f32 0.0, %v2083
      %v2085 = vpop.f32.mrf.mxu0
      %v2086 = vpop.f32.mrf.mxu0
      %v2087 = vadd.f32 0.0, %v2086
      %v2088 = vpop.f32.mrf.mxu0
      %2089 = vmatprep.mubr.bf16.mxu0 0
      %2090 = vmatmul.mubr.bf16.gmra.mxu0 %v814
      %v2091 = vpop.f32.mrf.mxu0
      %v2092 = vadd.f32 0.0, %v2091
      %v2093 = vpop.f32.mrf.mxu0
      %v2094 = vpop.f32.mrf.mxu0
      %v2095 = vadd.f32 0.0, %v2094
      %v2096 = vpop.f32.mrf.mxu0
      %2097 = vmatprep.mubr.bf16.mxu0 0
      %2098 = vmatmul.mubr.bf16.gmra.mxu0 %v817
      %v2099 = vpop.f32.mrf.mxu0
      %v2100 = vadd.f32 0.0, %v2099
      %v2101 = vpop.f32.mrf.mxu0
      %v2102 = vpop.f32.mrf.mxu0
      %v2103 = vadd.f32 0.0, %v2102
      %v2104 = vpop.f32.mrf.mxu0
      %2105 = vmatprep.mubr.bf16.mxu0 0
      %2106 = vmatmul.mubr.bf16.gmra.mxu0 %v820
      %v2107 = vpop.f32.mrf.mxu0
      %v2108 = vadd.f32 0.0, %v2107
      %v2109 = vpop.f32.mrf.mxu0
      %v2110 = vpop.f32.mrf.mxu0
      %v2111 = vadd.f32 0.0, %v2110
      %v2112 = vpop.f32.mrf.mxu0
      %2113 = vmatprep.mubr.bf16.mxu0 0
      %2114 = vmatmul.mubr.bf16.gmra.mxu0 %v823
      %v2115 = vpop.f32.mrf.mxu0
      %v2116 = vadd.f32 0.0, %v2115
      %v2117 = vpop.f32.mrf.mxu0
      %v2118 = vpop.f32.mrf.mxu0
      %v2119 = vadd.f32 0.0, %v2118
      %v2120 = vpop.f32.mrf.mxu0
      %2121 = vmatprep.mubr.bf16.mxu0 0
      %2122 = vmatmul.mubr.bf16.gmra.mxu0 %v826
      %v2123 = vpop.f32.mrf.mxu0
      %v2124 = vadd.f32 0.0, %v2123
      %v2125 = vpop.f32.mrf.mxu0
      %v2126 = vpop.f32.mrf.mxu0
      %v2127 = vadd.f32 0.0, %v2126
      %v2128 = vpop.f32.mrf.mxu0
      %2129 = vmatprep.mubr.bf16.mxu0 0
      %2130 = vmatmul.mubr.bf16.gmra.mxu0 %v829
      %v2131 = vpop.f32.mrf.mxu0
      %v2132 = vadd.f32 0.0, %v2131
      %v2133 = vpop.f32.mrf.mxu0
      %v2134 = vpop.f32.mrf.mxu0
      %v2135 = vadd.f32 0.0, %v2134
      %v2136 = vpop.f32.mrf.mxu0
      %2137 = vmatprep.mubr.bf16.mxu0 0
      %2138 = vmatmul.mubr.bf16.gmra.mxu0 %v832
      %v2139 = vpop.f32.mrf.mxu0
      %v2140 = vadd.f32 0.0, %v2139
      %v2141 = vpop.f32.mrf.mxu0
      %v2142 = vpop.f32.mrf.mxu0
      %v2143 = vadd.f32 0.0, %v2142
      %v2144 = vpop.f32.mrf.mxu0
      %2145 = vmatprep.mubr.bf16.mxu0 0
      %2146 = vmatmul.mubr.bf16.gmra.mxu0 %v835
      %v2147 = vpop.f32.mrf.mxu0
      %v2148 = vadd.f32 0.0, %v2147
      %v2149 = vpop.f32.mrf.mxu0
      %v2150 = vpop.f32.mrf.mxu0
      %v2151 = vadd.f32 0.0, %v2150
      %v2152 = vpop.f32.mrf.mxu0
      %2153 = vmatprep.mubr.bf16.mxu0 0
      %2154 = vmatmul.mubr.bf16.gmra.mxu0 %v838
      %v2155 = vpop.f32.mrf.mxu0
      %v2156 = vadd.f32 0.0, %v2155
      %v2157 = vpop.f32.mrf.mxu0
      %v2158 = vpop.f32.mrf.mxu0
      %v2159 = vadd.f32 0.0, %v2158
      %v2160 = vpop.f32.mrf.mxu0
      %2161 = vmatprep.mubr.bf16.mxu0 0
      %2162 = vmatmul.mubr.bf16.gmra.mxu0 %v841
      %v2163 = vpop.f32.mrf.mxu0
      %v2164 = vadd.f32 0.0, %v2163
      %v2165 = vpop.f32.mrf.mxu0
      %v2166 = vpop.f32.mrf.mxu0
      %v2167 = vadd.f32 0.0, %v2166
      %v2168 = vpop.f32.mrf.mxu0
      %2169 = vmatprep.mubr.bf16.mxu0 0
      %2170 = vmatmul.mubr.bf16.gmra.mxu0 %v844
      %v2171 = vpop.f32.mrf.mxu0
      %v2172 = vadd.f32 0.0, %v2171
      %v2173 = vpop.f32.mrf.mxu0
      %v2174 = vpop.f32.mrf.mxu0
      %v2175 = vadd.f32 0.0, %v2174
      %v2176 = vpop.f32.mrf.mxu0
      %2177 = vmatprep.mubr.bf16.mxu0 0
      %2178 = vmatmul.mubr.bf16.gmra.mxu0 %v2020
      %v2179 = vpop.f32.mrf.mxu0
      %v2180 = vadd.f32 0.0, %v2179
      %v2181 = vpop.f32.mrf.mxu0
      %v2182 = vpop.f32.mrf.mxu0
      %v2183 = vadd.f32 0.0, %v2182
      %v2184 = vpop.f32.mrf.mxu0
      %2185 = vdwg.mxu0
      %v2186 = vadd.f32 %v1982, %v2060
      %v2187 = vadd.f32 %v1983, %v2063
      %v2188 = vadd.f32 %v1984, %v2068
      %v2189 = vadd.f32 %v1985, %v2071
      %v2190 = vadd.f32 %v1986, %v2076
      %v2191 = vadd.f32 %v1987, %v2079
      %v2192 = vadd.f32 %v1988, %v2084
      %v2193 = vadd.f32 %v1989, %v2087
      %v2194 = vadd.f32 %v1990, %v2092
      %v2195 = vadd.f32 %v1991, %v2095
      %v2196 = vadd.f32 %v1992, %v2100
      %v2197 = vadd.f32 %v1993, %v2103
      %v2198 = vadd.f32 %v1994, %v2108
      %v2199 = vadd.f32 %v1995, %v2111
      %v2200 = vadd.f32 %v1996, %v2116
      %v2201 = vadd.f32 %v1997, %v2119
      %v2202 = vadd.f32 %v1998, %v2124
      %v2203 = vadd.f32 %v1999, %v2127
      %v2204 = vadd.f32 %v2000, %v2132
      %v2205 = vadd.f32 %v2001, %v2135
      %v2206 = vadd.f32 %v2002, %v2140
      %v2207 = vadd.f32 %v2003, %v2143
      %v2208 = vadd.f32 %v2004, %v2148
      %v2209 = vadd.f32 %v2005, %v2151
      %v2210 = vadd.f32 %v2006, %v2156
      %v2211 = vadd.f32 %v2007, %v2159
      %v2212 = vadd.f32 %v2008, %v2164
      %v2213 = vadd.f32 %v2009, %v2167
      %v2214 = vadd.f32 %v2010, %v2172
      %v2215 = vadd.f32 %v2011, %v2175
      %v2216 = vadd.f32 %v2012, %v2180
      %v2217 = vadd.f32 %v2013, %v2183
      %v2218 = vrot.slane %v1796, 4
      %v2219 = vrot.slane %v1799, 5
      %v2220 = vor.u32 %v2218, %v2219
      %v2221 = vrot.slane %v2220, 4
      %v2222 = vrot.slane %v1808, 5
      %v2223 = vsel %vm1273, %v2221, %v2222
      %v2224 = vrot.slane %v1805, 4
      %v2225 = vor.u32 %v2224, %v2222
      %v2226 = vrot.slane %v2225, 4
      %v2228 = vshll.u32 %v347, 16
      %v2230 = vrot.slane %v2228, 5
      %v2231 = vsel %vm1273, %v2226, %v2230
      %v2232 = vunpack.c.l.b16 %v2223
      %v2233 = vunpack.c.l.b16 %v2231
      %v2234 = vpack.c.b16 %v2233, %v2232
      %v2236 = vsel %vm797, %v2234, 0
      %v2239 = vsel %vm846, %v357, 0
      %2241 = vmatprep.subr.bf16.mxu0 0
      %2242 = vmatpush1.bf16.msra.mxu0 0
      %2243 = vmatprep.subr.bf16.mxu0 0
      %2244 = vmatpush1.bf16.msra.mxu0 0
      %2245 = vmatprep.subr.bf16.mxu0 0
      %2246 = vmatpush1.bf16.msra.mxu0 0
      %2247 = vmatprep.subr.bf16.mxu0 0
      %2248 = vmatpush1.bf16.msra.mxu0 0
      %2249 = vmatprep.subr.bf16.mxu0 0
      %2250 = vmatpush1.bf16.msra.mxu0 0
      %2251 = vmatprep.subr.bf16.mxu0 0
      %2252 = vmatpush1.bf16.msra.mxu0 0
      %2253 = vmatprep.subr.bf16.mxu0 0
      %2254 = vmatpush1.bf16.msra.mxu0 0
      %2255 = vmatprep.subr.bf16.mxu0 0
      %2256 = vmatpush1.bf16.msra.mxu0 %v2239
      %2257 = vmatprep.subr.bf16.mxu0 0
      %2258 = vmatpush2.bf16.msra.mxu0 0
      %2259 = vmatprep.subr.bf16.mxu0 0
      %2260 = vmatpush2.bf16.msra.mxu0 0
      %2261 = vmatprep.subr.bf16.mxu0 0
      %2262 = vmatpush2.bf16.msra.mxu0 0
      %2263 = vmatprep.subr.bf16.mxu0 0
      %2264 = vmatpush2.bf16.msra.mxu0 0
      %2265 = vmatprep.subr.bf16.mxu0 0
      %2266 = vmatpush2.bf16.msra.mxu0 0
      %2267 = vmatprep.subr.bf16.mxu0 0
      %2268 = vmatpush2.bf16.msra.mxu0 0
      %2269 = vmatprep.subr.bf16.mxu0 0
      %2270 = vmatpush2.bf16.msra.mxu0 0
      %2271 = vmatprep.subr.bf16.mxu0 0
      %2272 = vmatpush2.bf16.msra.mxu0 0
      %2273 = vmatprep.mubr.bf16.mxu0 0
      %2274 = vmatmul.mubr.bf16.gmra.mxu0 %v1550
      %v2275 = vpop.f32.mrf.mxu0
      %v2276 = vadd.f32 0.0, %v2275
      %v2277 = vpop.f32.mrf.mxu0
      %v2278 = vpop.f32.mrf.mxu0
      %v2279 = vadd.f32 0.0, %v2278
      %v2280 = vpop.f32.mrf.mxu0
      %2281 = vmatprep.mubr.bf16.mxu0 0
      %2282 = vmatmul.mubr.bf16.gmra.mxu0 %v1553
      %v2283 = vpop.f32.mrf.mxu0
      %v2284 = vadd.f32 0.0, %v2283
      %v2285 = vpop.f32.mrf.mxu0
      %v2286 = vpop.f32.mrf.mxu0
      %v2287 = vadd.f32 0.0, %v2286
      %v2288 = vpop.f32.mrf.mxu0
      %2289 = vmatprep.mubr.bf16.mxu0 0
      %2290 = vmatmul.mubr.bf16.gmra.mxu0 %v1556
      %v2291 = vpop.f32.mrf.mxu0
      %v2292 = vadd.f32 0.0, %v2291
      %v2293 = vpop.f32.mrf.mxu0
      %v2294 = vpop.f32.mrf.mxu0
      %v2295 = vadd.f32 0.0, %v2294
      %v2296 = vpop.f32.mrf.mxu0
      %2297 = vmatprep.mubr.bf16.mxu0 0
      %2298 = vmatmul.mubr.bf16.gmra.mxu0 %v1559
      %v2299 = vpop.f32.mrf.mxu0
      %v2300 = vadd.f32 0.0, %v2299
      %v2301 = vpop.f32.mrf.mxu0
      %v2302 = vpop.f32.mrf.mxu0
      %v2303 = vadd.f32 0.0, %v2302
      %v2304 = vpop.f32.mrf.mxu0
      %2305 = vmatprep.mubr.bf16.mxu0 0
      %2306 = vmatmul.mubr.bf16.gmra.mxu0 %v1562
      %v2307 = vpop.f32.mrf.mxu0
      %v2308 = vadd.f32 0.0, %v2307
      %v2309 = vpop.f32.mrf.mxu0
      %v2310 = vpop.f32.mrf.mxu0
      %v2311 = vadd.f32 0.0, %v2310
      %v2312 = vpop.f32.mrf.mxu0
      %2313 = vmatprep.mubr.bf16.mxu0 0
      %2314 = vmatmul.mubr.bf16.gmra.mxu0 %v1565
      %v2315 = vpop.f32.mrf.mxu0
      %v2316 = vadd.f32 0.0, %v2315
      %v2317 = vpop.f32.mrf.mxu0
      %v2318 = vpop.f32.mrf.mxu0
      %v2319 = vadd.f32 0.0, %v2318
      %v2320 = vpop.f32.mrf.mxu0
      %2321 = vmatprep.mubr.bf16.mxu0 0
      %2322 = vmatmul.mubr.bf16.gmra.mxu0 %v1568
      %v2323 = vpop.f32.mrf.mxu0
      %v2324 = vadd.f32 0.0, %v2323
      %v2325 = vpop.f32.mrf.mxu0
      %v2326 = vpop.f32.mrf.mxu0
      %v2327 = vadd.f32 0.0, %v2326
      %v2328 = vpop.f32.mrf.mxu0
      %2329 = vmatprep.mubr.bf16.mxu0 0
      %2330 = vmatmul.mubr.bf16.gmra.mxu0 %v1571
      %v2331 = vpop.f32.mrf.mxu0
      %v2332 = vadd.f32 0.0, %v2331
      %v2333 = vpop.f32.mrf.mxu0
      %v2334 = vpop.f32.mrf.mxu0
      %v2335 = vadd.f32 0.0, %v2334
      %v2336 = vpop.f32.mrf.mxu0
      %2337 = vmatprep.mubr.bf16.mxu0 0
      %2338 = vmatmul.mubr.bf16.gmra.mxu0 %v1574
      %v2339 = vpop.f32.mrf.mxu0
      %v2340 = vadd.f32 0.0, %v2339
      %v2341 = vpop.f32.mrf.mxu0
      %v2342 = vpop.f32.mrf.mxu0
      %v2343 = vadd.f32 0.0, %v2342
      %v2344 = vpop.f32.mrf.mxu0
      %2345 = vmatprep.mubr.bf16.mxu0 0
      %2346 = vmatmul.mubr.bf16.gmra.mxu0 %v1577
      %v2347 = vpop.f32.mrf.mxu0
      %v2348 = vadd.f32 0.0, %v2347
      %v2349 = vpop.f32.mrf.mxu0
      %v2350 = vpop.f32.mrf.mxu0
      %v2351 = vadd.f32 0.0, %v2350
      %v2352 = vpop.f32.mrf.mxu0
      %2353 = vmatprep.mubr.bf16.mxu0 0
      %2354 = vmatmul.mubr.bf16.gmra.mxu0 %v1580
      %v2355 = vpop.f32.mrf.mxu0
      %v2356 = vadd.f32 0.0, %v2355
      %v2357 = vpop.f32.mrf.mxu0
      %v2358 = vpop.f32.mrf.mxu0
      %v2359 = vadd.f32 0.0, %v2358
      %v2360 = vpop.f32.mrf.mxu0
      %2361 = vmatprep.mubr.bf16.mxu0 0
      %2362 = vmatmul.mubr.bf16.gmra.mxu0 %v1583
      %v2363 = vpop.f32.mrf.mxu0
      %v2364 = vadd.f32 0.0, %v2363
      %v2365 = vpop.f32.mrf.mxu0
      %v2366 = vpop.f32.mrf.mxu0
      %v2367 = vadd.f32 0.0, %v2366
      %v2368 = vpop.f32.mrf.mxu0
      %2369 = vmatprep.mubr.bf16.mxu0 0
      %2370 = vmatmul.mubr.bf16.gmra.mxu0 %v1586
      %v2371 = vpop.f32.mrf.mxu0
      %v2372 = vadd.f32 0.0, %v2371
      %v2373 = vpop.f32.mrf.mxu0
      %v2374 = vpop.f32.mrf.mxu0
      %v2375 = vadd.f32 0.0, %v2374
      %v2376 = vpop.f32.mrf.mxu0
      %2377 = vmatprep.mubr.bf16.mxu0 0
      %2378 = vmatmul.mubr.bf16.gmra.mxu0 %v1589
      %v2379 = vpop.f32.mrf.mxu0
      %v2380 = vadd.f32 0.0, %v2379
      %v2381 = vpop.f32.mrf.mxu0
      %v2382 = vpop.f32.mrf.mxu0
      %v2383 = vadd.f32 0.0, %v2382
      %v2384 = vpop.f32.mrf.mxu0
      %2385 = vmatprep.mubr.bf16.mxu0 0
      %2386 = vmatmul.mubr.bf16.gmra.mxu0 %v1592
      %v2387 = vpop.f32.mrf.mxu0
      %v2388 = vadd.f32 0.0, %v2387
      %v2389 = vpop.f32.mrf.mxu0
      %v2390 = vpop.f32.mrf.mxu0
      %v2391 = vadd.f32 0.0, %v2390
      %v2392 = vpop.f32.mrf.mxu0
      %2393 = vmatprep.mubr.bf16.mxu0 0
      %2394 = vmatmul.mubr.bf16.gmra.mxu0 %v2236
      %v2395 = vpop.f32.mrf.mxu0
      %v2396 = vadd.f32 0.0, %v2395
      %v2397 = vpop.f32.mrf.mxu0
      %v2398 = vpop.f32.mrf.mxu0
      %v2399 = vadd.f32 0.0, %v2398
      %v2400 = vpop.f32.mrf.mxu0
      %2401 = vdwg.mxu0
      %v2402 = vadd.f32 %v2186, %v2276
      %v2403 = vadd.f32 %v2187, %v2279
      %v2404 = vadd.f32 %v2188, %v2284
      %v2405 = vadd.f32 %v2189, %v2287
      %v2406 = vadd.f32 %v2190, %v2292
      %v2407 = vadd.f32 %v2191, %v2295
      %v2408 = vadd.f32 %v2192, %v2300
      %v2409 = vadd.f32 %v2193, %v2303
      %v2410 = vadd.f32 %v2194, %v2308
      %v2411 = vadd.f32 %v2195, %v2311
      %v2412 = vadd.f32 %v2196, %v2316
      %v2413 = vadd.f32 %v2197, %v2319
      %v2414 = vadd.f32 %v2198, %v2324
      %v2415 = vadd.f32 %v2199, %v2327
      %v2416 = vadd.f32 %v2200, %v2332
      %v2417 = vadd.f32 %v2201, %v2335
      %v2418 = vadd.f32 %v2202, %v2340
      %v2419 = vadd.f32 %v2203, %v2343
      %v2420 = vadd.f32 %v2204, %v2348
      %v2421 = vadd.f32 %v2205, %v2351
      %v2422 = vadd.f32 %v2206, %v2356
      %v2423 = vadd.f32 %v2207, %v2359
      %v2424 = vadd.f32 %v2208, %v2364
      %v2425 = vadd.f32 %v2209, %v2367
      %v2426 = vadd.f32 %v2210, %v2372
      %v2427 = vadd.f32 %v2211, %v2375
      %v2428 = vadd.f32 %v2212, %v2380
      %v2429 = vadd.f32 %v2213, %v2383
      %v2430 = vadd.f32 %v2214, %v2388
      %v2431 = vadd.f32 %v2215, %v2391
      %v2432 = vadd.f32 %v2216, %v2396
      %v2433 = vadd.f32 %v2217, %v2399
      %v2435 = vshrl.u32 %v348, 16
      %v2437 = vrot.slane %v2435, 7
      %v2438 = vrot.slane %v2437, 4
      %v2440 = vshrl.u32 %v349, 16
      %v2442 = vrot.slane %v2440, 7
      %v2443 = vshll.u32 %v349, 16
      %v2445 = vor.u32 %v2442, %v2443
      %v2446 = vsel %vm364, %v2438, %v2445
      %v2447 = vrot.slane %v2442, 4
      %v2449 = vshrl.u32 %v350, 16
      %v2451 = vrot.slane %v2449, 7
      %v2452 = vshll.u32 %v350, 16
      %v2454 = vor.u32 %v2451, %v2452
      %v2455 = vsel %vm364, %v2447, %v2454
      %v2456 = vunpack.c.l.b16 %v2446
      %v2457 = vunpack.c.l.b16 %v2455
      %v2458 = vpack.c.b16 %v2457, %v2456
      %v2460 = vsel %vm797, %v2458, 0
      %v2463 = vsel %vm846, %v358, 0
      %2465 = vmatprep.subr.bf16.mxu0 0
      %2466 = vmatpush1.bf16.msra.mxu0 0
      %2467 = vmatprep.subr.bf16.mxu0 0
      %2468 = vmatpush1.bf16.msra.mxu0 0
      %2469 = vmatprep.subr.bf16.mxu0 0
      %2470 = vmatpush1.bf16.msra.mxu0 0
      %2471 = vmatprep.subr.bf16.mxu0 0
      %2472 = vmatpush1.bf16.msra.mxu0 0
      %2473 = vmatprep.subr.bf16.mxu0 0
      %2474 = vmatpush1.bf16.msra.mxu0 0
      %2475 = vmatprep.subr.bf16.mxu0 0
      %2476 = vmatpush1.bf16.msra.mxu0 0
      %2477 = vmatprep.subr.bf16.mxu0 0
      %2478 = vmatpush1.bf16.msra.mxu0 0
      %2479 = vmatprep.subr.bf16.mxu0 0
      %2480 = vmatpush1.bf16.msra.mxu0 %v2463
      %2481 = vmatprep.subr.bf16.mxu0 0
      %2482 = vmatpush2.bf16.msra.mxu0 0
      %2483 = vmatprep.subr.bf16.mxu0 0
      %2484 = vmatpush2.bf16.msra.mxu0 0
      %2485 = vmatprep.subr.bf16.mxu0 0
      %2486 = vmatpush2.bf16.msra.mxu0 0
      %2487 = vmatprep.subr.bf16.mxu0 0
      %2488 = vmatpush2.bf16.msra.mxu0 0
      %2489 = vmatprep.subr.bf16.mxu0 0
      %2490 = vmatpush2.bf16.msra.mxu0 0
      %2491 = vmatprep.subr.bf16.mxu0 0
      %2492 = vmatpush2.bf16.msra.mxu0 0
      %2493 = vmatprep.subr.bf16.mxu0 0
      %2494 = vmatpush2.bf16.msra.mxu0 0
      %2495 = vmatprep.subr.bf16.mxu0 0
      %2496 = vmatpush2.bf16.msra.mxu0 0
      %2497 = vmatprep.mubr.bf16.mxu0 0
      %2498 = vmatmul.mubr.bf16.gmra.mxu0 %v1066
      %v2499 = vpop.f32.mrf.mxu0
      %v2500 = vadd.f32 0.0, %v2499
      %v2501 = vpop.f32.mrf.mxu0
      %v2502 = vpop.f32.mrf.mxu0
      %v2503 = vadd.f32 0.0, %v2502
      %v2504 = vpop.f32.mrf.mxu0
      %2505 = vmatprep.mubr.bf16.mxu0 0
      %2506 = vmatmul.mubr.bf16.gmra.mxu0 %v1069
      %v2507 = vpop.f32.mrf.mxu0
      %v2508 = vadd.f32 0.0, %v2507
      %v2509 = vpop.f32.mrf.mxu0
      %v2510 = vpop.f32.mrf.mxu0
      %v2511 = vadd.f32 0.0, %v2510
      %v2512 = vpop.f32.mrf.mxu0
      %2513 = vmatprep.mubr.bf16.mxu0 0
      %2514 = vmatmul.mubr.bf16.gmra.mxu0 %v1072
      %v2515 = vpop.f32.mrf.mxu0
      %v2516 = vadd.f32 0.0, %v2515
      %v2517 = vpop.f32.mrf.mxu0
      %v2518 = vpop.f32.mrf.mxu0
      %v2519 = vadd.f32 0.0, %v2518
      %v2520 = vpop.f32.mrf.mxu0
      %2521 = vmatprep.mubr.bf16.mxu0 0
      %2522 = vmatmul.mubr.bf16.gmra.mxu0 %v1075
      %v2523 = vpop.f32.mrf.mxu0
      %v2524 = vadd.f32 0.0, %v2523
      %v2525 = vpop.f32.mrf.mxu0
      %v2526 = vpop.f32.mrf.mxu0
      %v2527 = vadd.f32 0.0, %v2526
      %v2528 = vpop.f32.mrf.mxu0
      %2529 = vmatprep.mubr.bf16.mxu0 0
      %2530 = vmatmul.mubr.bf16.gmra.mxu0 %v1078
      %v2531 = vpop.f32.mrf.mxu0
      %v2532 = vadd.f32 0.0, %v2531
      %v2533 = vpop.f32.mrf.mxu0
      %v2534 = vpop.f32.mrf.mxu0
      %v2535 = vadd.f32 0.0, %v2534
      %v2536 = vpop.f32.mrf.mxu0
      %2537 = vmatprep.mubr.bf16.mxu0 0
      %2538 = vmatmul.mubr.bf16.gmra.mxu0 %v1081
      %v2539 = vpop.f32.mrf.mxu0
      %v2540 = vadd.f32 0.0, %v2539
      %v2541 = vpop.f32.mrf.mxu0
      %v2542 = vpop.f32.mrf.mxu0
      %v2543 = vadd.f32 0.0, %v2542
      %v2544 = vpop.f32.mrf.mxu0
      %2545 = vmatprep.mubr.bf16.mxu0 0
      %2546 = vmatmul.mubr.bf16.gmra.mxu0 %v1084
      %v2547 = vpop.f32.mrf.mxu0
      %v2548 = vadd.f32 0.0, %v2547
      %v2549 = vpop.f32.mrf.mxu0
      %v2550 = vpop.f32.mrf.mxu0
      %v2551 = vadd.f32 0.0, %v2550
      %v2552 = vpop.f32.mrf.mxu0
      %2553 = vmatprep.mubr.bf16.mxu0 0
      %2554 = vmatmul.mubr.bf16.gmra.mxu0 %v1087
      %v2555 = vpop.f32.mrf.mxu0
      %v2556 = vadd.f32 0.0, %v2555
      %v2557 = vpop.f32.mrf.mxu0
      %v2558 = vpop.f32.mrf.mxu0
      %v2559 = vadd.f32 0.0, %v2558
      %v2560 = vpop.f32.mrf.mxu0
      %2561 = vmatprep.mubr.bf16.mxu0 0
      %2562 = vmatmul.mubr.bf16.gmra.mxu0 %v1090
      %v2563 = vpop.f32.mrf.mxu0
      %v2564 = vadd.f32 0.0, %v2563
      %v2565 = vpop.f32.mrf.mxu0
      %v2566 = vpop.f32.mrf.mxu0
      %v2567 = vadd.f32 0.0, %v2566
      %v2568 = vpop.f32.mrf.mxu0
      %2569 = vmatprep.mubr.bf16.mxu0 0
      %2570 = vmatmul.mubr.bf16.gmra.mxu0 %v1093
      %v2571 = vpop.f32.mrf.mxu0
      %v2572 = vadd.f32 0.0, %v2571
      %v2573 = vpop.f32.mrf.mxu0
      %v2574 = vpop.f32.mrf.mxu0
      %v2575 = vadd.f32 0.0, %v2574
      %v2576 = vpop.f32.mrf.mxu0
      %2577 = vmatprep.mubr.bf16.mxu0 0
      %2578 = vmatmul.mubr.bf16.gmra.mxu0 %v1096
      %v2579 = vpop.f32.mrf.mxu0
      %v2580 = vadd.f32 0.0, %v2579
      %v2581 = vpop.f32.mrf.mxu0
      %v2582 = vpop.f32.mrf.mxu0
      %v2583 = vadd.f32 0.0, %v2582
      %v2584 = vpop.f32.mrf.mxu0
      %2585 = vmatprep.mubr.bf16.mxu0 0
      %2586 = vmatmul.mubr.bf16.gmra.mxu0 %v1099
      %v2587 = vpop.f32.mrf.mxu0
      %v2588 = vadd.f32 0.0, %v2587
      %v2589 = vpop.f32.mrf.mxu0
      %v2590 = vpop.f32.mrf.mxu0
      %v2591 = vadd.f32 0.0, %v2590
      %v2592 = vpop.f32.mrf.mxu0
      %2593 = vmatprep.mubr.bf16.mxu0 0
      %2594 = vmatmul.mubr.bf16.gmra.mxu0 %v1102
      %v2595 = vpop.f32.mrf.mxu0
      %v2596 = vadd.f32 0.0, %v2595
      %v2597 = vpop.f32.mrf.mxu0
      %v2598 = vpop.f32.mrf.mxu0
      %v2599 = vadd.f32 0.0, %v2598
      %v2600 = vpop.f32.mrf.mxu0
      %2601 = vmatprep.mubr.bf16.mxu0 0
      %2602 = vmatmul.mubr.bf16.gmra.mxu0 %v1105
      %v2603 = vpop.f32.mrf.mxu0
      %v2604 = vadd.f32 0.0, %v2603
      %v2605 = vpop.f32.mrf.mxu0
      %v2606 = vpop.f32.mrf.mxu0
      %v2607 = vadd.f32 0.0, %v2606
      %v2608 = vpop.f32.mrf.mxu0
      %2609 = vmatprep.mubr.bf16.mxu0 0
      %2610 = vmatmul.mubr.bf16.gmra.mxu0 %v1816
      %v2611 = vpop.f32.mrf.mxu0
      %v2612 = vadd.f32 0.0, %v2611
      %v2613 = vpop.f32.mrf.mxu0
      %v2614 = vpop.f32.mrf.mxu0
      %v2615 = vadd.f32 0.0, %v2614
      %v2616 = vpop.f32.mrf.mxu0
      %2617 = vmatprep.mubr.bf16.mxu0 0
      %2618 = vmatmul.mubr.bf16.gmra.mxu0 %v2460
      %v2619 = vpop.f32.mrf.mxu0
      %v2620 = vadd.f32 0.0, %v2619
      %v2621 = vpop.f32.mrf.mxu0
      %v2622 = vpop.f32.mrf.mxu0
      %v2623 = vadd.f32 0.0, %v2622
      %v2624 = vpop.f32.mrf.mxu0
      %2625 = vdwg.mxu0
      %v2626 = vadd.f32 %v2402, %v2500
      %v2627 = vadd.f32 %v2403, %v2503
      %v2628 = vadd.f32 %v2404, %v2508
      %v2629 = vadd.f32 %v2405, %v2511
      %v2630 = vadd.f32 %v2406, %v2516
      %v2631 = vadd.f32 %v2407, %v2519
      %v2632 = vadd.f32 %v2408, %v2524
      %v2633 = vadd.f32 %v2409, %v2527
      %v2634 = vadd.f32 %v2410, %v2532
      %v2635 = vadd.f32 %v2411, %v2535
      %v2636 = vadd.f32 %v2412, %v2540
      %v2637 = vadd.f32 %v2413, %v2543
      %v2638 = vadd.f32 %v2414, %v2548
      %v2639 = vadd.f32 %v2415, %v2551
      %v2640 = vadd.f32 %v2416, %v2556
      %v2641 = vadd.f32 %v2417, %v2559
      %v2642 = vadd.f32 %v2418, %v2564
      %v2643 = vadd.f32 %v2419, %v2567
      %v2644 = vadd.f32 %v2420, %v2572
      %v2645 = vadd.f32 %v2421, %v2575
      %v2646 = vadd.f32 %v2422, %v2580
      %v2647 = vadd.f32 %v2423, %v2583
      %v2648 = vadd.f32 %v2424, %v2588
      %v2649 = vadd.f32 %v2425, %v2591
      %v2650 = vadd.f32 %v2426, %v2596
      %v2651 = vadd.f32 %v2427, %v2599
      %v2652 = vadd.f32 %v2428, %v2604
      %v2653 = vadd.f32 %v2429, %v2607
      %v2654 = vadd.f32 %v2430, %v2612
      %v2655 = vadd.f32 %v2431, %v2615
      %v2656 = vadd.f32 %v2432, %v2620
      %v2657 = vadd.f32 %v2433, %v2623
      %v2660 = vunpack.c.l.b16 %v349
      %v2661 = vunpack.c.l.b16 %v350
      %v2662 = vpack.c.b16 %v2661, %v2660
      %v2664 = vsel %vm797, %v2662, 0
      %v2667 = vsel %vm846, %v359, 0
      %2669 = vmatprep.subr.bf16.mxu0 0
      %2670 = vmatpush1.bf16.msra.mxu0 0
      %2671 = vmatprep.subr.bf16.mxu0 0
      %2672 = vmatpush1.bf16.msra.mxu0 0
      %2673 = vmatprep.subr.bf16.mxu0 0
      %2674 = vmatpush1.bf16.msra.mxu0 0
      %2675 = vmatprep.subr.bf16.mxu0 0
      %2676 = vmatpush1.bf16.msra.mxu0 0
      %2677 = vmatprep.subr.bf16.mxu0 0
      %2678 = vmatpush1.bf16.msra.mxu0 0
      %2679 = vmatprep.subr.bf16.mxu0 0
      %2680 = vmatpush1.bf16.msra.mxu0 0
      %2681 = vmatprep.subr.bf16.mxu0 0
      %2682 = vmatpush1.bf16.msra.mxu0 0
      %2683 = vmatprep.subr.bf16.mxu0 0
      %2684 = vmatpush1.bf16.msra.mxu0 %v2667
      %2685 = vmatprep.subr.bf16.mxu0 0
      %2686 = vmatpush2.bf16.msra.mxu0 0
      %2687 = vmatprep.subr.bf16.mxu0 0
      %2688 = vmatpush2.bf16.msra.mxu0 0
      %2689 = vmatprep.subr.bf16.mxu0 0
      %2690 = vmatpush2.bf16.msra.mxu0 0
      %2691 = vmatprep.subr.bf16.mxu0 0
      %2692 = vmatpush2.bf16.msra.mxu0 0
      %2693 = vmatprep.subr.bf16.mxu0 0
      %2694 = vmatpush2.bf16.msra.mxu0 0
      %2695 = vmatprep.subr.bf16.mxu0 0
      %2696 = vmatpush2.bf16.msra.mxu0 0
      %2697 = vmatprep.subr.bf16.mxu0 0
      %2698 = vmatpush2.bf16.msra.mxu0 0
      %2699 = vmatprep.subr.bf16.mxu0 0
      %2700 = vmatpush2.bf16.msra.mxu0 0
      %2701 = vmatprep.mubr.bf16.mxu0 0
      %2702 = vmatmul.mubr.bf16.gmra.mxu0 %v805
      %v2703 = vpop.f32.mrf.mxu0
      %v2704 = vadd.f32 0.0, %v2703
      %v2705 = vpop.f32.mrf.mxu0
      %v2706 = vpop.f32.mrf.mxu0
      %v2707 = vadd.f32 0.0, %v2706
      %v2708 = vpop.f32.mrf.mxu0
      %2709 = vmatprep.mubr.bf16.mxu0 0
      %2710 = vmatmul.mubr.bf16.gmra.mxu0 %v808
      %v2711 = vpop.f32.mrf.mxu0
      %v2712 = vadd.f32 0.0, %v2711
      %v2713 = vpop.f32.mrf.mxu0
      %v2714 = vpop.f32.mrf.mxu0
      %v2715 = vadd.f32 0.0, %v2714
      %v2716 = vpop.f32.mrf.mxu0
      %2717 = vmatprep.mubr.bf16.mxu0 0
      %2718 = vmatmul.mubr.bf16.gmra.mxu0 %v811
      %v2719 = vpop.f32.mrf.mxu0
      %v2720 = vadd.f32 0.0, %v2719
      %v2721 = vpop.f32.mrf.mxu0
      %v2722 = vpop.f32.mrf.mxu0
      %v2723 = vadd.f32 0.0, %v2722
      %v2724 = vpop.f32.mrf.mxu0
      %2725 = vmatprep.mubr.bf16.mxu0 0
      %2726 = vmatmul.mubr.bf16.gmra.mxu0 %v814
      %v2727 = vpop.f32.mrf.mxu0
      %v2728 = vadd.f32 0.0, %v2727
      %v2729 = vpop.f32.mrf.mxu0
      %v2730 = vpop.f32.mrf.mxu0
      %v2731 = vadd.f32 0.0, %v2730
      %v2732 = vpop.f32.mrf.mxu0
      %2733 = vmatprep.mubr.bf16.mxu0 0
      %2734 = vmatmul.mubr.bf16.gmra.mxu0 %v817
      %v2735 = vpop.f32.mrf.mxu0
      %v2736 = vadd.f32 0.0, %v2735
      %v2737 = vpop.f32.mrf.mxu0
      %v2738 = vpop.f32.mrf.mxu0
      %v2739 = vadd.f32 0.0, %v2738
      %v2740 = vpop.f32.mrf.mxu0
      %2741 = vmatprep.mubr.bf16.mxu0 0
      %2742 = vmatmul.mubr.bf16.gmra.mxu0 %v820
      %v2743 = vpop.f32.mrf.mxu0
      %v2744 = vadd.f32 0.0, %v2743
      %v2745 = vpop.f32.mrf.mxu0
      %v2746 = vpop.f32.mrf.mxu0
      %v2747 = vadd.f32 0.0, %v2746
      %v2748 = vpop.f32.mrf.mxu0
      %2749 = vmatprep.mubr.bf16.mxu0 0
      %2750 = vmatmul.mubr.bf16.gmra.mxu0 %v823
      %v2751 = vpop.f32.mrf.mxu0
      %v2752 = vadd.f32 0.0, %v2751
      %v2753 = vpop.f32.mrf.mxu0
      %v2754 = vpop.f32.mrf.mxu0
      %v2755 = vadd.f32 0.0, %v2754
      %v2756 = vpop.f32.mrf.mxu0
      %2757 = vmatprep.mubr.bf16.mxu0 0
      %2758 = vmatmul.mubr.bf16.gmra.mxu0 %v826
      %v2759 = vpop.f32.mrf.mxu0
      %v2760 = vadd.f32 0.0, %v2759
      %v2761 = vpop.f32.mrf.mxu0
      %v2762 = vpop.f32.mrf.mxu0
      %v2763 = vadd.f32 0.0, %v2762
      %v2764 = vpop.f32.mrf.mxu0
      %2765 = vmatprep.mubr.bf16.mxu0 0
      %2766 = vmatmul.mubr.bf16.gmra.mxu0 %v829
      %v2767 = vpop.f32.mrf.mxu0
      %v2768 = vadd.f32 0.0, %v2767
      %v2769 = vpop.f32.mrf.mxu0
      %v2770 = vpop.f32.mrf.mxu0
      %v2771 = vadd.f32 0.0, %v2770
      %v2772 = vpop.f32.mrf.mxu0
      %2773 = vmatprep.mubr.bf16.mxu0 0
      %2774 = vmatmul.mubr.bf16.gmra.mxu0 %v832
      %v2775 = vpop.f32.mrf.mxu0
      %v2776 = vadd.f32 0.0, %v2775
      %v2777 = vpop.f32.mrf.mxu0
      %v2778 = vpop.f32.mrf.mxu0
      %v2779 = vadd.f32 0.0, %v2778
      %v2780 = vpop.f32.mrf.mxu0
      %2781 = vmatprep.mubr.bf16.mxu0 0
      %2782 = vmatmul.mubr.bf16.gmra.mxu0 %v835
      %v2783 = vpop.f32.mrf.mxu0
      %v2784 = vadd.f32 0.0, %v2783
      %v2785 = vpop.f32.mrf.mxu0
      %v2786 = vpop.f32.mrf.mxu0
      %v2787 = vadd.f32 0.0, %v2786
      %v2788 = vpop.f32.mrf.mxu0
      %2789 = vmatprep.mubr.bf16.mxu0 0
      %2790 = vmatmul.mubr.bf16.gmra.mxu0 %v838
      %v2791 = vpop.f32.mrf.mxu0
      %v2792 = vadd.f32 0.0, %v2791
      %v2793 = vpop.f32.mrf.mxu0
      %v2794 = vpop.f32.mrf.mxu0
      %v2795 = vadd.f32 0.0, %v2794
      %v2796 = vpop.f32.mrf.mxu0
      %2797 = vmatprep.mubr.bf16.mxu0 0
      %2798 = vmatmul.mubr.bf16.gmra.mxu0 %v841
      %v2799 = vpop.f32.mrf.mxu0
      %v2800 = vadd.f32 0.0, %v2799
      %v2801 = vpop.f32.mrf.mxu0
      %v2802 = vpop.f32.mrf.mxu0
      %v2803 = vadd.f32 0.0, %v2802
      %v2804 = vpop.f32.mrf.mxu0
      %2805 = vmatprep.mubr.bf16.mxu0 0
      %2806 = vmatmul.mubr.bf16.gmra.mxu0 %v844
      %v2807 = vpop.f32.mrf.mxu0
      %v2808 = vadd.f32 0.0, %v2807
      %v2809 = vpop.f32.mrf.mxu0
      %v2810 = vpop.f32.mrf.mxu0
      %v2811 = vadd.f32 0.0, %v2810
      %v2812 = vpop.f32.mrf.mxu0
      %2813 = vmatprep.mubr.bf16.mxu0 0
      %2814 = vmatmul.mubr.bf16.gmra.mxu0 %v2020
      %v2815 = vpop.f32.mrf.mxu0
      %v2816 = vadd.f32 0.0, %v2815
      %v2817 = vpop.f32.mrf.mxu0
      %v2818 = vpop.f32.mrf.mxu0
      %v2819 = vadd.f32 0.0, %v2818
      %v2820 = vpop.f32.mrf.mxu0
      %2821 = vmatprep.mubr.bf16.mxu0 0
      %2822 = vmatmul.mubr.bf16.gmra.mxu0 %v2664
      %v2823 = vpop.f32.mrf.mxu0
      %v2824 = vadd.f32 0.0, %v2823
      %v2825 = vpop.f32.mrf.mxu0
      %v2826 = vpop.f32.mrf.mxu0
      %v2827 = vadd.f32 0.0, %v2826
      %v2828 = vpop.f32.mrf.mxu0
      %2829 = vdwg.mxu0
      %v2830 = vadd.f32 %v2626, %v2704
      %v2831 = vadd.f32 %v2627, %v2707
      %v2832 = vadd.f32 %v2628, %v2712
      %v2833 = vadd.f32 %v2629, %v2715
      %v2834 = vadd.f32 %v2630, %v2720
      %v2835 = vadd.f32 %v2631, %v2723
      %v2836 = vadd.f32 %v2632, %v2728
      %v2837 = vadd.f32 %v2633, %v2731
      %v2838 = vadd.f32 %v2634, %v2736
      %v2839 = vadd.f32 %v2635, %v2739
      %v2840 = vadd.f32 %v2636, %v2744
      %v2841 = vadd.f32 %v2637, %v2747
      %v2842 = vadd.f32 %v2638, %v2752
      %v2843 = vadd.f32 %v2639, %v2755
      %v2844 = vadd.f32 %v2640, %v2760
      %v2845 = vadd.f32 %v2641, %v2763
      %v2846 = vadd.f32 %v2642, %v2768
      %v2847 = vadd.f32 %v2643, %v2771
      %v2848 = vadd.f32 %v2644, %v2776
      %v2849 = vadd.f32 %v2645, %v2779
      %v2850 = vadd.f32 %v2646, %v2784
      %v2851 = vadd.f32 %v2647, %v2787
      %v2852 = vadd.f32 %v2648, %v2792
      %v2853 = vadd.f32 %v2649, %v2795
      %v2854 = vadd.f32 %v2650, %v2800
      %v2855 = vadd.f32 %v2651, %v2803
      %v2856 = vadd.f32 %v2652, %v2808
      %v2857 = vadd.f32 %v2653, %v2811
      %v2858 = vadd.f32 %v2654, %v2816
      %v2859 = vadd.f32 %v2655, %v2819
      %v2860 = vadd.f32 %v2656, %v2824
      %v2861 = vadd.f32 %v2657, %v2827
      %v2862 = vrot.slane %v2440, 4
      %v2863 = vrot.slane %v2443, 5
      %v2864 = vor.u32 %v2862, %v2863
      %v2865 = vrot.slane %v2864, 4
      %v2866 = vrot.slane %v2452, 5
      %v2867 = vsel %vm1273, %v2865, %v2866
      %v2868 = vrot.slane %v2449, 4
      %v2869 = vor.u32 %v2868, %v2866
      %v2870 = vrot.slane %v2869, 4
      %v2872 = vshll.u32 %v351, 16
      %v2874 = vrot.slane %v2872, 5
      %v2875 = vsel %vm1273, %v2870, %v2874
      %v2876 = vunpack.c.l.b16 %v2867
      %v2877 = vunpack.c.l.b16 %v2875
      %v2878 = vpack.c.b16 %v2877, %v2876
      %v2880 = vsel %vm797, %v2878, 0
      %v2883 = vsel %vm846, %v360, 0
      %2885 = vmatprep.subr.bf16.mxu0 0
      %2886 = vmatpush1.bf16.msra.mxu0 0
      %2887 = vmatprep.subr.bf16.mxu0 0
      %2888 = vmatpush1.bf16.msra.mxu0 0
      %2889 = vmatprep.subr.bf16.mxu0 0
      %2890 = vmatpush1.bf16.msra.mxu0 0
      %2891 = vmatprep.subr.bf16.mxu0 0
      %2892 = vmatpush1.bf16.msra.mxu0 0
      %2893 = vmatprep.subr.bf16.mxu0 0
      %2894 = vmatpush1.bf16.msra.mxu0 0
      %2895 = vmatprep.subr.bf16.mxu0 0
      %2896 = vmatpush1.bf16.msra.mxu0 0
      %2897 = vmatprep.subr.bf16.mxu0 0
      %2898 = vmatpush1.bf16.msra.mxu0 0
      %2899 = vmatprep.subr.bf16.mxu0 0
      %2900 = vmatpush1.bf16.msra.mxu0 %v2883
      %2901 = vmatprep.subr.bf16.mxu0 0
      %2902 = vmatpush2.bf16.msra.mxu0 0
      %2903 = vmatprep.subr.bf16.mxu0 0
      %2904 = vmatpush2.bf16.msra.mxu0 0
      %2905 = vmatprep.subr.bf16.mxu0 0
      %2906 = vmatpush2.bf16.msra.mxu0 0
      %2907 = vmatprep.subr.bf16.mxu0 0
      %2908 = vmatpush2.bf16.msra.mxu0 0
      %2909 = vmatprep.subr.bf16.mxu0 0
      %2910 = vmatpush2.bf16.msra.mxu0 0
      %2911 = vmatprep.subr.bf16.mxu0 0
      %2912 = vmatpush2.bf16.msra.mxu0 0
      %2913 = vmatprep.subr.bf16.mxu0 0
      %2914 = vmatpush2.bf16.msra.mxu0 0
      %2915 = vmatprep.subr.bf16.mxu0 0
      %2916 = vmatpush2.bf16.msra.mxu0 0
      %2917 = vmatprep.mubr.bf16.mxu0 0
      %2918 = vmatmul.mubr.bf16.gmra.mxu0 %v1553
      %v2919 = vpop.f32.mrf.mxu0
      %v2920 = vadd.f32 0.0, %v2919
      %v2921 = vpop.f32.mrf.mxu0
      %v2922 = vpop.f32.mrf.mxu0
      %v2923 = vadd.f32 0.0, %v2922
      %v2924 = vpop.f32.mrf.mxu0
      %2925 = vmatprep.mubr.bf16.mxu0 0
      %2926 = vmatmul.mubr.bf16.gmra.mxu0 %v1556
      %v2927 = vpop.f32.mrf.mxu0
      %v2928 = vadd.f32 0.0, %v2927
      %v2929 = vpop.f32.mrf.mxu0
      %v2930 = vpop.f32.mrf.mxu0
      %v2931 = vadd.f32 0.0, %v2930
      %v2932 = vpop.f32.mrf.mxu0
      %2933 = vmatprep.mubr.bf16.mxu0 0
      %2934 = vmatmul.mubr.bf16.gmra.mxu0 %v1559
      %v2935 = vpop.f32.mrf.mxu0
      %v2936 = vadd.f32 0.0, %v2935
      %v2937 = vpop.f32.mrf.mxu0
      %v2938 = vpop.f32.mrf.mxu0
      %v2939 = vadd.f32 0.0, %v2938
      %v2940 = vpop.f32.mrf.mxu0
      %2941 = vmatprep.mubr.bf16.mxu0 0
      %2942 = vmatmul.mubr.bf16.gmra.mxu0 %v1562
      %v2943 = vpop.f32.mrf.mxu0
      %v2944 = vadd.f32 0.0, %v2943
      %v2945 = vpop.f32.mrf.mxu0
      %v2946 = vpop.f32.mrf.mxu0
      %v2947 = vadd.f32 0.0, %v2946
      %v2948 = vpop.f32.mrf.mxu0
      %2949 = vmatprep.mubr.bf16.mxu0 0
      %2950 = vmatmul.mubr.bf16.gmra.mxu0 %v1565
      %v2951 = vpop.f32.mrf.mxu0
      %v2952 = vadd.f32 0.0, %v2951
      %v2953 = vpop.f32.mrf.mxu0
      %v2954 = vpop.f32.mrf.mxu0
      %v2955 = vadd.f32 0.0, %v2954
      %v2956 = vpop.f32.mrf.mxu0
      %2957 = vmatprep.mubr.bf16.mxu0 0
      %2958 = vmatmul.mubr.bf16.gmra.mxu0 %v1568
      %v2959 = vpop.f32.mrf.mxu0
      %v2960 = vadd.f32 0.0, %v2959
      %v2961 = vpop.f32.mrf.mxu0
      %v2962 = vpop.f32.mrf.mxu0
      %v2963 = vadd.f32 0.0, %v2962
      %v2964 = vpop.f32.mrf.mxu0
      %2965 = vmatprep.mubr.bf16.mxu0 0
      %2966 = vmatmul.mubr.bf16.gmra.mxu0 %v1571
      %v2967 = vpop.f32.mrf.mxu0
      %v2968 = vadd.f32 0.0, %v2967
      %v2969 = vpop.f32.mrf.mxu0
      %v2970 = vpop.f32.mrf.mxu0
      %v2971 = vadd.f32 0.0, %v2970
      %v2972 = vpop.f32.mrf.mxu0
      %2973 = vmatprep.mubr.bf16.mxu0 0
      %2974 = vmatmul.mubr.bf16.gmra.mxu0 %v1574
      %v2975 = vpop.f32.mrf.mxu0
      %v2976 = vadd.f32 0.0, %v2975
      %v2977 = vpop.f32.mrf.mxu0
      %v2978 = vpop.f32.mrf.mxu0
      %v2979 = vadd.f32 0.0, %v2978
      %v2980 = vpop.f32.mrf.mxu0
      %2981 = vmatprep.mubr.bf16.mxu0 0
      %2982 = vmatmul.mubr.bf16.gmra.mxu0 %v1577
      %v2983 = vpop.f32.mrf.mxu0
      %v2984 = vadd.f32 0.0, %v2983
      %v2985 = vpop.f32.mrf.mxu0
      %v2986 = vpop.f32.mrf.mxu0
      %v2987 = vadd.f32 0.0, %v2986
      %v2988 = vpop.f32.mrf.mxu0
      %2989 = vmatprep.mubr.bf16.mxu0 0
      %2990 = vmatmul.mubr.bf16.gmra.mxu0 %v1580
      %v2991 = vpop.f32.mrf.mxu0
      %v2992 = vadd.f32 0.0, %v2991
      %v2993 = vpop.f32.mrf.mxu0
      %v2994 = vpop.f32.mrf.mxu0
      %v2995 = vadd.f32 0.0, %v2994
      %v2996 = vpop.f32.mrf.mxu0
      %2997 = vmatprep.mubr.bf16.mxu0 0
      %2998 = vmatmul.mubr.bf16.gmra.mxu0 %v1583
      %v2999 = vpop.f32.mrf.mxu0
      %v3000 = vadd.f32 0.0, %v2999
      %v3001 = vpop.f32.mrf.mxu0
      %v3002 = vpop.f32.mrf.mxu0
      %v3003 = vadd.f32 0.0, %v3002
      %v3004 = vpop.f32.mrf.mxu0
      %3005 = vmatprep.mubr.bf16.mxu0 0
      %3006 = vmatmul.mubr.bf16.gmra.mxu0 %v1586
      %v3007 = vpop.f32.mrf.mxu0
      %v3008 = vadd.f32 0.0, %v3007
      %v3009 = vpop.f32.mrf.mxu0
      %v3010 = vpop.f32.mrf.mxu0
      %v3011 = vadd.f32 0.0, %v3010
      %v3012 = vpop.f32.mrf.mxu0
      %3013 = vmatprep.mubr.bf16.mxu0 0
      %3014 = vmatmul.mubr.bf16.gmra.mxu0 %v1589
      %v3015 = vpop.f32.mrf.mxu0
      %v3016 = vadd.f32 0.0, %v3015
      %v3017 = vpop.f32.mrf.mxu0
      %v3018 = vpop.f32.mrf.mxu0
      %v3019 = vadd.f32 0.0, %v3018
      %v3020 = vpop.f32.mrf.mxu0
      %3021 = vmatprep.mubr.bf16.mxu0 0
      %3022 = vmatmul.mubr.bf16.gmra.mxu0 %v1592
      %v3023 = vpop.f32.mrf.mxu0
      %v3024 = vadd.f32 0.0, %v3023
      %v3025 = vpop.f32.mrf.mxu0
      %v3026 = vpop.f32.mrf.mxu0
      %v3027 = vadd.f32 0.0, %v3026
      %v3028 = vpop.f32.mrf.mxu0
      %3029 = vmatprep.mubr.bf16.mxu0 0
      %3030 = vmatmul.mubr.bf16.gmra.mxu0 %v2236
      %v3031 = vpop.f32.mrf.mxu0
      %v3032 = vadd.f32 0.0, %v3031
      %v3033 = vpop.f32.mrf.mxu0
      %v3034 = vpop.f32.mrf.mxu0
      %v3035 = vadd.f32 0.0, %v3034
      %v3036 = vpop.f32.mrf.mxu0
      %3037 = vmatprep.mubr.bf16.mxu0 0
      %3038 = vmatmul.mubr.bf16.gmra.mxu0 %v2880
      %v3039 = vpop.f32.mrf.mxu0
      %v3040 = vadd.f32 0.0, %v3039
      %v3041 = vpop.f32.mrf.mxu0
      %v3042 = vpop.f32.mrf.mxu0
      %v3043 = vadd.f32 0.0, %v3042
      %v3044 = vpop.f32.mrf.mxu0
      %3045 = vdwg.mxu0
      %v3046 = vadd.f32 %v2830, %v2920
      %v3047 = vadd.f32 %v2831, %v2923
      %v3048 = vadd.f32 %v2832, %v2928
      %v3049 = vadd.f32 %v2833, %v2931
      %v3050 = vadd.f32 %v2834, %v2936
      %v3051 = vadd.f32 %v2835, %v2939
      %v3052 = vadd.f32 %v2836, %v2944
      %v3053 = vadd.f32 %v2837, %v2947
      %v3054 = vadd.f32 %v2838, %v2952
      %v3055 = vadd.f32 %v2839, %v2955
      %v3056 = vadd.f32 %v2840, %v2960
      %v3057 = vadd.f32 %v2841, %v2963
      %v3058 = vadd.f32 %v2842, %v2968
      %v3059 = vadd.f32 %v2843, %v2971
      %v3060 = vadd.f32 %v2844, %v2976
      %v3061 = vadd.f32 %v2845, %v2979
      %v3062 = vadd.f32 %v2846, %v2984
      %v3063 = vadd.f32 %v2847, %v2987
      %v3064 = vadd.f32 %v2848, %v2992
      %v3065 = vadd.f32 %v2849, %v2995
      %v3066 = vadd.f32 %v2850, %v3000
      %v3067 = vadd.f32 %v2851, %v3003
      %v3068 = vadd.f32 %v2852, %v3008
      %v3069 = vadd.f32 %v2853, %v3011
      %v3070 = vadd.f32 %v2854, %v3016
      %v3071 = vadd.f32 %v2855, %v3019
      %v3072 = vadd.f32 %v2856, %v3024
      %v3073 = vadd.f32 %v2857, %v3027
      %v3074 = vadd.f32 %v2858, %v3032
      %v3075 = vadd.f32 %v2859, %v3035
      %v3076 = vadd.f32 %v2860, %v3040
      %v3077 = vadd.f32 %v2861, %v3043
      %v3079 = vlaneseq
      %v3080 = vshrl.u32 %v3079, 7
      %v3081 = vsub.s32 0, %v3080
      %v3082 = vrot.slane %v361, %v3081
      %v3084 = vadd.f32 %v3046, %v3082
      %v3085 = vadd.f32 %v3047, %v3082
      %v3086 = vadd.f32 %v3048, %v3082
      %v3087 = vadd.f32 %v3049, %v3082
      %v3088 = vadd.f32 %v3050, %v3082
      %v3089 = vadd.f32 %v3051, %v3082
      %v3090 = vadd.f32 %v3052, %v3082
      %v3091 = vadd.f32 %v3053, %v3082
      %v3092 = vadd.f32 %v3054, %v3082
      %v3093 = vadd.f32 %v3055, %v3082
      %v3094 = vadd.f32 %v3056, %v3082
      %v3095 = vadd.f32 %v3057, %v3082
      %v3096 = vadd.f32 %v3058, %v3082
      %v3097 = vadd.f32 %v3059, %v3082
      %v3098 = vadd.f32 %v3060, %v3082
      %v3099 = vadd.f32 %v3061, %v3082
      %v3100 = vadd.f32 %v3062, %v3082
      %v3101 = vadd.f32 %v3063, %v3082
      %v3102 = vadd.f32 %v3064, %v3082
      %v3103 = vadd.f32 %v3065, %v3082
      %v3104 = vadd.f32 %v3066, %v3082
      %v3105 = vadd.f32 %v3067, %v3082
      %v3106 = vadd.f32 %v3068, %v3082
      %v3107 = vadd.f32 %v3069, %v3082
      %v3108 = vadd.f32 %v3070, %v3082
      %v3109 = vadd.f32 %v3071, %v3082
      %v3110 = vadd.f32 %v3072, %v3082
      %v3111 = vadd.f32 %v3073, %v3082
      %v3112 = vadd.f32 %v3074, %v3082
      %v3113 = vadd.f32 %v3075, %v3082
      %v3114 = vadd.f32 %v3076, %v3082
      %v3115 = vadd.f32 %v3077, %v3082
      %vm3116 = vcmp.gt.f32.partialorder %v3084, 0.0
      %vm3117 = vcmp.gt.f32.partialorder %v3085, 0.0
      %vm3118 = vcmp.gt.f32.partialorder %v3086, 0.0
      %vm3119 = vcmp.gt.f32.partialorder %v3087, 0.0
      %vm3120 = vcmp.gt.f32.partialorder %v3088, 0.0
      %vm3121 = vcmp.gt.f32.partialorder %v3089, 0.0
      %vm3122 = vcmp.gt.f32.partialorder %v3090, 0.0
      %vm3123 = vcmp.gt.f32.partialorder %v3091, 0.0
      %vm3124 = vcmp.gt.f32.partialorder %v3092, 0.0
      %vm3125 = vcmp.gt.f32.partialorder %v3093, 0.0
      %vm3126 = vcmp.gt.f32.partialorder %v3094, 0.0
      %vm3127 = vcmp.gt.f32.partialorder %v3095, 0.0
      %vm3128 = vcmp.gt.f32.partialorder %v3096, 0.0
      %vm3129 = vcmp.gt.f32.partialorder %v3097, 0.0
      %vm3130 = vcmp.gt.f32.partialorder %v3098, 0.0
      %vm3131 = vcmp.gt.f32.partialorder %v3099, 0.0
      %vm3132 = vcmp.gt.f32.partialorder %v3100, 0.0
      %vm3133 = vcmp.gt.f32.partialorder %v3101, 0.0
      %vm3134 = vcmp.gt.f32.partialorder %v3102, 0.0
      %vm3135 = vcmp.gt.f32.partialorder %v3103, 0.0
      %vm3136 = vcmp.gt.f32.partialorder %v3104, 0.0
      %vm3137 = vcmp.gt.f32.partialorder %v3105, 0.0
      %vm3138 = vcmp.gt.f32.partialorder %v3106, 0.0
      %vm3139 = vcmp.gt.f32.partialorder %v3107, 0.0
      %vm3140 = vcmp.gt.f32.partialorder %v3108, 0.0
      %vm3141 = vcmp.gt.f32.partialorder %v3109, 0.0
      %vm3142 = vcmp.gt.f32.partialorder %v3110, 0.0
      %vm3143 = vcmp.gt.f32.partialorder %v3111, 0.0
      %vm3144 = vcmp.gt.f32.partialorder %v3112, 0.0
      %vm3145 = vcmp.gt.f32.partialorder %v3113, 0.0
      %vm3146 = vcmp.gt.f32.partialorder %v3114, 0.0
      %vm3147 = vcmp.gt.f32.partialorder %v3115, 0.0
      %v3148 = vmul.f32 %v3084, 0.1
      %v3149 = vmul.f32 %v3085, 0.1
      %v3150 = vmul.f32 %v3086, 0.1
      %v3151 = vmul.f32 %v3087, 0.1
      %v3152 = vmul.f32 %v3088, 0.1
      %v3153 = vmul.f32 %v3089, 0.1
      %v3154 = vmul.f32 %v3090, 0.1
      %v3155 = vmul.f32 %v3091, 0.1
      %v3156 = vmul.f32 %v3092, 0.1
      %v3157 = vmul.f32 %v3093, 0.1
      %v3158 = vmul.f32 %v3094, 0.1
      %v3159 = vmul.f32 %v3095, 0.1
      %v3160 = vmul.f32 %v3096, 0.1
      %v3161 = vmul.f32 %v3097, 0.1
      %v3162 = vmul.f32 %v3098, 0.1
      %v3163 = vmul.f32 %v3099, 0.1
      %v3164 = vmul.f32 %v3100, 0.1
      %v3165 = vmul.f32 %v3101, 0.1
      %v3166 = vmul.f32 %v3102, 0.1
      %v3167 = vmul.f32 %v3103, 0.1
      %v3168 = vmul.f32 %v3104, 0.1
      %v3169 = vmul.f32 %v3105, 0.1
      %v3170 = vmul.f32 %v3106, 0.1
      %v3171 = vmul.f32 %v3107, 0.1
      %v3172 = vmul.f32 %v3108, 0.1
      %v3173 = vmul.f32 %v3109, 0.1
      %v3174 = vmul.f32 %v3110, 0.1
      %v3175 = vmul.f32 %v3111, 0.1
      %v3176 = vmul.f32 %v3112, 0.1
      %v3177 = vmul.f32 %v3113, 0.1
      %v3178 = vmul.f32 %v3114, 0.1
      %v3179 = vmul.f32 %v3115, 0.1
      %v3180 = vsel %vm3116, %v3084, %v3148
      %v3181 = vsel %vm3117, %v3085, %v3149
      %v3182 = vsel %vm3118, %v3086, %v3150
      %v3183 = vsel %vm3119, %v3087, %v3151
      %v3184 = vsel %vm3120, %v3088, %v3152
      %v3185 = vsel %vm3121, %v3089, %v3153
      %v3186 = vsel %vm3122, %v3090, %v3154
      %v3187 = vsel %vm3123, %v3091, %v3155
      %v3188 = vsel %vm3124, %v3092, %v3156
      %v3189 = vsel %vm3125, %v3093, %v3157
      %v3190 = vsel %vm3126, %v3094, %v3158
      %v3191 = vsel %vm3127, %v3095, %v3159
      %v3192 = vsel %vm3128, %v3096, %v3160
      %v3193 = vsel %vm3129, %v3097, %v3161
      %v3194 = vsel %vm3130, %v3098, %v3162
      %v3195 = vsel %vm3131, %v3099, %v3163
      %v3196 = vsel %vm3132, %v3100, %v3164
      %v3197 = vsel %vm3133, %v3101, %v3165
      %v3198 = vsel %vm3134, %v3102, %v3166
      %v3199 = vsel %vm3135, %v3103, %v3167
      %v3200 = vsel %vm3136, %v3104, %v3168
      %v3201 = vsel %vm3137, %v3105, %v3169
      %v3202 = vsel %vm3138, %v3106, %v3170
      %v3203 = vsel %vm3139, %v3107, %v3171
      %v3204 = vsel %vm3140, %v3108, %v3172
      %v3205 = vsel %vm3141, %v3109, %v3173
      %v3206 = vsel %vm3142, %v3110, %v3174
      %v3207 = vsel %vm3143, %v3111, %v3175
      %v3208 = vsel %vm3144, %v3112, %v3176
      %v3209 = vsel %vm3145, %v3113, %v3177
      %v3210 = vsel %vm3146, %v3114, %v3178
      %v3211 = vsel %vm3147, %v3115, %v3179
      %vm3212 = vcmask 125952
      %3213 = vst.msk [vmem:[#allocation2] sm:$0xf] %vm3212, 0
      %3214 = vst.msk [vmem:[#allocation2 + $0x4] sm:$0xf] %vm3212, 0
      %3215 = vst.msk [vmem:[#allocation2 + $0x8] sm:$0xf] %vm3212, 0
      %3216 = vst.msk [vmem:[#allocation2 + $0xc] sm:$0xf] %vm3212, 0
      %3217 = vst.msk [vmem:[#allocation2 + $0x10] sm:$0xf] %vm3212, 0
      %3218 = vst.msk [vmem:[#allocation2 + $0x14] sm:$0xf] %vm3212, 0
      %3219 = vst.msk [vmem:[#allocation2 + $0x18] sm:$0xf] %vm3212, 0
      %3220 = vst.msk [vmem:[#allocation2 + $0x1c] sm:$0xf] %vm3212, 0
      %3221 = vst.msk [vmem:[#allocation2 + $0x20] sm:$0xf] %vm3212, 0
      %3222 = vst.msk [vmem:[#allocation2 + $0x24] sm:$0xf] %vm3212, 0
      %3223 = vst.msk [vmem:[#allocation2 + $0x28] sm:$0xf] %vm3212, 0
      %3224 = vst.msk [vmem:[#allocation2 + $0x2c] sm:$0xf] %vm3212, 0
      %3225 = vst.msk [vmem:[#allocation2 + $0x30] sm:$0xf] %vm3212, 0
      %3226 = vst.msk [vmem:[#allocation2 + $0x34] sm:$0xf] %vm3212, 0
      %3227 = vst.msk [vmem:[#allocation2 + $0x38] sm:$0xf] %vm3212, 0
      %3228 = vst.msk [vmem:[#allocation2 + $0x3c] sm:$0xf] %vm3212, 0
      %3229 = vst.msk [vmem:[#allocation2 + $0x40] sm:$0xf] %vm3212, 0
      %3230 = vst.msk [vmem:[#allocation2 + $0x44] sm:$0xf] %vm3212, 0
      %3231 = vst.msk [vmem:[#allocation2 + $0x48] sm:$0xf] %vm3212, 0
      %3232 = vst.msk [vmem:[#allocation2 + $0x4c] sm:$0xf] %vm3212, 0
      %3233 = vst.msk [vmem:[#allocation2 + $0x50] sm:$0xf] %vm3212, 0
      %3234 = vst.msk [vmem:[#allocation2 + $0x54] sm:$0xf] %vm3212, 0
      %3235 = vst.msk [vmem:[#allocation2 + $0x58] sm:$0xf] %vm3212, 0
      %3236 = vst.msk [vmem:[#allocation2 + $0x5c] sm:$0xf] %vm3212, 0
      %3237 = vst.msk [vmem:[#allocation2 + $0x60] sm:$0xf] %vm3212, 0
      %3238 = vst.msk [vmem:[#allocation2 + $0x64] sm:$0xf] %vm3212, 0
      %3239 = vst.msk [vmem:[#allocation2 + $0x68] sm:$0xf] %vm3212, 0
      %3240 = vst.msk [vmem:[#allocation2 + $0x6c] sm:$0xf] %vm3212, 0
      %3241 = vst.msk [vmem:[#allocation2 + $0x70] sm:$0xf] %vm3212, 0
      %3242 = vst.msk [vmem:[#allocation2 + $0x74] sm:$0xf] %vm3212, 0
      %3243 = vst.msk [vmem:[#allocation2 + $0x78] sm:$0xf] %vm3212, 0
      %3244 = vst.msk [vmem:[#allocation2 + $0x7c] sm:$0xf] %vm3212, 0
      %3245 = vst.msk [vmem:[#allocation2 + $0x80] sm:$0xf] %vm3212, 0
      %3246 = vst.msk [vmem:[#allocation2 + $0x84] sm:$0xf] %vm3212, 0
      %3247 = vst.msk [vmem:[#allocation2 + $0x88] sm:$0xf] %vm3212, 0
      %3248 = vst.msk [vmem:[#allocation2 + $0x8c] sm:$0xf] %vm3212, 0
      %3249 = vst.msk [vmem:[#allocation2 + $0x90] sm:$0xf] %vm3212, 0
      %3250 = vst.msk [vmem:[#allocation2 + $0x94] sm:$0xf] %vm3212, 0
      %3251 = vst.msk [vmem:[#allocation2 + $0x98] sm:$0xf] %vm3212, 0
      %3252 = vst.msk [vmem:[#allocation2 + $0x9c] sm:$0xf] %vm3212, 0
      %3253 = vst.msk [vmem:[#allocation2 + $0xa0] sm:$0xf] %vm3212, 0
      %3254 = vst.msk [vmem:[#allocation2 + $0xa4] sm:$0xf] %vm3212, 0
      %3255 = vst.msk [vmem:[#allocation2 + $0xa8] sm:$0xf] %vm3212, 0
      %3256 = vst.msk [vmem:[#allocation2 + $0xac] sm:$0xf] %vm3212, 0
      %3257 = vst.msk [vmem:[#allocation2 + $0xb0] sm:$0xf] %vm3212, 0
      %3258 = vst.msk [vmem:[#allocation2 + $0xb4] sm:$0xf] %vm3212, 0
      %3259 = vst.msk [vmem:[#allocation2 + $0xb8] sm:$0xf] %vm3212, 0
      %3260 = vst.msk [vmem:[#allocation2 + $0xbc] sm:$0xf] %vm3212, 0
      %3261 = vst.msk [vmem:[#allocation2 + $0xc0] sm:$0xf] %vm3212, 0
      %3262 = vst.msk [vmem:[#allocation2 + $0xc4] sm:$0xf] %vm3212, 0
      %3263 = vst.msk [vmem:[#allocation2 + $0xc8] sm:$0xf] %vm3212, 0
      %3264 = vst.msk [vmem:[#allocation2 + $0xcc] sm:$0xf] %vm3212, 0
      %3265 = vst.msk [vmem:[#allocation2 + $0xd0] sm:$0xf] %vm3212, 0
      %3266 = vst.msk [vmem:[#allocation2 + $0xd4] sm:$0xf] %vm3212, 0
      %3267 = vst.msk [vmem:[#allocation2 + $0xd8] sm:$0xf] %vm3212, 0
      %3268 = vst.msk [vmem:[#allocation2 + $0xdc] sm:$0xf] %vm3212, 0
      %3269 = vst.msk [vmem:[#allocation2 + $0xe0] sm:$0xf] %vm3212, 0
      %3270 = vst.msk [vmem:[#allocation2 + $0xe4] sm:$0xf] %vm3212, 0
      %3271 = vst.msk [vmem:[#allocation2 + $0xe8] sm:$0xf] %vm3212, 0
      %3272 = vst.msk [vmem:[#allocation2 + $0xec] sm:$0xf] %vm3212, 0
      %3273 = vst.msk [vmem:[#allocation2 + $0xf0] sm:$0xf] %vm3212, 0
      %3274 = vst.msk [vmem:[#allocation2 + $0xf4] sm:$0xf] %vm3212, 0
      %3275 = vst.msk [vmem:[#allocation2 + $0xf8] sm:$0xf] %vm3212, 0
      %3276 = vst.msk [vmem:[#allocation2 + $0xfc] sm:$0xf] %vm3212, 0
      %3277 = vst.msk [vmem:[#allocation2 + $0x100] sm:$0xf] %vm3212, 0
      %3278 = vst.msk [vmem:[#allocation2 + $0x104] sm:$0xf] %vm3212, 0
      %3279 = vst.msk [vmem:[#allocation2 + $0x108] sm:$0xf] %vm3212, 0
      %3280 = vst.msk [vmem:[#allocation2 + $0x10c] sm:$0xf] %vm3212, 0
      %3281 = vst.msk [vmem:[#allocation2 + $0x110] sm:$0xf] %vm3212, 0
      %3282 = vst.msk [vmem:[#allocation2 + $0x114] sm:$0xf] %vm3212, 0
      %3283 = vst.msk [vmem:[#allocation2 + $0x118] sm:$0xf] %vm3212, 0
      %3284 = vst.msk [vmem:[#allocation2 + $0x11c] sm:$0xf] %vm3212, 0
      %v3285 = vpack.c.bf16 %v3181, %v3180
      %v3286 = vpack.c.bf16 %v3183, %v3182
      %v3287 = vpack.c.bf16 %v3185, %v3184
      %v3288 = vpack.c.bf16 %v3187, %v3186
      %v3289 = vpack.c.bf16 %v3189, %v3188
      %v3290 = vpack.c.bf16 %v3191, %v3190
      %v3291 = vpack.c.bf16 %v3193, %v3192
      %v3292 = vpack.c.bf16 %v3195, %v3194
      %v3293 = vpack.c.bf16 %v3197, %v3196
      %v3294 = vpack.c.bf16 %v3199, %v3198
      %v3295 = vpack.c.bf16 %v3201, %v3200
      %v3296 = vpack.c.bf16 %v3203, %v3202
      %v3297 = vpack.c.bf16 %v3205, %v3204
      %v3298 = vpack.c.bf16 %v3207, %v3206
      %v3299 = vpack.c.bf16 %v3209, %v3208
      %v3300 = vpack.c.bf16 %v3211, %v3210
      %v3317 = vunpack.c.l.b16 %v3285
      %v3318 = vunpack.c.h.b16 %v3285
      %v3319 = vunpack.c.l.b16 %v3286
      %v3320 = vunpack.c.h.b16 %v3286
      %v3321 = vunpack.c.l.b16 %v3287
      %v3322 = vunpack.c.h.b16 %v3287
      %v3323 = vunpack.c.l.b16 %v3288
      %v3324 = vunpack.c.h.b16 %v3288
      %v3325 = vunpack.c.l.b16 %v3289
      %v3326 = vunpack.c.h.b16 %v3289
      %v3327 = vunpack.c.l.b16 %v3290
      %v3328 = vunpack.c.h.b16 %v3290
      %v3329 = vunpack.c.l.b16 %v3291
      %v3330 = vunpack.c.h.b16 %v3291
      %v3331 = vunpack.c.l.b16 %v3292
      %v3332 = vunpack.c.h.b16 %v3292
      %v3333 = vunpack.c.l.b16 %v3293
      %v3334 = vunpack.c.h.b16 %v3293
      %v3335 = vunpack.c.l.b16 %v3294
      %v3336 = vunpack.c.h.b16 %v3294
      %v3337 = vunpack.c.l.b16 %v3295
      %v3338 = vunpack.c.h.b16 %v3295
      %v3339 = vunpack.c.l.b16 %v3296
      %v3340 = vunpack.c.h.b16 %v3296
      %v3341 = vunpack.c.l.b16 %v3297
      %v3342 = vunpack.c.h.b16 %v3297
      %v3343 = vunpack.c.l.b16 %v3298
      %v3344 = vunpack.c.h.b16 %v3298
      %v3345 = vunpack.c.l.b16 %v3299
      %v3346 = vunpack.c.h.b16 %v3299
      %v3347 = vunpack.c.l.b16 %v3300
      %v3348 = vunpack.c.h.b16 %v3300
      %v3349 = vpack.c.b16 %v3317, %v3317
      %v3350 = vpack.c.b16 %v3318, %v3318
      %v3351 = vpack.c.b16 %v3319, %v3319
      %v3352 = vpack.c.b16 %v3320, %v3320
      %v3353 = vpack.c.b16 %v3321, %v3321
      %v3354 = vpack.c.b16 %v3322, %v3322
      %v3355 = vpack.c.b16 %v3323, %v3323
      %v3356 = vpack.c.b16 %v3324, %v3324
      %v3357 = vpack.c.b16 %v3325, %v3325
      %v3358 = vpack.c.b16 %v3326, %v3326
      %v3359 = vpack.c.b16 %v3327, %v3327
      %v3360 = vpack.c.b16 %v3328, %v3328
      %v3361 = vpack.c.b16 %v3329, %v3329
      %v3362 = vpack.c.b16 %v3330, %v3330
      %v3363 = vpack.c.b16 %v3331, %v3331
      %v3364 = vpack.c.b16 %v3332, %v3332
      %v3365 = vpack.c.b16 %v3333, %v3333
      %v3366 = vpack.c.b16 %v3334, %v3334
      %v3367 = vpack.c.b16 %v3335, %v3335
      %v3368 = vpack.c.b16 %v3336, %v3336
      %v3369 = vpack.c.b16 %v3337, %v3337
      %v3370 = vpack.c.b16 %v3338, %v3338
      %v3371 = vpack.c.b16 %v3339, %v3339
      %v3372 = vpack.c.b16 %v3340, %v3340
      %v3373 = vpack.c.b16 %v3341, %v3341
      %v3374 = vpack.c.b16 %v3342, %v3342
      %v3375 = vpack.c.b16 %v3343, %v3343
      %v3376 = vpack.c.b16 %v3344, %v3344
      %v3377 = vpack.c.b16 %v3345, %v3345
      %v3378 = vpack.c.b16 %v3346, %v3346
      %v3379 = vpack.c.b16 %v3347, %v3347
      %v3380 = vpack.c.b16 %v3348, %v3348
      %s3413 = scalar_lea.vmem [#allocation2], 16
      %3414 = vst.msk [vmem:[%s3413 + $0x4] sm:$0xf] %vm3212, %v3349
      %3415 = vst.msk [vmem:[%s3413 + $0x8] sm:$0xf] %vm3212, %v3350
      %3416 = vst.msk [vmem:[%s3413 + $0x14] sm:$0xf] %vm3212, %v3351
      %3417 = vst.msk [vmem:[%s3413 + $0x18] sm:$0xf] %vm3212, %v3352
      %3418 = vst.msk [vmem:[%s3413 + $0x24] sm:$0xf] %vm3212, %v3353
      %3419 = vst.msk [vmem:[%s3413 + $0x28] sm:$0xf] %vm3212, %v3354
      %3420 = vst.msk [vmem:[%s3413 + $0x34] sm:$0xf] %vm3212, %v3355
      %3421 = vst.msk [vmem:[%s3413 + $0x38] sm:$0xf] %vm3212, %v3356
      %3422 = vst.msk [vmem:[%s3413 + $0x44] sm:$0xf] %vm3212, %v3357
      %3423 = vst.msk [vmem:[%s3413 + $0x48] sm:$0xf] %vm3212, %v3358
      %3424 = vst.msk [vmem:[%s3413 + $0x54] sm:$0xf] %vm3212, %v3359
      %3425 = vst.msk [vmem:[%s3413 + $0x58] sm:$0xf] %vm3212, %v3360
      %3426 = vst.msk [vmem:[%s3413 + $0x64] sm:$0xf] %vm3212, %v3361
      %3427 = vst.msk [vmem:[%s3413 + $0x68] sm:$0xf] %vm3212, %v3362
      %3428 = vst.msk [vmem:[%s3413 + $0x74] sm:$0xf] %vm3212, %v3363
      %3429 = vst.msk [vmem:[%s3413 + $0x78] sm:$0xf] %vm3212, %v3364
      %3430 = vst.msk [vmem:[%s3413 + $0x84] sm:$0xf] %vm3212, %v3365
      %3431 = vst.msk [vmem:[%s3413 + $0x88] sm:$0xf] %vm3212, %v3366
      %3432 = vst.msk [vmem:[%s3413 + $0x94] sm:$0xf] %vm3212, %v3367
      %3433 = vst.msk [vmem:[%s3413 + $0x98] sm:$0xf] %vm3212, %v3368
      %3434 = vst.msk [vmem:[%s3413 + $0xa4] sm:$0xf] %vm3212, %v3369
      %3435 = vst.msk [vmem:[%s3413 + $0xa8] sm:$0xf] %vm3212, %v3370
      %3436 = vst.msk [vmem:[%s3413 + $0xb4] sm:$0xf] %vm3212, %v3371
      %3437 = vst.msk [vmem:[%s3413 + $0xb8] sm:$0xf] %vm3212, %v3372
      %3438 = vst.msk [vmem:[%s3413 + $0xc4] sm:$0xf] %vm3212, %v3373
      %3439 = vst.msk [vmem:[%s3413 + $0xc8] sm:$0xf] %vm3212, %v3374
      %3440 = vst.msk [vmem:[%s3413 + $0xd4] sm:$0xf] %vm3212, %v3375
      %3441 = vst.msk [vmem:[%s3413 + $0xd8] sm:$0xf] %vm3212, %v3376
      %3442 = vst.msk [vmem:[%s3413 + $0xe4] sm:$0xf] %vm3212, %v3377
      %3443 = vst.msk [vmem:[%s3413 + $0xe8] sm:$0xf] %vm3212, %v3378
      %3444 = vst.msk [vmem:[%s3413 + $0xf4] sm:$0xf] %vm3212, %v3379
      %3445 = vst.msk [vmem:[%s3413 + $0xf8] sm:$0xf] %vm3212, %v3380
      %v3446 = vld [vmem:[#allocation2] sm:$0xf]
      %v3447 = vld [vmem:[#allocation2 + $0x4] sm:$0xf]
      %v3448 = vld [vmem:[#allocation2 + $0x8] sm:$0xf]
      %v3449 = vld [vmem:[#allocation2 + $0xc] sm:$0xf]
      %v3450 = vld [vmem:[#allocation2 + $0x10] sm:$0xf]
      %v3451 = vld [vmem:[#allocation2 + $0x14] sm:$0xf]
      %v3452 = vld [vmem:[#allocation2 + $0x18] sm:$0xf]
      %v3453 = vld [vmem:[#allocation2 + $0x1c] sm:$0xf]
      %v3454 = vld [vmem:[#allocation2 + $0x20] sm:$0xf]
      %v3455 = vld [vmem:[#allocation2 + $0x24] sm:$0xf]
      %v3456 = vld [vmem:[#allocation2 + $0x28] sm:$0xf]
      %v3457 = vld [vmem:[#allocation2 + $0x2c] sm:$0xf]
      %v3458 = vld [vmem:[#allocation2 + $0x30] sm:$0xf]
      %v3459 = vld [vmem:[#allocation2 + $0x34] sm:$0xf]
      %v3460 = vld [vmem:[#allocation2 + $0x38] sm:$0xf]
      %v3461 = vld [vmem:[#allocation2 + $0x3c] sm:$0xf]
      %v3462 = vld [vmem:[#allocation2 + $0x40] sm:$0xf]
      %v3463 = vld [vmem:[#allocation2 + $0x44] sm:$0xf]
      %v3464 = vld [vmem:[#allocation2 + $0x48] sm:$0xf]
      %v3465 = vld [vmem:[#allocation2 + $0x4c] sm:$0xf]
      %v3466 = vld [vmem:[#allocation2 + $0x50] sm:$0xf]
      %v3467 = vld [vmem:[#allocation2 + $0x54] sm:$0xf]
      %v3468 = vld [vmem:[#allocation2 + $0x58] sm:$0xf]
      %v3469 = vld [vmem:[#allocation2 + $0x5c] sm:$0xf]
      %v3470 = vld [vmem:[#allocation2 + $0x60] sm:$0xf]
      %v3471 = vld [vmem:[#allocation2 + $0x64] sm:$0xf]
      %v3472 = vld [vmem:[#allocation2 + $0x68] sm:$0xf]
      %v3473 = vld [vmem:[#allocation2 + $0x6c] sm:$0xf]
      %v3474 = vld [vmem:[#allocation2 + $0x70] sm:$0xf]
      %v3475 = vld [vmem:[#allocation2 + $0x74] sm:$0xf]
      %v3476 = vld [vmem:[#allocation2 + $0x78] sm:$0xf]
      %v3477 = vld [vmem:[#allocation2 + $0x7c] sm:$0xf]
      %v3478 = vld [vmem:[#allocation2 + $0x80] sm:$0xf]
      %v3479 = vld [vmem:[#allocation2 + $0x84] sm:$0xf]
      %v3480 = vld [vmem:[#allocation2 + $0x88] sm:$0xf]
      %v3481 = vld [vmem:[#allocation2 + $0x8c] sm:$0xf]
      %v3482 = vld [vmem:[#allocation2 + $0x90] sm:$0xf]
      %v3483 = vld [vmem:[#allocation2 + $0x94] sm:$0xf]
      %v3484 = vld [vmem:[#allocation2 + $0x98] sm:$0xf]
      %v3485 = vld [vmem:[#allocation2 + $0x9c] sm:$0xf]
      %v3486 = vld [vmem:[#allocation2 + $0xa0] sm:$0xf]
      %v3487 = vld [vmem:[#allocation2 + $0xa4] sm:$0xf]
      %v3488 = vld [vmem:[#allocation2 + $0xa8] sm:$0xf]
      %v3489 = vld [vmem:[#allocation2 + $0xac] sm:$0xf]
      %v3490 = vld [vmem:[#allocation2 + $0xb0] sm:$0xf]
      %v3491 = vld [vmem:[#allocation2 + $0xb4] sm:$0xf]
      %v3492 = vld [vmem:[#allocation2 + $0xb8] sm:$0xf]
      %v3493 = vld [vmem:[#allocation2 + $0xbc] sm:$0xf]
      %v3494 = vld [vmem:[#allocation2 + $0xc0] sm:$0xf]
      %v3495 = vld [vmem:[#allocation2 + $0xc4] sm:$0xf]
      %v3496 = vld [vmem:[#allocation2 + $0xc8] sm:$0xf]
      %v3497 = vld [vmem:[#allocation2 + $0xcc] sm:$0xf]
      %v3498 = vld [vmem:[#allocation2 + $0xd0] sm:$0xf]
      %v3499 = vld [vmem:[#allocation2 + $0xd4] sm:$0xf]
      %v3500 = vld [vmem:[#allocation2 + $0xd8] sm:$0xf]
      %v3501 = vld [vmem:[#allocation2 + $0xdc] sm:$0xf]
      %v3502 = vld [vmem:[#allocation2 + $0xe0] sm:$0xf]
      %v3503 = vld [vmem:[#allocation2 + $0xe4] sm:$0xf]
      %v3504 = vld [vmem:[#allocation2 + $0xe8] sm:$0xf]
      %v3505 = vld [vmem:[#allocation2 + $0xec] sm:$0xf]
      %v3506 = vld [vmem:[#allocation2 + $0xf0] sm:$0xf]
      %v3507 = vld [vmem:[#allocation2 + $0xf4] sm:$0xf]
      %v3508 = vld [vmem:[#allocation2 + $0xf8] sm:$0xf]
      %v3509 = vld [vmem:[#allocation2 + $0xfc] sm:$0xf]
      %v3510 = vld [vmem:[#allocation2 + $0x100] sm:$0xf]
      %v3511 = vld [vmem:[#allocation2 + $0x104] sm:$0xf]
      %v3512 = vld [vmem:[#allocation2 + $0x108] sm:$0xf]
      %v3513 = vld [vmem:[#allocation2 + $0x10c] sm:$0xf]
      %v3514 = vld [vmem:[#allocation2 + $0x110] sm:$0xf]
      %v3515 = vld [vmem:[#allocation2 + $0x114] sm:$0xf]
      %v3516 = vld [vmem:[#allocation2 + $0x118] sm:$0xf]
      %v3517 = vld [vmem:[#allocation2 + $0x11c] sm:$0xf]
      %v3518 = vld [vmem:[%s3] sm:$0xf]
      %v3519 = vld [vmem:[%s3 + $0x4] sm:$0xf]
      %v3520 = vld [vmem:[%s3 + $0x8] sm:$0xf]
      %v3521 = vld [vmem:[%s3 + $0xc] sm:$0xf]
      %v3522 = vld [vmem:[%s3 + $0x10] sm:$0xf]
      %v3523 = vld [vmem:[%s3 + $0x14] sm:$0xf]
      %v3524 = vld [vmem:[%s3 + $0x18] sm:$0xf]
      %v3525 = vld [vmem:[%s3 + $0x1c] sm:$0xf]
      %v3526 = vld [vmem:[%s3 + $0x20] sm:$0xf]
      %v3527 = vld [vmem:[%s3 + $0x24] sm:$0xf]
      %v3528 = vld [vmem:[%s3 + $0x28] sm:$0xf]
      %v3529 = vld [vmem:[%s3 + $0x2c] sm:$0xf]
      %v3530 = vld [vmem:[%s3 + $0x30] sm:$0xf]
      %v3531 = vld [vmem:[%s3 + $0x34] sm:$0xf]
      %v3532 = vld [vmem:[%s3 + $0x38] sm:$0xf]
      %v3533 = vld [vmem:[%s3 + $0x3c] sm:$0xf]
      %v3534 = vld [vmem:[%s3 + $0x40] sm:$0xf]
      %v3535 = vld [vmem:[%s3 + $0x44] sm:$0xf]
      %v3536 = vld [vmem:[%s4] sm:$0x1]
      %v3538 = vshrl.u32 %v3446, 16
      %v3540 = vrot.slane %v3538, 7
      %v3541 = vrot.slane %v3540, 4
      %v3543 = vshrl.u32 %v3447, 16
      %v3545 = vrot.slane %v3543, 7
      %v3546 = vshll.u32 %v3447, 16
      %v3548 = vor.u32 %v3545, %v3546
      %v3549 = vsel %vm364, %v3541, %v3548
      %v3550 = vrot.slane %v3545, 4
      %v3552 = vshrl.u32 %v3448, 16
      %v3554 = vrot.slane %v3552, 7
      %v3555 = vshll.u32 %v3448, 16
      %v3557 = vor.u32 %v3554, %v3555
      %v3558 = vsel %vm364, %v3550, %v3557
      %v3560 = vshrl.u32 %v3450, 16
      %v3562 = vrot.slane %v3560, 7
      %v3563 = vrot.slane %v3562, 4
      %v3565 = vshrl.u32 %v3451, 16
      %v3567 = vrot.slane %v3565, 7
      %v3568 = vshll.u32 %v3451, 16
      %v3570 = vor.u32 %v3567, %v3568
      %v3571 = vsel %vm364, %v3563, %v3570
      %v3572 = vrot.slane %v3567, 4
      %v3574 = vshrl.u32 %v3452, 16
      %v3576 = vrot.slane %v3574, 7
      %v3577 = vshll.u32 %v3452, 16
      %v3579 = vor.u32 %v3576, %v3577
      %v3580 = vsel %vm364, %v3572, %v3579
      %v3582 = vshrl.u32 %v3454, 16
      %v3584 = vrot.slane %v3582, 7
      %v3585 = vrot.slane %v3584, 4
      %v3587 = vshrl.u32 %v3455, 16
      %v3589 = vrot.slane %v3587, 7
      %v3590 = vshll.u32 %v3455, 16
      %v3592 = vor.u32 %v3589, %v3590
      %v3593 = vsel %vm364, %v3585, %v3592
      %v3594 = vrot.slane %v3589, 4
      %v3596 = vshrl.u32 %v3456, 16
      %v3598 = vrot.slane %v3596, 7
      %v3599 = vshll.u32 %v3456, 16
      %v3601 = vor.u32 %v3598, %v3599
      %v3602 = vsel %vm364, %v3594, %v3601
      %v3604 = vshrl.u32 %v3458, 16
      %v3606 = vrot.slane %v3604, 7
      %v3607 = vrot.slane %v3606, 4
      %v3609 = vshrl.u32 %v3459, 16
      %v3611 = vrot.slane %v3609, 7
      %v3612 = vshll.u32 %v3459, 16
      %v3614 = vor.u32 %v3611, %v3612
      %v3615 = vsel %vm364, %v3607, %v3614
      %v3616 = vrot.slane %v3611, 4
      %v3618 = vshrl.u32 %v3460, 16
      %v3620 = vrot.slane %v3618, 7
      %v3621 = vshll.u32 %v3460, 16
      %v3623 = vor.u32 %v3620, %v3621
      %v3624 = vsel %vm364, %v3616, %v3623
      %v3626 = vshrl.u32 %v3462, 16
      %v3628 = vrot.slane %v3626, 7
      %v3629 = vrot.slane %v3628, 4
      %v3631 = vshrl.u32 %v3463, 16
      %v3633 = vrot.slane %v3631, 7
      %v3634 = vshll.u32 %v3463, 16
      %v3636 = vor.u32 %v3633, %v3634
      %v3637 = vsel %vm364, %v3629, %v3636
      %v3638 = vrot.slane %v3633, 4
      %v3640 = vshrl.u32 %v3464, 16
      %v3642 = vrot.slane %v3640, 7
      %v3643 = vshll.u32 %v3464, 16
      %v3645 = vor.u32 %v3642, %v3643
      %v3646 = vsel %vm364, %v3638, %v3645
      %v3648 = vshrl.u32 %v3466, 16
      %v3650 = vrot.slane %v3648, 7
      %v3651 = vrot.slane %v3650, 4
      %v3653 = vshrl.u32 %v3467, 16
      %v3655 = vrot.slane %v3653, 7
      %v3656 = vshll.u32 %v3467, 16
      %v3658 = vor.u32 %v3655, %v3656
      %v3659 = vsel %vm364, %v3651, %v3658
      %v3660 = vrot.slane %v3655, 4
      %v3662 = vshrl.u32 %v3468, 16
      %v3664 = vrot.slane %v3662, 7
      %v3665 = vshll.u32 %v3468, 16
      %v3667 = vor.u32 %v3664, %v3665
      %v3668 = vsel %vm364, %v3660, %v3667
      %v3670 = vshrl.u32 %v3470, 16
      %v3672 = vrot.slane %v3670, 7
      %v3673 = vrot.slane %v3672, 4
      %v3675 = vshrl.u32 %v3471, 16
      %v3677 = vrot.slane %v3675, 7
      %v3678 = vshll.u32 %v3471, 16
      %v3680 = vor.u32 %v3677, %v3678
      %v3681 = vsel %vm364, %v3673, %v3680
      %v3682 = vrot.slane %v3677, 4
      %v3684 = vshrl.u32 %v3472, 16
      %v3686 = vrot.slane %v3684, 7
      %v3687 = vshll.u32 %v3472, 16
      %v3689 = vor.u32 %v3686, %v3687
      %v3690 = vsel %vm364, %v3682, %v3689
      %v3692 = vshrl.u32 %v3474, 16
      %v3694 = vrot.slane %v3692, 7
      %v3695 = vrot.slane %v3694, 4
      %v3697 = vshrl.u32 %v3475, 16
      %v3699 = vrot.slane %v3697, 7
      %v3700 = vshll.u32 %v3475, 16
      %v3702 = vor.u32 %v3699, %v3700
      %v3703 = vsel %vm364, %v3695, %v3702
      %v3704 = vrot.slane %v3699, 4
      %v3706 = vshrl.u32 %v3476, 16
      %v3708 = vrot.slane %v3706, 7
      %v3709 = vshll.u32 %v3476, 16
      %v3711 = vor.u32 %v3708, %v3709
      %v3712 = vsel %vm364, %v3704, %v3711
      %v3714 = vshrl.u32 %v3478, 16
      %v3716 = vrot.slane %v3714, 7
      %v3717 = vrot.slane %v3716, 4
      %v3719 = vshrl.u32 %v3479, 16
      %v3721 = vrot.slane %v3719, 7
      %v3722 = vshll.u32 %v3479, 16
      %v3724 = vor.u32 %v3721, %v3722
      %v3725 = vsel %vm364, %v3717, %v3724
      %v3726 = vrot.slane %v3721, 4
      %v3728 = vshrl.u32 %v3480, 16
      %v3730 = vrot.slane %v3728, 7
      %v3731 = vshll.u32 %v3480, 16
      %v3733 = vor.u32 %v3730, %v3731
      %v3734 = vsel %vm364, %v3726, %v3733
      %v3736 = vshrl.u32 %v3482, 16
      %v3738 = vrot.slane %v3736, 7
      %v3739 = vrot.slane %v3738, 4
      %v3741 = vshrl.u32 %v3483, 16
      %v3743 = vrot.slane %v3741, 7
      %v3744 = vshll.u32 %v3483, 16
      %v3746 = vor.u32 %v3743, %v3744
      %v3747 = vsel %vm364, %v3739, %v3746
      %v3748 = vrot.slane %v3743, 4
      %v3750 = vshrl.u32 %v3484, 16
      %v3752 = vrot.slane %v3750, 7
      %v3753 = vshll.u32 %v3484, 16
      %v3755 = vor.u32 %v3752, %v3753
      %v3756 = vsel %vm364, %v3748, %v3755
      %v3758 = vshrl.u32 %v3486, 16
      %v3760 = vrot.slane %v3758, 7
      %v3761 = vrot.slane %v3760, 4
      %v3763 = vshrl.u32 %v3487, 16
      %v3765 = vrot.slane %v3763, 7
      %v3766 = vshll.u32 %v3487, 16
      %v3768 = vor.u32 %v3765, %v3766
      %v3769 = vsel %vm364, %v3761, %v3768
      %v3770 = vrot.slane %v3765, 4
      %v3772 = vshrl.u32 %v3488, 16
      %v3774 = vrot.slane %v3772, 7
      %v3775 = vshll.u32 %v3488, 16
      %v3777 = vor.u32 %v3774, %v3775
      %v3778 = vsel %vm364, %v3770, %v3777
      %v3780 = vshrl.u32 %v3490, 16
      %v3782 = vrot.slane %v3780, 7
      %v3783 = vrot.slane %v3782, 4
      %v3785 = vshrl.u32 %v3491, 16
      %v3787 = vrot.slane %v3785, 7
      %v3788 = vshll.u32 %v3491, 16
      %v3790 = vor.u32 %v3787, %v3788
      %v3791 = vsel %vm364, %v3783, %v3790
      %v3792 = vrot.slane %v3787, 4
      %v3794 = vshrl.u32 %v3492, 16
      %v3796 = vrot.slane %v3794, 7
      %v3797 = vshll.u32 %v3492, 16
      %v3799 = vor.u32 %v3796, %v3797
      %v3800 = vsel %vm364, %v3792, %v3799
      %v3802 = vshrl.u32 %v3494, 16
      %v3804 = vrot.slane %v3802, 7
      %v3805 = vrot.slane %v3804, 4
      %v3807 = vshrl.u32 %v3495, 16
      %v3809 = vrot.slane %v3807, 7
      %v3810 = vshll.u32 %v3495, 16
      %v3812 = vor.u32 %v3809, %v3810
      %v3813 = vsel %vm364, %v3805, %v3812
      %v3814 = vrot.slane %v3809, 4
      %v3816 = vshrl.u32 %v3496, 16
      %v3818 = vrot.slane %v3816, 7
      %v3819 = vshll.u32 %v3496, 16
      %v3821 = vor.u32 %v3818, %v3819
      %v3822 = vsel %vm364, %v3814, %v3821
      %v3824 = vshrl.u32 %v3498, 16
      %v3826 = vrot.slane %v3824, 7
      %v3827 = vrot.slane %v3826, 4
      %v3829 = vshrl.u32 %v3499, 16
      %v3831 = vrot.slane %v3829, 7
      %v3832 = vshll.u32 %v3499, 16
      %v3834 = vor.u32 %v3831, %v3832
      %v3835 = vsel %vm364, %v3827, %v3834
      %v3836 = vrot.slane %v3831, 4
      %v3838 = vshrl.u32 %v3500, 16
      %v3840 = vrot.slane %v3838, 7
      %v3841 = vshll.u32 %v3500, 16
      %v3843 = vor.u32 %v3840, %v3841
      %v3844 = vsel %vm364, %v3836, %v3843
      %v3846 = vshrl.u32 %v3502, 16
      %v3848 = vrot.slane %v3846, 7
      %v3849 = vrot.slane %v3848, 4
      %v3851 = vshrl.u32 %v3503, 16
      %v3853 = vrot.slane %v3851, 7
      %v3854 = vshll.u32 %v3503, 16
      %v3856 = vor.u32 %v3853, %v3854
      %v3857 = vsel %vm364, %v3849, %v3856
      %v3858 = vrot.slane %v3853, 4
      %v3860 = vshrl.u32 %v3504, 16
      %v3862 = vrot.slane %v3860, 7
      %v3863 = vshll.u32 %v3504, 16
      %v3865 = vor.u32 %v3862, %v3863
      %v3866 = vsel %vm364, %v3858, %v3865
      %v3868 = vshrl.u32 %v3506, 16
      %v3870 = vrot.slane %v3868, 7
      %v3871 = vrot.slane %v3870, 4
      %v3873 = vshrl.u32 %v3507, 16
      %v3875 = vrot.slane %v3873, 7
      %v3876 = vshll.u32 %v3507, 16
      %v3878 = vor.u32 %v3875, %v3876
      %v3879 = vsel %vm364, %v3871, %v3878
      %v3880 = vrot.slane %v3875, 4
      %v3882 = vshrl.u32 %v3508, 16
      %v3884 = vrot.slane %v3882, 7
      %v3885 = vshll.u32 %v3508, 16
      %v3887 = vor.u32 %v3884, %v3885
      %v3888 = vsel %vm364, %v3880, %v3887
      %v3921 = vunpack.c.l.b16 %v3447
      %v3922 = vunpack.c.l.b16 %v3448
      %v3923 = vunpack.c.l.b16 %v3451
      %v3924 = vunpack.c.l.b16 %v3452
      %v3925 = vunpack.c.l.b16 %v3455
      %v3926 = vunpack.c.l.b16 %v3456
      %v3927 = vunpack.c.l.b16 %v3459
      %v3928 = vunpack.c.l.b16 %v3460
      %v3929 = vunpack.c.l.b16 %v3463
      %v3930 = vunpack.c.l.b16 %v3464
      %v3931 = vunpack.c.l.b16 %v3467
      %v3932 = vunpack.c.l.b16 %v3468
      %v3933 = vunpack.c.l.b16 %v3471
      %v3934 = vunpack.c.l.b16 %v3472
      %v3935 = vunpack.c.l.b16 %v3475
      %v3936 = vunpack.c.l.b16 %v3476
      %v3937 = vunpack.c.l.b16 %v3479
      %v3938 = vunpack.c.l.b16 %v3480
      %v3939 = vunpack.c.l.b16 %v3483
      %v3940 = vunpack.c.l.b16 %v3484
      %v3941 = vunpack.c.l.b16 %v3487
      %v3942 = vunpack.c.l.b16 %v3488
      %v3943 = vunpack.c.l.b16 %v3491
      %v3944 = vunpack.c.l.b16 %v3492
      %v3945 = vunpack.c.l.b16 %v3495
      %v3946 = vunpack.c.l.b16 %v3496
      %v3947 = vunpack.c.l.b16 %v3499
      %v3948 = vunpack.c.l.b16 %v3500
      %v3949 = vunpack.c.l.b16 %v3503
      %v3950 = vunpack.c.l.b16 %v3504
      %v3951 = vunpack.c.l.b16 %v3507
      %v3952 = vunpack.c.l.b16 %v3508
      %v3953 = vpack.c.b16 %v3922, %v3921
      %v3954 = vpack.c.b16 %v3924, %v3923
      %v3955 = vpack.c.b16 %v3926, %v3925
      %v3956 = vpack.c.b16 %v3928, %v3927
      %v3957 = vpack.c.b16 %v3930, %v3929
      %v3958 = vpack.c.b16 %v3932, %v3931
      %v3959 = vpack.c.b16 %v3934, %v3933
      %v3960 = vpack.c.b16 %v3936, %v3935
      %v3961 = vpack.c.b16 %v3938, %v3937
      %v3962 = vpack.c.b16 %v3940, %v3939
      %v3963 = vpack.c.b16 %v3942, %v3941
      %v3964 = vpack.c.b16 %v3944, %v3943
      %v3965 = vpack.c.b16 %v3946, %v3945
      %v3966 = vpack.c.b16 %v3948, %v3947
      %v3967 = vpack.c.b16 %v3950, %v3949
      %v3968 = vpack.c.b16 %v3952, %v3951
      %v3971 = vunpack.c.l.b16 %v3520
      %v3972 = vunpack.c.l.b16 %v3521
      %v3973 = vpack.c.b16 %v3972, %v3971
      %vm3975 = vcmask 130048
      %v3977 = vsel %vm3975, %v3953, 0
      %v3980 = vsel %vm3975, %v3954, 0
      %v3983 = vsel %vm3975, %v3955, 0
      %v3986 = vsel %vm3975, %v3956, 0
      %v3989 = vsel %vm3975, %v3957, 0
      %v3992 = vsel %vm3975, %v3958, 0
      %v3995 = vsel %vm3975, %v3959, 0
      %v3998 = vsel %vm3975, %v3960, 0
      %v4001 = vsel %vm3975, %v3961, 0
      %v4004 = vsel %vm3975, %v3962, 0
      %v4007 = vsel %vm3975, %v3963, 0
      %v4010 = vsel %vm3975, %v3964, 0
      %v4013 = vsel %vm3975, %v3965, 0
      %v4016 = vsel %vm3975, %v3966, 0
      %v4019 = vsel %vm3975, %v3967, 0
      %v4022 = vsel %vm3975, %v3968, 0
      %4024 = vmatprep.subr.bf16.mxu0 0
      %4025 = vmatpush1.bf16.msra.mxu0 0
      %4026 = vmatprep.subr.bf16.mxu0 0
      %4027 = vmatpush1.bf16.msra.mxu0 0
      %4028 = vmatprep.subr.bf16.mxu0 0
      %4029 = vmatpush1.bf16.msra.mxu0 0
      %4030 = vmatprep.subr.bf16.mxu0 0
      %4031 = vmatpush1.bf16.msra.mxu0 0
      %4032 = vmatprep.subr.bf16.mxu0 0
      %4033 = vmatpush1.bf16.msra.mxu0 0
      %4034 = vmatprep.subr.bf16.mxu0 0
      %4035 = vmatpush1.bf16.msra.mxu0 0
      %4036 = vmatprep.subr.bf16.mxu0 0
      %4037 = vmatpush1.bf16.msra.mxu0 0
      %4038 = vmatprep.subr.bf16.mxu0 0
      %4039 = vmatpush1.bf16.msra.mxu0 %v3973
      %4040 = vmatprep.subr.bf16.mxu0 0
      %4041 = vmatpush2.bf16.msra.mxu0 0
      %4042 = vmatprep.subr.bf16.mxu0 0
      %4043 = vmatpush2.bf16.msra.mxu0 0
      %4044 = vmatprep.subr.bf16.mxu0 0
      %4045 = vmatpush2.bf16.msra.mxu0 0
      %4046 = vmatprep.subr.bf16.mxu0 0
      %4047 = vmatpush2.bf16.msra.mxu0 0
      %4048 = vmatprep.subr.bf16.mxu0 0
      %4049 = vmatpush2.bf16.msra.mxu0 0
      %4050 = vmatprep.subr.bf16.mxu0 0
      %4051 = vmatpush2.bf16.msra.mxu0 0
      %4052 = vmatprep.subr.bf16.mxu0 0
      %4053 = vmatpush2.bf16.msra.mxu0 0
      %4054 = vmatprep.subr.bf16.mxu0 0
      %4055 = vmatpush2.bf16.msra.mxu0 0
      %4056 = vmatprep.mubr.bf16.mxu0 0
      %4057 = vmatmul.mubr.bf16.gmra.mxu0 %v3977
      %v4058 = vpop.f32.mrf.mxu0
      %v4059 = vadd.f32 0.0, %v4058
      %v4060 = vpop.f32.mrf.mxu0
      %v4061 = vpop.f32.mrf.mxu0
      %v4062 = vadd.f32 0.0, %v4061
      %v4063 = vpop.f32.mrf.mxu0
      %4064 = vmatprep.mubr.bf16.mxu0 0
      %4065 = vmatmul.mubr.bf16.gmra.mxu0 %v3980
      %v4066 = vpop.f32.mrf.mxu0
      %v4067 = vadd.f32 0.0, %v4066
      %v4068 = vpop.f32.mrf.mxu0
      %v4069 = vpop.f32.mrf.mxu0
      %v4070 = vadd.f32 0.0, %v4069
      %v4071 = vpop.f32.mrf.mxu0
      %4072 = vmatprep.mubr.bf16.mxu0 0
      %4073 = vmatmul.mubr.bf16.gmra.mxu0 %v3983
      %v4074 = vpop.f32.mrf.mxu0
      %v4075 = vadd.f32 0.0, %v4074
      %v4076 = vpop.f32.mrf.mxu0
      %v4077 = vpop.f32.mrf.mxu0
      %v4078 = vadd.f32 0.0, %v4077
      %v4079 = vpop.f32.mrf.mxu0
      %4080 = vmatprep.mubr.bf16.mxu0 0
      %4081 = vmatmul.mubr.bf16.gmra.mxu0 %v3986
      %v4082 = vpop.f32.mrf.mxu0
      %v4083 = vadd.f32 0.0, %v4082
      %v4084 = vpop.f32.mrf.mxu0
      %v4085 = vpop.f32.mrf.mxu0
      %v4086 = vadd.f32 0.0, %v4085
      %v4087 = vpop.f32.mrf.mxu0
      %4088 = vmatprep.mubr.bf16.mxu0 0
      %4089 = vmatmul.mubr.bf16.gmra.mxu0 %v3989
      %v4090 = vpop.f32.mrf.mxu0
      %v4091 = vadd.f32 0.0, %v4090
      %v4092 = vpop.f32.mrf.mxu0
      %v4093 = vpop.f32.mrf.mxu0
      %v4094 = vadd.f32 0.0, %v4093
      %v4095 = vpop.f32.mrf.mxu0
      %4096 = vmatprep.mubr.bf16.mxu0 0
      %4097 = vmatmul.mubr.bf16.gmra.mxu0 %v3992
      %v4098 = vpop.f32.mrf.mxu0
      %v4099 = vadd.f32 0.0, %v4098
      %v4100 = vpop.f32.mrf.mxu0
      %v4101 = vpop.f32.mrf.mxu0
      %v4102 = vadd.f32 0.0, %v4101
      %v4103 = vpop.f32.mrf.mxu0
      %4104 = vmatprep.mubr.bf16.mxu0 0
      %4105 = vmatmul.mubr.bf16.gmra.mxu0 %v3995
      %v4106 = vpop.f32.mrf.mxu0
      %v4107 = vadd.f32 0.0, %v4106
      %v4108 = vpop.f32.mrf.mxu0
      %v4109 = vpop.f32.mrf.mxu0
      %v4110 = vadd.f32 0.0, %v4109
      %v4111 = vpop.f32.mrf.mxu0
      %4112 = vmatprep.mubr.bf16.mxu0 0
      %4113 = vmatmul.mubr.bf16.gmra.mxu0 %v3998
      %v4114 = vpop.f32.mrf.mxu0
      %v4115 = vadd.f32 0.0, %v4114
      %v4116 = vpop.f32.mrf.mxu0
      %v4117 = vpop.f32.mrf.mxu0
      %v4118 = vadd.f32 0.0, %v4117
      %v4119 = vpop.f32.mrf.mxu0
      %4120 = vmatprep.mubr.bf16.mxu0 0
      %4121 = vmatmul.mubr.bf16.gmra.mxu0 %v4001
      %v4122 = vpop.f32.mrf.mxu0
      %v4123 = vadd.f32 0.0, %v4122
      %v4124 = vpop.f32.mrf.mxu0
      %v4125 = vpop.f32.mrf.mxu0
      %v4126 = vadd.f32 0.0, %v4125
      %v4127 = vpop.f32.mrf.mxu0
      %4128 = vmatprep.mubr.bf16.mxu0 0
      %4129 = vmatmul.mubr.bf16.gmra.mxu0 %v4004
      %v4130 = vpop.f32.mrf.mxu0
      %v4131 = vadd.f32 0.0, %v4130
      %v4132 = vpop.f32.mrf.mxu0
      %v4133 = vpop.f32.mrf.mxu0
      %v4134 = vadd.f32 0.0, %v4133
      %v4135 = vpop.f32.mrf.mxu0
      %4136 = vmatprep.mubr.bf16.mxu0 0
      %4137 = vmatmul.mubr.bf16.gmra.mxu0 %v4007
      %v4138 = vpop.f32.mrf.mxu0
      %v4139 = vadd.f32 0.0, %v4138
      %v4140 = vpop.f32.mrf.mxu0
      %v4141 = vpop.f32.mrf.mxu0
      %v4142 = vadd.f32 0.0, %v4141
      %v4143 = vpop.f32.mrf.mxu0
      %4144 = vmatprep.mubr.bf16.mxu0 0
      %4145 = vmatmul.mubr.bf16.gmra.mxu0 %v4010
      %v4146 = vpop.f32.mrf.mxu0
      %v4147 = vadd.f32 0.0, %v4146
      %v4148 = vpop.f32.mrf.mxu0
      %v4149 = vpop.f32.mrf.mxu0
      %v4150 = vadd.f32 0.0, %v4149
      %v4151 = vpop.f32.mrf.mxu0
      %4152 = vmatprep.mubr.bf16.mxu0 0
      %4153 = vmatmul.mubr.bf16.gmra.mxu0 %v4013
      %v4154 = vpop.f32.mrf.mxu0
      %v4155 = vadd.f32 0.0, %v4154
      %v4156 = vpop.f32.mrf.mxu0
      %v4157 = vpop.f32.mrf.mxu0
      %v4158 = vadd.f32 0.0, %v4157
      %v4159 = vpop.f32.mrf.mxu0
      %4160 = vmatprep.mubr.bf16.mxu0 0
      %4161 = vmatmul.mubr.bf16.gmra.mxu0 %v4016
      %v4162 = vpop.f32.mrf.mxu0
      %v4163 = vadd.f32 0.0, %v4162
      %v4164 = vpop.f32.mrf.mxu0
      %v4165 = vpop.f32.mrf.mxu0
      %v4166 = vadd.f32 0.0, %v4165
      %v4167 = vpop.f32.mrf.mxu0
      %4168 = vmatprep.mubr.bf16.mxu0 0
      %4169 = vmatmul.mubr.bf16.gmra.mxu0 %v4019
      %v4170 = vpop.f32.mrf.mxu0
      %v4171 = vadd.f32 0.0, %v4170
      %v4172 = vpop.f32.mrf.mxu0
      %v4173 = vpop.f32.mrf.mxu0
      %v4174 = vadd.f32 0.0, %v4173
      %v4175 = vpop.f32.mrf.mxu0
      %4176 = vmatprep.mubr.bf16.mxu0 0
      %4177 = vmatmul.mubr.bf16.gmra.mxu0 %v4022
      %v4178 = vpop.f32.mrf.mxu0
      %v4179 = vadd.f32 0.0, %v4178
      %v4180 = vpop.f32.mrf.mxu0
      %v4181 = vpop.f32.mrf.mxu0
      %v4182 = vadd.f32 0.0, %v4181
      %v4183 = vpop.f32.mrf.mxu0
      %4184 = vdwg.mxu0
      %v4185 = vunpack.c.l.b16 %v3549
      %v4186 = vunpack.c.l.b16 %v3558
      %v4187 = vunpack.c.l.b16 %v3571
      %v4188 = vunpack.c.l.b16 %v3580
      %v4189 = vunpack.c.l.b16 %v3593
      %v4190 = vunpack.c.l.b16 %v3602
      %v4191 = vunpack.c.l.b16 %v3615
      %v4192 = vunpack.c.l.b16 %v3624
      %v4193 = vunpack.c.l.b16 %v3637
      %v4194 = vunpack.c.l.b16 %v3646
      %v4195 = vunpack.c.l.b16 %v3659
      %v4196 = vunpack.c.l.b16 %v3668
      %v4197 = vunpack.c.l.b16 %v3681
      %v4198 = vunpack.c.l.b16 %v3690
      %v4199 = vunpack.c.l.b16 %v3703
      %v4200 = vunpack.c.l.b16 %v3712
      %v4201 = vunpack.c.l.b16 %v3725
      %v4202 = vunpack.c.l.b16 %v3734
      %v4203 = vunpack.c.l.b16 %v3747
      %v4204 = vunpack.c.l.b16 %v3756
      %v4205 = vunpack.c.l.b16 %v3769
      %v4206 = vunpack.c.l.b16 %v3778
      %v4207 = vunpack.c.l.b16 %v3791
      %v4208 = vunpack.c.l.b16 %v3800
      %v4209 = vunpack.c.l.b16 %v3813
      %v4210 = vunpack.c.l.b16 %v3822
      %v4211 = vunpack.c.l.b16 %v3835
      %v4212 = vunpack.c.l.b16 %v3844
      %v4213 = vunpack.c.l.b16 %v3857
      %v4214 = vunpack.c.l.b16 %v3866
      %v4215 = vunpack.c.l.b16 %v3879
      %v4216 = vunpack.c.l.b16 %v3888
      %v4217 = vpack.c.b16 %v4186, %v4185
      %v4218 = vpack.c.b16 %v4188, %v4187
      %v4219 = vpack.c.b16 %v4190, %v4189
      %v4220 = vpack.c.b16 %v4192, %v4191
      %v4221 = vpack.c.b16 %v4194, %v4193
      %v4222 = vpack.c.b16 %v4196, %v4195
      %v4223 = vpack.c.b16 %v4198, %v4197
      %v4224 = vpack.c.b16 %v4200, %v4199
      %v4225 = vpack.c.b16 %v4202, %v4201
      %v4226 = vpack.c.b16 %v4204, %v4203
      %v4227 = vpack.c.b16 %v4206, %v4205
      %v4228 = vpack.c.b16 %v4208, %v4207
      %v4229 = vpack.c.b16 %v4210, %v4209
      %v4230 = vpack.c.b16 %v4212, %v4211
      %v4231 = vpack.c.b16 %v4214, %v4213
      %v4232 = vpack.c.b16 %v4216, %v4215
      %v4235 = vunpack.c.l.b16 %v3518
      %v4236 = vunpack.c.l.b16 %v3519
      %v4237 = vpack.c.b16 %v4236, %v4235
      %v4240 = vsel %vm3975, %v4217, 0
      %v4243 = vsel %vm3975, %v4218, 0
      %v4246 = vsel %vm3975, %v4219, 0
      %v4249 = vsel %vm3975, %v4220, 0
      %v4252 = vsel %vm3975, %v4221, 0
      %v4255 = vsel %vm3975, %v4222, 0
      %v4258 = vsel %vm3975, %v4223, 0
      %v4261 = vsel %vm3975, %v4224, 0
      %v4264 = vsel %vm3975, %v4225, 0
      %v4267 = vsel %vm3975, %v4226, 0
      %v4270 = vsel %vm3975, %v4227, 0
      %v4273 = vsel %vm3975, %v4228, 0
      %v4276 = vsel %vm3975, %v4229, 0
      %v4279 = vsel %vm3975, %v4230, 0
      %v4282 = vsel %vm3975, %v4231, 0
      %v4285 = vsel %vm3975, %v4232, 0
      %4287 = vmatprep.subr.bf16.mxu0 0
      %4288 = vmatpush1.bf16.msra.mxu0 0
      %4289 = vmatprep.subr.bf16.mxu0 0
      %4290 = vmatpush1.bf16.msra.mxu0 0
      %4291 = vmatprep.subr.bf16.mxu0 0
      %4292 = vmatpush1.bf16.msra.mxu0 0
      %4293 = vmatprep.subr.bf16.mxu0 0
      %4294 = vmatpush1.bf16.msra.mxu0 0
      %4295 = vmatprep.subr.bf16.mxu0 0
      %4296 = vmatpush1.bf16.msra.mxu0 0
      %4297 = vmatprep.subr.bf16.mxu0 0
      %4298 = vmatpush1.bf16.msra.mxu0 0
      %4299 = vmatprep.subr.bf16.mxu0 0
      %4300 = vmatpush1.bf16.msra.mxu0 0
      %4301 = vmatprep.subr.bf16.mxu0 0
      %4302 = vmatpush1.bf16.msra.mxu0 %v4237
      %4303 = vmatprep.subr.bf16.mxu0 0
      %4304 = vmatpush2.bf16.msra.mxu0 0
      %4305 = vmatprep.subr.bf16.mxu0 0
      %4306 = vmatpush2.bf16.msra.mxu0 0
      %4307 = vmatprep.subr.bf16.mxu0 0
      %4308 = vmatpush2.bf16.msra.mxu0 0
      %4309 = vmatprep.subr.bf16.mxu0 0
      %4310 = vmatpush2.bf16.msra.mxu0 0
      %4311 = vmatprep.subr.bf16.mxu0 0
      %4312 = vmatpush2.bf16.msra.mxu0 0
      %4313 = vmatprep.subr.bf16.mxu0 0
      %4314 = vmatpush2.bf16.msra.mxu0 0
      %4315 = vmatprep.subr.bf16.mxu0 0
      %4316 = vmatpush2.bf16.msra.mxu0 0
      %4317 = vmatprep.subr.bf16.mxu0 0
      %4318 = vmatpush2.bf16.msra.mxu0 0
      %4319 = vmatprep.mubr.bf16.mxu0 0
      %4320 = vmatmul.mubr.bf16.gmra.mxu0 %v4240
      %v4321 = vpop.f32.mrf.mxu0
      %v4322 = vadd.f32 %v4059, %v4321
      %v4323 = vpop.f32.mrf.mxu0
      %v4324 = vpop.f32.mrf.mxu0
      %v4325 = vadd.f32 %v4062, %v4324
      %v4326 = vpop.f32.mrf.mxu0
      %4327 = vmatprep.mubr.bf16.mxu0 0
      %4328 = vmatmul.mubr.bf16.gmra.mxu0 %v4243
      %v4329 = vpop.f32.mrf.mxu0
      %v4330 = vadd.f32 %v4067, %v4329
      %v4331 = vpop.f32.mrf.mxu0
      %v4332 = vpop.f32.mrf.mxu0
      %v4333 = vadd.f32 %v4070, %v4332
      %v4334 = vpop.f32.mrf.mxu0
      %4335 = vmatprep.mubr.bf16.mxu0 0
      %4336 = vmatmul.mubr.bf16.gmra.mxu0 %v4246
      %v4337 = vpop.f32.mrf.mxu0
      %v4338 = vadd.f32 %v4075, %v4337
      %v4339 = vpop.f32.mrf.mxu0
      %v4340 = vpop.f32.mrf.mxu0
      %v4341 = vadd.f32 %v4078, %v4340
      %v4342 = vpop.f32.mrf.mxu0
      %4343 = vmatprep.mubr.bf16.mxu0 0
      %4344 = vmatmul.mubr.bf16.gmra.mxu0 %v4249
      %v4345 = vpop.f32.mrf.mxu0
      %v4346 = vadd.f32 %v4083, %v4345
      %v4347 = vpop.f32.mrf.mxu0
      %v4348 = vpop.f32.mrf.mxu0
      %v4349 = vadd.f32 %v4086, %v4348
      %v4350 = vpop.f32.mrf.mxu0
      %4351 = vmatprep.mubr.bf16.mxu0 0
      %4352 = vmatmul.mubr.bf16.gmra.mxu0 %v4252
      %v4353 = vpop.f32.mrf.mxu0
      %v4354 = vadd.f32 %v4091, %v4353
      %v4355 = vpop.f32.mrf.mxu0
      %v4356 = vpop.f32.mrf.mxu0
      %v4357 = vadd.f32 %v4094, %v4356
      %v4358 = vpop.f32.mrf.mxu0
      %4359 = vmatprep.mubr.bf16.mxu0 0
      %4360 = vmatmul.mubr.bf16.gmra.mxu0 %v4255
      %v4361 = vpop.f32.mrf.mxu0
      %v4362 = vadd.f32 %v4099, %v4361
      %v4363 = vpop.f32.mrf.mxu0
      %v4364 = vpop.f32.mrf.mxu0
      %v4365 = vadd.f32 %v4102, %v4364
      %v4366 = vpop.f32.mrf.mxu0
      %4367 = vmatprep.mubr.bf16.mxu0 0
      %4368 = vmatmul.mubr.bf16.gmra.mxu0 %v4258
      %v4369 = vpop.f32.mrf.mxu0
      %v4370 = vadd.f32 %v4107, %v4369
      %v4371 = vpop.f32.mrf.mxu0
      %v4372 = vpop.f32.mrf.mxu0
      %v4373 = vadd.f32 %v4110, %v4372
      %v4374 = vpop.f32.mrf.mxu0
      %4375 = vmatprep.mubr.bf16.mxu0 0
      %4376 = vmatmul.mubr.bf16.gmra.mxu0 %v4261
      %v4377 = vpop.f32.mrf.mxu0
      %v4378 = vadd.f32 %v4115, %v4377
      %v4379 = vpop.f32.mrf.mxu0
      %v4380 = vpop.f32.mrf.mxu0
      %v4381 = vadd.f32 %v4118, %v4380
      %v4382 = vpop.f32.mrf.mxu0
      %4383 = vmatprep.mubr.bf16.mxu0 0
      %4384 = vmatmul.mubr.bf16.gmra.mxu0 %v4264
      %v4385 = vpop.f32.mrf.mxu0
      %v4386 = vadd.f32 %v4123, %v4385
      %v4387 = vpop.f32.mrf.mxu0
      %v4388 = vpop.f32.mrf.mxu0
      %v4389 = vadd.f32 %v4126, %v4388
      %v4390 = vpop.f32.mrf.mxu0
      %4391 = vmatprep.mubr.bf16.mxu0 0
      %4392 = vmatmul.mubr.bf16.gmra.mxu0 %v4267
      %v4393 = vpop.f32.mrf.mxu0
      %v4394 = vadd.f32 %v4131, %v4393
      %v4395 = vpop.f32.mrf.mxu0
      %v4396 = vpop.f32.mrf.mxu0
      %v4397 = vadd.f32 %v4134, %v4396
      %v4398 = vpop.f32.mrf.mxu0
      %4399 = vmatprep.mubr.bf16.mxu0 0
      %4400 = vmatmul.mubr.bf16.gmra.mxu0 %v4270
      %v4401 = vpop.f32.mrf.mxu0
      %v4402 = vadd.f32 %v4139, %v4401
      %v4403 = vpop.f32.mrf.mxu0
      %v4404 = vpop.f32.mrf.mxu0
      %v4405 = vadd.f32 %v4142, %v4404
      %v4406 = vpop.f32.mrf.mxu0
      %4407 = vmatprep.mubr.bf16.mxu0 0
      %4408 = vmatmul.mubr.bf16.gmra.mxu0 %v4273
      %v4409 = vpop.f32.mrf.mxu0
      %v4410 = vadd.f32 %v4147, %v4409
      %v4411 = vpop.f32.mrf.mxu0
      %v4412 = vpop.f32.mrf.mxu0
      %v4413 = vadd.f32 %v4150, %v4412
      %v4414 = vpop.f32.mrf.mxu0
      %4415 = vmatprep.mubr.bf16.mxu0 0
      %4416 = vmatmul.mubr.bf16.gmra.mxu0 %v4276
      %v4417 = vpop.f32.mrf.mxu0
      %v4418 = vadd.f32 %v4155, %v4417
      %v4419 = vpop.f32.mrf.mxu0
      %v4420 = vpop.f32.mrf.mxu0
      %v4421 = vadd.f32 %v4158, %v4420
      %v4422 = vpop.f32.mrf.mxu0
      %4423 = vmatprep.mubr.bf16.mxu0 0
      %4424 = vmatmul.mubr.bf16.gmra.mxu0 %v4279
      %v4425 = vpop.f32.mrf.mxu0
      %v4426 = vadd.f32 %v4163, %v4425
      %v4427 = vpop.f32.mrf.mxu0
      %v4428 = vpop.f32.mrf.mxu0
      %v4429 = vadd.f32 %v4166, %v4428
      %v4430 = vpop.f32.mrf.mxu0
      %4431 = vmatprep.mubr.bf16.mxu0 0
      %4432 = vmatmul.mubr.bf16.gmra.mxu0 %v4282
      %v4433 = vpop.f32.mrf.mxu0
      %v4434 = vadd.f32 %v4171, %v4433
      %v4435 = vpop.f32.mrf.mxu0
      %v4436 = vpop.f32.mrf.mxu0
      %v4437 = vadd.f32 %v4174, %v4436
      %v4438 = vpop.f32.mrf.mxu0
      %4439 = vmatprep.mubr.bf16.mxu0 0
      %4440 = vmatmul.mubr.bf16.gmra.mxu0 %v4285
      %v4441 = vpop.f32.mrf.mxu0
      %v4442 = vadd.f32 %v4179, %v4441
      %v4443 = vpop.f32.mrf.mxu0
      %v4444 = vpop.f32.mrf.mxu0
      %v4445 = vadd.f32 %v4182, %v4444
      %v4446 = vpop.f32.mrf.mxu0
      %4447 = vdwg.mxu0
      %v4448 = vrot.slane %v3543, 4
      %v4449 = vrot.slane %v3546, 5
      %v4450 = vor.u32 %v4448, %v4449
      %v4451 = vrot.slane %v4450, 4
      %v4452 = vrot.slane %v3555, 5
      %v4453 = vsel %vm1273, %v4451, %v4452
      %v4454 = vrot.slane %v3552, 4
      %v4455 = vor.u32 %v4454, %v4452
      %v4456 = vrot.slane %v4455, 4
      %v4458 = vshll.u32 %v3449, 16
      %v4460 = vrot.slane %v4458, 5
      %v4461 = vsel %vm1273, %v4456, %v4460
      %v4462 = vrot.slane %v3565, 4
      %v4463 = vrot.slane %v3568, 5
      %v4464 = vor.u32 %v4462, %v4463
      %v4465 = vrot.slane %v4464, 4
      %v4466 = vrot.slane %v3577, 5
      %v4467 = vsel %vm1273, %v4465, %v4466
      %v4468 = vrot.slane %v3574, 4
      %v4469 = vor.u32 %v4468, %v4466
      %v4470 = vrot.slane %v4469, 4
      %v4472 = vshll.u32 %v3453, 16
      %v4474 = vrot.slane %v4472, 5
      %v4475 = vsel %vm1273, %v4470, %v4474
      %v4476 = vrot.slane %v3587, 4
      %v4477 = vrot.slane %v3590, 5
      %v4478 = vor.u32 %v4476, %v4477
      %v4479 = vrot.slane %v4478, 4
      %v4480 = vrot.slane %v3599, 5
      %v4481 = vsel %vm1273, %v4479, %v4480
      %v4482 = vrot.slane %v3596, 4
      %v4483 = vor.u32 %v4482, %v4480
      %v4484 = vrot.slane %v4483, 4
      %v4486 = vshll.u32 %v3457, 16
      %v4488 = vrot.slane %v4486, 5
      %v4489 = vsel %vm1273, %v4484, %v4488
      %v4490 = vrot.slane %v3609, 4
      %v4491 = vrot.slane %v3612, 5
      %v4492 = vor.u32 %v4490, %v4491
      %v4493 = vrot.slane %v4492, 4
      %v4494 = vrot.slane %v3621, 5
      %v4495 = vsel %vm1273, %v4493, %v4494
      %v4496 = vrot.slane %v3618, 4
      %v4497 = vor.u32 %v4496, %v4494
      %v4498 = vrot.slane %v4497, 4
      %v4500 = vshll.u32 %v3461, 16
      %v4502 = vrot.slane %v4500, 5
      %v4503 = vsel %vm1273, %v4498, %v4502
      %v4504 = vrot.slane %v3631, 4
      %v4505 = vrot.slane %v3634, 5
      %v4506 = vor.u32 %v4504, %v4505
      %v4507 = vrot.slane %v4506, 4
      %v4508 = vrot.slane %v3643, 5
      %v4509 = vsel %vm1273, %v4507, %v4508
      %v4510 = vrot.slane %v3640, 4
      %v4511 = vor.u32 %v4510, %v4508
      %v4512 = vrot.slane %v4511, 4
      %v4514 = vshll.u32 %v3465, 16
      %v4516 = vrot.slane %v4514, 5
      %v4517 = vsel %vm1273, %v4512, %v4516
      %v4518 = vrot.slane %v3653, 4
      %v4519 = vrot.slane %v3656, 5
      %v4520 = vor.u32 %v4518, %v4519
      %v4521 = vrot.slane %v4520, 4
      %v4522 = vrot.slane %v3665, 5
      %v4523 = vsel %vm1273, %v4521, %v4522
      %v4524 = vrot.slane %v3662, 4
      %v4525 = vor.u32 %v4524, %v4522
      %v4526 = vrot.slane %v4525, 4
      %v4528 = vshll.u32 %v3469, 16
      %v4530 = vrot.slane %v4528, 5
      %v4531 = vsel %vm1273, %v4526, %v4530
      %v4532 = vrot.slane %v3675, 4
      %v4533 = vrot.slane %v3678, 5
      %v4534 = vor.u32 %v4532, %v4533
      %v4535 = vrot.slane %v4534, 4
      %v4536 = vrot.slane %v3687, 5
      %v4537 = vsel %vm1273, %v4535, %v4536
      %v4538 = vrot.slane %v3684, 4
      %v4539 = vor.u32 %v4538, %v4536
      %v4540 = vrot.slane %v4539, 4
      %v4542 = vshll.u32 %v3473, 16
      %v4544 = vrot.slane %v4542, 5
      %v4545 = vsel %vm1273, %v4540, %v4544
      %v4546 = vrot.slane %v3697, 4
      %v4547 = vrot.slane %v3700, 5
      %v4548 = vor.u32 %v4546, %v4547
      %v4549 = vrot.slane %v4548, 4
      %v4550 = vrot.slane %v3709, 5
      %v4551 = vsel %vm1273, %v4549, %v4550
      %v4552 = vrot.slane %v3706, 4
      %v4553 = vor.u32 %v4552, %v4550
      %v4554 = vrot.slane %v4553, 4
      %v4556 = vshll.u32 %v3477, 16
      %v4558 = vrot.slane %v4556, 5
      %v4559 = vsel %vm1273, %v4554, %v4558
      %v4560 = vrot.slane %v3719, 4
      %v4561 = vrot.slane %v3722, 5
      %v4562 = vor.u32 %v4560, %v4561
      %v4563 = vrot.slane %v4562, 4
      %v4564 = vrot.slane %v3731, 5
      %v4565 = vsel %vm1273, %v4563, %v4564
      %v4566 = vrot.slane %v3728, 4
      %v4567 = vor.u32 %v4566, %v4564
      %v4568 = vrot.slane %v4567, 4
      %v4570 = vshll.u32 %v3481, 16
      %v4572 = vrot.slane %v4570, 5
      %v4573 = vsel %vm1273, %v4568, %v4572
      %v4574 = vrot.slane %v3741, 4
      %v4575 = vrot.slane %v3744, 5
      %v4576 = vor.u32 %v4574, %v4575
      %v4577 = vrot.slane %v4576, 4
      %v4578 = vrot.slane %v3753, 5
      %v4579 = vsel %vm1273, %v4577, %v4578
      %v4580 = vrot.slane %v3750, 4
      %v4581 = vor.u32 %v4580, %v4578
      %v4582 = vrot.slane %v4581, 4
      %v4584 = vshll.u32 %v3485, 16
      %v4586 = vrot.slane %v4584, 5
      %v4587 = vsel %vm1273, %v4582, %v4586
      %v4588 = vrot.slane %v3763, 4
      %v4589 = vrot.slane %v3766, 5
      %v4590 = vor.u32 %v4588, %v4589
      %v4591 = vrot.slane %v4590, 4
      %v4592 = vrot.slane %v3775, 5
      %v4593 = vsel %vm1273, %v4591, %v4592
      %v4594 = vrot.slane %v3772, 4
      %v4595 = vor.u32 %v4594, %v4592
      %v4596 = vrot.slane %v4595, 4
      %v4598 = vshll.u32 %v3489, 16
      %v4600 = vrot.slane %v4598, 5
      %v4601 = vsel %vm1273, %v4596, %v4600
      %v4602 = vrot.slane %v3785, 4
      %v4603 = vrot.slane %v3788, 5
      %v4604 = vor.u32 %v4602, %v4603
      %v4605 = vrot.slane %v4604, 4
      %v4606 = vrot.slane %v3797, 5
      %v4607 = vsel %vm1273, %v4605, %v4606
      %v4608 = vrot.slane %v3794, 4
      %v4609 = vor.u32 %v4608, %v4606
      %v4610 = vrot.slane %v4609, 4
      %v4612 = vshll.u32 %v3493, 16
      %v4614 = vrot.slane %v4612, 5
      %v4615 = vsel %vm1273, %v4610, %v4614
      %v4616 = vrot.slane %v3807, 4
      %v4617 = vrot.slane %v3810, 5
      %v4618 = vor.u32 %v4616, %v4617
      %v4619 = vrot.slane %v4618, 4
      %v4620 = vrot.slane %v3819, 5
      %v4621 = vsel %vm1273, %v4619, %v4620
      %v4622 = vrot.slane %v3816, 4
      %v4623 = vor.u32 %v4622, %v4620
      %v4624 = vrot.slane %v4623, 4
      %v4626 = vshll.u32 %v3497, 16
      %v4628 = vrot.slane %v4626, 5
      %v4629 = vsel %vm1273, %v4624, %v4628
      %v4630 = vrot.slane %v3829, 4
      %v4631 = vrot.slane %v3832, 5
      %v4632 = vor.u32 %v4630, %v4631
      %v4633 = vrot.slane %v4632, 4
      %v4634 = vrot.slane %v3841, 5
      %v4635 = vsel %vm1273, %v4633, %v4634
      %v4636 = vrot.slane %v3838, 4
      %v4637 = vor.u32 %v4636, %v4634
      %v4638 = vrot.slane %v4637, 4
      %v4640 = vshll.u32 %v3501, 16
      %v4642 = vrot.slane %v4640, 5
      %v4643 = vsel %vm1273, %v4638, %v4642
      %v4644 = vrot.slane %v3851, 4
      %v4645 = vrot.slane %v3854, 5
      %v4646 = vor.u32 %v4644, %v4645
      %v4647 = vrot.slane %v4646, 4
      %v4648 = vrot.slane %v3863, 5
      %v4649 = vsel %vm1273, %v4647, %v4648
      %v4650 = vrot.slane %v3860, 4
      %v4651 = vor.u32 %v4650, %v4648
      %v4652 = vrot.slane %v4651, 4
      %v4654 = vshll.u32 %v3505, 16
      %v4656 = vrot.slane %v4654, 5
      %v4657 = vsel %vm1273, %v4652, %v4656
      %v4658 = vrot.slane %v3873, 4
      %v4659 = vrot.slane %v3876, 5
      %v4660 = vor.u32 %v4658, %v4659
      %v4661 = vrot.slane %v4660, 4
      %v4662 = vrot.slane %v3885, 5
      %v4663 = vsel %vm1273, %v4661, %v4662
      %v4664 = vrot.slane %v3882, 4
      %v4665 = vor.u32 %v4664, %v4662
      %v4666 = vrot.slane %v4665, 4
      %v4668 = vshll.u32 %v3509, 16
      %v4670 = vrot.slane %v4668, 5
      %v4671 = vsel %vm1273, %v4666, %v4670
      %v4672 = vunpack.c.l.b16 %v4453
      %v4673 = vunpack.c.l.b16 %v4461
      %v4674 = vunpack.c.l.b16 %v4467
      %v4675 = vunpack.c.l.b16 %v4475
      %v4676 = vunpack.c.l.b16 %v4481
      %v4677 = vunpack.c.l.b16 %v4489
      %v4678 = vunpack.c.l.b16 %v4495
      %v4679 = vunpack.c.l.b16 %v4503
      %v4680 = vunpack.c.l.b16 %v4509
      %v4681 = vunpack.c.l.b16 %v4517
      %v4682 = vunpack.c.l.b16 %v4523
      %v4683 = vunpack.c.l.b16 %v4531
      %v4684 = vunpack.c.l.b16 %v4537
      %v4685 = vunpack.c.l.b16 %v4545
      %v4686 = vunpack.c.l.b16 %v4551
      %v4687 = vunpack.c.l.b16 %v4559
      %v4688 = vunpack.c.l.b16 %v4565
      %v4689 = vunpack.c.l.b16 %v4573
      %v4690 = vunpack.c.l.b16 %v4579
      %v4691 = vunpack.c.l.b16 %v4587
      %v4692 = vunpack.c.l.b16 %v4593
      %v4693 = vunpack.c.l.b16 %v4601
      %v4694 = vunpack.c.l.b16 %v4607
      %v4695 = vunpack.c.l.b16 %v4615
      %v4696 = vunpack.c.l.b16 %v4621
      %v4697 = vunpack.c.l.b16 %v4629
      %v4698 = vunpack.c.l.b16 %v4635
      %v4699 = vunpack.c.l.b16 %v4643
      %v4700 = vunpack.c.l.b16 %v4649
      %v4701 = vunpack.c.l.b16 %v4657
      %v4702 = vunpack.c.l.b16 %v4663
      %v4703 = vunpack.c.l.b16 %v4671
      %v4704 = vpack.c.b16 %v4673, %v4672
      %v4705 = vpack.c.b16 %v4675, %v4674
      %v4706 = vpack.c.b16 %v4677, %v4676
      %v4707 = vpack.c.b16 %v4679, %v4678
      %v4708 = vpack.c.b16 %v4681, %v4680
      %v4709 = vpack.c.b16 %v4683, %v4682
      %v4710 = vpack.c.b16 %v4685, %v4684
      %v4711 = vpack.c.b16 %v4687, %v4686
      %v4712 = vpack.c.b16 %v4689, %v4688
      %v4713 = vpack.c.b16 %v4691, %v4690
      %v4714 = vpack.c.b16 %v4693, %v4692
      %v4715 = vpack.c.b16 %v4695, %v4694
      %v4716 = vpack.c.b16 %v4697, %v4696
      %v4717 = vpack.c.b16 %v4699, %v4698
      %v4718 = vpack.c.b16 %v4701, %v4700
      %v4719 = vpack.c.b16 %v4703, %v4702
      %v4722 = vunpack.c.l.b16 %v3522
      %v4723 = vunpack.c.l.b16 %v3523
      %v4724 = vpack.c.b16 %v4723, %v4722
      %v4727 = vsel %vm3975, %v4704, 0
      %v4730 = vsel %vm3975, %v4705, 0
      %v4733 = vsel %vm3975, %v4706, 0
      %v4736 = vsel %vm3975, %v4707, 0
      %v4739 = vsel %vm3975, %v4708, 0
      %v4742 = vsel %vm3975, %v4709, 0
      %v4745 = vsel %vm3975, %v4710, 0
      %v4748 = vsel %vm3975, %v4711, 0
      %v4751 = vsel %vm3975, %v4712, 0
      %v4754 = vsel %vm3975, %v4713, 0
      %v4757 = vsel %vm3975, %v4714, 0
      %v4760 = vsel %vm3975, %v4715, 0
      %v4763 = vsel %vm3975, %v4716, 0
      %v4766 = vsel %vm3975, %v4717, 0
      %v4769 = vsel %vm3975, %v4718, 0
      %v4772 = vsel %vm3975, %v4719, 0
      %4774 = vmatprep.subr.bf16.mxu0 0
      %4775 = vmatpush1.bf16.msra.mxu0 0
      %4776 = vmatprep.subr.bf16.mxu0 0
      %4777 = vmatpush1.bf16.msra.mxu0 0
      %4778 = vmatprep.subr.bf16.mxu0 0
      %4779 = vmatpush1.bf16.msra.mxu0 0
      %4780 = vmatprep.subr.bf16.mxu0 0
      %4781 = vmatpush1.bf16.msra.mxu0 0
      %4782 = vmatprep.subr.bf16.mxu0 0
      %4783 = vmatpush1.bf16.msra.mxu0 0
      %4784 = vmatprep.subr.bf16.mxu0 0
      %4785 = vmatpush1.bf16.msra.mxu0 0
      %4786 = vmatprep.subr.bf16.mxu0 0
      %4787 = vmatpush1.bf16.msra.mxu0 0
      %4788 = vmatprep.subr.bf16.mxu0 0
      %4789 = vmatpush1.bf16.msra.mxu0 %v4724
      %4790 = vmatprep.subr.bf16.mxu0 0
      %4791 = vmatpush2.bf16.msra.mxu0 0
      %4792 = vmatprep.subr.bf16.mxu0 0
      %4793 = vmatpush2.bf16.msra.mxu0 0
      %4794 = vmatprep.subr.bf16.mxu0 0
      %4795 = vmatpush2.bf16.msra.mxu0 0
      %4796 = vmatprep.subr.bf16.mxu0 0
      %4797 = vmatpush2.bf16.msra.mxu0 0
      %4798 = vmatprep.subr.bf16.mxu0 0
      %4799 = vmatpush2.bf16.msra.mxu0 0
      %4800 = vmatprep.subr.bf16.mxu0 0
      %4801 = vmatpush2.bf16.msra.mxu0 0
      %4802 = vmatprep.subr.bf16.mxu0 0
      %4803 = vmatpush2.bf16.msra.mxu0 0
      %4804 = vmatprep.subr.bf16.mxu0 0
      %4805 = vmatpush2.bf16.msra.mxu0 0
      %4806 = vmatprep.mubr.bf16.mxu0 0
      %4807 = vmatmul.mubr.bf16.gmra.mxu0 %v4727
      %v4808 = vpop.f32.mrf.mxu0
      %v4809 = vadd.f32 0.0, %v4808
      %v4810 = vpop.f32.mrf.mxu0
      %v4811 = vpop.f32.mrf.mxu0
      %v4812 = vadd.f32 0.0, %v4811
      %v4813 = vpop.f32.mrf.mxu0
      %4814 = vmatprep.mubr.bf16.mxu0 0
      %4815 = vmatmul.mubr.bf16.gmra.mxu0 %v4730
      %v4816 = vpop.f32.mrf.mxu0
      %v4817 = vadd.f32 0.0, %v4816
      %v4818 = vpop.f32.mrf.mxu0
      %v4819 = vpop.f32.mrf.mxu0
      %v4820 = vadd.f32 0.0, %v4819
      %v4821 = vpop.f32.mrf.mxu0
      %4822 = vmatprep.mubr.bf16.mxu0 0
      %4823 = vmatmul.mubr.bf16.gmra.mxu0 %v4733
      %v4824 = vpop.f32.mrf.mxu0
      %v4825 = vadd.f32 0.0, %v4824
      %v4826 = vpop.f32.mrf.mxu0
      %v4827 = vpop.f32.mrf.mxu0
      %v4828 = vadd.f32 0.0, %v4827
      %v4829 = vpop.f32.mrf.mxu0
      %4830 = vmatprep.mubr.bf16.mxu0 0
      %4831 = vmatmul.mubr.bf16.gmra.mxu0 %v4736
      %v4832 = vpop.f32.mrf.mxu0
      %v4833 = vadd.f32 0.0, %v4832
      %v4834 = vpop.f32.mrf.mxu0
      %v4835 = vpop.f32.mrf.mxu0
      %v4836 = vadd.f32 0.0, %v4835
      %v4837 = vpop.f32.mrf.mxu0
      %4838 = vmatprep.mubr.bf16.mxu0 0
      %4839 = vmatmul.mubr.bf16.gmra.mxu0 %v4739
      %v4840 = vpop.f32.mrf.mxu0
      %v4841 = vadd.f32 0.0, %v4840
      %v4842 = vpop.f32.mrf.mxu0
      %v4843 = vpop.f32.mrf.mxu0
      %v4844 = vadd.f32 0.0, %v4843
      %v4845 = vpop.f32.mrf.mxu0
      %4846 = vmatprep.mubr.bf16.mxu0 0
      %4847 = vmatmul.mubr.bf16.gmra.mxu0 %v4742
      %v4848 = vpop.f32.mrf.mxu0
      %v4849 = vadd.f32 0.0, %v4848
      %v4850 = vpop.f32.mrf.mxu0
      %v4851 = vpop.f32.mrf.mxu0
      %v4852 = vadd.f32 0.0, %v4851
      %v4853 = vpop.f32.mrf.mxu0
      %4854 = vmatprep.mubr.bf16.mxu0 0
      %4855 = vmatmul.mubr.bf16.gmra.mxu0 %v4745
      %v4856 = vpop.f32.mrf.mxu0
      %v4857 = vadd.f32 0.0, %v4856
      %v4858 = vpop.f32.mrf.mxu0
      %v4859 = vpop.f32.mrf.mxu0
      %v4860 = vadd.f32 0.0, %v4859
      %v4861 = vpop.f32.mrf.mxu0
      %4862 = vmatprep.mubr.bf16.mxu0 0
      %4863 = vmatmul.mubr.bf16.gmra.mxu0 %v4748
      %v4864 = vpop.f32.mrf.mxu0
      %v4865 = vadd.f32 0.0, %v4864
      %v4866 = vpop.f32.mrf.mxu0
      %v4867 = vpop.f32.mrf.mxu0
      %v4868 = vadd.f32 0.0, %v4867
      %v4869 = vpop.f32.mrf.mxu0
      %4870 = vmatprep.mubr.bf16.mxu0 0
      %4871 = vmatmul.mubr.bf16.gmra.mxu0 %v4751
      %v4872 = vpop.f32.mrf.mxu0
      %v4873 = vadd.f32 0.0, %v4872
      %v4874 = vpop.f32.mrf.mxu0
      %v4875 = vpop.f32.mrf.mxu0
      %v4876 = vadd.f32 0.0, %v4875
      %v4877 = vpop.f32.mrf.mxu0
      %4878 = vmatprep.mubr.bf16.mxu0 0
      %4879 = vmatmul.mubr.bf16.gmra.mxu0 %v4754
      %v4880 = vpop.f32.mrf.mxu0
      %v4881 = vadd.f32 0.0, %v4880
      %v4882 = vpop.f32.mrf.mxu0
      %v4883 = vpop.f32.mrf.mxu0
      %v4884 = vadd.f32 0.0, %v4883
      %v4885 = vpop.f32.mrf.mxu0
      %4886 = vmatprep.mubr.bf16.mxu0 0
      %4887 = vmatmul.mubr.bf16.gmra.mxu0 %v4757
      %v4888 = vpop.f32.mrf.mxu0
      %v4889 = vadd.f32 0.0, %v4888
      %v4890 = vpop.f32.mrf.mxu0
      %v4891 = vpop.f32.mrf.mxu0
      %v4892 = vadd.f32 0.0, %v4891
      %v4893 = vpop.f32.mrf.mxu0
      %4894 = vmatprep.mubr.bf16.mxu0 0
      %4895 = vmatmul.mubr.bf16.gmra.mxu0 %v4760
      %v4896 = vpop.f32.mrf.mxu0
      %v4897 = vadd.f32 0.0, %v4896
      %v4898 = vpop.f32.mrf.mxu0
      %v4899 = vpop.f32.mrf.mxu0
      %v4900 = vadd.f32 0.0, %v4899
      %v4901 = vpop.f32.mrf.mxu0
      %4902 = vmatprep.mubr.bf16.mxu0 0
      %4903 = vmatmul.mubr.bf16.gmra.mxu0 %v4763
      %v4904 = vpop.f32.mrf.mxu0
      %v4905 = vadd.f32 0.0, %v4904
      %v4906 = vpop.f32.mrf.mxu0
      %v4907 = vpop.f32.mrf.mxu0
      %v4908 = vadd.f32 0.0, %v4907
      %v4909 = vpop.f32.mrf.mxu0
      %4910 = vmatprep.mubr.bf16.mxu0 0
      %4911 = vmatmul.mubr.bf16.gmra.mxu0 %v4766
      %v4912 = vpop.f32.mrf.mxu0
      %v4913 = vadd.f32 0.0, %v4912
      %v4914 = vpop.f32.mrf.mxu0
      %v4915 = vpop.f32.mrf.mxu0
      %v4916 = vadd.f32 0.0, %v4915
      %v4917 = vpop.f32.mrf.mxu0
      %4918 = vmatprep.mubr.bf16.mxu0 0
      %4919 = vmatmul.mubr.bf16.gmra.mxu0 %v4769
      %v4920 = vpop.f32.mrf.mxu0
      %v4921 = vadd.f32 0.0, %v4920
      %v4922 = vpop.f32.mrf.mxu0
      %v4923 = vpop.f32.mrf.mxu0
      %v4924 = vadd.f32 0.0, %v4923
      %v4925 = vpop.f32.mrf.mxu0
      %4926 = vmatprep.mubr.bf16.mxu0 0
      %4927 = vmatmul.mubr.bf16.gmra.mxu0 %v4772
      %v4928 = vpop.f32.mrf.mxu0
      %v4929 = vadd.f32 0.0, %v4928
      %v4930 = vpop.f32.mrf.mxu0
      %v4931 = vpop.f32.mrf.mxu0
      %v4932 = vadd.f32 0.0, %v4931
      %v4933 = vpop.f32.mrf.mxu0
      %4934 = vdwg.mxu0
      %v4935 = vadd.f32 %v4322, %v4809
      %v4936 = vadd.f32 %v4325, %v4812
      %v4937 = vadd.f32 %v4330, %v4817
      %v4938 = vadd.f32 %v4333, %v4820
      %v4939 = vadd.f32 %v4338, %v4825
      %v4940 = vadd.f32 %v4341, %v4828
      %v4941 = vadd.f32 %v4346, %v4833
      %v4942 = vadd.f32 %v4349, %v4836
      %v4943 = vadd.f32 %v4354, %v4841
      %v4944 = vadd.f32 %v4357, %v4844
      %v4945 = vadd.f32 %v4362, %v4849
      %v4946 = vadd.f32 %v4365, %v4852
      %v4947 = vadd.f32 %v4370, %v4857
      %v4948 = vadd.f32 %v4373, %v4860
      %v4949 = vadd.f32 %v4378, %v4865
      %v4950 = vadd.f32 %v4381, %v4868
      %v4951 = vadd.f32 %v4386, %v4873
      %v4952 = vadd.f32 %v4389, %v4876
      %v4953 = vadd.f32 %v4394, %v4881
      %v4954 = vadd.f32 %v4397, %v4884
      %v4955 = vadd.f32 %v4402, %v4889
      %v4956 = vadd.f32 %v4405, %v4892
      %v4957 = vadd.f32 %v4410, %v4897
      %v4958 = vadd.f32 %v4413, %v4900
      %v4959 = vadd.f32 %v4418, %v4905
      %v4960 = vadd.f32 %v4421, %v4908
      %v4961 = vadd.f32 %v4426, %v4913
      %v4962 = vadd.f32 %v4429, %v4916
      %v4963 = vadd.f32 %v4434, %v4921
      %v4964 = vadd.f32 %v4437, %v4924
      %v4965 = vadd.f32 %v4442, %v4929
      %v4966 = vadd.f32 %v4445, %v4932
      %v4968 = vshrl.u32 %v3510, 16
      %v4970 = vrot.slane %v4968, 7
      %v4971 = vrot.slane %v4970, 4
      %v4973 = vshrl.u32 %v3511, 16
      %v4975 = vrot.slane %v4973, 7
      %v4976 = vshll.u32 %v3511, 16
      %v4978 = vor.u32 %v4975, %v4976
      %v4979 = vsel %vm364, %v4971, %v4978
      %v4980 = vrot.slane %v4975, 4
      %v4982 = vshrl.u32 %v3512, 16
      %v4984 = vrot.slane %v4982, 7
      %v4985 = vshll.u32 %v3512, 16
      %v4987 = vor.u32 %v4984, %v4985
      %v4988 = vsel %vm364, %v4980, %v4987
      %v4989 = vunpack.c.l.b16 %v4979
      %v4990 = vunpack.c.l.b16 %v4988
      %v4991 = vpack.c.b16 %v4990, %v4989
      %v4994 = vunpack.c.l.b16 %v3524
      %v4995 = vunpack.c.l.b16 %v3525
      %v4996 = vpack.c.b16 %v4995, %v4994
      %v4999 = vsel %vm3975, %v4991, 0
      %5001 = vmatprep.subr.bf16.mxu0 0
      %5002 = vmatpush1.bf16.msra.mxu0 0
      %5003 = vmatprep.subr.bf16.mxu0 0
      %5004 = vmatpush1.bf16.msra.mxu0 0
      %5005 = vmatprep.subr.bf16.mxu0 0
      %5006 = vmatpush1.bf16.msra.mxu0 0
      %5007 = vmatprep.subr.bf16.mxu0 0
      %5008 = vmatpush1.bf16.msra.mxu0 0
      %5009 = vmatprep.subr.bf16.mxu0 0
      %5010 = vmatpush1.bf16.msra.mxu0 0
      %5011 = vmatprep.subr.bf16.mxu0 0
      %5012 = vmatpush1.bf16.msra.mxu0 0
      %5013 = vmatprep.subr.bf16.mxu0 0
      %5014 = vmatpush1.bf16.msra.mxu0 0
      %5015 = vmatprep.subr.bf16.mxu0 0
      %5016 = vmatpush1.bf16.msra.mxu0 %v4996
      %5017 = vmatprep.subr.bf16.mxu0 0
      %5018 = vmatpush2.bf16.msra.mxu0 0
      %5019 = vmatprep.subr.bf16.mxu0 0
      %5020 = vmatpush2.bf16.msra.mxu0 0
      %5021 = vmatprep.subr.bf16.mxu0 0
      %5022 = vmatpush2.bf16.msra.mxu0 0
      %5023 = vmatprep.subr.bf16.mxu0 0
      %5024 = vmatpush2.bf16.msra.mxu0 0
      %5025 = vmatprep.subr.bf16.mxu0 0
      %5026 = vmatpush2.bf16.msra.mxu0 0
      %5027 = vmatprep.subr.bf16.mxu0 0
      %5028 = vmatpush2.bf16.msra.mxu0 0
      %5029 = vmatprep.subr.bf16.mxu0 0
      %5030 = vmatpush2.bf16.msra.mxu0 0
      %5031 = vmatprep.subr.bf16.mxu0 0
      %5032 = vmatpush2.bf16.msra.mxu0 0
      %5033 = vmatprep.mubr.bf16.mxu0 0
      %5034 = vmatmul.mubr.bf16.gmra.mxu0 %v4243
      %v5035 = vpop.f32.mrf.mxu0
      %v5036 = vadd.f32 0.0, %v5035
      %v5037 = vpop.f32.mrf.mxu0
      %v5038 = vpop.f32.mrf.mxu0
      %v5039 = vadd.f32 0.0, %v5038
      %v5040 = vpop.f32.mrf.mxu0
      %5041 = vmatprep.mubr.bf16.mxu0 0
      %5042 = vmatmul.mubr.bf16.gmra.mxu0 %v4246
      %v5043 = vpop.f32.mrf.mxu0
      %v5044 = vadd.f32 0.0, %v5043
      %v5045 = vpop.f32.mrf.mxu0
      %v5046 = vpop.f32.mrf.mxu0
      %v5047 = vadd.f32 0.0, %v5046
      %v5048 = vpop.f32.mrf.mxu0
      %5049 = vmatprep.mubr.bf16.mxu0 0
      %5050 = vmatmul.mubr.bf16.gmra.mxu0 %v4249
      %v5051 = vpop.f32.mrf.mxu0
      %v5052 = vadd.f32 0.0, %v5051
      %v5053 = vpop.f32.mrf.mxu0
      %v5054 = vpop.f32.mrf.mxu0
      %v5055 = vadd.f32 0.0, %v5054
      %v5056 = vpop.f32.mrf.mxu0
      %5057 = vmatprep.mubr.bf16.mxu0 0
      %5058 = vmatmul.mubr.bf16.gmra.mxu0 %v4252
      %v5059 = vpop.f32.mrf.mxu0
      %v5060 = vadd.f32 0.0, %v5059
      %v5061 = vpop.f32.mrf.mxu0
      %v5062 = vpop.f32.mrf.mxu0
      %v5063 = vadd.f32 0.0, %v5062
      %v5064 = vpop.f32.mrf.mxu0
      %5065 = vmatprep.mubr.bf16.mxu0 0
      %5066 = vmatmul.mubr.bf16.gmra.mxu0 %v4255
      %v5067 = vpop.f32.mrf.mxu0
      %v5068 = vadd.f32 0.0, %v5067
      %v5069 = vpop.f32.mrf.mxu0
      %v5070 = vpop.f32.mrf.mxu0
      %v5071 = vadd.f32 0.0, %v5070
      %v5072 = vpop.f32.mrf.mxu0
      %5073 = vmatprep.mubr.bf16.mxu0 0
      %5074 = vmatmul.mubr.bf16.gmra.mxu0 %v4258
      %v5075 = vpop.f32.mrf.mxu0
      %v5076 = vadd.f32 0.0, %v5075
      %v5077 = vpop.f32.mrf.mxu0
      %v5078 = vpop.f32.mrf.mxu0
      %v5079 = vadd.f32 0.0, %v5078
      %v5080 = vpop.f32.mrf.mxu0
      %5081 = vmatprep.mubr.bf16.mxu0 0
      %5082 = vmatmul.mubr.bf16.gmra.mxu0 %v4261
      %v5083 = vpop.f32.mrf.mxu0
      %v5084 = vadd.f32 0.0, %v5083
      %v5085 = vpop.f32.mrf.mxu0
      %v5086 = vpop.f32.mrf.mxu0
      %v5087 = vadd.f32 0.0, %v5086
      %v5088 = vpop.f32.mrf.mxu0
      %5089 = vmatprep.mubr.bf16.mxu0 0
      %5090 = vmatmul.mubr.bf16.gmra.mxu0 %v4264
      %v5091 = vpop.f32.mrf.mxu0
      %v5092 = vadd.f32 0.0, %v5091
      %v5093 = vpop.f32.mrf.mxu0
      %v5094 = vpop.f32.mrf.mxu0
      %v5095 = vadd.f32 0.0, %v5094
      %v5096 = vpop.f32.mrf.mxu0
      %5097 = vmatprep.mubr.bf16.mxu0 0
      %5098 = vmatmul.mubr.bf16.gmra.mxu0 %v4267
      %v5099 = vpop.f32.mrf.mxu0
      %v5100 = vadd.f32 0.0, %v5099
      %v5101 = vpop.f32.mrf.mxu0
      %v5102 = vpop.f32.mrf.mxu0
      %v5103 = vadd.f32 0.0, %v5102
      %v5104 = vpop.f32.mrf.mxu0
      %5105 = vmatprep.mubr.bf16.mxu0 0
      %5106 = vmatmul.mubr.bf16.gmra.mxu0 %v4270
      %v5107 = vpop.f32.mrf.mxu0
      %v5108 = vadd.f32 0.0, %v5107
      %v5109 = vpop.f32.mrf.mxu0
      %v5110 = vpop.f32.mrf.mxu0
      %v5111 = vadd.f32 0.0, %v5110
      %v5112 = vpop.f32.mrf.mxu0
      %5113 = vmatprep.mubr.bf16.mxu0 0
      %5114 = vmatmul.mubr.bf16.gmra.mxu0 %v4273
      %v5115 = vpop.f32.mrf.mxu0
      %v5116 = vadd.f32 0.0, %v5115
      %v5117 = vpop.f32.mrf.mxu0
      %v5118 = vpop.f32.mrf.mxu0
      %v5119 = vadd.f32 0.0, %v5118
      %v5120 = vpop.f32.mrf.mxu0
      %5121 = vmatprep.mubr.bf16.mxu0 0
      %5122 = vmatmul.mubr.bf16.gmra.mxu0 %v4276
      %v5123 = vpop.f32.mrf.mxu0
      %v5124 = vadd.f32 0.0, %v5123
      %v5125 = vpop.f32.mrf.mxu0
      %v5126 = vpop.f32.mrf.mxu0
      %v5127 = vadd.f32 0.0, %v5126
      %v5128 = vpop.f32.mrf.mxu0
      %5129 = vmatprep.mubr.bf16.mxu0 0
      %5130 = vmatmul.mubr.bf16.gmra.mxu0 %v4279
      %v5131 = vpop.f32.mrf.mxu0
      %v5132 = vadd.f32 0.0, %v5131
      %v5133 = vpop.f32.mrf.mxu0
      %v5134 = vpop.f32.mrf.mxu0
      %v5135 = vadd.f32 0.0, %v5134
      %v5136 = vpop.f32.mrf.mxu0
      %5137 = vmatprep.mubr.bf16.mxu0 0
      %5138 = vmatmul.mubr.bf16.gmra.mxu0 %v4282
      %v5139 = vpop.f32.mrf.mxu0
      %v5140 = vadd.f32 0.0, %v5139
      %v5141 = vpop.f32.mrf.mxu0
      %v5142 = vpop.f32.mrf.mxu0
      %v5143 = vadd.f32 0.0, %v5142
      %v5144 = vpop.f32.mrf.mxu0
      %5145 = vmatprep.mubr.bf16.mxu0 0
      %5146 = vmatmul.mubr.bf16.gmra.mxu0 %v4285
      %v5147 = vpop.f32.mrf.mxu0
      %v5148 = vadd.f32 0.0, %v5147
      %v5149 = vpop.f32.mrf.mxu0
      %v5150 = vpop.f32.mrf.mxu0
      %v5151 = vadd.f32 0.0, %v5150
      %v5152 = vpop.f32.mrf.mxu0
      %5153 = vmatprep.mubr.bf16.mxu0 0
      %5154 = vmatmul.mubr.bf16.gmra.mxu0 %v4999
      %v5155 = vpop.f32.mrf.mxu0
      %v5156 = vadd.f32 0.0, %v5155
      %v5157 = vpop.f32.mrf.mxu0
      %v5158 = vpop.f32.mrf.mxu0
      %v5159 = vadd.f32 0.0, %v5158
      %v5160 = vpop.f32.mrf.mxu0
      %5161 = vdwg.mxu0
      %v5162 = vadd.f32 %v4935, %v5036
      %v5163 = vadd.f32 %v4936, %v5039
      %v5164 = vadd.f32 %v4937, %v5044
      %v5165 = vadd.f32 %v4938, %v5047
      %v5166 = vadd.f32 %v4939, %v5052
      %v5167 = vadd.f32 %v4940, %v5055
      %v5168 = vadd.f32 %v4941, %v5060
      %v5169 = vadd.f32 %v4942, %v5063
      %v5170 = vadd.f32 %v4943, %v5068
      %v5171 = vadd.f32 %v4944, %v5071
      %v5172 = vadd.f32 %v4945, %v5076
      %v5173 = vadd.f32 %v4946, %v5079
      %v5174 = vadd.f32 %v4947, %v5084
      %v5175 = vadd.f32 %v4948, %v5087
      %v5176 = vadd.f32 %v4949, %v5092
      %v5177 = vadd.f32 %v4950, %v5095
      %v5178 = vadd.f32 %v4951, %v5100
      %v5179 = vadd.f32 %v4952, %v5103
      %v5180 = vadd.f32 %v4953, %v5108
      %v5181 = vadd.f32 %v4954, %v5111
      %v5182 = vadd.f32 %v4955, %v5116
      %v5183 = vadd.f32 %v4956, %v5119
      %v5184 = vadd.f32 %v4957, %v5124
      %v5185 = vadd.f32 %v4958, %v5127
      %v5186 = vadd.f32 %v4959, %v5132
      %v5187 = vadd.f32 %v4960, %v5135
      %v5188 = vadd.f32 %v4961, %v5140
      %v5189 = vadd.f32 %v4962, %v5143
      %v5190 = vadd.f32 %v4963, %v5148
      %v5191 = vadd.f32 %v4964, %v5151
      %v5192 = vadd.f32 %v4965, %v5156
      %v5193 = vadd.f32 %v4966, %v5159
      %v5196 = vunpack.c.l.b16 %v3511
      %v5197 = vunpack.c.l.b16 %v3512
      %v5198 = vpack.c.b16 %v5197, %v5196
      %v5201 = vunpack.c.l.b16 %v3526
      %v5202 = vunpack.c.l.b16 %v3527
      %v5203 = vpack.c.b16 %v5202, %v5201
      %v5206 = vsel %vm3975, %v5198, 0
      %5208 = vmatprep.subr.bf16.mxu0 0
      %5209 = vmatpush1.bf16.msra.mxu0 0
      %5210 = vmatprep.subr.bf16.mxu0 0
      %5211 = vmatpush1.bf16.msra.mxu0 0
      %5212 = vmatprep.subr.bf16.mxu0 0
      %5213 = vmatpush1.bf16.msra.mxu0 0
      %5214 = vmatprep.subr.bf16.mxu0 0
      %5215 = vmatpush1.bf16.msra.mxu0 0
      %5216 = vmatprep.subr.bf16.mxu0 0
      %5217 = vmatpush1.bf16.msra.mxu0 0
      %5218 = vmatprep.subr.bf16.mxu0 0
      %5219 = vmatpush1.bf16.msra.mxu0 0
      %5220 = vmatprep.subr.bf16.mxu0 0
      %5221 = vmatpush1.bf16.msra.mxu0 0
      %5222 = vmatprep.subr.bf16.mxu0 0
      %5223 = vmatpush1.bf16.msra.mxu0 %v5203
      %5224 = vmatprep.subr.bf16.mxu0 0
      %5225 = vmatpush2.bf16.msra.mxu0 0
      %5226 = vmatprep.subr.bf16.mxu0 0
      %5227 = vmatpush2.bf16.msra.mxu0 0
      %5228 = vmatprep.subr.bf16.mxu0 0
      %5229 = vmatpush2.bf16.msra.mxu0 0
      %5230 = vmatprep.subr.bf16.mxu0 0
      %5231 = vmatpush2.bf16.msra.mxu0 0
      %5232 = vmatprep.subr.bf16.mxu0 0
      %5233 = vmatpush2.bf16.msra.mxu0 0
      %5234 = vmatprep.subr.bf16.mxu0 0
      %5235 = vmatpush2.bf16.msra.mxu0 0
      %5236 = vmatprep.subr.bf16.mxu0 0
      %5237 = vmatpush2.bf16.msra.mxu0 0
      %5238 = vmatprep.subr.bf16.mxu0 0
      %5239 = vmatpush2.bf16.msra.mxu0 0
      %5240 = vmatprep.mubr.bf16.mxu0 0
      %5241 = vmatmul.mubr.bf16.gmra.mxu0 %v3980
      %v5242 = vpop.f32.mrf.mxu0
      %v5243 = vadd.f32 0.0, %v5242
      %v5244 = vpop.f32.mrf.mxu0
      %v5245 = vpop.f32.mrf.mxu0
      %v5246 = vadd.f32 0.0, %v5245
      %v5247 = vpop.f32.mrf.mxu0
      %5248 = vmatprep.mubr.bf16.mxu0 0
      %5249 = vmatmul.mubr.bf16.gmra.mxu0 %v3983
      %v5250 = vpop.f32.mrf.mxu0
      %v5251 = vadd.f32 0.0, %v5250
      %v5252 = vpop.f32.mrf.mxu0
      %v5253 = vpop.f32.mrf.mxu0
      %v5254 = vadd.f32 0.0, %v5253
      %v5255 = vpop.f32.mrf.mxu0
      %5256 = vmatprep.mubr.bf16.mxu0 0
      %5257 = vmatmul.mubr.bf16.gmra.mxu0 %v3986
      %v5258 = vpop.f32.mrf.mxu0
      %v5259 = vadd.f32 0.0, %v5258
      %v5260 = vpop.f32.mrf.mxu0
      %v5261 = vpop.f32.mrf.mxu0
      %v5262 = vadd.f32 0.0, %v5261
      %v5263 = vpop.f32.mrf.mxu0
      %5264 = vmatprep.mubr.bf16.mxu0 0
      %5265 = vmatmul.mubr.bf16.gmra.mxu0 %v3989
      %v5266 = vpop.f32.mrf.mxu0
      %v5267 = vadd.f32 0.0, %v5266
      %v5268 = vpop.f32.mrf.mxu0
      %v5269 = vpop.f32.mrf.mxu0
      %v5270 = vadd.f32 0.0, %v5269
      %v5271 = vpop.f32.mrf.mxu0
      %5272 = vmatprep.mubr.bf16.mxu0 0
      %5273 = vmatmul.mubr.bf16.gmra.mxu0 %v3992
      %v5274 = vpop.f32.mrf.mxu0
      %v5275 = vadd.f32 0.0, %v5274
      %v5276 = vpop.f32.mrf.mxu0
      %v5277 = vpop.f32.mrf.mxu0
      %v5278 = vadd.f32 0.0, %v5277
      %v5279 = vpop.f32.mrf.mxu0
      %5280 = vmatprep.mubr.bf16.mxu0 0
      %5281 = vmatmul.mubr.bf16.gmra.mxu0 %v3995
      %v5282 = vpop.f32.mrf.mxu0
      %v5283 = vadd.f32 0.0, %v5282
      %v5284 = vpop.f32.mrf.mxu0
      %v5285 = vpop.f32.mrf.mxu0
      %v5286 = vadd.f32 0.0, %v5285
      %v5287 = vpop.f32.mrf.mxu0
      %5288 = vmatprep.mubr.bf16.mxu0 0
      %5289 = vmatmul.mubr.bf16.gmra.mxu0 %v3998
      %v5290 = vpop.f32.mrf.mxu0
      %v5291 = vadd.f32 0.0, %v5290
      %v5292 = vpop.f32.mrf.mxu0
      %v5293 = vpop.f32.mrf.mxu0
      %v5294 = vadd.f32 0.0, %v5293
      %v5295 = vpop.f32.mrf.mxu0
      %5296 = vmatprep.mubr.bf16.mxu0 0
      %5297 = vmatmul.mubr.bf16.gmra.mxu0 %v4001
      %v5298 = vpop.f32.mrf.mxu0
      %v5299 = vadd.f32 0.0, %v5298
      %v5300 = vpop.f32.mrf.mxu0
      %v5301 = vpop.f32.mrf.mxu0
      %v5302 = vadd.f32 0.0, %v5301
      %v5303 = vpop.f32.mrf.mxu0
      %5304 = vmatprep.mubr.bf16.mxu0 0
      %5305 = vmatmul.mubr.bf16.gmra.mxu0 %v4004
      %v5306 = vpop.f32.mrf.mxu0
      %v5307 = vadd.f32 0.0, %v5306
      %v5308 = vpop.f32.mrf.mxu0
      %v5309 = vpop.f32.mrf.mxu0
      %v5310 = vadd.f32 0.0, %v5309
      %v5311 = vpop.f32.mrf.mxu0
      %5312 = vmatprep.mubr.bf16.mxu0 0
      %5313 = vmatmul.mubr.bf16.gmra.mxu0 %v4007
      %v5314 = vpop.f32.mrf.mxu0
      %v5315 = vadd.f32 0.0, %v5314
      %v5316 = vpop.f32.mrf.mxu0
      %v5317 = vpop.f32.mrf.mxu0
      %v5318 = vadd.f32 0.0, %v5317
      %v5319 = vpop.f32.mrf.mxu0
      %5320 = vmatprep.mubr.bf16.mxu0 0
      %5321 = vmatmul.mubr.bf16.gmra.mxu0 %v4010
      %v5322 = vpop.f32.mrf.mxu0
      %v5323 = vadd.f32 0.0, %v5322
      %v5324 = vpop.f32.mrf.mxu0
      %v5325 = vpop.f32.mrf.mxu0
      %v5326 = vadd.f32 0.0, %v5325
      %v5327 = vpop.f32.mrf.mxu0
      %5328 = vmatprep.mubr.bf16.mxu0 0
      %5329 = vmatmul.mubr.bf16.gmra.mxu0 %v4013
      %v5330 = vpop.f32.mrf.mxu0
      %v5331 = vadd.f32 0.0, %v5330
      %v5332 = vpop.f32.mrf.mxu0
      %v5333 = vpop.f32.mrf.mxu0
      %v5334 = vadd.f32 0.0, %v5333
      %v5335 = vpop.f32.mrf.mxu0
      %5336 = vmatprep.mubr.bf16.mxu0 0
      %5337 = vmatmul.mubr.bf16.gmra.mxu0 %v4016
      %v5338 = vpop.f32.mrf.mxu0
      %v5339 = vadd.f32 0.0, %v5338
      %v5340 = vpop.f32.mrf.mxu0
      %v5341 = vpop.f32.mrf.mxu0
      %v5342 = vadd.f32 0.0, %v5341
      %v5343 = vpop.f32.mrf.mxu0
      %5344 = vmatprep.mubr.bf16.mxu0 0
      %5345 = vmatmul.mubr.bf16.gmra.mxu0 %v4019
      %v5346 = vpop.f32.mrf.mxu0
      %v5347 = vadd.f32 0.0, %v5346
      %v5348 = vpop.f32.mrf.mxu0
      %v5349 = vpop.f32.mrf.mxu0
      %v5350 = vadd.f32 0.0, %v5349
      %v5351 = vpop.f32.mrf.mxu0
      %5352 = vmatprep.mubr.bf16.mxu0 0
      %5353 = vmatmul.mubr.bf16.gmra.mxu0 %v4022
      %v5354 = vpop.f32.mrf.mxu0
      %v5355 = vadd.f32 0.0, %v5354
      %v5356 = vpop.f32.mrf.mxu0
      %v5357 = vpop.f32.mrf.mxu0
      %v5358 = vadd.f32 0.0, %v5357
      %v5359 = vpop.f32.mrf.mxu0
      %5360 = vmatprep.mubr.bf16.mxu0 0
      %5361 = vmatmul.mubr.bf16.gmra.mxu0 %v5206
      %v5362 = vpop.f32.mrf.mxu0
      %v5363 = vadd.f32 0.0, %v5362
      %v5364 = vpop.f32.mrf.mxu0
      %v5365 = vpop.f32.mrf.mxu0
      %v5366 = vadd.f32 0.0, %v5365
      %v5367 = vpop.f32.mrf.mxu0
      %5368 = vdwg.mxu0
      %v5369 = vadd.f32 %v5162, %v5243
      %v5370 = vadd.f32 %v5163, %v5246
      %v5371 = vadd.f32 %v5164, %v5251
      %v5372 = vadd.f32 %v5165, %v5254
      %v5373 = vadd.f32 %v5166, %v5259
      %v5374 = vadd.f32 %v5167, %v5262
      %v5375 = vadd.f32 %v5168, %v5267
      %v5376 = vadd.f32 %v5169, %v5270
      %v5377 = vadd.f32 %v5170, %v5275
      %v5378 = vadd.f32 %v5171, %v5278
      %v5379 = vadd.f32 %v5172, %v5283
      %v5380 = vadd.f32 %v5173, %v5286
      %v5381 = vadd.f32 %v5174, %v5291
      %v5382 = vadd.f32 %v5175, %v5294
      %v5383 = vadd.f32 %v5176, %v5299
      %v5384 = vadd.f32 %v5177, %v5302
      %v5385 = vadd.f32 %v5178, %v5307
      %v5386 = vadd.f32 %v5179, %v5310
      %v5387 = vadd.f32 %v5180, %v5315
      %v5388 = vadd.f32 %v5181, %v5318
      %v5389 = vadd.f32 %v5182, %v5323
      %v5390 = vadd.f32 %v5183, %v5326
      %v5391 = vadd.f32 %v5184, %v5331
      %v5392 = vadd.f32 %v5185, %v5334
      %v5393 = vadd.f32 %v5186, %v5339
      %v5394 = vadd.f32 %v5187, %v5342
      %v5395 = vadd.f32 %v5188, %v5347
      %v5396 = vadd.f32 %v5189, %v5350
      %v5397 = vadd.f32 %v5190, %v5355
      %v5398 = vadd.f32 %v5191, %v5358
      %v5399 = vadd.f32 %v5192, %v5363
      %v5400 = vadd.f32 %v5193, %v5366
      %v5401 = vrot.slane %v4973, 4
      %v5402 = vrot.slane %v4976, 5
      %v5403 = vor.u32 %v5401, %v5402
      %v5404 = vrot.slane %v5403, 4
      %v5405 = vrot.slane %v4985, 5
      %v5406 = vsel %vm1273, %v5404, %v5405
      %v5407 = vrot.slane %v4982, 4
      %v5408 = vor.u32 %v5407, %v5405
      %v5409 = vrot.slane %v5408, 4
      %v5411 = vshll.u32 %v3513, 16
      %v5413 = vrot.slane %v5411, 5
      %v5414 = vsel %vm1273, %v5409, %v5413
      %v5415 = vunpack.c.l.b16 %v5406
      %v5416 = vunpack.c.l.b16 %v5414
      %v5417 = vpack.c.b16 %v5416, %v5415
      %v5420 = vunpack.c.l.b16 %v3528
      %v5421 = vunpack.c.l.b16 %v3529
      %v5422 = vpack.c.b16 %v5421, %v5420
      %v5425 = vsel %vm3975, %v5417, 0
      %5427 = vmatprep.subr.bf16.mxu0 0
      %5428 = vmatpush1.bf16.msra.mxu0 0
      %5429 = vmatprep.subr.bf16.mxu0 0
      %5430 = vmatpush1.bf16.msra.mxu0 0
      %5431 = vmatprep.subr.bf16.mxu0 0
      %5432 = vmatpush1.bf16.msra.mxu0 0
      %5433 = vmatprep.subr.bf16.mxu0 0
      %5434 = vmatpush1.bf16.msra.mxu0 0
      %5435 = vmatprep.subr.bf16.mxu0 0
      %5436 = vmatpush1.bf16.msra.mxu0 0
      %5437 = vmatprep.subr.bf16.mxu0 0
      %5438 = vmatpush1.bf16.msra.mxu0 0
      %5439 = vmatprep.subr.bf16.mxu0 0
      %5440 = vmatpush1.bf16.msra.mxu0 0
      %5441 = vmatprep.subr.bf16.mxu0 0
      %5442 = vmatpush1.bf16.msra.mxu0 %v5422
      %5443 = vmatprep.subr.bf16.mxu0 0
      %5444 = vmatpush2.bf16.msra.mxu0 0
      %5445 = vmatprep.subr.bf16.mxu0 0
      %5446 = vmatpush2.bf16.msra.mxu0 0
      %5447 = vmatprep.subr.bf16.mxu0 0
      %5448 = vmatpush2.bf16.msra.mxu0 0
      %5449 = vmatprep.subr.bf16.mxu0 0
      %5450 = vmatpush2.bf16.msra.mxu0 0
      %5451 = vmatprep.subr.bf16.mxu0 0
      %5452 = vmatpush2.bf16.msra.mxu0 0
      %5453 = vmatprep.subr.bf16.mxu0 0
      %5454 = vmatpush2.bf16.msra.mxu0 0
      %5455 = vmatprep.subr.bf16.mxu0 0
      %5456 = vmatpush2.bf16.msra.mxu0 0
      %5457 = vmatprep.subr.bf16.mxu0 0
      %5458 = vmatpush2.bf16.msra.mxu0 0
      %5459 = vmatprep.mubr.bf16.mxu0 0
      %5460 = vmatmul.mubr.bf16.gmra.mxu0 %v4730
      %v5461 = vpop.f32.mrf.mxu0
      %v5462 = vadd.f32 0.0, %v5461
      %v5463 = vpop.f32.mrf.mxu0
      %v5464 = vpop.f32.mrf.mxu0
      %v5465 = vadd.f32 0.0, %v5464
      %v5466 = vpop.f32.mrf.mxu0
      %5467 = vmatprep.mubr.bf16.mxu0 0
      %5468 = vmatmul.mubr.bf16.gmra.mxu0 %v4733
      %v5469 = vpop.f32.mrf.mxu0
      %v5470 = vadd.f32 0.0, %v5469
      %v5471 = vpop.f32.mrf.mxu0
      %v5472 = vpop.f32.mrf.mxu0
      %v5473 = vadd.f32 0.0, %v5472
      %v5474 = vpop.f32.mrf.mxu0
      %5475 = vmatprep.mubr.bf16.mxu0 0
      %5476 = vmatmul.mubr.bf16.gmra.mxu0 %v4736
      %v5477 = vpop.f32.mrf.mxu0
      %v5478 = vadd.f32 0.0, %v5477
      %v5479 = vpop.f32.mrf.mxu0
      %v5480 = vpop.f32.mrf.mxu0
      %v5481 = vadd.f32 0.0, %v5480
      %v5482 = vpop.f32.mrf.mxu0
      %5483 = vmatprep.mubr.bf16.mxu0 0
      %5484 = vmatmul.mubr.bf16.gmra.mxu0 %v4739
      %v5485 = vpop.f32.mrf.mxu0
      %v5486 = vadd.f32 0.0, %v5485
      %v5487 = vpop.f32.mrf.mxu0
      %v5488 = vpop.f32.mrf.mxu0
      %v5489 = vadd.f32 0.0, %v5488
      %v5490 = vpop.f32.mrf.mxu0
      %5491 = vmatprep.mubr.bf16.mxu0 0
      %5492 = vmatmul.mubr.bf16.gmra.mxu0 %v4742
      %v5493 = vpop.f32.mrf.mxu0
      %v5494 = vadd.f32 0.0, %v5493
      %v5495 = vpop.f32.mrf.mxu0
      %v5496 = vpop.f32.mrf.mxu0
      %v5497 = vadd.f32 0.0, %v5496
      %v5498 = vpop.f32.mrf.mxu0
      %5499 = vmatprep.mubr.bf16.mxu0 0
      %5500 = vmatmul.mubr.bf16.gmra.mxu0 %v4745
      %v5501 = vpop.f32.mrf.mxu0
      %v5502 = vadd.f32 0.0, %v5501
      %v5503 = vpop.f32.mrf.mxu0
      %v5504 = vpop.f32.mrf.mxu0
      %v5505 = vadd.f32 0.0, %v5504
      %v5506 = vpop.f32.mrf.mxu0
      %5507 = vmatprep.mubr.bf16.mxu0 0
      %5508 = vmatmul.mubr.bf16.gmra.mxu0 %v4748
      %v5509 = vpop.f32.mrf.mxu0
      %v5510 = vadd.f32 0.0, %v5509
      %v5511 = vpop.f32.mrf.mxu0
      %v5512 = vpop.f32.mrf.mxu0
      %v5513 = vadd.f32 0.0, %v5512
      %v5514 = vpop.f32.mrf.mxu0
      %5515 = vmatprep.mubr.bf16.mxu0 0
      %5516 = vmatmul.mubr.bf16.gmra.mxu0 %v4751
      %v5517 = vpop.f32.mrf.mxu0
      %v5518 = vadd.f32 0.0, %v5517
      %v5519 = vpop.f32.mrf.mxu0
      %v5520 = vpop.f32.mrf.mxu0
      %v5521 = vadd.f32 0.0, %v5520
      %v5522 = vpop.f32.mrf.mxu0
      %5523 = vmatprep.mubr.bf16.mxu0 0
      %5524 = vmatmul.mubr.bf16.gmra.mxu0 %v4754
      %v5525 = vpop.f32.mrf.mxu0
      %v5526 = vadd.f32 0.0, %v5525
      %v5527 = vpop.f32.mrf.mxu0
      %v5528 = vpop.f32.mrf.mxu0
      %v5529 = vadd.f32 0.0, %v5528
      %v5530 = vpop.f32.mrf.mxu0
      %5531 = vmatprep.mubr.bf16.mxu0 0
      %5532 = vmatmul.mubr.bf16.gmra.mxu0 %v4757
      %v5533 = vpop.f32.mrf.mxu0
      %v5534 = vadd.f32 0.0, %v5533
      %v5535 = vpop.f32.mrf.mxu0
      %v5536 = vpop.f32.mrf.mxu0
      %v5537 = vadd.f32 0.0, %v5536
      %v5538 = vpop.f32.mrf.mxu0
      %5539 = vmatprep.mubr.bf16.mxu0 0
      %5540 = vmatmul.mubr.bf16.gmra.mxu0 %v4760
      %v5541 = vpop.f32.mrf.mxu0
      %v5542 = vadd.f32 0.0, %v5541
      %v5543 = vpop.f32.mrf.mxu0
      %v5544 = vpop.f32.mrf.mxu0
      %v5545 = vadd.f32 0.0, %v5544
      %v5546 = vpop.f32.mrf.mxu0
      %5547 = vmatprep.mubr.bf16.mxu0 0
      %5548 = vmatmul.mubr.bf16.gmra.mxu0 %v4763
      %v5549 = vpop.f32.mrf.mxu0
      %v5550 = vadd.f32 0.0, %v5549
      %v5551 = vpop.f32.mrf.mxu0
      %v5552 = vpop.f32.mrf.mxu0
      %v5553 = vadd.f32 0.0, %v5552
      %v5554 = vpop.f32.mrf.mxu0
      %5555 = vmatprep.mubr.bf16.mxu0 0
      %5556 = vmatmul.mubr.bf16.gmra.mxu0 %v4766
      %v5557 = vpop.f32.mrf.mxu0
      %v5558 = vadd.f32 0.0, %v5557
      %v5559 = vpop.f32.mrf.mxu0
      %v5560 = vpop.f32.mrf.mxu0
      %v5561 = vadd.f32 0.0, %v5560
      %v5562 = vpop.f32.mrf.mxu0
      %5563 = vmatprep.mubr.bf16.mxu0 0
      %5564 = vmatmul.mubr.bf16.gmra.mxu0 %v4769
      %v5565 = vpop.f32.mrf.mxu0
      %v5566 = vadd.f32 0.0, %v5565
      %v5567 = vpop.f32.mrf.mxu0
      %v5568 = vpop.f32.mrf.mxu0
      %v5569 = vadd.f32 0.0, %v5568
      %v5570 = vpop.f32.mrf.mxu0
      %5571 = vmatprep.mubr.bf16.mxu0 0
      %5572 = vmatmul.mubr.bf16.gmra.mxu0 %v4772
      %v5573 = vpop.f32.mrf.mxu0
      %v5574 = vadd.f32 0.0, %v5573
      %v5575 = vpop.f32.mrf.mxu0
      %v5576 = vpop.f32.mrf.mxu0
      %v5577 = vadd.f32 0.0, %v5576
      %v5578 = vpop.f32.mrf.mxu0
      %5579 = vmatprep.mubr.bf16.mxu0 0
      %5580 = vmatmul.mubr.bf16.gmra.mxu0 %v5425
      %v5581 = vpop.f32.mrf.mxu0
      %v5582 = vadd.f32 0.0, %v5581
      %v5583 = vpop.f32.mrf.mxu0
      %v5584 = vpop.f32.mrf.mxu0
      %v5585 = vadd.f32 0.0, %v5584
      %v5586 = vpop.f32.mrf.mxu0
      %5587 = vdwg.mxu0
      %v5588 = vadd.f32 %v5369, %v5462
      %v5589 = vadd.f32 %v5370, %v5465
      %v5590 = vadd.f32 %v5371, %v5470
      %v5591 = vadd.f32 %v5372, %v5473
      %v5592 = vadd.f32 %v5373, %v5478
      %v5593 = vadd.f32 %v5374, %v5481
      %v5594 = vadd.f32 %v5375, %v5486
      %v5595 = vadd.f32 %v5376, %v5489
      %v5596 = vadd.f32 %v5377, %v5494
      %v5597 = vadd.f32 %v5378, %v5497
      %v5598 = vadd.f32 %v5379, %v5502
      %v5599 = vadd.f32 %v5380, %v5505
      %v5600 = vadd.f32 %v5381, %v5510
      %v5601 = vadd.f32 %v5382, %v5513
      %v5602 = vadd.f32 %v5383, %v5518
      %v5603 = vadd.f32 %v5384, %v5521
      %v5604 = vadd.f32 %v5385, %v5526
      %v5605 = vadd.f32 %v5386, %v5529
      %v5606 = vadd.f32 %v5387, %v5534
      %v5607 = vadd.f32 %v5388, %v5537
      %v5608 = vadd.f32 %v5389, %v5542
      %v5609 = vadd.f32 %v5390, %v5545
      %v5610 = vadd.f32 %v5391, %v5550
      %v5611 = vadd.f32 %v5392, %v5553
      %v5612 = vadd.f32 %v5393, %v5558
      %v5613 = vadd.f32 %v5394, %v5561
      %v5614 = vadd.f32 %v5395, %v5566
      %v5615 = vadd.f32 %v5396, %v5569
      %v5616 = vadd.f32 %v5397, %v5574
      %v5617 = vadd.f32 %v5398, %v5577
      %v5618 = vadd.f32 %v5399, %v5582
      %v5619 = vadd.f32 %v5400, %v5585
      %v5621 = vshrl.u32 %v3514, 16
      %v5623 = vrot.slane %v5621, 7
      %v5624 = vrot.slane %v5623, 4
      %v5626 = vshrl.u32 %v3515, 16
      %v5628 = vrot.slane %v5626, 7
      %v5629 = vshll.u32 %v3515, 16
      %v5631 = vor.u32 %v5628, %v5629
      %v5632 = vsel %vm364, %v5624, %v5631
      %v5633 = vrot.slane %v5628, 4
      %v5635 = vshrl.u32 %v3516, 16
      %v5637 = vrot.slane %v5635, 7
      %v5638 = vshll.u32 %v3516, 16
      %v5640 = vor.u32 %v5637, %v5638
      %v5641 = vsel %vm364, %v5633, %v5640
      %v5642 = vunpack.c.l.b16 %v5632
      %v5643 = vunpack.c.l.b16 %v5641
      %v5644 = vpack.c.b16 %v5643, %v5642
      %v5647 = vunpack.c.l.b16 %v3530
      %v5648 = vunpack.c.l.b16 %v3531
      %v5649 = vpack.c.b16 %v5648, %v5647
      %v5652 = vsel %vm3975, %v5644, 0
      %5654 = vmatprep.subr.bf16.mxu0 0
      %5655 = vmatpush1.bf16.msra.mxu0 0
      %5656 = vmatprep.subr.bf16.mxu0 0
      %5657 = vmatpush1.bf16.msra.mxu0 0
      %5658 = vmatprep.subr.bf16.mxu0 0
      %5659 = vmatpush1.bf16.msra.mxu0 0
      %5660 = vmatprep.subr.bf16.mxu0 0
      %5661 = vmatpush1.bf16.msra.mxu0 0
      %5662 = vmatprep.subr.bf16.mxu0 0
      %5663 = vmatpush1.bf16.msra.mxu0 0
      %5664 = vmatprep.subr.bf16.mxu0 0
      %5665 = vmatpush1.bf16.msra.mxu0 0
      %5666 = vmatprep.subr.bf16.mxu0 0
      %5667 = vmatpush1.bf16.msra.mxu0 0
      %5668 = vmatprep.subr.bf16.mxu0 0
      %5669 = vmatpush1.bf16.msra.mxu0 %v5649
      %5670 = vmatprep.subr.bf16.mxu0 0
      %5671 = vmatpush2.bf16.msra.mxu0 0
      %5672 = vmatprep.subr.bf16.mxu0 0
      %5673 = vmatpush2.bf16.msra.mxu0 0
      %5674 = vmatprep.subr.bf16.mxu0 0
      %5675 = vmatpush2.bf16.msra.mxu0 0
      %5676 = vmatprep.subr.bf16.mxu0 0
      %5677 = vmatpush2.bf16.msra.mxu0 0
      %5678 = vmatprep.subr.bf16.mxu0 0
      %5679 = vmatpush2.bf16.msra.mxu0 0
      %5680 = vmatprep.subr.bf16.mxu0 0
      %5681 = vmatpush2.bf16.msra.mxu0 0
      %5682 = vmatprep.subr.bf16.mxu0 0
      %5683 = vmatpush2.bf16.msra.mxu0 0
      %5684 = vmatprep.subr.bf16.mxu0 0
      %5685 = vmatpush2.bf16.msra.mxu0 0
      %5686 = vmatprep.mubr.bf16.mxu0 0
      %5687 = vmatmul.mubr.bf16.gmra.mxu0 %v4246
      %v5688 = vpop.f32.mrf.mxu0
      %v5689 = vadd.f32 0.0, %v5688
      %v5690 = vpop.f32.mrf.mxu0
      %v5691 = vpop.f32.mrf.mxu0
      %v5692 = vadd.f32 0.0, %v5691
      %v5693 = vpop.f32.mrf.mxu0
      %5694 = vmatprep.mubr.bf16.mxu0 0
      %5695 = vmatmul.mubr.bf16.gmra.mxu0 %v4249
      %v5696 = vpop.f32.mrf.mxu0
      %v5697 = vadd.f32 0.0, %v5696
      %v5698 = vpop.f32.mrf.mxu0
      %v5699 = vpop.f32.mrf.mxu0
      %v5700 = vadd.f32 0.0, %v5699
      %v5701 = vpop.f32.mrf.mxu0
      %5702 = vmatprep.mubr.bf16.mxu0 0
      %5703 = vmatmul.mubr.bf16.gmra.mxu0 %v4252
      %v5704 = vpop.f32.mrf.mxu0
      %v5705 = vadd.f32 0.0, %v5704
      %v5706 = vpop.f32.mrf.mxu0
      %v5707 = vpop.f32.mrf.mxu0
      %v5708 = vadd.f32 0.0, %v5707
      %v5709 = vpop.f32.mrf.mxu0
      %5710 = vmatprep.mubr.bf16.mxu0 0
      %5711 = vmatmul.mubr.bf16.gmra.mxu0 %v4255
      %v5712 = vpop.f32.mrf.mxu0
      %v5713 = vadd.f32 0.0, %v5712
      %v5714 = vpop.f32.mrf.mxu0
      %v5715 = vpop.f32.mrf.mxu0
      %v5716 = vadd.f32 0.0, %v5715
      %v5717 = vpop.f32.mrf.mxu0
      %5718 = vmatprep.mubr.bf16.mxu0 0
      %5719 = vmatmul.mubr.bf16.gmra.mxu0 %v4258
      %v5720 = vpop.f32.mrf.mxu0
      %v5721 = vadd.f32 0.0, %v5720
      %v5722 = vpop.f32.mrf.mxu0
      %v5723 = vpop.f32.mrf.mxu0
      %v5724 = vadd.f32 0.0, %v5723
      %v5725 = vpop.f32.mrf.mxu0
      %5726 = vmatprep.mubr.bf16.mxu0 0
      %5727 = vmatmul.mubr.bf16.gmra.mxu0 %v4261
      %v5728 = vpop.f32.mrf.mxu0
      %v5729 = vadd.f32 0.0, %v5728
      %v5730 = vpop.f32.mrf.mxu0
      %v5731 = vpop.f32.mrf.mxu0
      %v5732 = vadd.f32 0.0, %v5731
      %v5733 = vpop.f32.mrf.mxu0
      %5734 = vmatprep.mubr.bf16.mxu0 0
      %5735 = vmatmul.mubr.bf16.gmra.mxu0 %v4264
      %v5736 = vpop.f32.mrf.mxu0
      %v5737 = vadd.f32 0.0, %v5736
      %v5738 = vpop.f32.mrf.mxu0
      %v5739 = vpop.f32.mrf.mxu0
      %v5740 = vadd.f32 0.0, %v5739
      %v5741 = vpop.f32.mrf.mxu0
      %5742 = vmatprep.mubr.bf16.mxu0 0
      %5743 = vmatmul.mubr.bf16.gmra.mxu0 %v4267
      %v5744 = vpop.f32.mrf.mxu0
      %v5745 = vadd.f32 0.0, %v5744
      %v5746 = vpop.f32.mrf.mxu0
      %v5747 = vpop.f32.mrf.mxu0
      %v5748 = vadd.f32 0.0, %v5747
      %v5749 = vpop.f32.mrf.mxu0
      %5750 = vmatprep.mubr.bf16.mxu0 0
      %5751 = vmatmul.mubr.bf16.gmra.mxu0 %v4270
      %v5752 = vpop.f32.mrf.mxu0
      %v5753 = vadd.f32 0.0, %v5752
      %v5754 = vpop.f32.mrf.mxu0
      %v5755 = vpop.f32.mrf.mxu0
      %v5756 = vadd.f32 0.0, %v5755
      %v5757 = vpop.f32.mrf.mxu0
      %5758 = vmatprep.mubr.bf16.mxu0 0
      %5759 = vmatmul.mubr.bf16.gmra.mxu0 %v4273
      %v5760 = vpop.f32.mrf.mxu0
      %v5761 = vadd.f32 0.0, %v5760
      %v5762 = vpop.f32.mrf.mxu0
      %v5763 = vpop.f32.mrf.mxu0
      %v5764 = vadd.f32 0.0, %v5763
      %v5765 = vpop.f32.mrf.mxu0
      %5766 = vmatprep.mubr.bf16.mxu0 0
      %5767 = vmatmul.mubr.bf16.gmra.mxu0 %v4276
      %v5768 = vpop.f32.mrf.mxu0
      %v5769 = vadd.f32 0.0, %v5768
      %v5770 = vpop.f32.mrf.mxu0
      %v5771 = vpop.f32.mrf.mxu0
      %v5772 = vadd.f32 0.0, %v5771
      %v5773 = vpop.f32.mrf.mxu0
      %5774 = vmatprep.mubr.bf16.mxu0 0
      %5775 = vmatmul.mubr.bf16.gmra.mxu0 %v4279
      %v5776 = vpop.f32.mrf.mxu0
      %v5777 = vadd.f32 0.0, %v5776
      %v5778 = vpop.f32.mrf.mxu0
      %v5779 = vpop.f32.mrf.mxu0
      %v5780 = vadd.f32 0.0, %v5779
      %v5781 = vpop.f32.mrf.mxu0
      %5782 = vmatprep.mubr.bf16.mxu0 0
      %5783 = vmatmul.mubr.bf16.gmra.mxu0 %v4282
      %v5784 = vpop.f32.mrf.mxu0
      %v5785 = vadd.f32 0.0, %v5784
      %v5786 = vpop.f32.mrf.mxu0
      %v5787 = vpop.f32.mrf.mxu0
      %v5788 = vadd.f32 0.0, %v5787
      %v5789 = vpop.f32.mrf.mxu0
      %5790 = vmatprep.mubr.bf16.mxu0 0
      %5791 = vmatmul.mubr.bf16.gmra.mxu0 %v4285
      %v5792 = vpop.f32.mrf.mxu0
      %v5793 = vadd.f32 0.0, %v5792
      %v5794 = vpop.f32.mrf.mxu0
      %v5795 = vpop.f32.mrf.mxu0
      %v5796 = vadd.f32 0.0, %v5795
      %v5797 = vpop.f32.mrf.mxu0
      %5798 = vmatprep.mubr.bf16.mxu0 0
      %5799 = vmatmul.mubr.bf16.gmra.mxu0 %v4999
      %v5800 = vpop.f32.mrf.mxu0
      %v5801 = vadd.f32 0.0, %v5800
      %v5802 = vpop.f32.mrf.mxu0
      %v5803 = vpop.f32.mrf.mxu0
      %v5804 = vadd.f32 0.0, %v5803
      %v5805 = vpop.f32.mrf.mxu0
      %5806 = vmatprep.mubr.bf16.mxu0 0
      %5807 = vmatmul.mubr.bf16.gmra.mxu0 %v5652
      %v5808 = vpop.f32.mrf.mxu0
      %v5809 = vadd.f32 0.0, %v5808
      %v5810 = vpop.f32.mrf.mxu0
      %v5811 = vpop.f32.mrf.mxu0
      %v5812 = vadd.f32 0.0, %v5811
      %v5813 = vpop.f32.mrf.mxu0
      %5814 = vdwg.mxu0
      %v5815 = vadd.f32 %v5588, %v5689
      %v5816 = vadd.f32 %v5589, %v5692
      %v5817 = vadd.f32 %v5590, %v5697
      %v5818 = vadd.f32 %v5591, %v5700
      %v5819 = vadd.f32 %v5592, %v5705
      %v5820 = vadd.f32 %v5593, %v5708
      %v5821 = vadd.f32 %v5594, %v5713
      %v5822 = vadd.f32 %v5595, %v5716
      %v5823 = vadd.f32 %v5596, %v5721
      %v5824 = vadd.f32 %v5597, %v5724
      %v5825 = vadd.f32 %v5598, %v5729
      %v5826 = vadd.f32 %v5599, %v5732
      %v5827 = vadd.f32 %v5600, %v5737
      %v5828 = vadd.f32 %v5601, %v5740
      %v5829 = vadd.f32 %v5602, %v5745
      %v5830 = vadd.f32 %v5603, %v5748
      %v5831 = vadd.f32 %v5604, %v5753
      %v5832 = vadd.f32 %v5605, %v5756
      %v5833 = vadd.f32 %v5606, %v5761
      %v5834 = vadd.f32 %v5607, %v5764
      %v5835 = vadd.f32 %v5608, %v5769
      %v5836 = vadd.f32 %v5609, %v5772
      %v5837 = vadd.f32 %v5610, %v5777
      %v5838 = vadd.f32 %v5611, %v5780
      %v5839 = vadd.f32 %v5612, %v5785
      %v5840 = vadd.f32 %v5613, %v5788
      %v5841 = vadd.f32 %v5614, %v5793
      %v5842 = vadd.f32 %v5615, %v5796
      %v5843 = vadd.f32 %v5616, %v5801
      %v5844 = vadd.f32 %v5617, %v5804
      %v5845 = vadd.f32 %v5618, %v5809
      %v5846 = vadd.f32 %v5619, %v5812
      %v5849 = vunpack.c.l.b16 %v3515
      %v5850 = vunpack.c.l.b16 %v3516
      %v5851 = vpack.c.b16 %v5850, %v5849
      %v5854 = vunpack.c.l.b16 %v3532
      %v5855 = vunpack.c.l.b16 %v3533
      %v5856 = vpack.c.b16 %v5855, %v5854
      %v5859 = vsel %vm3975, %v5851, 0
      %5861 = vmatprep.subr.bf16.mxu0 0
      %5862 = vmatpush1.bf16.msra.mxu0 0
      %5863 = vmatprep.subr.bf16.mxu0 0
      %5864 = vmatpush1.bf16.msra.mxu0 0
      %5865 = vmatprep.subr.bf16.mxu0 0
      %5866 = vmatpush1.bf16.msra.mxu0 0
      %5867 = vmatprep.subr.bf16.mxu0 0
      %5868 = vmatpush1.bf16.msra.mxu0 0
      %5869 = vmatprep.subr.bf16.mxu0 0
      %5870 = vmatpush1.bf16.msra.mxu0 0
      %5871 = vmatprep.subr.bf16.mxu0 0
      %5872 = vmatpush1.bf16.msra.mxu0 0
      %5873 = vmatprep.subr.bf16.mxu0 0
      %5874 = vmatpush1.bf16.msra.mxu0 0
      %5875 = vmatprep.subr.bf16.mxu0 0
      %5876 = vmatpush1.bf16.msra.mxu0 %v5856
      %5877 = vmatprep.subr.bf16.mxu0 0
      %5878 = vmatpush2.bf16.msra.mxu0 0
      %5879 = vmatprep.subr.bf16.mxu0 0
      %5880 = vmatpush2.bf16.msra.mxu0 0
      %5881 = vmatprep.subr.bf16.mxu0 0
      %5882 = vmatpush2.bf16.msra.mxu0 0
      %5883 = vmatprep.subr.bf16.mxu0 0
      %5884 = vmatpush2.bf16.msra.mxu0 0
      %5885 = vmatprep.subr.bf16.mxu0 0
      %5886 = vmatpush2.bf16.msra.mxu0 0
      %5887 = vmatprep.subr.bf16.mxu0 0
      %5888 = vmatpush2.bf16.msra.mxu0 0
      %5889 = vmatprep.subr.bf16.mxu0 0
      %5890 = vmatpush2.bf16.msra.mxu0 0
      %5891 = vmatprep.subr.bf16.mxu0 0
      %5892 = vmatpush2.bf16.msra.mxu0 0
      %5893 = vmatprep.mubr.bf16.mxu0 0
      %5894 = vmatmul.mubr.bf16.gmra.mxu0 %v3983
      %v5895 = vpop.f32.mrf.mxu0
      %v5896 = vadd.f32 0.0, %v5895
      %v5897 = vpop.f32.mrf.mxu0
      %v5898 = vpop.f32.mrf.mxu0
      %v5899 = vadd.f32 0.0, %v5898
      %v5900 = vpop.f32.mrf.mxu0
      %5901 = vmatprep.mubr.bf16.mxu0 0
      %5902 = vmatmul.mubr.bf16.gmra.mxu0 %v3986
      %v5903 = vpop.f32.mrf.mxu0
      %v5904 = vadd.f32 0.0, %v5903
      %v5905 = vpop.f32.mrf.mxu0
      %v5906 = vpop.f32.mrf.mxu0
      %v5907 = vadd.f32 0.0, %v5906
      %v5908 = vpop.f32.mrf.mxu0
      %5909 = vmatprep.mubr.bf16.mxu0 0
      %5910 = vmatmul.mubr.bf16.gmra.mxu0 %v3989
      %v5911 = vpop.f32.mrf.mxu0
      %v5912 = vadd.f32 0.0, %v5911
      %v5913 = vpop.f32.mrf.mxu0
      %v5914 = vpop.f32.mrf.mxu0
      %v5915 = vadd.f32 0.0, %v5914
      %v5916 = vpop.f32.mrf.mxu0
      %5917 = vmatprep.mubr.bf16.mxu0 0
      %5918 = vmatmul.mubr.bf16.gmra.mxu0 %v3992
      %v5919 = vpop.f32.mrf.mxu0
      %v5920 = vadd.f32 0.0, %v5919
      %v5921 = vpop.f32.mrf.mxu0
      %v5922 = vpop.f32.mrf.mxu0
      %v5923 = vadd.f32 0.0, %v5922
      %v5924 = vpop.f32.mrf.mxu0
      %5925 = vmatprep.mubr.bf16.mxu0 0
      %5926 = vmatmul.mubr.bf16.gmra.mxu0 %v3995
      %v5927 = vpop.f32.mrf.mxu0
      %v5928 = vadd.f32 0.0, %v5927
      %v5929 = vpop.f32.mrf.mxu0
      %v5930 = vpop.f32.mrf.mxu0
      %v5931 = vadd.f32 0.0, %v5930
      %v5932 = vpop.f32.mrf.mxu0
      %5933 = vmatprep.mubr.bf16.mxu0 0
      %5934 = vmatmul.mubr.bf16.gmra.mxu0 %v3998
      %v5935 = vpop.f32.mrf.mxu0
      %v5936 = vadd.f32 0.0, %v5935
      %v5937 = vpop.f32.mrf.mxu0
      %v5938 = vpop.f32.mrf.mxu0
      %v5939 = vadd.f32 0.0, %v5938
      %v5940 = vpop.f32.mrf.mxu0
      %5941 = vmatprep.mubr.bf16.mxu0 0
      %5942 = vmatmul.mubr.bf16.gmra.mxu0 %v4001
      %v5943 = vpop.f32.mrf.mxu0
      %v5944 = vadd.f32 0.0, %v5943
      %v5945 = vpop.f32.mrf.mxu0
      %v5946 = vpop.f32.mrf.mxu0
      %v5947 = vadd.f32 0.0, %v5946
      %v5948 = vpop.f32.mrf.mxu0
      %5949 = vmatprep.mubr.bf16.mxu0 0
      %5950 = vmatmul.mubr.bf16.gmra.mxu0 %v4004
      %v5951 = vpop.f32.mrf.mxu0
      %v5952 = vadd.f32 0.0, %v5951
      %v5953 = vpop.f32.mrf.mxu0
      %v5954 = vpop.f32.mrf.mxu0
      %v5955 = vadd.f32 0.0, %v5954
      %v5956 = vpop.f32.mrf.mxu0
      %5957 = vmatprep.mubr.bf16.mxu0 0
      %5958 = vmatmul.mubr.bf16.gmra.mxu0 %v4007
      %v5959 = vpop.f32.mrf.mxu0
      %v5960 = vadd.f32 0.0, %v5959
      %v5961 = vpop.f32.mrf.mxu0
      %v5962 = vpop.f32.mrf.mxu0
      %v5963 = vadd.f32 0.0, %v5962
      %v5964 = vpop.f32.mrf.mxu0
      %5965 = vmatprep.mubr.bf16.mxu0 0
      %5966 = vmatmul.mubr.bf16.gmra.mxu0 %v4010
      %v5967 = vpop.f32.mrf.mxu0
      %v5968 = vadd.f32 0.0, %v5967
      %v5969 = vpop.f32.mrf.mxu0
      %v5970 = vpop.f32.mrf.mxu0
      %v5971 = vadd.f32 0.0, %v5970
      %v5972 = vpop.f32.mrf.mxu0
      %5973 = vmatprep.mubr.bf16.mxu0 0
      %5974 = vmatmul.mubr.bf16.gmra.mxu0 %v4013
      %v5975 = vpop.f32.mrf.mxu0
      %v5976 = vadd.f32 0.0, %v5975
      %v5977 = vpop.f32.mrf.mxu0
      %v5978 = vpop.f32.mrf.mxu0
      %v5979 = vadd.f32 0.0, %v5978
      %v5980 = vpop.f32.mrf.mxu0
      %5981 = vmatprep.mubr.bf16.mxu0 0
      %5982 = vmatmul.mubr.bf16.gmra.mxu0 %v4016
      %v5983 = vpop.f32.mrf.mxu0
      %v5984 = vadd.f32 0.0, %v5983
      %v5985 = vpop.f32.mrf.mxu0
      %v5986 = vpop.f32.mrf.mxu0
      %v5987 = vadd.f32 0.0, %v5986
      %v5988 = vpop.f32.mrf.mxu0
      %5989 = vmatprep.mubr.bf16.mxu0 0
      %5990 = vmatmul.mubr.bf16.gmra.mxu0 %v4019
      %v5991 = vpop.f32.mrf.mxu0
      %v5992 = vadd.f32 0.0, %v5991
      %v5993 = vpop.f32.mrf.mxu0
      %v5994 = vpop.f32.mrf.mxu0
      %v5995 = vadd.f32 0.0, %v5994
      %v5996 = vpop.f32.mrf.mxu0
      %5997 = vmatprep.mubr.bf16.mxu0 0
      %5998 = vmatmul.mubr.bf16.gmra.mxu0 %v4022
      %v5999 = vpop.f32.mrf.mxu0
      %v6000 = vadd.f32 0.0, %v5999
      %v6001 = vpop.f32.mrf.mxu0
      %v6002 = vpop.f32.mrf.mxu0
      %v6003 = vadd.f32 0.0, %v6002
      %v6004 = vpop.f32.mrf.mxu0
      %6005 = vmatprep.mubr.bf16.mxu0 0
      %6006 = vmatmul.mubr.bf16.gmra.mxu0 %v5206
      %v6007 = vpop.f32.mrf.mxu0
      %v6008 = vadd.f32 0.0, %v6007
      %v6009 = vpop.f32.mrf.mxu0
      %v6010 = vpop.f32.mrf.mxu0
      %v6011 = vadd.f32 0.0, %v6010
      %v6012 = vpop.f32.mrf.mxu0
      %6013 = vmatprep.mubr.bf16.mxu0 0
      %6014 = vmatmul.mubr.bf16.gmra.mxu0 %v5859
      %v6015 = vpop.f32.mrf.mxu0
      %v6016 = vadd.f32 0.0, %v6015
      %v6017 = vpop.f32.mrf.mxu0
      %v6018 = vpop.f32.mrf.mxu0
      %v6019 = vadd.f32 0.0, %v6018
      %v6020 = vpop.f32.mrf.mxu0
      %6021 = vdwg.mxu0
      %v6022 = vadd.f32 %v5815, %v5896
      %v6023 = vadd.f32 %v5816, %v5899
      %v6024 = vadd.f32 %v5817, %v5904
      %v6025 = vadd.f32 %v5818, %v5907
      %v6026 = vadd.f32 %v5819, %v5912
      %v6027 = vadd.f32 %v5820, %v5915
      %v6028 = vadd.f32 %v5821, %v5920
      %v6029 = vadd.f32 %v5822, %v5923
      %v6030 = vadd.f32 %v5823, %v5928
      %v6031 = vadd.f32 %v5824, %v5931
      %v6032 = vadd.f32 %v5825, %v5936
      %v6033 = vadd.f32 %v5826, %v5939
      %v6034 = vadd.f32 %v5827, %v5944
      %v6035 = vadd.f32 %v5828, %v5947
      %v6036 = vadd.f32 %v5829, %v5952
      %v6037 = vadd.f32 %v5830, %v5955
      %v6038 = vadd.f32 %v5831, %v5960
      %v6039 = vadd.f32 %v5832, %v5963
      %v6040 = vadd.f32 %v5833, %v5968
      %v6041 = vadd.f32 %v5834, %v5971
      %v6042 = vadd.f32 %v5835, %v5976
      %v6043 = vadd.f32 %v5836, %v5979
      %v6044 = vadd.f32 %v5837, %v5984
      %v6045 = vadd.f32 %v5838, %v5987
      %v6046 = vadd.f32 %v5839, %v5992
      %v6047 = vadd.f32 %v5840, %v5995
      %v6048 = vadd.f32 %v5841, %v6000
      %v6049 = vadd.f32 %v5842, %v6003
      %v6050 = vadd.f32 %v5843, %v6008
      %v6051 = vadd.f32 %v5844, %v6011
      %v6052 = vadd.f32 %v5845, %v6016
      %v6053 = vadd.f32 %v5846, %v6019
      %v6054 = vrot.slane %v5626, 4
      %v6055 = vrot.slane %v5629, 5
      %v6056 = vor.u32 %v6054, %v6055
      %v6057 = vrot.slane %v6056, 4
      %v6058 = vrot.slane %v5638, 5
      %v6059 = vsel %vm1273, %v6057, %v6058
      %v6060 = vrot.slane %v5635, 4
      %v6061 = vor.u32 %v6060, %v6058
      %v6062 = vrot.slane %v6061, 4
      %v6064 = vshll.u32 %v3517, 16
      %v6066 = vrot.slane %v6064, 5
      %v6067 = vsel %vm1273, %v6062, %v6066
      %v6068 = vunpack.c.l.b16 %v6059
      %v6069 = vunpack.c.l.b16 %v6067
      %v6070 = vpack.c.b16 %v6069, %v6068
      %v6073 = vunpack.c.l.b16 %v3534
      %v6074 = vunpack.c.l.b16 %v3535
      %v6075 = vpack.c.b16 %v6074, %v6073
      %v6078 = vsel %vm3975, %v6070, 0
      %6080 = vmatprep.subr.bf16.mxu0 0
      %6081 = vmatpush1.bf16.msra.mxu0 0
      %6082 = vmatprep.subr.bf16.mxu0 0
      %6083 = vmatpush1.bf16.msra.mxu0 0
      %6084 = vmatprep.subr.bf16.mxu0 0
      %6085 = vmatpush1.bf16.msra.mxu0 0
      %6086 = vmatprep.subr.bf16.mxu0 0
      %6087 = vmatpush1.bf16.msra.mxu0 0
      %6088 = vmatprep.subr.bf16.mxu0 0
      %6089 = vmatpush1.bf16.msra.mxu0 0
      %6090 = vmatprep.subr.bf16.mxu0 0
      %6091 = vmatpush1.bf16.msra.mxu0 0
      %6092 = vmatprep.subr.bf16.mxu0 0
      %6093 = vmatpush1.bf16.msra.mxu0 0
      %6094 = vmatprep.subr.bf16.mxu0 0
      %6095 = vmatpush1.bf16.msra.mxu0 %v6075
      %6096 = vmatprep.subr.bf16.mxu0 0
      %6097 = vmatpush2.bf16.msra.mxu0 0
      %6098 = vmatprep.subr.bf16.mxu0 0
      %6099 = vmatpush2.bf16.msra.mxu0 0
      %6100 = vmatprep.subr.bf16.mxu0 0
      %6101 = vmatpush2.bf16.msra.mxu0 0
      %6102 = vmatprep.subr.bf16.mxu0 0
      %6103 = vmatpush2.bf16.msra.mxu0 0
      %6104 = vmatprep.subr.bf16.mxu0 0
      %6105 = vmatpush2.bf16.msra.mxu0 0
      %6106 = vmatprep.subr.bf16.mxu0 0
      %6107 = vmatpush2.bf16.msra.mxu0 0
      %6108 = vmatprep.subr.bf16.mxu0 0
      %6109 = vmatpush2.bf16.msra.mxu0 0
      %6110 = vmatprep.subr.bf16.mxu0 0
      %6111 = vmatpush2.bf16.msra.mxu0 0
      %6112 = vmatprep.mubr.bf16.mxu0 0
      %6113 = vmatmul.mubr.bf16.gmra.mxu0 %v4733
      %v6114 = vpop.f32.mrf.mxu0
      %v6115 = vadd.f32 0.0, %v6114
      %v6116 = vpop.f32.mrf.mxu0
      %v6117 = vpop.f32.mrf.mxu0
      %v6118 = vadd.f32 0.0, %v6117
      %v6119 = vpop.f32.mrf.mxu0
      %6120 = vmatprep.mubr.bf16.mxu0 0
      %6121 = vmatmul.mubr.bf16.gmra.mxu0 %v4736
      %v6122 = vpop.f32.mrf.mxu0
      %v6123 = vadd.f32 0.0, %v6122
      %v6124 = vpop.f32.mrf.mxu0
      %v6125 = vpop.f32.mrf.mxu0
      %v6126 = vadd.f32 0.0, %v6125
      %v6127 = vpop.f32.mrf.mxu0
      %6128 = vmatprep.mubr.bf16.mxu0 0
      %6129 = vmatmul.mubr.bf16.gmra.mxu0 %v4739
      %v6130 = vpop.f32.mrf.mxu0
      %v6131 = vadd.f32 0.0, %v6130
      %v6132 = vpop.f32.mrf.mxu0
      %v6133 = vpop.f32.mrf.mxu0
      %v6134 = vadd.f32 0.0, %v6133
      %v6135 = vpop.f32.mrf.mxu0
      %6136 = vmatprep.mubr.bf16.mxu0 0
      %6137 = vmatmul.mubr.bf16.gmra.mxu0 %v4742
      %v6138 = vpop.f32.mrf.mxu0
      %v6139 = vadd.f32 0.0, %v6138
      %v6140 = vpop.f32.mrf.mxu0
      %v6141 = vpop.f32.mrf.mxu0
      %v6142 = vadd.f32 0.0, %v6141
      %v6143 = vpop.f32.mrf.mxu0
      %6144 = vmatprep.mubr.bf16.mxu0 0
      %6145 = vmatmul.mubr.bf16.gmra.mxu0 %v4745
      %v6146 = vpop.f32.mrf.mxu0
      %v6147 = vadd.f32 0.0, %v6146
      %v6148 = vpop.f32.mrf.mxu0
      %v6149 = vpop.f32.mrf.mxu0
      %v6150 = vadd.f32 0.0, %v6149
      %v6151 = vpop.f32.mrf.mxu0
      %6152 = vmatprep.mubr.bf16.mxu0 0
      %6153 = vmatmul.mubr.bf16.gmra.mxu0 %v4748
      %v6154 = vpop.f32.mrf.mxu0
      %v6155 = vadd.f32 0.0, %v6154
      %v6156 = vpop.f32.mrf.mxu0
      %v6157 = vpop.f32.mrf.mxu0
      %v6158 = vadd.f32 0.0, %v6157
      %v6159 = vpop.f32.mrf.mxu0
      %6160 = vmatprep.mubr.bf16.mxu0 0
      %6161 = vmatmul.mubr.bf16.gmra.mxu0 %v4751
      %v6162 = vpop.f32.mrf.mxu0
      %v6163 = vadd.f32 0.0, %v6162
      %v6164 = vpop.f32.mrf.mxu0
      %v6165 = vpop.f32.mrf.mxu0
      %v6166 = vadd.f32 0.0, %v6165
      %v6167 = vpop.f32.mrf.mxu0
      %6168 = vmatprep.mubr.bf16.mxu0 0
      %6169 = vmatmul.mubr.bf16.gmra.mxu0 %v4754
      %v6170 = vpop.f32.mrf.mxu0
      %v6171 = vadd.f32 0.0, %v6170
      %v6172 = vpop.f32.mrf.mxu0
      %v6173 = vpop.f32.mrf.mxu0
      %v6174 = vadd.f32 0.0, %v6173
      %v6175 = vpop.f32.mrf.mxu0
      %6176 = vmatprep.mubr.bf16.mxu0 0
      %6177 = vmatmul.mubr.bf16.gmra.mxu0 %v4757
      %v6178 = vpop.f32.mrf.mxu0
      %v6179 = vadd.f32 0.0, %v6178
      %v6180 = vpop.f32.mrf.mxu0
      %v6181 = vpop.f32.mrf.mxu0
      %v6182 = vadd.f32 0.0, %v6181
      %v6183 = vpop.f32.mrf.mxu0
      %6184 = vmatprep.mubr.bf16.mxu0 0
      %6185 = vmatmul.mubr.bf16.gmra.mxu0 %v4760
      %v6186 = vpop.f32.mrf.mxu0
      %v6187 = vadd.f32 0.0, %v6186
      %v6188 = vpop.f32.mrf.mxu0
      %v6189 = vpop.f32.mrf.mxu0
      %v6190 = vadd.f32 0.0, %v6189
      %v6191 = vpop.f32.mrf.mxu0
      %6192 = vmatprep.mubr.bf16.mxu0 0
      %6193 = vmatmul.mubr.bf16.gmra.mxu0 %v4763
      %v6194 = vpop.f32.mrf.mxu0
      %v6195 = vadd.f32 0.0, %v6194
      %v6196 = vpop.f32.mrf.mxu0
      %v6197 = vpop.f32.mrf.mxu0
      %v6198 = vadd.f32 0.0, %v6197
      %v6199 = vpop.f32.mrf.mxu0
      %6200 = vmatprep.mubr.bf16.mxu0 0
      %6201 = vmatmul.mubr.bf16.gmra.mxu0 %v4766
      %v6202 = vpop.f32.mrf.mxu0
      %v6203 = vadd.f32 0.0, %v6202
      %v6204 = vpop.f32.mrf.mxu0
      %v6205 = vpop.f32.mrf.mxu0
      %v6206 = vadd.f32 0.0, %v6205
      %v6207 = vpop.f32.mrf.mxu0
      %6208 = vmatprep.mubr.bf16.mxu0 0
      %6209 = vmatmul.mubr.bf16.gmra.mxu0 %v4769
      %v6210 = vpop.f32.mrf.mxu0
      %v6211 = vadd.f32 0.0, %v6210
      %v6212 = vpop.f32.mrf.mxu0
      %v6213 = vpop.f32.mrf.mxu0
      %v6214 = vadd.f32 0.0, %v6213
      %v6215 = vpop.f32.mrf.mxu0
      %6216 = vmatprep.mubr.bf16.mxu0 0
      %6217 = vmatmul.mubr.bf16.gmra.mxu0 %v4772
      %v6218 = vpop.f32.mrf.mxu0
      %v6219 = vadd.f32 0.0, %v6218
      %v6220 = vpop.f32.mrf.mxu0
      %v6221 = vpop.f32.mrf.mxu0
      %v6222 = vadd.f32 0.0, %v6221
      %v6223 = vpop.f32.mrf.mxu0
      %6224 = vmatprep.mubr.bf16.mxu0 0
      %6225 = vmatmul.mubr.bf16.gmra.mxu0 %v5425
      %v6226 = vpop.f32.mrf.mxu0
      %v6227 = vadd.f32 0.0, %v6226
      %v6228 = vpop.f32.mrf.mxu0
      %v6229 = vpop.f32.mrf.mxu0
      %v6230 = vadd.f32 0.0, %v6229
      %v6231 = vpop.f32.mrf.mxu0
      %6232 = vmatprep.mubr.bf16.mxu0 0
      %6233 = vmatmul.mubr.bf16.gmra.mxu0 %v6078
      %v6234 = vpop.f32.mrf.mxu0
      %v6235 = vadd.f32 0.0, %v6234
      %v6236 = vpop.f32.mrf.mxu0
      %v6237 = vpop.f32.mrf.mxu0
      %v6238 = vadd.f32 0.0, %v6237
      %v6239 = vpop.f32.mrf.mxu0
      %6240 = vdwg.mxu0
      %v6241 = vadd.f32 %v6022, %v6115
      %v6242 = vadd.f32 %v6023, %v6118
      %v6243 = vadd.f32 %v6024, %v6123
      %v6244 = vadd.f32 %v6025, %v6126
      %v6245 = vadd.f32 %v6026, %v6131
      %v6246 = vadd.f32 %v6027, %v6134
      %v6247 = vadd.f32 %v6028, %v6139
      %v6248 = vadd.f32 %v6029, %v6142
      %v6249 = vadd.f32 %v6030, %v6147
      %v6250 = vadd.f32 %v6031, %v6150
      %v6251 = vadd.f32 %v6032, %v6155
      %v6252 = vadd.f32 %v6033, %v6158
      %v6253 = vadd.f32 %v6034, %v6163
      %v6254 = vadd.f32 %v6035, %v6166
      %v6255 = vadd.f32 %v6036, %v6171
      %v6256 = vadd.f32 %v6037, %v6174
      %v6257 = vadd.f32 %v6038, %v6179
      %v6258 = vadd.f32 %v6039, %v6182
      %v6259 = vadd.f32 %v6040, %v6187
      %v6260 = vadd.f32 %v6041, %v6190
      %v6261 = vadd.f32 %v6042, %v6195
      %v6262 = vadd.f32 %v6043, %v6198
      %v6263 = vadd.f32 %v6044, %v6203
      %v6264 = vadd.f32 %v6045, %v6206
      %v6265 = vadd.f32 %v6046, %v6211
      %v6266 = vadd.f32 %v6047, %v6214
      %v6267 = vadd.f32 %v6048, %v6219
      %v6268 = vadd.f32 %v6049, %v6222
      %v6269 = vadd.f32 %v6050, %v6227
      %v6270 = vadd.f32 %v6051, %v6230
      %v6271 = vadd.f32 %v6052, %v6235
      %v6272 = vadd.f32 %v6053, %v6238
      %v6274 = vlaneseq
      %v6275 = vshrl.u32 %v6274, 7
      %v6276 = vsub.s32 0, %v6275
      %v6277 = vrot.slane %v3536, %v6276
      %v6279 = vadd.f32 %v6241, %v6277
      %v6280 = vadd.f32 %v6242, %v6277
      %v6281 = vadd.f32 %v6243, %v6277
      %v6282 = vadd.f32 %v6244, %v6277
      %v6283 = vadd.f32 %v6245, %v6277
      %v6284 = vadd.f32 %v6246, %v6277
      %v6285 = vadd.f32 %v6247, %v6277
      %v6286 = vadd.f32 %v6248, %v6277
      %v6287 = vadd.f32 %v6249, %v6277
      %v6288 = vadd.f32 %v6250, %v6277
      %v6289 = vadd.f32 %v6251, %v6277
      %v6290 = vadd.f32 %v6252, %v6277
      %v6291 = vadd.f32 %v6253, %v6277
      %v6292 = vadd.f32 %v6254, %v6277
      %v6293 = vadd.f32 %v6255, %v6277
      %v6294 = vadd.f32 %v6256, %v6277
      %v6295 = vadd.f32 %v6257, %v6277
      %v6296 = vadd.f32 %v6258, %v6277
      %v6297 = vadd.f32 %v6259, %v6277
      %v6298 = vadd.f32 %v6260, %v6277
      %v6299 = vadd.f32 %v6261, %v6277
      %v6300 = vadd.f32 %v6262, %v6277
      %v6301 = vadd.f32 %v6263, %v6277
      %v6302 = vadd.f32 %v6264, %v6277
      %v6303 = vadd.f32 %v6265, %v6277
      %v6304 = vadd.f32 %v6266, %v6277
      %v6305 = vadd.f32 %v6267, %v6277
      %v6306 = vadd.f32 %v6268, %v6277
      %v6307 = vadd.f32 %v6269, %v6277
      %v6308 = vadd.f32 %v6270, %v6277
      %v6309 = vadd.f32 %v6271, %v6277
      %v6310 = vadd.f32 %v6272, %v6277
      %vm6311 = vcmp.gt.f32.partialorder %v6279, 0.0
      %vm6312 = vcmp.gt.f32.partialorder %v6280, 0.0
      %vm6313 = vcmp.gt.f32.partialorder %v6281, 0.0
      %vm6314 = vcmp.gt.f32.partialorder %v6282, 0.0
      %vm6315 = vcmp.gt.f32.partialorder %v6283, 0.0
      %vm6316 = vcmp.gt.f32.partialorder %v6284, 0.0
      %vm6317 = vcmp.gt.f32.partialorder %v6285, 0.0
      %vm6318 = vcmp.gt.f32.partialorder %v6286, 0.0
      %vm6319 = vcmp.gt.f32.partialorder %v6287, 0.0
      %vm6320 = vcmp.gt.f32.partialorder %v6288, 0.0
      %vm6321 = vcmp.gt.f32.partialorder %v6289, 0.0
      %vm6322 = vcmp.gt.f32.partialorder %v6290, 0.0
      %vm6323 = vcmp.gt.f32.partialorder %v6291, 0.0
      %vm6324 = vcmp.gt.f32.partialorder %v6292, 0.0
      %vm6325 = vcmp.gt.f32.partialorder %v6293, 0.0
      %vm6326 = vcmp.gt.f32.partialorder %v6294, 0.0
      %vm6327 = vcmp.gt.f32.partialorder %v6295, 0.0
      %vm6328 = vcmp.gt.f32.partialorder %v6296, 0.0
      %vm6329 = vcmp.gt.f32.partialorder %v6297, 0.0
      %vm6330 = vcmp.gt.f32.partialorder %v6298, 0.0
      %vm6331 = vcmp.gt.f32.partialorder %v6299, 0.0
      %vm6332 = vcmp.gt.f32.partialorder %v6300, 0.0
      %vm6333 = vcmp.gt.f32.partialorder %v6301, 0.0
      %vm6334 = vcmp.gt.f32.partialorder %v6302, 0.0
      %vm6335 = vcmp.gt.f32.partialorder %v6303, 0.0
      %vm6336 = vcmp.gt.f32.partialorder %v6304, 0.0
      %vm6337 = vcmp.gt.f32.partialorder %v6305, 0.0
      %vm6338 = vcmp.gt.f32.partialorder %v6306, 0.0
      %vm6339 = vcmp.gt.f32.partialorder %v6307, 0.0
      %vm6340 = vcmp.gt.f32.partialorder %v6308, 0.0
      %vm6341 = vcmp.gt.f32.partialorder %v6309, 0.0
      %vm6342 = vcmp.gt.f32.partialorder %v6310, 0.0
      %v6343 = vmul.f32 %v6279, 0.1
      %v6344 = vmul.f32 %v6280, 0.1
      %v6345 = vmul.f32 %v6281, 0.1
      %v6346 = vmul.f32 %v6282, 0.1
      %v6347 = vmul.f32 %v6283, 0.1
      %v6348 = vmul.f32 %v6284, 0.1
      %v6349 = vmul.f32 %v6285, 0.1
      %v6350 = vmul.f32 %v6286, 0.1
      %v6351 = vmul.f32 %v6287, 0.1
      %v6352 = vmul.f32 %v6288, 0.1
      %v6353 = vmul.f32 %v6289, 0.1
      %v6354 = vmul.f32 %v6290, 0.1
      %v6355 = vmul.f32 %v6291, 0.1
      %v6356 = vmul.f32 %v6292, 0.1
      %v6357 = vmul.f32 %v6293, 0.1
      %v6358 = vmul.f32 %v6294, 0.1
      %v6359 = vmul.f32 %v6295, 0.1
      %v6360 = vmul.f32 %v6296, 0.1
      %v6361 = vmul.f32 %v6297, 0.1
      %v6362 = vmul.f32 %v6298, 0.1
      %v6363 = vmul.f32 %v6299, 0.1
      %v6364 = vmul.f32 %v6300, 0.1
      %v6365 = vmul.f32 %v6301, 0.1
      %v6366 = vmul.f32 %v6302, 0.1
      %v6367 = vmul.f32 %v6303, 0.1
      %v6368 = vmul.f32 %v6304, 0.1
      %v6369 = vmul.f32 %v6305, 0.1
      %v6370 = vmul.f32 %v6306, 0.1
      %v6371 = vmul.f32 %v6307, 0.1
      %v6372 = vmul.f32 %v6308, 0.1
      %v6373 = vmul.f32 %v6309, 0.1
      %v6374 = vmul.f32 %v6310, 0.1
      %v6375 = vsel %vm6311, %v6279, %v6343
      %v6376 = vsel %vm6312, %v6280, %v6344
      %v6377 = vsel %vm6313, %v6281, %v6345
      %v6378 = vsel %vm6314, %v6282, %v6346
      %v6379 = vsel %vm6315, %v6283, %v6347
      %v6380 = vsel %vm6316, %v6284, %v6348
      %v6381 = vsel %vm6317, %v6285, %v6349
      %v6382 = vsel %vm6318, %v6286, %v6350
      %v6383 = vsel %vm6319, %v6287, %v6351
      %v6384 = vsel %vm6320, %v6288, %v6352
      %v6385 = vsel %vm6321, %v6289, %v6353
      %v6386 = vsel %vm6322, %v6290, %v6354
      %v6387 = vsel %vm6323, %v6291, %v6355
      %v6388 = vsel %vm6324, %v6292, %v6356
      %v6389 = vsel %vm6325, %v6293, %v6357
      %v6390 = vsel %vm6326, %v6294, %v6358
      %v6391 = vsel %vm6327, %v6295, %v6359
      %v6392 = vsel %vm6328, %v6296, %v6360
      %v6393 = vsel %vm6329, %v6297, %v6361
      %v6394 = vsel %vm6330, %v6298, %v6362
      %v6395 = vsel %vm6331, %v6299, %v6363
      %v6396 = vsel %vm6332, %v6300, %v6364
      %v6397 = vsel %vm6333, %v6301, %v6365
      %v6398 = vsel %vm6334, %v6302, %v6366
      %v6399 = vsel %vm6335, %v6303, %v6367
      %v6400 = vsel %vm6336, %v6304, %v6368
      %v6401 = vsel %vm6337, %v6305, %v6369
      %v6402 = vsel %vm6338, %v6306, %v6370
      %v6403 = vsel %vm6339, %v6307, %v6371
      %v6404 = vsel %vm6340, %v6308, %v6372
      %v6405 = vsel %vm6341, %v6309, %v6373
      %v6406 = vsel %vm6342, %v6310, %v6374
      %6407 = vst.msk [vmem:[#allocation3] sm:$0xf] %vm3212, 0
      %6408 = vst.msk [vmem:[#allocation3 + $0x4] sm:$0xf] %vm3212, 0
      %6409 = vst.msk [vmem:[#allocation3 + $0x8] sm:$0xf] %vm3212, 0
      %6410 = vst.msk [vmem:[#allocation3 + $0xc] sm:$0xf] %vm3212, 0
      %6411 = vst.msk [vmem:[#allocation3 + $0x10] sm:$0xf] %vm3212, 0
      %6412 = vst.msk [vmem:[#allocation3 + $0x14] sm:$0xf] %vm3212, 0
      %6413 = vst.msk [vmem:[#allocation3 + $0x18] sm:$0xf] %vm3212, 0
      %6414 = vst.msk [vmem:[#allocation3 + $0x1c] sm:$0xf] %vm3212, 0
      %6415 = vst.msk [vmem:[#allocation3 + $0x20] sm:$0xf] %vm3212, 0
      %6416 = vst.msk [vmem:[#allocation3 + $0x24] sm:$0xf] %vm3212, 0
      %6417 = vst.msk [vmem:[#allocation3 + $0x28] sm:$0xf] %vm3212, 0
      %6418 = vst.msk [vmem:[#allocation3 + $0x2c] sm:$0xf] %vm3212, 0
      %6419 = vst.msk [vmem:[#allocation3 + $0x30] sm:$0xf] %vm3212, 0
      %6420 = vst.msk [vmem:[#allocation3 + $0x34] sm:$0xf] %vm3212, 0
      %6421 = vst.msk [vmem:[#allocation3 + $0x38] sm:$0xf] %vm3212, 0
      %6422 = vst.msk [vmem:[#allocation3 + $0x3c] sm:$0xf] %vm3212, 0
      %6423 = vst.msk [vmem:[#allocation3 + $0x40] sm:$0xf] %vm3212, 0
      %6424 = vst.msk [vmem:[#allocation3 + $0x44] sm:$0xf] %vm3212, 0
      %6425 = vst.msk [vmem:[#allocation3 + $0x48] sm:$0xf] %vm3212, 0
      %6426 = vst.msk [vmem:[#allocation3 + $0x4c] sm:$0xf] %vm3212, 0
      %6427 = vst.msk [vmem:[#allocation3 + $0x50] sm:$0xf] %vm3212, 0
      %6428 = vst.msk [vmem:[#allocation3 + $0x54] sm:$0xf] %vm3212, 0
      %6429 = vst.msk [vmem:[#allocation3 + $0x58] sm:$0xf] %vm3212, 0
      %6430 = vst.msk [vmem:[#allocation3 + $0x5c] sm:$0xf] %vm3212, 0
      %6431 = vst.msk [vmem:[#allocation3 + $0x60] sm:$0xf] %vm3212, 0
      %6432 = vst.msk [vmem:[#allocation3 + $0x64] sm:$0xf] %vm3212, 0
      %6433 = vst.msk [vmem:[#allocation3 + $0x68] sm:$0xf] %vm3212, 0
      %6434 = vst.msk [vmem:[#allocation3 + $0x6c] sm:$0xf] %vm3212, 0
      %6435 = vst.msk [vmem:[#allocation3 + $0x70] sm:$0xf] %vm3212, 0
      %6436 = vst.msk [vmem:[#allocation3 + $0x74] sm:$0xf] %vm3212, 0
      %6437 = vst.msk [vmem:[#allocation3 + $0x78] sm:$0xf] %vm3212, 0
      %6438 = vst.msk [vmem:[#allocation3 + $0x7c] sm:$0xf] %vm3212, 0
      %6439 = vst.msk [vmem:[#allocation3 + $0x80] sm:$0xf] %vm3212, 0
      %6440 = vst.msk [vmem:[#allocation3 + $0x84] sm:$0xf] %vm3212, 0
      %6441 = vst.msk [vmem:[#allocation3 + $0x88] sm:$0xf] %vm3212, 0
      %6442 = vst.msk [vmem:[#allocation3 + $0x8c] sm:$0xf] %vm3212, 0
      %6443 = vst.msk [vmem:[#allocation3 + $0x90] sm:$0xf] %vm3212, 0
      %6444 = vst.msk [vmem:[#allocation3 + $0x94] sm:$0xf] %vm3212, 0
      %6445 = vst.msk [vmem:[#allocation3 + $0x98] sm:$0xf] %vm3212, 0
      %6446 = vst.msk [vmem:[#allocation3 + $0x9c] sm:$0xf] %vm3212, 0
      %6447 = vst.msk [vmem:[#allocation3 + $0xa0] sm:$0xf] %vm3212, 0
      %6448 = vst.msk [vmem:[#allocation3 + $0xa4] sm:$0xf] %vm3212, 0
      %6449 = vst.msk [vmem:[#allocation3 + $0xa8] sm:$0xf] %vm3212, 0
      %6450 = vst.msk [vmem:[#allocation3 + $0xac] sm:$0xf] %vm3212, 0
      %6451 = vst.msk [vmem:[#allocation3 + $0xb0] sm:$0xf] %vm3212, 0
      %6452 = vst.msk [vmem:[#allocation3 + $0xb4] sm:$0xf] %vm3212, 0
      %6453 = vst.msk [vmem:[#allocation3 + $0xb8] sm:$0xf] %vm3212, 0
      %6454 = vst.msk [vmem:[#allocation3 + $0xbc] sm:$0xf] %vm3212, 0
      %6455 = vst.msk [vmem:[#allocation3 + $0xc0] sm:$0xf] %vm3212, 0
      %6456 = vst.msk [vmem:[#allocation3 + $0xc4] sm:$0xf] %vm3212, 0
      %6457 = vst.msk [vmem:[#allocation3 + $0xc8] sm:$0xf] %vm3212, 0
      %6458 = vst.msk [vmem:[#allocation3 + $0xcc] sm:$0xf] %vm3212, 0
      %6459 = vst.msk [vmem:[#allocation3 + $0xd0] sm:$0xf] %vm3212, 0
      %6460 = vst.msk [vmem:[#allocation3 + $0xd4] sm:$0xf] %vm3212, 0
      %6461 = vst.msk [vmem:[#allocation3 + $0xd8] sm:$0xf] %vm3212, 0
      %6462 = vst.msk [vmem:[#allocation3 + $0xdc] sm:$0xf] %vm3212, 0
      %6463 = vst.msk [vmem:[#allocation3 + $0xe0] sm:$0xf] %vm3212, 0
      %6464 = vst.msk [vmem:[#allocation3 + $0xe4] sm:$0xf] %vm3212, 0
      %6465 = vst.msk [vmem:[#allocation3 + $0xe8] sm:$0xf] %vm3212, 0
      %6466 = vst.msk [vmem:[#allocation3 + $0xec] sm:$0xf] %vm3212, 0
      %6467 = vst.msk [vmem:[#allocation3 + $0xf0] sm:$0xf] %vm3212, 0
      %6468 = vst.msk [vmem:[#allocation3 + $0xf4] sm:$0xf] %vm3212, 0
      %6469 = vst.msk [vmem:[#allocation3 + $0xf8] sm:$0xf] %vm3212, 0
      %6470 = vst.msk [vmem:[#allocation3 + $0xfc] sm:$0xf] %vm3212, 0
      %6471 = vst.msk [vmem:[#allocation3 + $0x100] sm:$0xf] %vm3212, 0
      %6472 = vst.msk [vmem:[#allocation3 + $0x104] sm:$0xf] %vm3212, 0
      %6473 = vst.msk [vmem:[#allocation3 + $0x108] sm:$0xf] %vm3212, 0
      %6474 = vst.msk [vmem:[#allocation3 + $0x10c] sm:$0xf] %vm3212, 0
      %6475 = vst.msk [vmem:[#allocation3 + $0x110] sm:$0xf] %vm3212, 0
      %6476 = vst.msk [vmem:[#allocation3 + $0x114] sm:$0xf] %vm3212, 0
      %6477 = vst.msk [vmem:[#allocation3 + $0x118] sm:$0xf] %vm3212, 0
      %6478 = vst.msk [vmem:[#allocation3 + $0x11c] sm:$0xf] %vm3212, 0
      %v6479 = vpack.c.bf16 %v6376, %v6375
      %v6480 = vpack.c.bf16 %v6378, %v6377
      %v6481 = vpack.c.bf16 %v6380, %v6379
      %v6482 = vpack.c.bf16 %v6382, %v6381
      %v6483 = vpack.c.bf16 %v6384, %v6383
      %v6484 = vpack.c.bf16 %v6386, %v6385
      %v6485 = vpack.c.bf16 %v6388, %v6387
      %v6486 = vpack.c.bf16 %v6390, %v6389
      %v6487 = vpack.c.bf16 %v6392, %v6391
      %v6488 = vpack.c.bf16 %v6394, %v6393
      %v6489 = vpack.c.bf16 %v6396, %v6395
      %v6490 = vpack.c.bf16 %v6398, %v6397
      %v6491 = vpack.c.bf16 %v6400, %v6399
      %v6492 = vpack.c.bf16 %v6402, %v6401
      %v6493 = vpack.c.bf16 %v6404, %v6403
      %v6494 = vpack.c.bf16 %v6406, %v6405
      %v6511 = vunpack.c.l.b16 %v6479
      %v6512 = vunpack.c.h.b16 %v6479
      %v6513 = vunpack.c.l.b16 %v6480
      %v6514 = vunpack.c.h.b16 %v6480
      %v6515 = vunpack.c.l.b16 %v6481
      %v6516 = vunpack.c.h.b16 %v6481
      %v6517 = vunpack.c.l.b16 %v6482
      %v6518 = vunpack.c.h.b16 %v6482
      %v6519 = vunpack.c.l.b16 %v6483
      %v6520 = vunpack.c.h.b16 %v6483
      %v6521 = vunpack.c.l.b16 %v6484
      %v6522 = vunpack.c.h.b16 %v6484
      %v6523 = vunpack.c.l.b16 %v6485
      %v6524 = vunpack.c.h.b16 %v6485
      %v6525 = vunpack.c.l.b16 %v6486
      %v6526 = vunpack.c.h.b16 %v6486
      %v6527 = vunpack.c.l.b16 %v6487
      %v6528 = vunpack.c.h.b16 %v6487
      %v6529 = vunpack.c.l.b16 %v6488
      %v6530 = vunpack.c.h.b16 %v6488
      %v6531 = vunpack.c.l.b16 %v6489
      %v6532 = vunpack.c.h.b16 %v6489
      %v6533 = vunpack.c.l.b16 %v6490
      %v6534 = vunpack.c.h.b16 %v6490
      %v6535 = vunpack.c.l.b16 %v6491
      %v6536 = vunpack.c.h.b16 %v6491
      %v6537 = vunpack.c.l.b16 %v6492
      %v6538 = vunpack.c.h.b16 %v6492
      %v6539 = vunpack.c.l.b16 %v6493
      %v6540 = vunpack.c.h.b16 %v6493
      %v6541 = vunpack.c.l.b16 %v6494
      %v6542 = vunpack.c.h.b16 %v6494
      %v6543 = vpack.c.b16 %v6511, %v6511
      %v6544 = vpack.c.b16 %v6512, %v6512
      %v6545 = vpack.c.b16 %v6513, %v6513
      %v6546 = vpack.c.b16 %v6514, %v6514
      %v6547 = vpack.c.b16 %v6515, %v6515
      %v6548 = vpack.c.b16 %v6516, %v6516
      %v6549 = vpack.c.b16 %v6517, %v6517
      %v6550 = vpack.c.b16 %v6518, %v6518
      %v6551 = vpack.c.b16 %v6519, %v6519
      %v6552 = vpack.c.b16 %v6520, %v6520
      %v6553 = vpack.c.b16 %v6521, %v6521
      %v6554 = vpack.c.b16 %v6522, %v6522
      %v6555 = vpack.c.b16 %v6523, %v6523
      %v6556 = vpack.c.b16 %v6524, %v6524
      %v6557 = vpack.c.b16 %v6525, %v6525
      %v6558 = vpack.c.b16 %v6526, %v6526
      %v6559 = vpack.c.b16 %v6527, %v6527
      %v6560 = vpack.c.b16 %v6528, %v6528
      %v6561 = vpack.c.b16 %v6529, %v6529
      %v6562 = vpack.c.b16 %v6530, %v6530
      %v6563 = vpack.c.b16 %v6531, %v6531
      %v6564 = vpack.c.b16 %v6532, %v6532
      %v6565 = vpack.c.b16 %v6533, %v6533
      %v6566 = vpack.c.b16 %v6534, %v6534
      %v6567 = vpack.c.b16 %v6535, %v6535
      %v6568 = vpack.c.b16 %v6536, %v6536
      %v6569 = vpack.c.b16 %v6537, %v6537
      %v6570 = vpack.c.b16 %v6538, %v6538
      %v6571 = vpack.c.b16 %v6539, %v6539
      %v6572 = vpack.c.b16 %v6540, %v6540
      %v6573 = vpack.c.b16 %v6541, %v6541
      %v6574 = vpack.c.b16 %v6542, %v6542
      %s6607 = scalar_lea.vmem [#allocation3], 16
      %6608 = vst.msk [vmem:[%s6607 + $0x4] sm:$0xf] %vm3212, %v6543
      %6609 = vst.msk [vmem:[%s6607 + $0x8] sm:$0xf] %vm3212, %v6544
      %6610 = vst.msk [vmem:[%s6607 + $0x14] sm:$0xf] %vm3212, %v6545
      %6611 = vst.msk [vmem:[%s6607 + $0x18] sm:$0xf] %vm3212, %v6546
      %6612 = vst.msk [vmem:[%s6607 + $0x24] sm:$0xf] %vm3212, %v6547
      %6613 = vst.msk [vmem:[%s6607 + $0x28] sm:$0xf] %vm3212, %v6548
      %6614 = vst.msk [vmem:[%s6607 + $0x34] sm:$0xf] %vm3212, %v6549
      %6615 = vst.msk [vmem:[%s6607 + $0x38] sm:$0xf] %vm3212, %v6550
      %6616 = vst.msk [vmem:[%s6607 + $0x44] sm:$0xf] %vm3212, %v6551
      %6617 = vst.msk [vmem:[%s6607 + $0x48] sm:$0xf] %vm3212, %v6552
      %6618 = vst.msk [vmem:[%s6607 + $0x54] sm:$0xf] %vm3212, %v6553
      %6619 = vst.msk [vmem:[%s6607 + $0x58] sm:$0xf] %vm3212, %v6554
      %6620 = vst.msk [vmem:[%s6607 + $0x64] sm:$0xf] %vm3212, %v6555
      %6621 = vst.msk [vmem:[%s6607 + $0x68] sm:$0xf] %vm3212, %v6556
      %6622 = vst.msk [vmem:[%s6607 + $0x74] sm:$0xf] %vm3212, %v6557
      %6623 = vst.msk [vmem:[%s6607 + $0x78] sm:$0xf] %vm3212, %v6558
      %6624 = vst.msk [vmem:[%s6607 + $0x84] sm:$0xf] %vm3212, %v6559
      %6625 = vst.msk [vmem:[%s6607 + $0x88] sm:$0xf] %vm3212, %v6560
      %6626 = vst.msk [vmem:[%s6607 + $0x94] sm:$0xf] %vm3212, %v6561
      %6627 = vst.msk [vmem:[%s6607 + $0x98] sm:$0xf] %vm3212, %v6562
      %6628 = vst.msk [vmem:[%s6607 + $0xa4] sm:$0xf] %vm3212, %v6563
      %6629 = vst.msk [vmem:[%s6607 + $0xa8] sm:$0xf] %vm3212, %v6564
      %6630 = vst.msk [vmem:[%s6607 + $0xb4] sm:$0xf] %vm3212, %v6565
      %6631 = vst.msk [vmem:[%s6607 + $0xb8] sm:$0xf] %vm3212, %v6566
      %6632 = vst.msk [vmem:[%s6607 + $0xc4] sm:$0xf] %vm3212, %v6567
      %6633 = vst.msk [vmem:[%s6607 + $0xc8] sm:$0xf] %vm3212, %v6568
      %6634 = vst.msk [vmem:[%s6607 + $0xd4] sm:$0xf] %vm3212, %v6569
      %6635 = vst.msk [vmem:[%s6607 + $0xd8] sm:$0xf] %vm3212, %v6570
      %6636 = vst.msk [vmem:[%s6607 + $0xe4] sm:$0xf] %vm3212, %v6571
      %6637 = vst.msk [vmem:[%s6607 + $0xe8] sm:$0xf] %vm3212, %v6572
      %6638 = vst.msk [vmem:[%s6607 + $0xf4] sm:$0xf] %vm3212, %v6573
      %6639 = vst.msk [vmem:[%s6607 + $0xf8] sm:$0xf] %vm3212, %v6574
      %v6640 = vld [vmem:[#allocation3] sm:$0xf]
      %v6641 = vld [vmem:[#allocation3 + $0x4] sm:$0xf]
      %v6642 = vld [vmem:[#allocation3 + $0x8] sm:$0xf]
      %v6643 = vld [vmem:[#allocation3 + $0xc] sm:$0xf]
      %v6644 = vld [vmem:[#allocation3 + $0x10] sm:$0xf]
      %v6645 = vld [vmem:[#allocation3 + $0x14] sm:$0xf]
      %v6646 = vld [vmem:[#allocation3 + $0x18] sm:$0xf]
      %v6647 = vld [vmem:[#allocation3 + $0x1c] sm:$0xf]
      %v6648 = vld [vmem:[#allocation3 + $0x20] sm:$0xf]
      %v6649 = vld [vmem:[#allocation3 + $0x24] sm:$0xf]
      %v6650 = vld [vmem:[#allocation3 + $0x28] sm:$0xf]
      %v6651 = vld [vmem:[#allocation3 + $0x2c] sm:$0xf]
      %v6652 = vld [vmem:[#allocation3 + $0x30] sm:$0xf]
      %v6653 = vld [vmem:[#allocation3 + $0x34] sm:$0xf]
      %v6654 = vld [vmem:[#allocation3 + $0x38] sm:$0xf]
      %v6655 = vld [vmem:[#allocation3 + $0x3c] sm:$0xf]
      %v6656 = vld [vmem:[#allocation3 + $0x40] sm:$0xf]
      %v6657 = vld [vmem:[#allocation3 + $0x44] sm:$0xf]
      %v6658 = vld [vmem:[#allocation3 + $0x48] sm:$0xf]
      %v6659 = vld [vmem:[#allocation3 + $0x4c] sm:$0xf]
      %v6660 = vld [vmem:[#allocation3 + $0x50] sm:$0xf]
      %v6661 = vld [vmem:[#allocation3 + $0x54] sm:$0xf]
      %v6662 = vld [vmem:[#allocation3 + $0x58] sm:$0xf]
      %v6663 = vld [vmem:[#allocation3 + $0x5c] sm:$0xf]
      %v6664 = vld [vmem:[#allocation3 + $0x60] sm:$0xf]
      %v6665 = vld [vmem:[#allocation3 + $0x64] sm:$0xf]
      %v6666 = vld [vmem:[#allocation3 + $0x68] sm:$0xf]
      %v6667 = vld [vmem:[#allocation3 + $0x6c] sm:$0xf]
      %v6668 = vld [vmem:[#allocation3 + $0x70] sm:$0xf]
      %v6669 = vld [vmem:[#allocation3 + $0x74] sm:$0xf]
      %v6670 = vld [vmem:[#allocation3 + $0x78] sm:$0xf]
      %v6671 = vld [vmem:[#allocation3 + $0x7c] sm:$0xf]
      %v6672 = vld [vmem:[#allocation3 + $0x80] sm:$0xf]
      %v6673 = vld [vmem:[#allocation3 + $0x84] sm:$0xf]
      %v6674 = vld [vmem:[#allocation3 + $0x88] sm:$0xf]
      %v6675 = vld [vmem:[#allocation3 + $0x8c] sm:$0xf]
      %v6676 = vld [vmem:[#allocation3 + $0x90] sm:$0xf]
      %v6677 = vld [vmem:[#allocation3 + $0x94] sm:$0xf]
      %v6678 = vld [vmem:[#allocation3 + $0x98] sm:$0xf]
      %v6679 = vld [vmem:[#allocation3 + $0x9c] sm:$0xf]
      %v6680 = vld [vmem:[#allocation3 + $0xa0] sm:$0xf]
      %v6681 = vld [vmem:[#allocation3 + $0xa4] sm:$0xf]
      %v6682 = vld [vmem:[#allocation3 + $0xa8] sm:$0xf]
      %v6683 = vld [vmem:[#allocation3 + $0xac] sm:$0xf]
      %v6684 = vld [vmem:[#allocation3 + $0xb0] sm:$0xf]
      %v6685 = vld [vmem:[#allocation3 + $0xb4] sm:$0xf]
      %v6686 = vld [vmem:[#allocation3 + $0xb8] sm:$0xf]
      %v6687 = vld [vmem:[#allocation3 + $0xbc] sm:$0xf]
      %v6688 = vld [vmem:[#allocation3 + $0xc0] sm:$0xf]
      %v6689 = vld [vmem:[#allocation3 + $0xc4] sm:$0xf]
      %v6690 = vld [vmem:[#allocation3 + $0xc8] sm:$0xf]
      %v6691 = vld [vmem:[#allocation3 + $0xcc] sm:$0xf]
      %v6692 = vld [vmem:[#allocation3 + $0xd0] sm:$0xf]
      %v6693 = vld [vmem:[#allocation3 + $0xd4] sm:$0xf]
      %v6694 = vld [vmem:[#allocation3 + $0xd8] sm:$0xf]
      %v6695 = vld [vmem:[#allocation3 + $0xdc] sm:$0xf]
      %v6696 = vld [vmem:[#allocation3 + $0xe0] sm:$0xf]
      %v6697 = vld [vmem:[#allocation3 + $0xe4] sm:$0xf]
      %v6698 = vld [vmem:[#allocation3 + $0xe8] sm:$0xf]
      %v6699 = vld [vmem:[#allocation3 + $0xec] sm:$0xf]
      %v6700 = vld [vmem:[#allocation3 + $0xf0] sm:$0xf]
      %v6701 = vld [vmem:[#allocation3 + $0xf4] sm:$0xf]
      %v6702 = vld [vmem:[#allocation3 + $0xf8] sm:$0xf]
      %v6703 = vld [vmem:[#allocation3 + $0xfc] sm:$0xf]
      %v6704 = vld [vmem:[#allocation3 + $0x100] sm:$0xf]
      %v6705 = vld [vmem:[#allocation3 + $0x104] sm:$0xf]
      %v6706 = vld [vmem:[#allocation3 + $0x108] sm:$0xf]
      %v6707 = vld [vmem:[#allocation3 + $0x10c] sm:$0xf]
      %v6708 = vld [vmem:[#allocation3 + $0x110] sm:$0xf]
      %v6709 = vld [vmem:[#allocation3 + $0x114] sm:$0xf]
      %v6710 = vld [vmem:[#allocation3 + $0x118] sm:$0xf]
      %v6711 = vld [vmem:[#allocation3 + $0x11c] sm:$0xf]
      %v6712 = vld [vmem:[%s5] sm:$0xf]
      %v6713 = vld [vmem:[%s5 + $0x4] sm:$0xf]
      %v6714 = vld [vmem:[%s5 + $0x8] sm:$0xf]
      %v6715 = vld [vmem:[%s5 + $0xc] sm:$0xf]
      %v6716 = vld [vmem:[%s5 + $0x10] sm:$0xf]
      %v6717 = vld [vmem:[%s5 + $0x14] sm:$0xf]
      %v6718 = vld [vmem:[%s5 + $0x18] sm:$0xf]
      %v6719 = vld [vmem:[%s5 + $0x1c] sm:$0xf]
      %v6720 = vld [vmem:[%s5 + $0x20] sm:$0xf]
      %v6721 = vld [vmem:[%s5 + $0x24] sm:$0xf]
      %v6722 = vld [vmem:[%s5 + $0x28] sm:$0xf]
      %v6723 = vld [vmem:[%s5 + $0x2c] sm:$0xf]
      %v6724 = vld [vmem:[%s5 + $0x30] sm:$0xf]
      %v6725 = vld [vmem:[%s5 + $0x34] sm:$0xf]
      %v6726 = vld [vmem:[%s5 + $0x38] sm:$0xf]
      %v6727 = vld [vmem:[%s5 + $0x3c] sm:$0xf]
      %v6728 = vld [vmem:[%s5 + $0x40] sm:$0xf]
      %v6729 = vld [vmem:[%s5 + $0x44] sm:$0xf]
      %v6730 = vld [vmem:[%s6] sm:$0x1]
      %v6732 = vshrl.u32 %v6640, 16
      %v6734 = vrot.slane %v6732, 7
      %v6735 = vrot.slane %v6734, 4
      %v6737 = vshrl.u32 %v6641, 16
      %v6739 = vrot.slane %v6737, 7
      %v6740 = vshll.u32 %v6641, 16
      %v6742 = vor.u32 %v6739, %v6740
      %v6743 = vsel %vm364, %v6735, %v6742
      %v6744 = vrot.slane %v6739, 4
      %v6746 = vshrl.u32 %v6642, 16
      %v6748 = vrot.slane %v6746, 7
      %v6749 = vshll.u32 %v6642, 16
      %v6751 = vor.u32 %v6748, %v6749
      %v6752 = vsel %vm364, %v6744, %v6751
      %v6754 = vshrl.u32 %v6644, 16
      %v6756 = vrot.slane %v6754, 7
      %v6757 = vrot.slane %v6756, 4
      %v6759 = vshrl.u32 %v6645, 16
      %v6761 = vrot.slane %v6759, 7
      %v6762 = vshll.u32 %v6645, 16
      %v6764 = vor.u32 %v6761, %v6762
      %v6765 = vsel %vm364, %v6757, %v6764
      %v6766 = vrot.slane %v6761, 4
      %v6768 = vshrl.u32 %v6646, 16
      %v6770 = vrot.slane %v6768, 7
      %v6771 = vshll.u32 %v6646, 16
      %v6773 = vor.u32 %v6770, %v6771
      %v6774 = vsel %vm364, %v6766, %v6773
      %v6776 = vshrl.u32 %v6648, 16
      %v6778 = vrot.slane %v6776, 7
      %v6779 = vrot.slane %v6778, 4
      %v6781 = vshrl.u32 %v6649, 16
      %v6783 = vrot.slane %v6781, 7
      %v6784 = vshll.u32 %v6649, 16
      %v6786 = vor.u32 %v6783, %v6784
      %v6787 = vsel %vm364, %v6779, %v6786
      %v6788 = vrot.slane %v6783, 4
      %v6790 = vshrl.u32 %v6650, 16
      %v6792 = vrot.slane %v6790, 7
      %v6793 = vshll.u32 %v6650, 16
      %v6795 = vor.u32 %v6792, %v6793
      %v6796 = vsel %vm364, %v6788, %v6795
      %v6798 = vshrl.u32 %v6652, 16
      %v6800 = vrot.slane %v6798, 7
      %v6801 = vrot.slane %v6800, 4
      %v6803 = vshrl.u32 %v6653, 16
      %v6805 = vrot.slane %v6803, 7
      %v6806 = vshll.u32 %v6653, 16
      %v6808 = vor.u32 %v6805, %v6806
      %v6809 = vsel %vm364, %v6801, %v6808
      %v6810 = vrot.slane %v6805, 4
      %v6812 = vshrl.u32 %v6654, 16
      %v6814 = vrot.slane %v6812, 7
      %v6815 = vshll.u32 %v6654, 16
      %v6817 = vor.u32 %v6814, %v6815
      %v6818 = vsel %vm364, %v6810, %v6817
      %v6820 = vshrl.u32 %v6656, 16
      %v6822 = vrot.slane %v6820, 7
      %v6823 = vrot.slane %v6822, 4
      %v6825 = vshrl.u32 %v6657, 16
      %v6827 = vrot.slane %v6825, 7
      %v6828 = vshll.u32 %v6657, 16
      %v6830 = vor.u32 %v6827, %v6828
      %v6831 = vsel %vm364, %v6823, %v6830
      %v6832 = vrot.slane %v6827, 4
      %v6834 = vshrl.u32 %v6658, 16
      %v6836 = vrot.slane %v6834, 7
      %v6837 = vshll.u32 %v6658, 16
      %v6839 = vor.u32 %v6836, %v6837
      %v6840 = vsel %vm364, %v6832, %v6839
      %v6842 = vshrl.u32 %v6660, 16
      %v6844 = vrot.slane %v6842, 7
      %v6845 = vrot.slane %v6844, 4
      %v6847 = vshrl.u32 %v6661, 16
      %v6849 = vrot.slane %v6847, 7
      %v6850 = vshll.u32 %v6661, 16
      %v6852 = vor.u32 %v6849, %v6850
      %v6853 = vsel %vm364, %v6845, %v6852
      %v6854 = vrot.slane %v6849, 4
      %v6856 = vshrl.u32 %v6662, 16
      %v6858 = vrot.slane %v6856, 7
      %v6859 = vshll.u32 %v6662, 16
      %v6861 = vor.u32 %v6858, %v6859
      %v6862 = vsel %vm364, %v6854, %v6861
      %v6864 = vshrl.u32 %v6664, 16
      %v6866 = vrot.slane %v6864, 7
      %v6867 = vrot.slane %v6866, 4
      %v6869 = vshrl.u32 %v6665, 16
      %v6871 = vrot.slane %v6869, 7
      %v6872 = vshll.u32 %v6665, 16
      %v6874 = vor.u32 %v6871, %v6872
      %v6875 = vsel %vm364, %v6867, %v6874
      %v6876 = vrot.slane %v6871, 4
      %v6878 = vshrl.u32 %v6666, 16
      %v6880 = vrot.slane %v6878, 7
      %v6881 = vshll.u32 %v6666, 16
      %v6883 = vor.u32 %v6880, %v6881
      %v6884 = vsel %vm364, %v6876, %v6883
      %v6886 = vshrl.u32 %v6668, 16
      %v6888 = vrot.slane %v6886, 7
      %v6889 = vrot.slane %v6888, 4
      %v6891 = vshrl.u32 %v6669, 16
      %v6893 = vrot.slane %v6891, 7
      %v6894 = vshll.u32 %v6669, 16
      %v6896 = vor.u32 %v6893, %v6894
      %v6897 = vsel %vm364, %v6889, %v6896
      %v6898 = vrot.slane %v6893, 4
      %v6900 = vshrl.u32 %v6670, 16
      %v6902 = vrot.slane %v6900, 7
      %v6903 = vshll.u32 %v6670, 16
      %v6905 = vor.u32 %v6902, %v6903
      %v6906 = vsel %vm364, %v6898, %v6905
      %v6908 = vshrl.u32 %v6672, 16
      %v6910 = vrot.slane %v6908, 7
      %v6911 = vrot.slane %v6910, 4
      %v6913 = vshrl.u32 %v6673, 16
      %v6915 = vrot.slane %v6913, 7
      %v6916 = vshll.u32 %v6673, 16
      %v6918 = vor.u32 %v6915, %v6916
      %v6919 = vsel %vm364, %v6911, %v6918
      %v6920 = vrot.slane %v6915, 4
      %v6922 = vshrl.u32 %v6674, 16
      %v6924 = vrot.slane %v6922, 7
      %v6925 = vshll.u32 %v6674, 16
      %v6927 = vor.u32 %v6924, %v6925
      %v6928 = vsel %vm364, %v6920, %v6927
      %v6930 = vshrl.u32 %v6676, 16
      %v6932 = vrot.slane %v6930, 7
      %v6933 = vrot.slane %v6932, 4
      %v6935 = vshrl.u32 %v6677, 16
      %v6937 = vrot.slane %v6935, 7
      %v6938 = vshll.u32 %v6677, 16
      %v6940 = vor.u32 %v6937, %v6938
      %v6941 = vsel %vm364, %v6933, %v6940
      %v6942 = vrot.slane %v6937, 4
      %v6944 = vshrl.u32 %v6678, 16
      %v6946 = vrot.slane %v6944, 7
      %v6947 = vshll.u32 %v6678, 16
      %v6949 = vor.u32 %v6946, %v6947
      %v6950 = vsel %vm364, %v6942, %v6949
      %v6952 = vshrl.u32 %v6680, 16
      %v6954 = vrot.slane %v6952, 7
      %v6955 = vrot.slane %v6954, 4
      %v6957 = vshrl.u32 %v6681, 16
      %v6959 = vrot.slane %v6957, 7
      %v6960 = vshll.u32 %v6681, 16
      %v6962 = vor.u32 %v6959, %v6960
      %v6963 = vsel %vm364, %v6955, %v6962
      %v6964 = vrot.slane %v6959, 4
      %v6966 = vshrl.u32 %v6682, 16
      %v6968 = vrot.slane %v6966, 7
      %v6969 = vshll.u32 %v6682, 16
      %v6971 = vor.u32 %v6968, %v6969
      %v6972 = vsel %vm364, %v6964, %v6971
      %v6974 = vshrl.u32 %v6684, 16
      %v6976 = vrot.slane %v6974, 7
      %v6977 = vrot.slane %v6976, 4
      %v6979 = vshrl.u32 %v6685, 16
      %v6981 = vrot.slane %v6979, 7
      %v6982 = vshll.u32 %v6685, 16
      %v6984 = vor.u32 %v6981, %v6982
      %v6985 = vsel %vm364, %v6977, %v6984
      %v6986 = vrot.slane %v6981, 4
      %v6988 = vshrl.u32 %v6686, 16
      %v6990 = vrot.slane %v6988, 7
      %v6991 = vshll.u32 %v6686, 16
      %v6993 = vor.u32 %v6990, %v6991
      %v6994 = vsel %vm364, %v6986, %v6993
      %v6996 = vshrl.u32 %v6688, 16
      %v6998 = vrot.slane %v6996, 7
      %v6999 = vrot.slane %v6998, 4
      %v7001 = vshrl.u32 %v6689, 16
      %v7003 = vrot.slane %v7001, 7
      %v7004 = vshll.u32 %v6689, 16
      %v7006 = vor.u32 %v7003, %v7004
      %v7007 = vsel %vm364, %v6999, %v7006
      %v7008 = vrot.slane %v7003, 4
      %v7010 = vshrl.u32 %v6690, 16
      %v7012 = vrot.slane %v7010, 7
      %v7013 = vshll.u32 %v6690, 16
      %v7015 = vor.u32 %v7012, %v7013
      %v7016 = vsel %vm364, %v7008, %v7015
      %v7018 = vshrl.u32 %v6692, 16
      %v7020 = vrot.slane %v7018, 7
      %v7021 = vrot.slane %v7020, 4
      %v7023 = vshrl.u32 %v6693, 16
      %v7025 = vrot.slane %v7023, 7
      %v7026 = vshll.u32 %v6693, 16
      %v7028 = vor.u32 %v7025, %v7026
      %v7029 = vsel %vm364, %v7021, %v7028
      %v7030 = vrot.slane %v7025, 4
      %v7032 = vshrl.u32 %v6694, 16
      %v7034 = vrot.slane %v7032, 7
      %v7035 = vshll.u32 %v6694, 16
      %v7037 = vor.u32 %v7034, %v7035
      %v7038 = vsel %vm364, %v7030, %v7037
      %v7040 = vshrl.u32 %v6696, 16
      %v7042 = vrot.slane %v7040, 7
      %v7043 = vrot.slane %v7042, 4
      %v7045 = vshrl.u32 %v6697, 16
      %v7047 = vrot.slane %v7045, 7
      %v7048 = vshll.u32 %v6697, 16
      %v7050 = vor.u32 %v7047, %v7048
      %v7051 = vsel %vm364, %v7043, %v7050
      %v7052 = vrot.slane %v7047, 4
      %v7054 = vshrl.u32 %v6698, 16
      %v7056 = vrot.slane %v7054, 7
      %v7057 = vshll.u32 %v6698, 16
      %v7059 = vor.u32 %v7056, %v7057
      %v7060 = vsel %vm364, %v7052, %v7059
      %v7062 = vshrl.u32 %v6700, 16
      %v7064 = vrot.slane %v7062, 7
      %v7065 = vrot.slane %v7064, 4
      %v7067 = vshrl.u32 %v6701, 16
      %v7069 = vrot.slane %v7067, 7
      %v7070 = vshll.u32 %v6701, 16
      %v7072 = vor.u32 %v7069, %v7070
      %v7073 = vsel %vm364, %v7065, %v7072
      %v7074 = vrot.slane %v7069, 4
      %v7076 = vshrl.u32 %v6702, 16
      %v7078 = vrot.slane %v7076, 7
      %v7079 = vshll.u32 %v6702, 16
      %v7081 = vor.u32 %v7078, %v7079
      %v7082 = vsel %vm364, %v7074, %v7081
      %v7115 = vunpack.c.l.b16 %v6641
      %v7116 = vunpack.c.l.b16 %v6642
      %v7117 = vunpack.c.l.b16 %v6645
      %v7118 = vunpack.c.l.b16 %v6646
      %v7119 = vunpack.c.l.b16 %v6649
      %v7120 = vunpack.c.l.b16 %v6650
      %v7121 = vunpack.c.l.b16 %v6653
      %v7122 = vunpack.c.l.b16 %v6654
      %v7123 = vunpack.c.l.b16 %v6657
      %v7124 = vunpack.c.l.b16 %v6658
      %v7125 = vunpack.c.l.b16 %v6661
      %v7126 = vunpack.c.l.b16 %v6662
      %v7127 = vunpack.c.l.b16 %v6665
      %v7128 = vunpack.c.l.b16 %v6666
      %v7129 = vunpack.c.l.b16 %v6669
      %v7130 = vunpack.c.l.b16 %v6670
      %v7131 = vunpack.c.l.b16 %v6673
      %v7132 = vunpack.c.l.b16 %v6674
      %v7133 = vunpack.c.l.b16 %v6677
      %v7134 = vunpack.c.l.b16 %v6678
      %v7135 = vunpack.c.l.b16 %v6681
      %v7136 = vunpack.c.l.b16 %v6682
      %v7137 = vunpack.c.l.b16 %v6685
      %v7138 = vunpack.c.l.b16 %v6686
      %v7139 = vunpack.c.l.b16 %v6689
      %v7140 = vunpack.c.l.b16 %v6690
      %v7141 = vunpack.c.l.b16 %v6693
      %v7142 = vunpack.c.l.b16 %v6694
      %v7143 = vunpack.c.l.b16 %v6697
      %v7144 = vunpack.c.l.b16 %v6698
      %v7145 = vunpack.c.l.b16 %v6701
      %v7146 = vunpack.c.l.b16 %v6702
      %v7147 = vpack.c.b16 %v7116, %v7115
      %v7148 = vpack.c.b16 %v7118, %v7117
      %v7149 = vpack.c.b16 %v7120, %v7119
      %v7150 = vpack.c.b16 %v7122, %v7121
      %v7151 = vpack.c.b16 %v7124, %v7123
      %v7152 = vpack.c.b16 %v7126, %v7125
      %v7153 = vpack.c.b16 %v7128, %v7127
      %v7154 = vpack.c.b16 %v7130, %v7129
      %v7155 = vpack.c.b16 %v7132, %v7131
      %v7156 = vpack.c.b16 %v7134, %v7133
      %v7157 = vpack.c.b16 %v7136, %v7135
      %v7158 = vpack.c.b16 %v7138, %v7137
      %v7159 = vpack.c.b16 %v7140, %v7139
      %v7160 = vpack.c.b16 %v7142, %v7141
      %v7161 = vpack.c.b16 %v7144, %v7143
      %v7162 = vpack.c.b16 %v7146, %v7145
      %v7165 = vunpack.c.l.b16 %v6714
      %v7166 = vunpack.c.l.b16 %v6715
      %v7167 = vpack.c.b16 %v7166, %v7165
      %v7170 = vsel %vm3975, %v7147, 0
      %v7173 = vsel %vm3975, %v7148, 0
      %v7176 = vsel %vm3975, %v7149, 0
      %v7179 = vsel %vm3975, %v7150, 0
      %v7182 = vsel %vm3975, %v7151, 0
      %v7185 = vsel %vm3975, %v7152, 0
      %v7188 = vsel %vm3975, %v7153, 0
      %v7191 = vsel %vm3975, %v7154, 0
      %v7194 = vsel %vm3975, %v7155, 0
      %v7197 = vsel %vm3975, %v7156, 0
      %v7200 = vsel %vm3975, %v7157, 0
      %v7203 = vsel %vm3975, %v7158, 0
      %v7206 = vsel %vm3975, %v7159, 0
      %v7209 = vsel %vm3975, %v7160, 0
      %v7212 = vsel %vm3975, %v7161, 0
      %v7215 = vsel %vm3975, %v7162, 0
      %7217 = vmatprep.subr.bf16.mxu0 0
      %7218 = vmatpush1.bf16.msra.mxu0 0
      %7219 = vmatprep.subr.bf16.mxu0 0
      %7220 = vmatpush1.bf16.msra.mxu0 0
      %7221 = vmatprep.subr.bf16.mxu0 0
      %7222 = vmatpush1.bf16.msra.mxu0 0
      %7223 = vmatprep.subr.bf16.mxu0 0
      %7224 = vmatpush1.bf16.msra.mxu0 0
      %7225 = vmatprep.subr.bf16.mxu0 0
      %7226 = vmatpush1.bf16.msra.mxu0 0
      %7227 = vmatprep.subr.bf16.mxu0 0
      %7228 = vmatpush1.bf16.msra.mxu0 0
      %7229 = vmatprep.subr.bf16.mxu0 0
      %7230 = vmatpush1.bf16.msra.mxu0 0
      %7231 = vmatprep.subr.bf16.mxu0 0
      %7232 = vmatpush1.bf16.msra.mxu0 %v7167
      %7233 = vmatprep.subr.bf16.mxu0 0
      %7234 = vmatpush2.bf16.msra.mxu0 0
      %7235 = vmatprep.subr.bf16.mxu0 0
      %7236 = vmatpush2.bf16.msra.mxu0 0
      %7237 = vmatprep.subr.bf16.mxu0 0
      %7238 = vmatpush2.bf16.msra.mxu0 0
      %7239 = vmatprep.subr.bf16.mxu0 0
      %7240 = vmatpush2.bf16.msra.mxu0 0
      %7241 = vmatprep.subr.bf16.mxu0 0
      %7242 = vmatpush2.bf16.msra.mxu0 0
      %7243 = vmatprep.subr.bf16.mxu0 0
      %7244 = vmatpush2.bf16.msra.mxu0 0
      %7245 = vmatprep.subr.bf16.mxu0 0
      %7246 = vmatpush2.bf16.msra.mxu0 0
      %7247 = vmatprep.subr.bf16.mxu0 0
      %7248 = vmatpush2.bf16.msra.mxu0 0
      %7249 = vmatprep.mubr.bf16.mxu0 0
      %7250 = vmatmul.mubr.bf16.gmra.mxu0 %v7170
      %v7251 = vpop.f32.mrf.mxu0
      %v7252 = vadd.f32 0.0, %v7251
      %v7253 = vpop.f32.mrf.mxu0
      %v7254 = vpop.f32.mrf.mxu0
      %v7255 = vadd.f32 0.0, %v7254
      %v7256 = vpop.f32.mrf.mxu0
      %7257 = vmatprep.mubr.bf16.mxu0 0
      %7258 = vmatmul.mubr.bf16.gmra.mxu0 %v7173
      %v7259 = vpop.f32.mrf.mxu0
      %v7260 = vadd.f32 0.0, %v7259
      %v7261 = vpop.f32.mrf.mxu0
      %v7262 = vpop.f32.mrf.mxu0
      %v7263 = vadd.f32 0.0, %v7262
      %v7264 = vpop.f32.mrf.mxu0
      %7265 = vmatprep.mubr.bf16.mxu0 0
      %7266 = vmatmul.mubr.bf16.gmra.mxu0 %v7176
      %v7267 = vpop.f32.mrf.mxu0
      %v7268 = vadd.f32 0.0, %v7267
      %v7269 = vpop.f32.mrf.mxu0
      %v7270 = vpop.f32.mrf.mxu0
      %v7271 = vadd.f32 0.0, %v7270
      %v7272 = vpop.f32.mrf.mxu0
      %7273 = vmatprep.mubr.bf16.mxu0 0
      %7274 = vmatmul.mubr.bf16.gmra.mxu0 %v7179
      %v7275 = vpop.f32.mrf.mxu0
      %v7276 = vadd.f32 0.0, %v7275
      %v7277 = vpop.f32.mrf.mxu0
      %v7278 = vpop.f32.mrf.mxu0
      %v7279 = vadd.f32 0.0, %v7278
      %v7280 = vpop.f32.mrf.mxu0
      %7281 = vmatprep.mubr.bf16.mxu0 0
      %7282 = vmatmul.mubr.bf16.gmra.mxu0 %v7182
      %v7283 = vpop.f32.mrf.mxu0
      %v7284 = vadd.f32 0.0, %v7283
      %v7285 = vpop.f32.mrf.mxu0
      %v7286 = vpop.f32.mrf.mxu0
      %v7287 = vadd.f32 0.0, %v7286
      %v7288 = vpop.f32.mrf.mxu0
      %7289 = vmatprep.mubr.bf16.mxu0 0
      %7290 = vmatmul.mubr.bf16.gmra.mxu0 %v7185
      %v7291 = vpop.f32.mrf.mxu0
      %v7292 = vadd.f32 0.0, %v7291
      %v7293 = vpop.f32.mrf.mxu0
      %v7294 = vpop.f32.mrf.mxu0
      %v7295 = vadd.f32 0.0, %v7294
      %v7296 = vpop.f32.mrf.mxu0
      %7297 = vmatprep.mubr.bf16.mxu0 0
      %7298 = vmatmul.mubr.bf16.gmra.mxu0 %v7188
      %v7299 = vpop.f32.mrf.mxu0
      %v7300 = vadd.f32 0.0, %v7299
      %v7301 = vpop.f32.mrf.mxu0
      %v7302 = vpop.f32.mrf.mxu0
      %v7303 = vadd.f32 0.0, %v7302
      %v7304 = vpop.f32.mrf.mxu0
      %7305 = vmatprep.mubr.bf16.mxu0 0
      %7306 = vmatmul.mubr.bf16.gmra.mxu0 %v7191
      %v7307 = vpop.f32.mrf.mxu0
      %v7308 = vadd.f32 0.0, %v7307
      %v7309 = vpop.f32.mrf.mxu0
      %v7310 = vpop.f32.mrf.mxu0
      %v7311 = vadd.f32 0.0, %v7310
      %v7312 = vpop.f32.mrf.mxu0
      %7313 = vmatprep.mubr.bf16.mxu0 0
      %7314 = vmatmul.mubr.bf16.gmra.mxu0 %v7194
      %v7315 = vpop.f32.mrf.mxu0
      %v7316 = vadd.f32 0.0, %v7315
      %v7317 = vpop.f32.mrf.mxu0
      %v7318 = vpop.f32.mrf.mxu0
      %v7319 = vadd.f32 0.0, %v7318
      %v7320 = vpop.f32.mrf.mxu0
      %7321 = vmatprep.mubr.bf16.mxu0 0
      %7322 = vmatmul.mubr.bf16.gmra.mxu0 %v7197
      %v7323 = vpop.f32.mrf.mxu0
      %v7324 = vadd.f32 0.0, %v7323
      %v7325 = vpop.f32.mrf.mxu0
      %v7326 = vpop.f32.mrf.mxu0
      %v7327 = vadd.f32 0.0, %v7326
      %v7328 = vpop.f32.mrf.mxu0
      %7329 = vmatprep.mubr.bf16.mxu0 0
      %7330 = vmatmul.mubr.bf16.gmra.mxu0 %v7200
      %v7331 = vpop.f32.mrf.mxu0
      %v7332 = vadd.f32 0.0, %v7331
      %v7333 = vpop.f32.mrf.mxu0
      %v7334 = vpop.f32.mrf.mxu0
      %v7335 = vadd.f32 0.0, %v7334
      %v7336 = vpop.f32.mrf.mxu0
      %7337 = vmatprep.mubr.bf16.mxu0 0
      %7338 = vmatmul.mubr.bf16.gmra.mxu0 %v7203
      %v7339 = vpop.f32.mrf.mxu0
      %v7340 = vadd.f32 0.0, %v7339
      %v7341 = vpop.f32.mrf.mxu0
      %v7342 = vpop.f32.mrf.mxu0
      %v7343 = vadd.f32 0.0, %v7342
      %v7344 = vpop.f32.mrf.mxu0
      %7345 = vmatprep.mubr.bf16.mxu0 0
      %7346 = vmatmul.mubr.bf16.gmra.mxu0 %v7206
      %v7347 = vpop.f32.mrf.mxu0
      %v7348 = vadd.f32 0.0, %v7347
      %v7349 = vpop.f32.mrf.mxu0
      %v7350 = vpop.f32.mrf.mxu0
      %v7351 = vadd.f32 0.0, %v7350
      %v7352 = vpop.f32.mrf.mxu0
      %7353 = vmatprep.mubr.bf16.mxu0 0
      %7354 = vmatmul.mubr.bf16.gmra.mxu0 %v7209
      %v7355 = vpop.f32.mrf.mxu0
      %v7356 = vadd.f32 0.0, %v7355
      %v7357 = vpop.f32.mrf.mxu0
      %v7358 = vpop.f32.mrf.mxu0
      %v7359 = vadd.f32 0.0, %v7358
      %v7360 = vpop.f32.mrf.mxu0
      %7361 = vmatprep.mubr.bf16.mxu0 0
      %7362 = vmatmul.mubr.bf16.gmra.mxu0 %v7212
      %v7363 = vpop.f32.mrf.mxu0
      %v7364 = vadd.f32 0.0, %v7363
      %v7365 = vpop.f32.mrf.mxu0
      %v7366 = vpop.f32.mrf.mxu0
      %v7367 = vadd.f32 0.0, %v7366
      %v7368 = vpop.f32.mrf.mxu0
      %7369 = vmatprep.mubr.bf16.mxu0 0
      %7370 = vmatmul.mubr.bf16.gmra.mxu0 %v7215
      %v7371 = vpop.f32.mrf.mxu0
      %v7372 = vadd.f32 0.0, %v7371
      %v7373 = vpop.f32.mrf.mxu0
      %v7374 = vpop.f32.mrf.mxu0
      %v7375 = vadd.f32 0.0, %v7374
      %v7376 = vpop.f32.mrf.mxu0
      %7377 = vdwg.mxu0
      %v7378 = vunpack.c.l.b16 %v6743
      %v7379 = vunpack.c.l.b16 %v6752
      %v7380 = vunpack.c.l.b16 %v6765
      %v7381 = vunpack.c.l.b16 %v6774
      %v7382 = vunpack.c.l.b16 %v6787
      %v7383 = vunpack.c.l.b16 %v6796
      %v7384 = vunpack.c.l.b16 %v6809
      %v7385 = vunpack.c.l.b16 %v6818
      %v7386 = vunpack.c.l.b16 %v6831
      %v7387 = vunpack.c.l.b16 %v6840
      %v7388 = vunpack.c.l.b16 %v6853
      %v7389 = vunpack.c.l.b16 %v6862
      %v7390 = vunpack.c.l.b16 %v6875
      %v7391 = vunpack.c.l.b16 %v6884
      %v7392 = vunpack.c.l.b16 %v6897
      %v7393 = vunpack.c.l.b16 %v6906
      %v7394 = vunpack.c.l.b16 %v6919
      %v7395 = vunpack.c.l.b16 %v6928
      %v7396 = vunpack.c.l.b16 %v6941
      %v7397 = vunpack.c.l.b16 %v6950
      %v7398 = vunpack.c.l.b16 %v6963
      %v7399 = vunpack.c.l.b16 %v6972
      %v7400 = vunpack.c.l.b16 %v6985
      %v7401 = vunpack.c.l.b16 %v6994
      %v7402 = vunpack.c.l.b16 %v7007
      %v7403 = vunpack.c.l.b16 %v7016
      %v7404 = vunpack.c.l.b16 %v7029
      %v7405 = vunpack.c.l.b16 %v7038
      %v7406 = vunpack.c.l.b16 %v7051
      %v7407 = vunpack.c.l.b16 %v7060
      %v7408 = vunpack.c.l.b16 %v7073
      %v7409 = vunpack.c.l.b16 %v7082
      %v7410 = vpack.c.b16 %v7379, %v7378
      %v7411 = vpack.c.b16 %v7381, %v7380
      %v7412 = vpack.c.b16 %v7383, %v7382
      %v7413 = vpack.c.b16 %v7385, %v7384
      %v7414 = vpack.c.b16 %v7387, %v7386
      %v7415 = vpack.c.b16 %v7389, %v7388
      %v7416 = vpack.c.b16 %v7391, %v7390
      %v7417 = vpack.c.b16 %v7393, %v7392
      %v7418 = vpack.c.b16 %v7395, %v7394
      %v7419 = vpack.c.b16 %v7397, %v7396
      %v7420 = vpack.c.b16 %v7399, %v7398
      %v7421 = vpack.c.b16 %v7401, %v7400
      %v7422 = vpack.c.b16 %v7403, %v7402
      %v7423 = vpack.c.b16 %v7405, %v7404
      %v7424 = vpack.c.b16 %v7407, %v7406
      %v7425 = vpack.c.b16 %v7409, %v7408
      %v7428 = vunpack.c.l.b16 %v6712
      %v7429 = vunpack.c.l.b16 %v6713
      %v7430 = vpack.c.b16 %v7429, %v7428
      %v7433 = vsel %vm3975, %v7410, 0
      %v7436 = vsel %vm3975, %v7411, 0
      %v7439 = vsel %vm3975, %v7412, 0
      %v7442 = vsel %vm3975, %v7413, 0
      %v7445 = vsel %vm3975, %v7414, 0
      %v7448 = vsel %vm3975, %v7415, 0
      %v7451 = vsel %vm3975, %v7416, 0
      %v7454 = vsel %vm3975, %v7417, 0
      %v7457 = vsel %vm3975, %v7418, 0
      %v7460 = vsel %vm3975, %v7419, 0
      %v7463 = vsel %vm3975, %v7420, 0
      %v7466 = vsel %vm3975, %v7421, 0
      %v7469 = vsel %vm3975, %v7422, 0
      %v7472 = vsel %vm3975, %v7423, 0
      %v7475 = vsel %vm3975, %v7424, 0
      %v7478 = vsel %vm3975, %v7425, 0
      %7480 = vmatprep.subr.bf16.mxu0 0
      %7481 = vmatpush1.bf16.msra.mxu0 0
      %7482 = vmatprep.subr.bf16.mxu0 0
      %7483 = vmatpush1.bf16.msra.mxu0 0
      %7484 = vmatprep.subr.bf16.mxu0 0
      %7485 = vmatpush1.bf16.msra.mxu0 0
      %7486 = vmatprep.subr.bf16.mxu0 0
      %7487 = vmatpush1.bf16.msra.mxu0 0
      %7488 = vmatprep.subr.bf16.mxu0 0
      %7489 = vmatpush1.bf16.msra.mxu0 0
      %7490 = vmatprep.subr.bf16.mxu0 0
      %7491 = vmatpush1.bf16.msra.mxu0 0
      %7492 = vmatprep.subr.bf16.mxu0 0
      %7493 = vmatpush1.bf16.msra.mxu0 0
      %7494 = vmatprep.subr.bf16.mxu0 0
      %7495 = vmatpush1.bf16.msra.mxu0 %v7430
      %7496 = vmatprep.subr.bf16.mxu0 0
      %7497 = vmatpush2.bf16.msra.mxu0 0
      %7498 = vmatprep.subr.bf16.mxu0 0
      %7499 = vmatpush2.bf16.msra.mxu0 0
      %7500 = vmatprep.subr.bf16.mxu0 0
      %7501 = vmatpush2.bf16.msra.mxu0 0
      %7502 = vmatprep.subr.bf16.mxu0 0
      %7503 = vmatpush2.bf16.msra.mxu0 0
      %7504 = vmatprep.subr.bf16.mxu0 0
      %7505 = vmatpush2.bf16.msra.mxu0 0
      %7506 = vmatprep.subr.bf16.mxu0 0
      %7507 = vmatpush2.bf16.msra.mxu0 0
      %7508 = vmatprep.subr.bf16.mxu0 0
      %7509 = vmatpush2.bf16.msra.mxu0 0
      %7510 = vmatprep.subr.bf16.mxu0 0
      %7511 = vmatpush2.bf16.msra.mxu0 0
      %7512 = vmatprep.mubr.bf16.mxu0 0
      %7513 = vmatmul.mubr.bf16.gmra.mxu0 %v7433
      %v7514 = vpop.f32.mrf.mxu0
      %v7515 = vadd.f32 %v7252, %v7514
      %v7516 = vpop.f32.mrf.mxu0
      %v7517 = vpop.f32.mrf.mxu0
      %v7518 = vadd.f32 %v7255, %v7517
      %v7519 = vpop.f32.mrf.mxu0
      %7520 = vmatprep.mubr.bf16.mxu0 0
      %7521 = vmatmul.mubr.bf16.gmra.mxu0 %v7436
      %v7522 = vpop.f32.mrf.mxu0
      %v7523 = vadd.f32 %v7260, %v7522
      %v7524 = vpop.f32.mrf.mxu0
      %v7525 = vpop.f32.mrf.mxu0
      %v7526 = vadd.f32 %v7263, %v7525
      %v7527 = vpop.f32.mrf.mxu0
      %7528 = vmatprep.mubr.bf16.mxu0 0
      %7529 = vmatmul.mubr.bf16.gmra.mxu0 %v7439
      %v7530 = vpop.f32.mrf.mxu0
      %v7531 = vadd.f32 %v7268, %v7530
      %v7532 = vpop.f32.mrf.mxu0
      %v7533 = vpop.f32.mrf.mxu0
      %v7534 = vadd.f32 %v7271, %v7533
      %v7535 = vpop.f32.mrf.mxu0
      %7536 = vmatprep.mubr.bf16.mxu0 0
      %7537 = vmatmul.mubr.bf16.gmra.mxu0 %v7442
      %v7538 = vpop.f32.mrf.mxu0
      %v7539 = vadd.f32 %v7276, %v7538
      %v7540 = vpop.f32.mrf.mxu0
      %v7541 = vpop.f32.mrf.mxu0
      %v7542 = vadd.f32 %v7279, %v7541
      %v7543 = vpop.f32.mrf.mxu0
      %7544 = vmatprep.mubr.bf16.mxu0 0
      %7545 = vmatmul.mubr.bf16.gmra.mxu0 %v7445
      %v7546 = vpop.f32.mrf.mxu0
      %v7547 = vadd.f32 %v7284, %v7546
      %v7548 = vpop.f32.mrf.mxu0
      %v7549 = vpop.f32.mrf.mxu0
      %v7550 = vadd.f32 %v7287, %v7549
      %v7551 = vpop.f32.mrf.mxu0
      %7552 = vmatprep.mubr.bf16.mxu0 0
      %7553 = vmatmul.mubr.bf16.gmra.mxu0 %v7448
      %v7554 = vpop.f32.mrf.mxu0
      %v7555 = vadd.f32 %v7292, %v7554
      %v7556 = vpop.f32.mrf.mxu0
      %v7557 = vpop.f32.mrf.mxu0
      %v7558 = vadd.f32 %v7295, %v7557
      %v7559 = vpop.f32.mrf.mxu0
      %7560 = vmatprep.mubr.bf16.mxu0 0
      %7561 = vmatmul.mubr.bf16.gmra.mxu0 %v7451
      %v7562 = vpop.f32.mrf.mxu0
      %v7563 = vadd.f32 %v7300, %v7562
      %v7564 = vpop.f32.mrf.mxu0
      %v7565 = vpop.f32.mrf.mxu0
      %v7566 = vadd.f32 %v7303, %v7565
      %v7567 = vpop.f32.mrf.mxu0
      %7568 = vmatprep.mubr.bf16.mxu0 0
      %7569 = vmatmul.mubr.bf16.gmra.mxu0 %v7454
      %v7570 = vpop.f32.mrf.mxu0
      %v7571 = vadd.f32 %v7308, %v7570
      %v7572 = vpop.f32.mrf.mxu0
      %v7573 = vpop.f32.mrf.mxu0
      %v7574 = vadd.f32 %v7311, %v7573
      %v7575 = vpop.f32.mrf.mxu0
      %7576 = vmatprep.mubr.bf16.mxu0 0
      %7577 = vmatmul.mubr.bf16.gmra.mxu0 %v7457
      %v7578 = vpop.f32.mrf.mxu0
      %v7579 = vadd.f32 %v7316, %v7578
      %v7580 = vpop.f32.mrf.mxu0
      %v7581 = vpop.f32.mrf.mxu0
      %v7582 = vadd.f32 %v7319, %v7581
      %v7583 = vpop.f32.mrf.mxu0
      %7584 = vmatprep.mubr.bf16.mxu0 0
      %7585 = vmatmul.mubr.bf16.gmra.mxu0 %v7460
      %v7586 = vpop.f32.mrf.mxu0
      %v7587 = vadd.f32 %v7324, %v7586
      %v7588 = vpop.f32.mrf.mxu0
      %v7589 = vpop.f32.mrf.mxu0
      %v7590 = vadd.f32 %v7327, %v7589
      %v7591 = vpop.f32.mrf.mxu0
      %7592 = vmatprep.mubr.bf16.mxu0 0
      %7593 = vmatmul.mubr.bf16.gmra.mxu0 %v7463
      %v7594 = vpop.f32.mrf.mxu0
      %v7595 = vadd.f32 %v7332, %v7594
      %v7596 = vpop.f32.mrf.mxu0
      %v7597 = vpop.f32.mrf.mxu0
      %v7598 = vadd.f32 %v7335, %v7597
      %v7599 = vpop.f32.mrf.mxu0
      %7600 = vmatprep.mubr.bf16.mxu0 0
      %7601 = vmatmul.mubr.bf16.gmra.mxu0 %v7466
      %v7602 = vpop.f32.mrf.mxu0
      %v7603 = vadd.f32 %v7340, %v7602
      %v7604 = vpop.f32.mrf.mxu0
      %v7605 = vpop.f32.mrf.mxu0
      %v7606 = vadd.f32 %v7343, %v7605
      %v7607 = vpop.f32.mrf.mxu0
      %7608 = vmatprep.mubr.bf16.mxu0 0
      %7609 = vmatmul.mubr.bf16.gmra.mxu0 %v7469
      %v7610 = vpop.f32.mrf.mxu0
      %v7611 = vadd.f32 %v7348, %v7610
      %v7612 = vpop.f32.mrf.mxu0
      %v7613 = vpop.f32.mrf.mxu0
      %v7614 = vadd.f32 %v7351, %v7613
      %v7615 = vpop.f32.mrf.mxu0
      %7616 = vmatprep.mubr.bf16.mxu0 0
      %7617 = vmatmul.mubr.bf16.gmra.mxu0 %v7472
      %v7618 = vpop.f32.mrf.mxu0
      %v7619 = vadd.f32 %v7356, %v7618
      %v7620 = vpop.f32.mrf.mxu0
      %v7621 = vpop.f32.mrf.mxu0
      %v7622 = vadd.f32 %v7359, %v7621
      %v7623 = vpop.f32.mrf.mxu0
      %7624 = vmatprep.mubr.bf16.mxu0 0
      %7625 = vmatmul.mubr.bf16.gmra.mxu0 %v7475
      %v7626 = vpop.f32.mrf.mxu0
      %v7627 = vadd.f32 %v7364, %v7626
      %v7628 = vpop.f32.mrf.mxu0
      %v7629 = vpop.f32.mrf.mxu0
      %v7630 = vadd.f32 %v7367, %v7629
      %v7631 = vpop.f32.mrf.mxu0
      %7632 = vmatprep.mubr.bf16.mxu0 0
      %7633 = vmatmul.mubr.bf16.gmra.mxu0 %v7478
      %v7634 = vpop.f32.mrf.mxu0
      %v7635 = vadd.f32 %v7372, %v7634
      %v7636 = vpop.f32.mrf.mxu0
      %v7637 = vpop.f32.mrf.mxu0
      %v7638 = vadd.f32 %v7375, %v7637
      %v7639 = vpop.f32.mrf.mxu0
      %7640 = vdwg.mxu0
      %v7641 = vrot.slane %v6737, 4
      %v7642 = vrot.slane %v6740, 5
      %v7643 = vor.u32 %v7641, %v7642
      %v7644 = vrot.slane %v7643, 4
      %v7645 = vrot.slane %v6749, 5
      %v7646 = vsel %vm1273, %v7644, %v7645
      %v7647 = vrot.slane %v6746, 4
      %v7648 = vor.u32 %v7647, %v7645
      %v7649 = vrot.slane %v7648, 4
      %v7651 = vshll.u32 %v6643, 16
      %v7653 = vrot.slane %v7651, 5
      %v7654 = vsel %vm1273, %v7649, %v7653
      %v7655 = vrot.slane %v6759, 4
      %v7656 = vrot.slane %v6762, 5
      %v7657 = vor.u32 %v7655, %v7656
      %v7658 = vrot.slane %v7657, 4
      %v7659 = vrot.slane %v6771, 5
      %v7660 = vsel %vm1273, %v7658, %v7659
      %v7661 = vrot.slane %v6768, 4
      %v7662 = vor.u32 %v7661, %v7659
      %v7663 = vrot.slane %v7662, 4
      %v7665 = vshll.u32 %v6647, 16
      %v7667 = vrot.slane %v7665, 5
      %v7668 = vsel %vm1273, %v7663, %v7667
      %v7669 = vrot.slane %v6781, 4
      %v7670 = vrot.slane %v6784, 5
      %v7671 = vor.u32 %v7669, %v7670
      %v7672 = vrot.slane %v7671, 4
      %v7673 = vrot.slane %v6793, 5
      %v7674 = vsel %vm1273, %v7672, %v7673
      %v7675 = vrot.slane %v6790, 4
      %v7676 = vor.u32 %v7675, %v7673
      %v7677 = vrot.slane %v7676, 4
      %v7679 = vshll.u32 %v6651, 16
      %v7681 = vrot.slane %v7679, 5
      %v7682 = vsel %vm1273, %v7677, %v7681
      %v7683 = vrot.slane %v6803, 4
      %v7684 = vrot.slane %v6806, 5
      %v7685 = vor.u32 %v7683, %v7684
      %v7686 = vrot.slane %v7685, 4
      %v7687 = vrot.slane %v6815, 5
      %v7688 = vsel %vm1273, %v7686, %v7687
      %v7689 = vrot.slane %v6812, 4
      %v7690 = vor.u32 %v7689, %v7687
      %v7691 = vrot.slane %v7690, 4
      %v7693 = vshll.u32 %v6655, 16
      %v7695 = vrot.slane %v7693, 5
      %v7696 = vsel %vm1273, %v7691, %v7695
      %v7697 = vrot.slane %v6825, 4
      %v7698 = vrot.slane %v6828, 5
      %v7699 = vor.u32 %v7697, %v7698
      %v7700 = vrot.slane %v7699, 4
      %v7701 = vrot.slane %v6837, 5
      %v7702 = vsel %vm1273, %v7700, %v7701
      %v7703 = vrot.slane %v6834, 4
      %v7704 = vor.u32 %v7703, %v7701
      %v7705 = vrot.slane %v7704, 4
      %v7707 = vshll.u32 %v6659, 16
      %v7709 = vrot.slane %v7707, 5
      %v7710 = vsel %vm1273, %v7705, %v7709
      %v7711 = vrot.slane %v6847, 4
      %v7712 = vrot.slane %v6850, 5
      %v7713 = vor.u32 %v7711, %v7712
      %v7714 = vrot.slane %v7713, 4
      %v7715 = vrot.slane %v6859, 5
      %v7716 = vsel %vm1273, %v7714, %v7715
      %v7717 = vrot.slane %v6856, 4
      %v7718 = vor.u32 %v7717, %v7715
      %v7719 = vrot.slane %v7718, 4
      %v7721 = vshll.u32 %v6663, 16
      %v7723 = vrot.slane %v7721, 5
      %v7724 = vsel %vm1273, %v7719, %v7723
      %v7725 = vrot.slane %v6869, 4
      %v7726 = vrot.slane %v6872, 5
      %v7727 = vor.u32 %v7725, %v7726
      %v7728 = vrot.slane %v7727, 4
      %v7729 = vrot.slane %v6881, 5
      %v7730 = vsel %vm1273, %v7728, %v7729
      %v7731 = vrot.slane %v6878, 4
      %v7732 = vor.u32 %v7731, %v7729
      %v7733 = vrot.slane %v7732, 4
      %v7735 = vshll.u32 %v6667, 16
      %v7737 = vrot.slane %v7735, 5
      %v7738 = vsel %vm1273, %v7733, %v7737
      %v7739 = vrot.slane %v6891, 4
      %v7740 = vrot.slane %v6894, 5
      %v7741 = vor.u32 %v7739, %v7740
      %v7742 = vrot.slane %v7741, 4
      %v7743 = vrot.slane %v6903, 5
      %v7744 = vsel %vm1273, %v7742, %v7743
      %v7745 = vrot.slane %v6900, 4
      %v7746 = vor.u32 %v7745, %v7743
      %v7747 = vrot.slane %v7746, 4
      %v7749 = vshll.u32 %v6671, 16
      %v7751 = vrot.slane %v7749, 5
      %v7752 = vsel %vm1273, %v7747, %v7751
      %v7753 = vrot.slane %v6913, 4
      %v7754 = vrot.slane %v6916, 5
      %v7755 = vor.u32 %v7753, %v7754
      %v7756 = vrot.slane %v7755, 4
      %v7757 = vrot.slane %v6925, 5
      %v7758 = vsel %vm1273, %v7756, %v7757
      %v7759 = vrot.slane %v6922, 4
      %v7760 = vor.u32 %v7759, %v7757
      %v7761 = vrot.slane %v7760, 4
      %v7763 = vshll.u32 %v6675, 16
      %v7765 = vrot.slane %v7763, 5
      %v7766 = vsel %vm1273, %v7761, %v7765
      %v7767 = vrot.slane %v6935, 4
      %v7768 = vrot.slane %v6938, 5
      %v7769 = vor.u32 %v7767, %v7768
      %v7770 = vrot.slane %v7769, 4
      %v7771 = vrot.slane %v6947, 5
      %v7772 = vsel %vm1273, %v7770, %v7771
      %v7773 = vrot.slane %v6944, 4
      %v7774 = vor.u32 %v7773, %v7771
      %v7775 = vrot.slane %v7774, 4
      %v7777 = vshll.u32 %v6679, 16
      %v7779 = vrot.slane %v7777, 5
      %v7780 = vsel %vm1273, %v7775, %v7779
      %v7781 = vrot.slane %v6957, 4
      %v7782 = vrot.slane %v6960, 5
      %v7783 = vor.u32 %v7781, %v7782
      %v7784 = vrot.slane %v7783, 4
      %v7785 = vrot.slane %v6969, 5
      %v7786 = vsel %vm1273, %v7784, %v7785
      %v7787 = vrot.slane %v6966, 4
      %v7788 = vor.u32 %v7787, %v7785
      %v7789 = vrot.slane %v7788, 4
      %v7791 = vshll.u32 %v6683, 16
      %v7793 = vrot.slane %v7791, 5
      %v7794 = vsel %vm1273, %v7789, %v7793
      %v7795 = vrot.slane %v6979, 4
      %v7796 = vrot.slane %v6982, 5
      %v7797 = vor.u32 %v7795, %v7796
      %v7798 = vrot.slane %v7797, 4
      %v7799 = vrot.slane %v6991, 5
      %v7800 = vsel %vm1273, %v7798, %v7799
      %v7801 = vrot.slane %v6988, 4
      %v7802 = vor.u32 %v7801, %v7799
      %v7803 = vrot.slane %v7802, 4
      %v7805 = vshll.u32 %v6687, 16
      %v7807 = vrot.slane %v7805, 5
      %v7808 = vsel %vm1273, %v7803, %v7807
      %v7809 = vrot.slane %v7001, 4
      %v7810 = vrot.slane %v7004, 5
      %v7811 = vor.u32 %v7809, %v7810
      %v7812 = vrot.slane %v7811, 4
      %v7813 = vrot.slane %v7013, 5
      %v7814 = vsel %vm1273, %v7812, %v7813
      %v7815 = vrot.slane %v7010, 4
      %v7816 = vor.u32 %v7815, %v7813
      %v7817 = vrot.slane %v7816, 4
      %v7819 = vshll.u32 %v6691, 16
      %v7821 = vrot.slane %v7819, 5
      %v7822 = vsel %vm1273, %v7817, %v7821
      %v7823 = vrot.slane %v7023, 4
      %v7824 = vrot.slane %v7026, 5
      %v7825 = vor.u32 %v7823, %v7824
      %v7826 = vrot.slane %v7825, 4
      %v7827 = vrot.slane %v7035, 5
      %v7828 = vsel %vm1273, %v7826, %v7827
      %v7829 = vrot.slane %v7032, 4
      %v7830 = vor.u32 %v7829, %v7827
      %v7831 = vrot.slane %v7830, 4
      %v7833 = vshll.u32 %v6695, 16
      %v7835 = vrot.slane %v7833, 5
      %v7836 = vsel %vm1273, %v7831, %v7835
      %v7837 = vrot.slane %v7045, 4
      %v7838 = vrot.slane %v7048, 5
      %v7839 = vor.u32 %v7837, %v7838
      %v7840 = vrot.slane %v7839, 4
      %v7841 = vrot.slane %v7057, 5
      %v7842 = vsel %vm1273, %v7840, %v7841
      %v7843 = vrot.slane %v7054, 4
      %v7844 = vor.u32 %v7843, %v7841
      %v7845 = vrot.slane %v7844, 4
      %v7847 = vshll.u32 %v6699, 16
      %v7849 = vrot.slane %v7847, 5
      %v7850 = vsel %vm1273, %v7845, %v7849
      %v7851 = vrot.slane %v7067, 4
      %v7852 = vrot.slane %v7070, 5
      %v7853 = vor.u32 %v7851, %v7852
      %v7854 = vrot.slane %v7853, 4
      %v7855 = vrot.slane %v7079, 5
      %v7856 = vsel %vm1273, %v7854, %v7855
      %v7857 = vrot.slane %v7076, 4
      %v7858 = vor.u32 %v7857, %v7855
      %v7859 = vrot.slane %v7858, 4
      %v7861 = vshll.u32 %v6703, 16
      %v7863 = vrot.slane %v7861, 5
      %v7864 = vsel %vm1273, %v7859, %v7863
      %v7865 = vunpack.c.l.b16 %v7646
      %v7866 = vunpack.c.l.b16 %v7654
      %v7867 = vunpack.c.l.b16 %v7660
      %v7868 = vunpack.c.l.b16 %v7668
      %v7869 = vunpack.c.l.b16 %v7674
      %v7870 = vunpack.c.l.b16 %v7682
      %v7871 = vunpack.c.l.b16 %v7688
      %v7872 = vunpack.c.l.b16 %v7696
      %v7873 = vunpack.c.l.b16 %v7702
      %v7874 = vunpack.c.l.b16 %v7710
      %v7875 = vunpack.c.l.b16 %v7716
      %v7876 = vunpack.c.l.b16 %v7724
      %v7877 = vunpack.c.l.b16 %v7730
      %v7878 = vunpack.c.l.b16 %v7738
      %v7879 = vunpack.c.l.b16 %v7744
      %v7880 = vunpack.c.l.b16 %v7752
      %v7881 = vunpack.c.l.b16 %v7758
      %v7882 = vunpack.c.l.b16 %v7766
      %v7883 = vunpack.c.l.b16 %v7772
      %v7884 = vunpack.c.l.b16 %v7780
      %v7885 = vunpack.c.l.b16 %v7786
      %v7886 = vunpack.c.l.b16 %v7794
      %v7887 = vunpack.c.l.b16 %v7800
      %v7888 = vunpack.c.l.b16 %v7808
      %v7889 = vunpack.c.l.b16 %v7814
      %v7890 = vunpack.c.l.b16 %v7822
      %v7891 = vunpack.c.l.b16 %v7828
      %v7892 = vunpack.c.l.b16 %v7836
      %v7893 = vunpack.c.l.b16 %v7842
      %v7894 = vunpack.c.l.b16 %v7850
      %v7895 = vunpack.c.l.b16 %v7856
      %v7896 = vunpack.c.l.b16 %v7864
      %v7897 = vpack.c.b16 %v7866, %v7865
      %v7898 = vpack.c.b16 %v7868, %v7867
      %v7899 = vpack.c.b16 %v7870, %v7869
      %v7900 = vpack.c.b16 %v7872, %v7871
      %v7901 = vpack.c.b16 %v7874, %v7873
      %v7902 = vpack.c.b16 %v7876, %v7875
      %v7903 = vpack.c.b16 %v7878, %v7877
      %v7904 = vpack.c.b16 %v7880, %v7879
      %v7905 = vpack.c.b16 %v7882, %v7881
      %v7906 = vpack.c.b16 %v7884, %v7883
      %v7907 = vpack.c.b16 %v7886, %v7885
      %v7908 = vpack.c.b16 %v7888, %v7887
      %v7909 = vpack.c.b16 %v7890, %v7889
      %v7910 = vpack.c.b16 %v7892, %v7891
      %v7911 = vpack.c.b16 %v7894, %v7893
      %v7912 = vpack.c.b16 %v7896, %v7895
      %v7915 = vunpack.c.l.b16 %v6716
      %v7916 = vunpack.c.l.b16 %v6717
      %v7917 = vpack.c.b16 %v7916, %v7915
      %v7920 = vsel %vm3975, %v7897, 0
      %v7923 = vsel %vm3975, %v7898, 0
      %v7926 = vsel %vm3975, %v7899, 0
      %v7929 = vsel %vm3975, %v7900, 0
      %v7932 = vsel %vm3975, %v7901, 0
      %v7935 = vsel %vm3975, %v7902, 0
      %v7938 = vsel %vm3975, %v7903, 0
      %v7941 = vsel %vm3975, %v7904, 0
      %v7944 = vsel %vm3975, %v7905, 0
      %v7947 = vsel %vm3975, %v7906, 0
      %v7950 = vsel %vm3975, %v7907, 0
      %v7953 = vsel %vm3975, %v7908, 0
      %v7956 = vsel %vm3975, %v7909, 0
      %v7959 = vsel %vm3975, %v7910, 0
      %v7962 = vsel %vm3975, %v7911, 0
      %v7965 = vsel %vm3975, %v7912, 0
      %7967 = vmatprep.subr.bf16.mxu0 0
      %7968 = vmatpush1.bf16.msra.mxu0 0
      %7969 = vmatprep.subr.bf16.mxu0 0
      %7970 = vmatpush1.bf16.msra.mxu0 0
      %7971 = vmatprep.subr.bf16.mxu0 0
      %7972 = vmatpush1.bf16.msra.mxu0 0
      %7973 = vmatprep.subr.bf16.mxu0 0
      %7974 = vmatpush1.bf16.msra.mxu0 0
      %7975 = vmatprep.subr.bf16.mxu0 0
      %7976 = vmatpush1.bf16.msra.mxu0 0
      %7977 = vmatprep.subr.bf16.mxu0 0
      %7978 = vmatpush1.bf16.msra.mxu0 0
      %7979 = vmatprep.subr.bf16.mxu0 0
      %7980 = vmatpush1.bf16.msra.mxu0 0
      %7981 = vmatprep.subr.bf16.mxu0 0
      %7982 = vmatpush1.bf16.msra.mxu0 %v7917
      %7983 = vmatprep.subr.bf16.mxu0 0
      %7984 = vmatpush2.bf16.msra.mxu0 0
      %7985 = vmatprep.subr.bf16.mxu0 0
      %7986 = vmatpush2.bf16.msra.mxu0 0
      %7987 = vmatprep.subr.bf16.mxu0 0
      %7988 = vmatpush2.bf16.msra.mxu0 0
      %7989 = vmatprep.subr.bf16.mxu0 0
      %7990 = vmatpush2.bf16.msra.mxu0 0
      %7991 = vmatprep.subr.bf16.mxu0 0
      %7992 = vmatpush2.bf16.msra.mxu0 0
      %7993 = vmatprep.subr.bf16.mxu0 0
      %7994 = vmatpush2.bf16.msra.mxu0 0
      %7995 = vmatprep.subr.bf16.mxu0 0
      %7996 = vmatpush2.bf16.msra.mxu0 0
      %7997 = vmatprep.subr.bf16.mxu0 0
      %7998 = vmatpush2.bf16.msra.mxu0 0
      %7999 = vmatprep.mubr.bf16.mxu0 0
      %8000 = vmatmul.mubr.bf16.gmra.mxu0 %v7920
      %v8001 = vpop.f32.mrf.mxu0
      %v8002 = vadd.f32 0.0, %v8001
      %v8003 = vpop.f32.mrf.mxu0
      %v8004 = vpop.f32.mrf.mxu0
      %v8005 = vadd.f32 0.0, %v8004
      %v8006 = vpop.f32.mrf.mxu0
      %8007 = vmatprep.mubr.bf16.mxu0 0
      %8008 = vmatmul.mubr.bf16.gmra.mxu0 %v7923
      %v8009 = vpop.f32.mrf.mxu0
      %v8010 = vadd.f32 0.0, %v8009
      %v8011 = vpop.f32.mrf.mxu0
      %v8012 = vpop.f32.mrf.mxu0
      %v8013 = vadd.f32 0.0, %v8012
      %v8014 = vpop.f32.mrf.mxu0
      %8015 = vmatprep.mubr.bf16.mxu0 0
      %8016 = vmatmul.mubr.bf16.gmra.mxu0 %v7926
      %v8017 = vpop.f32.mrf.mxu0
      %v8018 = vadd.f32 0.0, %v8017
      %v8019 = vpop.f32.mrf.mxu0
      %v8020 = vpop.f32.mrf.mxu0
      %v8021 = vadd.f32 0.0, %v8020
      %v8022 = vpop.f32.mrf.mxu0
      %8023 = vmatprep.mubr.bf16.mxu0 0
      %8024 = vmatmul.mubr.bf16.gmra.mxu0 %v7929
      %v8025 = vpop.f32.mrf.mxu0
      %v8026 = vadd.f32 0.0, %v8025
      %v8027 = vpop.f32.mrf.mxu0
      %v8028 = vpop.f32.mrf.mxu0
      %v8029 = vadd.f32 0.0, %v8028
      %v8030 = vpop.f32.mrf.mxu0
      %8031 = vmatprep.mubr.bf16.mxu0 0
      %8032 = vmatmul.mubr.bf16.gmra.mxu0 %v7932
      %v8033 = vpop.f32.mrf.mxu0
      %v8034 = vadd.f32 0.0, %v8033
      %v8035 = vpop.f32.mrf.mxu0
      %v8036 = vpop.f32.mrf.mxu0
      %v8037 = vadd.f32 0.0, %v8036
      %v8038 = vpop.f32.mrf.mxu0
      %8039 = vmatprep.mubr.bf16.mxu0 0
      %8040 = vmatmul.mubr.bf16.gmra.mxu0 %v7935
      %v8041 = vpop.f32.mrf.mxu0
      %v8042 = vadd.f32 0.0, %v8041
      %v8043 = vpop.f32.mrf.mxu0
      %v8044 = vpop.f32.mrf.mxu0
      %v8045 = vadd.f32 0.0, %v8044
      %v8046 = vpop.f32.mrf.mxu0
      %8047 = vmatprep.mubr.bf16.mxu0 0
      %8048 = vmatmul.mubr.bf16.gmra.mxu0 %v7938
      %v8049 = vpop.f32.mrf.mxu0
      %v8050 = vadd.f32 0.0, %v8049
      %v8051 = vpop.f32.mrf.mxu0
      %v8052 = vpop.f32.mrf.mxu0
      %v8053 = vadd.f32 0.0, %v8052
      %v8054 = vpop.f32.mrf.mxu0
      %8055 = vmatprep.mubr.bf16.mxu0 0
      %8056 = vmatmul.mubr.bf16.gmra.mxu0 %v7941
      %v8057 = vpop.f32.mrf.mxu0
      %v8058 = vadd.f32 0.0, %v8057
      %v8059 = vpop.f32.mrf.mxu0
      %v8060 = vpop.f32.mrf.mxu0
      %v8061 = vadd.f32 0.0, %v8060
      %v8062 = vpop.f32.mrf.mxu0
      %8063 = vmatprep.mubr.bf16.mxu0 0
      %8064 = vmatmul.mubr.bf16.gmra.mxu0 %v7944
      %v8065 = vpop.f32.mrf.mxu0
      %v8066 = vadd.f32 0.0, %v8065
      %v8067 = vpop.f32.mrf.mxu0
      %v8068 = vpop.f32.mrf.mxu0
      %v8069 = vadd.f32 0.0, %v8068
      %v8070 = vpop.f32.mrf.mxu0
      %8071 = vmatprep.mubr.bf16.mxu0 0
      %8072 = vmatmul.mubr.bf16.gmra.mxu0 %v7947
      %v8073 = vpop.f32.mrf.mxu0
      %v8074 = vadd.f32 0.0, %v8073
      %v8075 = vpop.f32.mrf.mxu0
      %v8076 = vpop.f32.mrf.mxu0
      %v8077 = vadd.f32 0.0, %v8076
      %v8078 = vpop.f32.mrf.mxu0
      %8079 = vmatprep.mubr.bf16.mxu0 0
      %8080 = vmatmul.mubr.bf16.gmra.mxu0 %v7950
      %v8081 = vpop.f32.mrf.mxu0
      %v8082 = vadd.f32 0.0, %v8081
      %v8083 = vpop.f32.mrf.mxu0
      %v8084 = vpop.f32.mrf.mxu0
      %v8085 = vadd.f32 0.0, %v8084
      %v8086 = vpop.f32.mrf.mxu0
      %8087 = vmatprep.mubr.bf16.mxu0 0
      %8088 = vmatmul.mubr.bf16.gmra.mxu0 %v7953
      %v8089 = vpop.f32.mrf.mxu0
      %v8090 = vadd.f32 0.0, %v8089
      %v8091 = vpop.f32.mrf.mxu0
      %v8092 = vpop.f32.mrf.mxu0
      %v8093 = vadd.f32 0.0, %v8092
      %v8094 = vpop.f32.mrf.mxu0
      %8095 = vmatprep.mubr.bf16.mxu0 0
      %8096 = vmatmul.mubr.bf16.gmra.mxu0 %v7956
      %v8097 = vpop.f32.mrf.mxu0
      %v8098 = vadd.f32 0.0, %v8097
      %v8099 = vpop.f32.mrf.mxu0
      %v8100 = vpop.f32.mrf.mxu0
      %v8101 = vadd.f32 0.0, %v8100
      %v8102 = vpop.f32.mrf.mxu0
      %8103 = vmatprep.mubr.bf16.mxu0 0
      %8104 = vmatmul.mubr.bf16.gmra.mxu0 %v7959
      %v8105 = vpop.f32.mrf.mxu0
      %v8106 = vadd.f32 0.0, %v8105
      %v8107 = vpop.f32.mrf.mxu0
      %v8108 = vpop.f32.mrf.mxu0
      %v8109 = vadd.f32 0.0, %v8108
      %v8110 = vpop.f32.mrf.mxu0
      %8111 = vmatprep.mubr.bf16.mxu0 0
      %8112 = vmatmul.mubr.bf16.gmra.mxu0 %v7962
      %v8113 = vpop.f32.mrf.mxu0
      %v8114 = vadd.f32 0.0, %v8113
      %v8115 = vpop.f32.mrf.mxu0
      %v8116 = vpop.f32.mrf.mxu0
      %v8117 = vadd.f32 0.0, %v8116
      %v8118 = vpop.f32.mrf.mxu0
      %8119 = vmatprep.mubr.bf16.mxu0 0
      %8120 = vmatmul.mubr.bf16.gmra.mxu0 %v7965
      %v8121 = vpop.f32.mrf.mxu0
      %v8122 = vadd.f32 0.0, %v8121
      %v8123 = vpop.f32.mrf.mxu0
      %v8124 = vpop.f32.mrf.mxu0
      %v8125 = vadd.f32 0.0, %v8124
      %v8126 = vpop.f32.mrf.mxu0
      %8127 = vdwg.mxu0
      %v8128 = vadd.f32 %v7515, %v8002
      %v8129 = vadd.f32 %v7518, %v8005
      %v8130 = vadd.f32 %v7523, %v8010
      %v8131 = vadd.f32 %v7526, %v8013
      %v8132 = vadd.f32 %v7531, %v8018
      %v8133 = vadd.f32 %v7534, %v8021
      %v8134 = vadd.f32 %v7539, %v8026
      %v8135 = vadd.f32 %v7542, %v8029
      %v8136 = vadd.f32 %v7547, %v8034
      %v8137 = vadd.f32 %v7550, %v8037
      %v8138 = vadd.f32 %v7555, %v8042
      %v8139 = vadd.f32 %v7558, %v8045
      %v8140 = vadd.f32 %v7563, %v8050
      %v8141 = vadd.f32 %v7566, %v8053
      %v8142 = vadd.f32 %v7571, %v8058
      %v8143 = vadd.f32 %v7574, %v8061
      %v8144 = vadd.f32 %v7579, %v8066
      %v8145 = vadd.f32 %v7582, %v8069
      %v8146 = vadd.f32 %v7587, %v8074
      %v8147 = vadd.f32 %v7590, %v8077
      %v8148 = vadd.f32 %v7595, %v8082
      %v8149 = vadd.f32 %v7598, %v8085
      %v8150 = vadd.f32 %v7603, %v8090
      %v8151 = vadd.f32 %v7606, %v8093
      %v8152 = vadd.f32 %v7611, %v8098
      %v8153 = vadd.f32 %v7614, %v8101
      %v8154 = vadd.f32 %v7619, %v8106
      %v8155 = vadd.f32 %v7622, %v8109
      %v8156 = vadd.f32 %v7627, %v8114
      %v8157 = vadd.f32 %v7630, %v8117
      %v8158 = vadd.f32 %v7635, %v8122
      %v8159 = vadd.f32 %v7638, %v8125
      %v8161 = vshrl.u32 %v6704, 16
      %v8163 = vrot.slane %v8161, 7
      %v8164 = vrot.slane %v8163, 4
      %v8166 = vshrl.u32 %v6705, 16
      %v8168 = vrot.slane %v8166, 7
      %v8169 = vshll.u32 %v6705, 16
      %v8171 = vor.u32 %v8168, %v8169
      %v8172 = vsel %vm364, %v8164, %v8171
      %v8173 = vrot.slane %v8168, 4
      %v8175 = vshrl.u32 %v6706, 16
      %v8177 = vrot.slane %v8175, 7
      %v8178 = vshll.u32 %v6706, 16
      %v8180 = vor.u32 %v8177, %v8178
      %v8181 = vsel %vm364, %v8173, %v8180
      %v8182 = vunpack.c.l.b16 %v8172
      %v8183 = vunpack.c.l.b16 %v8181
      %v8184 = vpack.c.b16 %v8183, %v8182
      %v8187 = vunpack.c.l.b16 %v6718
      %v8188 = vunpack.c.l.b16 %v6719
      %v8189 = vpack.c.b16 %v8188, %v8187
      %v8192 = vsel %vm3975, %v8184, 0
      %8194 = vmatprep.subr.bf16.mxu0 0
      %8195 = vmatpush1.bf16.msra.mxu0 0
      %8196 = vmatprep.subr.bf16.mxu0 0
      %8197 = vmatpush1.bf16.msra.mxu0 0
      %8198 = vmatprep.subr.bf16.mxu0 0
      %8199 = vmatpush1.bf16.msra.mxu0 0
      %8200 = vmatprep.subr.bf16.mxu0 0
      %8201 = vmatpush1.bf16.msra.mxu0 0
      %8202 = vmatprep.subr.bf16.mxu0 0
      %8203 = vmatpush1.bf16.msra.mxu0 0
      %8204 = vmatprep.subr.bf16.mxu0 0
      %8205 = vmatpush1.bf16.msra.mxu0 0
      %8206 = vmatprep.subr.bf16.mxu0 0
      %8207 = vmatpush1.bf16.msra.mxu0 0
      %8208 = vmatprep.subr.bf16.mxu0 0
      %8209 = vmatpush1.bf16.msra.mxu0 %v8189
      %8210 = vmatprep.subr.bf16.mxu0 0
      %8211 = vmatpush2.bf16.msra.mxu0 0
      %8212 = vmatprep.subr.bf16.mxu0 0
      %8213 = vmatpush2.bf16.msra.mxu0 0
      %8214 = vmatprep.subr.bf16.mxu0 0
      %8215 = vmatpush2.bf16.msra.mxu0 0
      %8216 = vmatprep.subr.bf16.mxu0 0
      %8217 = vmatpush2.bf16.msra.mxu0 0
      %8218 = vmatprep.subr.bf16.mxu0 0
      %8219 = vmatpush2.bf16.msra.mxu0 0
      %8220 = vmatprep.subr.bf16.mxu0 0
      %8221 = vmatpush2.bf16.msra.mxu0 0
      %8222 = vmatprep.subr.bf16.mxu0 0
      %8223 = vmatpush2.bf16.msra.mxu0 0
      %8224 = vmatprep.subr.bf16.mxu0 0
      %8225 = vmatpush2.bf16.msra.mxu0 0
      %8226 = vmatprep.mubr.bf16.mxu0 0
      %8227 = vmatmul.mubr.bf16.gmra.mxu0 %v7436
      %v8228 = vpop.f32.mrf.mxu0
      %v8229 = vadd.f32 0.0, %v8228
      %v8230 = vpop.f32.mrf.mxu0
      %v8231 = vpop.f32.mrf.mxu0
      %v8232 = vadd.f32 0.0, %v8231
      %v8233 = vpop.f32.mrf.mxu0
      %8234 = vmatprep.mubr.bf16.mxu0 0
      %8235 = vmatmul.mubr.bf16.gmra.mxu0 %v7439
      %v8236 = vpop.f32.mrf.mxu0
      %v8237 = vadd.f32 0.0, %v8236
      %v8238 = vpop.f32.mrf.mxu0
      %v8239 = vpop.f32.mrf.mxu0
      %v8240 = vadd.f32 0.0, %v8239
      %v8241 = vpop.f32.mrf.mxu0
      %8242 = vmatprep.mubr.bf16.mxu0 0
      %8243 = vmatmul.mubr.bf16.gmra.mxu0 %v7442
      %v8244 = vpop.f32.mrf.mxu0
      %v8245 = vadd.f32 0.0, %v8244
      %v8246 = vpop.f32.mrf.mxu0
      %v8247 = vpop.f32.mrf.mxu0
      %v8248 = vadd.f32 0.0, %v8247
      %v8249 = vpop.f32.mrf.mxu0
      %8250 = vmatprep.mubr.bf16.mxu0 0
      %8251 = vmatmul.mubr.bf16.gmra.mxu0 %v7445
      %v8252 = vpop.f32.mrf.mxu0
      %v8253 = vadd.f32 0.0, %v8252
      %v8254 = vpop.f32.mrf.mxu0
      %v8255 = vpop.f32.mrf.mxu0
      %v8256 = vadd.f32 0.0, %v8255
      %v8257 = vpop.f32.mrf.mxu0
      %8258 = vmatprep.mubr.bf16.mxu0 0
      %8259 = vmatmul.mubr.bf16.gmra.mxu0 %v7448
      %v8260 = vpop.f32.mrf.mxu0
      %v8261 = vadd.f32 0.0, %v8260
      %v8262 = vpop.f32.mrf.mxu0
      %v8263 = vpop.f32.mrf.mxu0
      %v8264 = vadd.f32 0.0, %v8263
      %v8265 = vpop.f32.mrf.mxu0
      %8266 = vmatprep.mubr.bf16.mxu0 0
      %8267 = vmatmul.mubr.bf16.gmra.mxu0 %v7451
      %v8268 = vpop.f32.mrf.mxu0
      %v8269 = vadd.f32 0.0, %v8268
      %v8270 = vpop.f32.mrf.mxu0
      %v8271 = vpop.f32.mrf.mxu0
      %v8272 = vadd.f32 0.0, %v8271
      %v8273 = vpop.f32.mrf.mxu0
      %8274 = vmatprep.mubr.bf16.mxu0 0
      %8275 = vmatmul.mubr.bf16.gmra.mxu0 %v7454
      %v8276 = vpop.f32.mrf.mxu0
      %v8277 = vadd.f32 0.0, %v8276
      %v8278 = vpop.f32.mrf.mxu0
      %v8279 = vpop.f32.mrf.mxu0
      %v8280 = vadd.f32 0.0, %v8279
      %v8281 = vpop.f32.mrf.mxu0
      %8282 = vmatprep.mubr.bf16.mxu0 0
      %8283 = vmatmul.mubr.bf16.gmra.mxu0 %v7457
      %v8284 = vpop.f32.mrf.mxu0
      %v8285 = vadd.f32 0.0, %v8284
      %v8286 = vpop.f32.mrf.mxu0
      %v8287 = vpop.f32.mrf.mxu0
      %v8288 = vadd.f32 0.0, %v8287
      %v8289 = vpop.f32.mrf.mxu0
      %8290 = vmatprep.mubr.bf16.mxu0 0
      %8291 = vmatmul.mubr.bf16.gmra.mxu0 %v7460
      %v8292 = vpop.f32.mrf.mxu0
      %v8293 = vadd.f32 0.0, %v8292
      %v8294 = vpop.f32.mrf.mxu0
      %v8295 = vpop.f32.mrf.mxu0
      %v8296 = vadd.f32 0.0, %v8295
      %v8297 = vpop.f32.mrf.mxu0
      %8298 = vmatprep.mubr.bf16.mxu0 0
      %8299 = vmatmul.mubr.bf16.gmra.mxu0 %v7463
      %v8300 = vpop.f32.mrf.mxu0
      %v8301 = vadd.f32 0.0, %v8300
      %v8302 = vpop.f32.mrf.mxu0
      %v8303 = vpop.f32.mrf.mxu0
      %v8304 = vadd.f32 0.0, %v8303
      %v8305 = vpop.f32.mrf.mxu0
      %8306 = vmatprep.mubr.bf16.mxu0 0
      %8307 = vmatmul.mubr.bf16.gmra.mxu0 %v7466
      %v8308 = vpop.f32.mrf.mxu0
      %v8309 = vadd.f32 0.0, %v8308
      %v8310 = vpop.f32.mrf.mxu0
      %v8311 = vpop.f32.mrf.mxu0
      %v8312 = vadd.f32 0.0, %v8311
      %v8313 = vpop.f32.mrf.mxu0
      %8314 = vmatprep.mubr.bf16.mxu0 0
      %8315 = vmatmul.mubr.bf16.gmra.mxu0 %v7469
      %v8316 = vpop.f32.mrf.mxu0
      %v8317 = vadd.f32 0.0, %v8316
      %v8318 = vpop.f32.mrf.mxu0
      %v8319 = vpop.f32.mrf.mxu0
      %v8320 = vadd.f32 0.0, %v8319
      %v8321 = vpop.f32.mrf.mxu0
      %8322 = vmatprep.mubr.bf16.mxu0 0
      %8323 = vmatmul.mubr.bf16.gmra.mxu0 %v7472
      %v8324 = vpop.f32.mrf.mxu0
      %v8325 = vadd.f32 0.0, %v8324
      %v8326 = vpop.f32.mrf.mxu0
      %v8327 = vpop.f32.mrf.mxu0
      %v8328 = vadd.f32 0.0, %v8327
      %v8329 = vpop.f32.mrf.mxu0
      %8330 = vmatprep.mubr.bf16.mxu0 0
      %8331 = vmatmul.mubr.bf16.gmra.mxu0 %v7475
      %v8332 = vpop.f32.mrf.mxu0
      %v8333 = vadd.f32 0.0, %v8332
      %v8334 = vpop.f32.mrf.mxu0
      %v8335 = vpop.f32.mrf.mxu0
      %v8336 = vadd.f32 0.0, %v8335
      %v8337 = vpop.f32.mrf.mxu0
      %8338 = vmatprep.mubr.bf16.mxu0 0
      %8339 = vmatmul.mubr.bf16.gmra.mxu0 %v7478
      %v8340 = vpop.f32.mrf.mxu0
      %v8341 = vadd.f32 0.0, %v8340
      %v8342 = vpop.f32.mrf.mxu0
      %v8343 = vpop.f32.mrf.mxu0
      %v8344 = vadd.f32 0.0, %v8343
      %v8345 = vpop.f32.mrf.mxu0
      %8346 = vmatprep.mubr.bf16.mxu0 0
      %8347 = vmatmul.mubr.bf16.gmra.mxu0 %v8192
      %v8348 = vpop.f32.mrf.mxu0
      %v8349 = vadd.f32 0.0, %v8348
      %v8350 = vpop.f32.mrf.mxu0
      %v8351 = vpop.f32.mrf.mxu0
      %v8352 = vadd.f32 0.0, %v8351
      %v8353 = vpop.f32.mrf.mxu0
      %8354 = vdwg.mxu0
      %v8355 = vadd.f32 %v8128, %v8229
      %v8356 = vadd.f32 %v8129, %v8232
      %v8357 = vadd.f32 %v8130, %v8237
      %v8358 = vadd.f32 %v8131, %v8240
      %v8359 = vadd.f32 %v8132, %v8245
      %v8360 = vadd.f32 %v8133, %v8248
      %v8361 = vadd.f32 %v8134, %v8253
      %v8362 = vadd.f32 %v8135, %v8256
      %v8363 = vadd.f32 %v8136, %v8261
      %v8364 = vadd.f32 %v8137, %v8264
      %v8365 = vadd.f32 %v8138, %v8269
      %v8366 = vadd.f32 %v8139, %v8272
      %v8367 = vadd.f32 %v8140, %v8277
      %v8368 = vadd.f32 %v8141, %v8280
      %v8369 = vadd.f32 %v8142, %v8285
      %v8370 = vadd.f32 %v8143, %v8288
      %v8371 = vadd.f32 %v8144, %v8293
      %v8372 = vadd.f32 %v8145, %v8296
      %v8373 = vadd.f32 %v8146, %v8301
      %v8374 = vadd.f32 %v8147, %v8304
      %v8375 = vadd.f32 %v8148, %v8309
      %v8376 = vadd.f32 %v8149, %v8312
      %v8377 = vadd.f32 %v8150, %v8317
      %v8378 = vadd.f32 %v8151, %v8320
      %v8379 = vadd.f32 %v8152, %v8325
      %v8380 = vadd.f32 %v8153, %v8328
      %v8381 = vadd.f32 %v8154, %v8333
      %v8382 = vadd.f32 %v8155, %v8336
      %v8383 = vadd.f32 %v8156, %v8341
      %v8384 = vadd.f32 %v8157, %v8344
      %v8385 = vadd.f32 %v8158, %v8349
      %v8386 = vadd.f32 %v8159, %v8352
      %v8389 = vunpack.c.l.b16 %v6705
      %v8390 = vunpack.c.l.b16 %v6706
      %v8391 = vpack.c.b16 %v8390, %v8389
      %v8394 = vunpack.c.l.b16 %v6720
      %v8395 = vunpack.c.l.b16 %v6721
      %v8396 = vpack.c.b16 %v8395, %v8394
      %v8399 = vsel %vm3975, %v8391, 0
      %8401 = vmatprep.subr.bf16.mxu0 0
      %8402 = vmatpush1.bf16.msra.mxu0 0
      %8403 = vmatprep.subr.bf16.mxu0 0
      %8404 = vmatpush1.bf16.msra.mxu0 0
      %8405 = vmatprep.subr.bf16.mxu0 0
      %8406 = vmatpush1.bf16.msra.mxu0 0
      %8407 = vmatprep.subr.bf16.mxu0 0
      %8408 = vmatpush1.bf16.msra.mxu0 0
      %8409 = vmatprep.subr.bf16.mxu0 0
      %8410 = vmatpush1.bf16.msra.mxu0 0
      %8411 = vmatprep.subr.bf16.mxu0 0
      %8412 = vmatpush1.bf16.msra.mxu0 0
      %8413 = vmatprep.subr.bf16.mxu0 0
      %8414 = vmatpush1.bf16.msra.mxu0 0
      %8415 = vmatprep.subr.bf16.mxu0 0
      %8416 = vmatpush1.bf16.msra.mxu0 %v8396
      %8417 = vmatprep.subr.bf16.mxu0 0
      %8418 = vmatpush2.bf16.msra.mxu0 0
      %8419 = vmatprep.subr.bf16.mxu0 0
      %8420 = vmatpush2.bf16.msra.mxu0 0
      %8421 = vmatprep.subr.bf16.mxu0 0
      %8422 = vmatpush2.bf16.msra.mxu0 0
      %8423 = vmatprep.subr.bf16.mxu0 0
      %8424 = vmatpush2.bf16.msra.mxu0 0
      %8425 = vmatprep.subr.bf16.mxu0 0
      %8426 = vmatpush2.bf16.msra.mxu0 0
      %8427 = vmatprep.subr.bf16.mxu0 0
      %8428 = vmatpush2.bf16.msra.mxu0 0
      %8429 = vmatprep.subr.bf16.mxu0 0
      %8430 = vmatpush2.bf16.msra.mxu0 0
      %8431 = vmatprep.subr.bf16.mxu0 0
      %8432 = vmatpush2.bf16.msra.mxu0 0
      %8433 = vmatprep.mubr.bf16.mxu0 0
      %8434 = vmatmul.mubr.bf16.gmra.mxu0 %v7173
      %v8435 = vpop.f32.mrf.mxu0
      %v8436 = vadd.f32 0.0, %v8435
      %v8437 = vpop.f32.mrf.mxu0
      %v8438 = vpop.f32.mrf.mxu0
      %v8439 = vadd.f32 0.0, %v8438
      %v8440 = vpop.f32.mrf.mxu0
      %8441 = vmatprep.mubr.bf16.mxu0 0
      %8442 = vmatmul.mubr.bf16.gmra.mxu0 %v7176
      %v8443 = vpop.f32.mrf.mxu0
      %v8444 = vadd.f32 0.0, %v8443
      %v8445 = vpop.f32.mrf.mxu0
      %v8446 = vpop.f32.mrf.mxu0
      %v8447 = vadd.f32 0.0, %v8446
      %v8448 = vpop.f32.mrf.mxu0
      %8449 = vmatprep.mubr.bf16.mxu0 0
      %8450 = vmatmul.mubr.bf16.gmra.mxu0 %v7179
      %v8451 = vpop.f32.mrf.mxu0
      %v8452 = vadd.f32 0.0, %v8451
      %v8453 = vpop.f32.mrf.mxu0
      %v8454 = vpop.f32.mrf.mxu0
      %v8455 = vadd.f32 0.0, %v8454
      %v8456 = vpop.f32.mrf.mxu0
      %8457 = vmatprep.mubr.bf16.mxu0 0
      %8458 = vmatmul.mubr.bf16.gmra.mxu0 %v7182
      %v8459 = vpop.f32.mrf.mxu0
      %v8460 = vadd.f32 0.0, %v8459
      %v8461 = vpop.f32.mrf.mxu0
      %v8462 = vpop.f32.mrf.mxu0
      %v8463 = vadd.f32 0.0, %v8462
      %v8464 = vpop.f32.mrf.mxu0
      %8465 = vmatprep.mubr.bf16.mxu0 0
      %8466 = vmatmul.mubr.bf16.gmra.mxu0 %v7185
      %v8467 = vpop.f32.mrf.mxu0
      %v8468 = vadd.f32 0.0, %v8467
      %v8469 = vpop.f32.mrf.mxu0
      %v8470 = vpop.f32.mrf.mxu0
      %v8471 = vadd.f32 0.0, %v8470
      %v8472 = vpop.f32.mrf.mxu0
      %8473 = vmatprep.mubr.bf16.mxu0 0
      %8474 = vmatmul.mubr.bf16.gmra.mxu0 %v7188
      %v8475 = vpop.f32.mrf.mxu0
      %v8476 = vadd.f32 0.0, %v8475
      %v8477 = vpop.f32.mrf.mxu0
      %v8478 = vpop.f32.mrf.mxu0
      %v8479 = vadd.f32 0.0, %v8478
      %v8480 = vpop.f32.mrf.mxu0
      %8481 = vmatprep.mubr.bf16.mxu0 0
      %8482 = vmatmul.mubr.bf16.gmra.mxu0 %v7191
      %v8483 = vpop.f32.mrf.mxu0
      %v8484 = vadd.f32 0.0, %v8483
      %v8485 = vpop.f32.mrf.mxu0
      %v8486 = vpop.f32.mrf.mxu0
      %v8487 = vadd.f32 0.0, %v8486
      %v8488 = vpop.f32.mrf.mxu0
      %8489 = vmatprep.mubr.bf16.mxu0 0
      %8490 = vmatmul.mubr.bf16.gmra.mxu0 %v7194
      %v8491 = vpop.f32.mrf.mxu0
      %v8492 = vadd.f32 0.0, %v8491
      %v8493 = vpop.f32.mrf.mxu0
      %v8494 = vpop.f32.mrf.mxu0
      %v8495 = vadd.f32 0.0, %v8494
      %v8496 = vpop.f32.mrf.mxu0
      %8497 = vmatprep.mubr.bf16.mxu0 0
      %8498 = vmatmul.mubr.bf16.gmra.mxu0 %v7197
      %v8499 = vpop.f32.mrf.mxu0
      %v8500 = vadd.f32 0.0, %v8499
      %v8501 = vpop.f32.mrf.mxu0
      %v8502 = vpop.f32.mrf.mxu0
      %v8503 = vadd.f32 0.0, %v8502
      %v8504 = vpop.f32.mrf.mxu0
      %8505 = vmatprep.mubr.bf16.mxu0 0
      %8506 = vmatmul.mubr.bf16.gmra.mxu0 %v7200
      %v8507 = vpop.f32.mrf.mxu0
      %v8508 = vadd.f32 0.0, %v8507
      %v8509 = vpop.f32.mrf.mxu0
      %v8510 = vpop.f32.mrf.mxu0
      %v8511 = vadd.f32 0.0, %v8510
      %v8512 = vpop.f32.mrf.mxu0
      %8513 = vmatprep.mubr.bf16.mxu0 0
      %8514 = vmatmul.mubr.bf16.gmra.mxu0 %v7203
      %v8515 = vpop.f32.mrf.mxu0
      %v8516 = vadd.f32 0.0, %v8515
      %v8517 = vpop.f32.mrf.mxu0
      %v8518 = vpop.f32.mrf.mxu0
      %v8519 = vadd.f32 0.0, %v8518
      %v8520 = vpop.f32.mrf.mxu0
      %8521 = vmatprep.mubr.bf16.mxu0 0
      %8522 = vmatmul.mubr.bf16.gmra.mxu0 %v7206
      %v8523 = vpop.f32.mrf.mxu0
      %v8524 = vadd.f32 0.0, %v8523
      %v8525 = vpop.f32.mrf.mxu0
      %v8526 = vpop.f32.mrf.mxu0
      %v8527 = vadd.f32 0.0, %v8526
      %v8528 = vpop.f32.mrf.mxu0
      %8529 = vmatprep.mubr.bf16.mxu0 0
      %8530 = vmatmul.mubr.bf16.gmra.mxu0 %v7209
      %v8531 = vpop.f32.mrf.mxu0
      %v8532 = vadd.f32 0.0, %v8531
      %v8533 = vpop.f32.mrf.mxu0
      %v8534 = vpop.f32.mrf.mxu0
      %v8535 = vadd.f32 0.0, %v8534
      %v8536 = vpop.f32.mrf.mxu0
      %8537 = vmatprep.mubr.bf16.mxu0 0
      %8538 = vmatmul.mubr.bf16.gmra.mxu0 %v7212
      %v8539 = vpop.f32.mrf.mxu0
      %v8540 = vadd.f32 0.0, %v8539
      %v8541 = vpop.f32.mrf.mxu0
      %v8542 = vpop.f32.mrf.mxu0
      %v8543 = vadd.f32 0.0, %v8542
      %v8544 = vpop.f32.mrf.mxu0
      %8545 = vmatprep.mubr.bf16.mxu0 0
      %8546 = vmatmul.mubr.bf16.gmra.mxu0 %v7215
      %v8547 = vpop.f32.mrf.mxu0
      %v8548 = vadd.f32 0.0, %v8547
      %v8549 = vpop.f32.mrf.mxu0
      %v8550 = vpop.f32.mrf.mxu0
      %v8551 = vadd.f32 0.0, %v8550
      %v8552 = vpop.f32.mrf.mxu0
      %8553 = vmatprep.mubr.bf16.mxu0 0
      %8554 = vmatmul.mubr.bf16.gmra.mxu0 %v8399
      %v8555 = vpop.f32.mrf.mxu0
      %v8556 = vadd.f32 0.0, %v8555
      %v8557 = vpop.f32.mrf.mxu0
      %v8558 = vpop.f32.mrf.mxu0
      %v8559 = vadd.f32 0.0, %v8558
      %v8560 = vpop.f32.mrf.mxu0
      %8561 = vdwg.mxu0
      %v8562 = vadd.f32 %v8355, %v8436
      %v8563 = vadd.f32 %v8356, %v8439
      %v8564 = vadd.f32 %v8357, %v8444
      %v8565 = vadd.f32 %v8358, %v8447
      %v8566 = vadd.f32 %v8359, %v8452
      %v8567 = vadd.f32 %v8360, %v8455
      %v8568 = vadd.f32 %v8361, %v8460
      %v8569 = vadd.f32 %v8362, %v8463
      %v8570 = vadd.f32 %v8363, %v8468
      %v8571 = vadd.f32 %v8364, %v8471
      %v8572 = vadd.f32 %v8365, %v8476
      %v8573 = vadd.f32 %v8366, %v8479
      %v8574 = vadd.f32 %v8367, %v8484
      %v8575 = vadd.f32 %v8368, %v8487
      %v8576 = vadd.f32 %v8369, %v8492
      %v8577 = vadd.f32 %v8370, %v8495
      %v8578 = vadd.f32 %v8371, %v8500
      %v8579 = vadd.f32 %v8372, %v8503
      %v8580 = vadd.f32 %v8373, %v8508
      %v8581 = vadd.f32 %v8374, %v8511
      %v8582 = vadd.f32 %v8375, %v8516
      %v8583 = vadd.f32 %v8376, %v8519
      %v8584 = vadd.f32 %v8377, %v8524
      %v8585 = vadd.f32 %v8378, %v8527
      %v8586 = vadd.f32 %v8379, %v8532
      %v8587 = vadd.f32 %v8380, %v8535
      %v8588 = vadd.f32 %v8381, %v8540
      %v8589 = vadd.f32 %v8382, %v8543
      %v8590 = vadd.f32 %v8383, %v8548
      %v8591 = vadd.f32 %v8384, %v8551
      %v8592 = vadd.f32 %v8385, %v8556
      %v8593 = vadd.f32 %v8386, %v8559
      %v8594 = vrot.slane %v8166, 4
      %v8595 = vrot.slane %v8169, 5
      %v8596 = vor.u32 %v8594, %v8595
      %v8597 = vrot.slane %v8596, 4
      %v8598 = vrot.slane %v8178, 5
      %v8599 = vsel %vm1273, %v8597, %v8598
      %v8600 = vrot.slane %v8175, 4
      %v8601 = vor.u32 %v8600, %v8598
      %v8602 = vrot.slane %v8601, 4
      %v8604 = vshll.u32 %v6707, 16
      %v8606 = vrot.slane %v8604, 5
      %v8607 = vsel %vm1273, %v8602, %v8606
      %v8608 = vunpack.c.l.b16 %v8599
      %v8609 = vunpack.c.l.b16 %v8607
      %v8610 = vpack.c.b16 %v8609, %v8608
      %v8613 = vunpack.c.l.b16 %v6722
      %v8614 = vunpack.c.l.b16 %v6723
      %v8615 = vpack.c.b16 %v8614, %v8613
      %v8618 = vsel %vm3975, %v8610, 0
      %8620 = vmatprep.subr.bf16.mxu0 0
      %8621 = vmatpush1.bf16.msra.mxu0 0
      %8622 = vmatprep.subr.bf16.mxu0 0
      %8623 = vmatpush1.bf16.msra.mxu0 0
      %8624 = vmatprep.subr.bf16.mxu0 0
      %8625 = vmatpush1.bf16.msra.mxu0 0
      %8626 = vmatprep.subr.bf16.mxu0 0
      %8627 = vmatpush1.bf16.msra.mxu0 0
      %8628 = vmatprep.subr.bf16.mxu0 0
      %8629 = vmatpush1.bf16.msra.mxu0 0
      %8630 = vmatprep.subr.bf16.mxu0 0
      %8631 = vmatpush1.bf16.msra.mxu0 0
      %8632 = vmatprep.subr.bf16.mxu0 0
      %8633 = vmatpush1.bf16.msra.mxu0 0
      %8634 = vmatprep.subr.bf16.mxu0 0
      %8635 = vmatpush1.bf16.msra.mxu0 %v8615
      %8636 = vmatprep.subr.bf16.mxu0 0
      %8637 = vmatpush2.bf16.msra.mxu0 0
      %8638 = vmatprep.subr.bf16.mxu0 0
      %8639 = vmatpush2.bf16.msra.mxu0 0
      %8640 = vmatprep.subr.bf16.mxu0 0
      %8641 = vmatpush2.bf16.msra.mxu0 0
      %8642 = vmatprep.subr.bf16.mxu0 0
      %8643 = vmatpush2.bf16.msra.mxu0 0
      %8644 = vmatprep.subr.bf16.mxu0 0
      %8645 = vmatpush2.bf16.msra.mxu0 0
      %8646 = vmatprep.subr.bf16.mxu0 0
      %8647 = vmatpush2.bf16.msra.mxu0 0
      %8648 = vmatprep.subr.bf16.mxu0 0
      %8649 = vmatpush2.bf16.msra.mxu0 0
      %8650 = vmatprep.subr.bf16.mxu0 0
      %8651 = vmatpush2.bf16.msra.mxu0 0
      %8652 = vmatprep.mubr.bf16.mxu0 0
      %8653 = vmatmul.mubr.bf16.gmra.mxu0 %v7923
      %v8654 = vpop.f32.mrf.mxu0
      %v8655 = vadd.f32 0.0, %v8654
      %v8656 = vpop.f32.mrf.mxu0
      %v8657 = vpop.f32.mrf.mxu0
      %v8658 = vadd.f32 0.0, %v8657
      %v8659 = vpop.f32.mrf.mxu0
      %8660 = vmatprep.mubr.bf16.mxu0 0
      %8661 = vmatmul.mubr.bf16.gmra.mxu0 %v7926
      %v8662 = vpop.f32.mrf.mxu0
      %v8663 = vadd.f32 0.0, %v8662
      %v8664 = vpop.f32.mrf.mxu0
      %v8665 = vpop.f32.mrf.mxu0
      %v8666 = vadd.f32 0.0, %v8665
      %v8667 = vpop.f32.mrf.mxu0
      %8668 = vmatprep.mubr.bf16.mxu0 0
      %8669 = vmatmul.mubr.bf16.gmra.mxu0 %v7929
      %v8670 = vpop.f32.mrf.mxu0
      %v8671 = vadd.f32 0.0, %v8670
      %v8672 = vpop.f32.mrf.mxu0
      %v8673 = vpop.f32.mrf.mxu0
      %v8674 = vadd.f32 0.0, %v8673
      %v8675 = vpop.f32.mrf.mxu0
      %8676 = vmatprep.mubr.bf16.mxu0 0
      %8677 = vmatmul.mubr.bf16.gmra.mxu0 %v7932
      %v8678 = vpop.f32.mrf.mxu0
      %v8679 = vadd.f32 0.0, %v8678
      %v8680 = vpop.f32.mrf.mxu0
      %v8681 = vpop.f32.mrf.mxu0
      %v8682 = vadd.f32 0.0, %v8681
      %v8683 = vpop.f32.mrf.mxu0
      %8684 = vmatprep.mubr.bf16.mxu0 0
      %8685 = vmatmul.mubr.bf16.gmra.mxu0 %v7935
      %v8686 = vpop.f32.mrf.mxu0
      %v8687 = vadd.f32 0.0, %v8686
      %v8688 = vpop.f32.mrf.mxu0
      %v8689 = vpop.f32.mrf.mxu0
      %v8690 = vadd.f32 0.0, %v8689
      %v8691 = vpop.f32.mrf.mxu0
      %8692 = vmatprep.mubr.bf16.mxu0 0
      %8693 = vmatmul.mubr.bf16.gmra.mxu0 %v7938
      %v8694 = vpop.f32.mrf.mxu0
      %v8695 = vadd.f32 0.0, %v8694
      %v8696 = vpop.f32.mrf.mxu0
      %v8697 = vpop.f32.mrf.mxu0
      %v8698 = vadd.f32 0.0, %v8697
      %v8699 = vpop.f32.mrf.mxu0
      %8700 = vmatprep.mubr.bf16.mxu0 0
      %8701 = vmatmul.mubr.bf16.gmra.mxu0 %v7941
      %v8702 = vpop.f32.mrf.mxu0
      %v8703 = vadd.f32 0.0, %v8702
      %v8704 = vpop.f32.mrf.mxu0
      %v8705 = vpop.f32.mrf.mxu0
      %v8706 = vadd.f32 0.0, %v8705
      %v8707 = vpop.f32.mrf.mxu0
      %8708 = vmatprep.mubr.bf16.mxu0 0
      %8709 = vmatmul.mubr.bf16.gmra.mxu0 %v7944
      %v8710 = vpop.f32.mrf.mxu0
      %v8711 = vadd.f32 0.0, %v8710
      %v8712 = vpop.f32.mrf.mxu0
      %v8713 = vpop.f32.mrf.mxu0
      %v8714 = vadd.f32 0.0, %v8713
      %v8715 = vpop.f32.mrf.mxu0
      %8716 = vmatprep.mubr.bf16.mxu0 0
      %8717 = vmatmul.mubr.bf16.gmra.mxu0 %v7947
      %v8718 = vpop.f32.mrf.mxu0
      %v8719 = vadd.f32 0.0, %v8718
      %v8720 = vpop.f32.mrf.mxu0
      %v8721 = vpop.f32.mrf.mxu0
      %v8722 = vadd.f32 0.0, %v8721
      %v8723 = vpop.f32.mrf.mxu0
      %8724 = vmatprep.mubr.bf16.mxu0 0
      %8725 = vmatmul.mubr.bf16.gmra.mxu0 %v7950
      %v8726 = vpop.f32.mrf.mxu0
      %v8727 = vadd.f32 0.0, %v8726
      %v8728 = vpop.f32.mrf.mxu0
      %v8729 = vpop.f32.mrf.mxu0
      %v8730 = vadd.f32 0.0, %v8729
      %v8731 = vpop.f32.mrf.mxu0
      %8732 = vmatprep.mubr.bf16.mxu0 0
      %8733 = vmatmul.mubr.bf16.gmra.mxu0 %v7953
      %v8734 = vpop.f32.mrf.mxu0
      %v8735 = vadd.f32 0.0, %v8734
      %v8736 = vpop.f32.mrf.mxu0
      %v8737 = vpop.f32.mrf.mxu0
      %v8738 = vadd.f32 0.0, %v8737
      %v8739 = vpop.f32.mrf.mxu0
      %8740 = vmatprep.mubr.bf16.mxu0 0
      %8741 = vmatmul.mubr.bf16.gmra.mxu0 %v7956
      %v8742 = vpop.f32.mrf.mxu0
      %v8743 = vadd.f32 0.0, %v8742
      %v8744 = vpop.f32.mrf.mxu0
      %v8745 = vpop.f32.mrf.mxu0
      %v8746 = vadd.f32 0.0, %v8745
      %v8747 = vpop.f32.mrf.mxu0
      %8748 = vmatprep.mubr.bf16.mxu0 0
      %8749 = vmatmul.mubr.bf16.gmra.mxu0 %v7959
      %v8750 = vpop.f32.mrf.mxu0
      %v8751 = vadd.f32 0.0, %v8750
      %v8752 = vpop.f32.mrf.mxu0
      %v8753 = vpop.f32.mrf.mxu0
      %v8754 = vadd.f32 0.0, %v8753
      %v8755 = vpop.f32.mrf.mxu0
      %8756 = vmatprep.mubr.bf16.mxu0 0
      %8757 = vmatmul.mubr.bf16.gmra.mxu0 %v7962
      %v8758 = vpop.f32.mrf.mxu0
      %v8759 = vadd.f32 0.0, %v8758
      %v8760 = vpop.f32.mrf.mxu0
      %v8761 = vpop.f32.mrf.mxu0
      %v8762 = vadd.f32 0.0, %v8761
      %v8763 = vpop.f32.mrf.mxu0
      %8764 = vmatprep.mubr.bf16.mxu0 0
      %8765 = vmatmul.mubr.bf16.gmra.mxu0 %v7965
      %v8766 = vpop.f32.mrf.mxu0
      %v8767 = vadd.f32 0.0, %v8766
      %v8768 = vpop.f32.mrf.mxu0
      %v8769 = vpop.f32.mrf.mxu0
      %v8770 = vadd.f32 0.0, %v8769
      %v8771 = vpop.f32.mrf.mxu0
      %8772 = vmatprep.mubr.bf16.mxu0 0
      %8773 = vmatmul.mubr.bf16.gmra.mxu0 %v8618
      %v8774 = vpop.f32.mrf.mxu0
      %v8775 = vadd.f32 0.0, %v8774
      %v8776 = vpop.f32.mrf.mxu0
      %v8777 = vpop.f32.mrf.mxu0
      %v8778 = vadd.f32 0.0, %v8777
      %v8779 = vpop.f32.mrf.mxu0
      %8780 = vdwg.mxu0
      %v8781 = vadd.f32 %v8562, %v8655
      %v8782 = vadd.f32 %v8563, %v8658
      %v8783 = vadd.f32 %v8564, %v8663
      %v8784 = vadd.f32 %v8565, %v8666
      %v8785 = vadd.f32 %v8566, %v8671
      %v8786 = vadd.f32 %v8567, %v8674
      %v8787 = vadd.f32 %v8568, %v8679
      %v8788 = vadd.f32 %v8569, %v8682
      %v8789 = vadd.f32 %v8570, %v8687
      %v8790 = vadd.f32 %v8571, %v8690
      %v8791 = vadd.f32 %v8572, %v8695
      %v8792 = vadd.f32 %v8573, %v8698
      %v8793 = vadd.f32 %v8574, %v8703
      %v8794 = vadd.f32 %v8575, %v8706
      %v8795 = vadd.f32 %v8576, %v8711
      %v8796 = vadd.f32 %v8577, %v8714
      %v8797 = vadd.f32 %v8578, %v8719
      %v8798 = vadd.f32 %v8579, %v8722
      %v8799 = vadd.f32 %v8580, %v8727
      %v8800 = vadd.f32 %v8581, %v8730
      %v8801 = vadd.f32 %v8582, %v8735
      %v8802 = vadd.f32 %v8583, %v8738
      %v8803 = vadd.f32 %v8584, %v8743
      %v8804 = vadd.f32 %v8585, %v8746
      %v8805 = vadd.f32 %v8586, %v8751
      %v8806 = vadd.f32 %v8587, %v8754
      %v8807 = vadd.f32 %v8588, %v8759
      %v8808 = vadd.f32 %v8589, %v8762
      %v8809 = vadd.f32 %v8590, %v8767
      %v8810 = vadd.f32 %v8591, %v8770
      %v8811 = vadd.f32 %v8592, %v8775
      %v8812 = vadd.f32 %v8593, %v8778
      %v8814 = vshrl.u32 %v6708, 16
      %v8816 = vrot.slane %v8814, 7
      %v8817 = vrot.slane %v8816, 4
      %v8819 = vshrl.u32 %v6709, 16
      %v8821 = vrot.slane %v8819, 7
      %v8822 = vshll.u32 %v6709, 16
      %v8824 = vor.u32 %v8821, %v8822
      %v8825 = vsel %vm364, %v8817, %v8824
      %v8826 = vrot.slane %v8821, 4
      %v8828 = vshrl.u32 %v6710, 16
      %v8830 = vrot.slane %v8828, 7
      %v8831 = vshll.u32 %v6710, 16
      %v8833 = vor.u32 %v8830, %v8831
      %v8834 = vsel %vm364, %v8826, %v8833
      %v8835 = vunpack.c.l.b16 %v8825
      %v8836 = vunpack.c.l.b16 %v8834
      %v8837 = vpack.c.b16 %v8836, %v8835
      %v8840 = vunpack.c.l.b16 %v6724
      %v8841 = vunpack.c.l.b16 %v6725
      %v8842 = vpack.c.b16 %v8841, %v8840
      %v8845 = vsel %vm3975, %v8837, 0
      %8847 = vmatprep.subr.bf16.mxu0 0
      %8848 = vmatpush1.bf16.msra.mxu0 0
      %8849 = vmatprep.subr.bf16.mxu0 0
      %8850 = vmatpush1.bf16.msra.mxu0 0
      %8851 = vmatprep.subr.bf16.mxu0 0
      %8852 = vmatpush1.bf16.msra.mxu0 0
      %8853 = vmatprep.subr.bf16.mxu0 0
      %8854 = vmatpush1.bf16.msra.mxu0 0
      %8855 = vmatprep.subr.bf16.mxu0 0
      %8856 = vmatpush1.bf16.msra.mxu0 0
      %8857 = vmatprep.subr.bf16.mxu0 0
      %8858 = vmatpush1.bf16.msra.mxu0 0
      %8859 = vmatprep.subr.bf16.mxu0 0
      %8860 = vmatpush1.bf16.msra.mxu0 0
      %8861 = vmatprep.subr.bf16.mxu0 0
      %8862 = vmatpush1.bf16.msra.mxu0 %v8842
      %8863 = vmatprep.subr.bf16.mxu0 0
      %8864 = vmatpush2.bf16.msra.mxu0 0
      %8865 = vmatprep.subr.bf16.mxu0 0
      %8866 = vmatpush2.bf16.msra.mxu0 0
      %8867 = vmatprep.subr.bf16.mxu0 0
      %8868 = vmatpush2.bf16.msra.mxu0 0
      %8869 = vmatprep.subr.bf16.mxu0 0
      %8870 = vmatpush2.bf16.msra.mxu0 0
      %8871 = vmatprep.subr.bf16.mxu0 0
      %8872 = vmatpush2.bf16.msra.mxu0 0
      %8873 = vmatprep.subr.bf16.mxu0 0
      %8874 = vmatpush2.bf16.msra.mxu0 0
      %8875 = vmatprep.subr.bf16.mxu0 0
      %8876 = vmatpush2.bf16.msra.mxu0 0
      %8877 = vmatprep.subr.bf16.mxu0 0
      %8878 = vmatpush2.bf16.msra.mxu0 0
      %8879 = vmatprep.mubr.bf16.mxu0 0
      %8880 = vmatmul.mubr.bf16.gmra.mxu0 %v7439
      %v8881 = vpop.f32.mrf.mxu0
      %v8882 = vadd.f32 0.0, %v8881
      %v8883 = vpop.f32.mrf.mxu0
      %v8884 = vpop.f32.mrf.mxu0
      %v8885 = vadd.f32 0.0, %v8884
      %v8886 = vpop.f32.mrf.mxu0
      %8887 = vmatprep.mubr.bf16.mxu0 0
      %8888 = vmatmul.mubr.bf16.gmra.mxu0 %v7442
      %v8889 = vpop.f32.mrf.mxu0
      %v8890 = vadd.f32 0.0, %v8889
      %v8891 = vpop.f32.mrf.mxu0
      %v8892 = vpop.f32.mrf.mxu0
      %v8893 = vadd.f32 0.0, %v8892
      %v8894 = vpop.f32.mrf.mxu0
      %8895 = vmatprep.mubr.bf16.mxu0 0
      %8896 = vmatmul.mubr.bf16.gmra.mxu0 %v7445
      %v8897 = vpop.f32.mrf.mxu0
      %v8898 = vadd.f32 0.0, %v8897
      %v8899 = vpop.f32.mrf.mxu0
      %v8900 = vpop.f32.mrf.mxu0
      %v8901 = vadd.f32 0.0, %v8900
      %v8902 = vpop.f32.mrf.mxu0
      %8903 = vmatprep.mubr.bf16.mxu0 0
      %8904 = vmatmul.mubr.bf16.gmra.mxu0 %v7448
      %v8905 = vpop.f32.mrf.mxu0
      %v8906 = vadd.f32 0.0, %v8905
      %v8907 = vpop.f32.mrf.mxu0
      %v8908 = vpop.f32.mrf.mxu0
      %v8909 = vadd.f32 0.0, %v8908
      %v8910 = vpop.f32.mrf.mxu0
      %8911 = vmatprep.mubr.bf16.mxu0 0
      %8912 = vmatmul.mubr.bf16.gmra.mxu0 %v7451
      %v8913 = vpop.f32.mrf.mxu0
      %v8914 = vadd.f32 0.0, %v8913
      %v8915 = vpop.f32.mrf.mxu0
      %v8916 = vpop.f32.mrf.mxu0
      %v8917 = vadd.f32 0.0, %v8916
      %v8918 = vpop.f32.mrf.mxu0
      %8919 = vmatprep.mubr.bf16.mxu0 0
      %8920 = vmatmul.mubr.bf16.gmra.mxu0 %v7454
      %v8921 = vpop.f32.mrf.mxu0
      %v8922 = vadd.f32 0.0, %v8921
      %v8923 = vpop.f32.mrf.mxu0
      %v8924 = vpop.f32.mrf.mxu0
      %v8925 = vadd.f32 0.0, %v8924
      %v8926 = vpop.f32.mrf.mxu0
      %8927 = vmatprep.mubr.bf16.mxu0 0
      %8928 = vmatmul.mubr.bf16.gmra.mxu0 %v7457
      %v8929 = vpop.f32.mrf.mxu0
      %v8930 = vadd.f32 0.0, %v8929
      %v8931 = vpop.f32.mrf.mxu0
      %v8932 = vpop.f32.mrf.mxu0
      %v8933 = vadd.f32 0.0, %v8932
      %v8934 = vpop.f32.mrf.mxu0
      %8935 = vmatprep.mubr.bf16.mxu0 0
      %8936 = vmatmul.mubr.bf16.gmra.mxu0 %v7460
      %v8937 = vpop.f32.mrf.mxu0
      %v8938 = vadd.f32 0.0, %v8937
      %v8939 = vpop.f32.mrf.mxu0
      %v8940 = vpop.f32.mrf.mxu0
      %v8941 = vadd.f32 0.0, %v8940
      %v8942 = vpop.f32.mrf.mxu0
      %8943 = vmatprep.mubr.bf16.mxu0 0
      %8944 = vmatmul.mubr.bf16.gmra.mxu0 %v7463
      %v8945 = vpop.f32.mrf.mxu0
      %v8946 = vadd.f32 0.0, %v8945
      %v8947 = vpop.f32.mrf.mxu0
      %v8948 = vpop.f32.mrf.mxu0
      %v8949 = vadd.f32 0.0, %v8948
      %v8950 = vpop.f32.mrf.mxu0
      %8951 = vmatprep.mubr.bf16.mxu0 0
      %8952 = vmatmul.mubr.bf16.gmra.mxu0 %v7466
      %v8953 = vpop.f32.mrf.mxu0
      %v8954 = vadd.f32 0.0, %v8953
      %v8955 = vpop.f32.mrf.mxu0
      %v8956 = vpop.f32.mrf.mxu0
      %v8957 = vadd.f32 0.0, %v8956
      %v8958 = vpop.f32.mrf.mxu0
      %8959 = vmatprep.mubr.bf16.mxu0 0
      %8960 = vmatmul.mubr.bf16.gmra.mxu0 %v7469
      %v8961 = vpop.f32.mrf.mxu0
      %v8962 = vadd.f32 0.0, %v8961
      %v8963 = vpop.f32.mrf.mxu0
      %v8964 = vpop.f32.mrf.mxu0
      %v8965 = vadd.f32 0.0, %v8964
      %v8966 = vpop.f32.mrf.mxu0
      %8967 = vmatprep.mubr.bf16.mxu0 0
      %8968 = vmatmul.mubr.bf16.gmra.mxu0 %v7472
      %v8969 = vpop.f32.mrf.mxu0
      %v8970 = vadd.f32 0.0, %v8969
      %v8971 = vpop.f32.mrf.mxu0
      %v8972 = vpop.f32.mrf.mxu0
      %v8973 = vadd.f32 0.0, %v8972
      %v8974 = vpop.f32.mrf.mxu0
      %8975 = vmatprep.mubr.bf16.mxu0 0
      %8976 = vmatmul.mubr.bf16.gmra.mxu0 %v7475
      %v8977 = vpop.f32.mrf.mxu0
      %v8978 = vadd.f32 0.0, %v8977
      %v8979 = vpop.f32.mrf.mxu0
      %v8980 = vpop.f32.mrf.mxu0
      %v8981 = vadd.f32 0.0, %v8980
      %v8982 = vpop.f32.mrf.mxu0
      %8983 = vmatprep.mubr.bf16.mxu0 0
      %8984 = vmatmul.mubr.bf16.gmra.mxu0 %v7478
      %v8985 = vpop.f32.mrf.mxu0
      %v8986 = vadd.f32 0.0, %v8985
      %v8987 = vpop.f32.mrf.mxu0
      %v8988 = vpop.f32.mrf.mxu0
      %v8989 = vadd.f32 0.0, %v8988
      %v8990 = vpop.f32.mrf.mxu0
      %8991 = vmatprep.mubr.bf16.mxu0 0
      %8992 = vmatmul.mubr.bf16.gmra.mxu0 %v8192
      %v8993 = vpop.f32.mrf.mxu0
      %v8994 = vadd.f32 0.0, %v8993
      %v8995 = vpop.f32.mrf.mxu0
      %v8996 = vpop.f32.mrf.mxu0
      %v8997 = vadd.f32 0.0, %v8996
      %v8998 = vpop.f32.mrf.mxu0
      %8999 = vmatprep.mubr.bf16.mxu0 0
      %9000 = vmatmul.mubr.bf16.gmra.mxu0 %v8845
      %v9001 = vpop.f32.mrf.mxu0
      %v9002 = vadd.f32 0.0, %v9001
      %v9003 = vpop.f32.mrf.mxu0
      %v9004 = vpop.f32.mrf.mxu0
      %v9005 = vadd.f32 0.0, %v9004
      %v9006 = vpop.f32.mrf.mxu0
      %9007 = vdwg.mxu0
      %v9008 = vadd.f32 %v8781, %v8882
      %v9009 = vadd.f32 %v8782, %v8885
      %v9010 = vadd.f32 %v8783, %v8890
      %v9011 = vadd.f32 %v8784, %v8893
      %v9012 = vadd.f32 %v8785, %v8898
      %v9013 = vadd.f32 %v8786, %v8901
      %v9014 = vadd.f32 %v8787, %v8906
      %v9015 = vadd.f32 %v8788, %v8909
      %v9016 = vadd.f32 %v8789, %v8914
      %v9017 = vadd.f32 %v8790, %v8917
      %v9018 = vadd.f32 %v8791, %v8922
      %v9019 = vadd.f32 %v8792, %v8925
      %v9020 = vadd.f32 %v8793, %v8930
      %v9021 = vadd.f32 %v8794, %v8933
      %v9022 = vadd.f32 %v8795, %v8938
      %v9023 = vadd.f32 %v8796, %v8941
      %v9024 = vadd.f32 %v8797, %v8946
      %v9025 = vadd.f32 %v8798, %v8949
      %v9026 = vadd.f32 %v8799, %v8954
      %v9027 = vadd.f32 %v8800, %v8957
      %v9028 = vadd.f32 %v8801, %v8962
      %v9029 = vadd.f32 %v8802, %v8965
      %v9030 = vadd.f32 %v8803, %v8970
      %v9031 = vadd.f32 %v8804, %v8973
      %v9032 = vadd.f32 %v8805, %v8978
      %v9033 = vadd.f32 %v8806, %v8981
      %v9034 = vadd.f32 %v8807, %v8986
      %v9035 = vadd.f32 %v8808, %v8989
      %v9036 = vadd.f32 %v8809, %v8994
      %v9037 = vadd.f32 %v8810, %v8997
      %v9038 = vadd.f32 %v8811, %v9002
      %v9039 = vadd.f32 %v8812, %v9005
      %v9042 = vunpack.c.l.b16 %v6709
      %v9043 = vunpack.c.l.b16 %v6710
      %v9044 = vpack.c.b16 %v9043, %v9042
      %v9047 = vunpack.c.l.b16 %v6726
      %v9048 = vunpack.c.l.b16 %v6727
      %v9049 = vpack.c.b16 %v9048, %v9047
      %v9052 = vsel %vm3975, %v9044, 0
      %9054 = vmatprep.subr.bf16.mxu0 0
      %9055 = vmatpush1.bf16.msra.mxu0 0
      %9056 = vmatprep.subr.bf16.mxu0 0
      %9057 = vmatpush1.bf16.msra.mxu0 0
      %9058 = vmatprep.subr.bf16.mxu0 0
      %9059 = vmatpush1.bf16.msra.mxu0 0
      %9060 = vmatprep.subr.bf16.mxu0 0
      %9061 = vmatpush1.bf16.msra.mxu0 0
      %9062 = vmatprep.subr.bf16.mxu0 0
      %9063 = vmatpush1.bf16.msra.mxu0 0
      %9064 = vmatprep.subr.bf16.mxu0 0
      %9065 = vmatpush1.bf16.msra.mxu0 0
      %9066 = vmatprep.subr.bf16.mxu0 0
      %9067 = vmatpush1.bf16.msra.mxu0 0
      %9068 = vmatprep.subr.bf16.mxu0 0
      %9069 = vmatpush1.bf16.msra.mxu0 %v9049
      %9070 = vmatprep.subr.bf16.mxu0 0
      %9071 = vmatpush2.bf16.msra.mxu0 0
      %9072 = vmatprep.subr.bf16.mxu0 0
      %9073 = vmatpush2.bf16.msra.mxu0 0
      %9074 = vmatprep.subr.bf16.mxu0 0
      %9075 = vmatpush2.bf16.msra.mxu0 0
      %9076 = vmatprep.subr.bf16.mxu0 0
      %9077 = vmatpush2.bf16.msra.mxu0 0
      %9078 = vmatprep.subr.bf16.mxu0 0
      %9079 = vmatpush2.bf16.msra.mxu0 0
      %9080 = vmatprep.subr.bf16.mxu0 0
      %9081 = vmatpush2.bf16.msra.mxu0 0
      %9082 = vmatprep.subr.bf16.mxu0 0
      %9083 = vmatpush2.bf16.msra.mxu0 0
      %9084 = vmatprep.subr.bf16.mxu0 0
      %9085 = vmatpush2.bf16.msra.mxu0 0
      %9086 = vmatprep.mubr.bf16.mxu0 0
      %9087 = vmatmul.mubr.bf16.gmra.mxu0 %v7176
      %v9088 = vpop.f32.mrf.mxu0
      %v9089 = vadd.f32 0.0, %v9088
      %v9090 = vpop.f32.mrf.mxu0
      %v9091 = vpop.f32.mrf.mxu0
      %v9092 = vadd.f32 0.0, %v9091
      %v9093 = vpop.f32.mrf.mxu0
      %9094 = vmatprep.mubr.bf16.mxu0 0
      %9095 = vmatmul.mubr.bf16.gmra.mxu0 %v7179
      %v9096 = vpop.f32.mrf.mxu0
      %v9097 = vadd.f32 0.0, %v9096
      %v9098 = vpop.f32.mrf.mxu0
      %v9099 = vpop.f32.mrf.mxu0
      %v9100 = vadd.f32 0.0, %v9099
      %v9101 = vpop.f32.mrf.mxu0
      %9102 = vmatprep.mubr.bf16.mxu0 0
      %9103 = vmatmul.mubr.bf16.gmra.mxu0 %v7182
      %v9104 = vpop.f32.mrf.mxu0
      %v9105 = vadd.f32 0.0, %v9104
      %v9106 = vpop.f32.mrf.mxu0
      %v9107 = vpop.f32.mrf.mxu0
      %v9108 = vadd.f32 0.0, %v9107
      %v9109 = vpop.f32.mrf.mxu0
      %9110 = vmatprep.mubr.bf16.mxu0 0
      %9111 = vmatmul.mubr.bf16.gmra.mxu0 %v7185
      %v9112 = vpop.f32.mrf.mxu0
      %v9113 = vadd.f32 0.0, %v9112
      %v9114 = vpop.f32.mrf.mxu0
      %v9115 = vpop.f32.mrf.mxu0
      %v9116 = vadd.f32 0.0, %v9115
      %v9117 = vpop.f32.mrf.mxu0
      %9118 = vmatprep.mubr.bf16.mxu0 0
      %9119 = vmatmul.mubr.bf16.gmra.mxu0 %v7188
      %v9120 = vpop.f32.mrf.mxu0
      %v9121 = vadd.f32 0.0, %v9120
      %v9122 = vpop.f32.mrf.mxu0
      %v9123 = vpop.f32.mrf.mxu0
      %v9124 = vadd.f32 0.0, %v9123
      %v9125 = vpop.f32.mrf.mxu0
      %9126 = vmatprep.mubr.bf16.mxu0 0
      %9127 = vmatmul.mubr.bf16.gmra.mxu0 %v7191
      %v9128 = vpop.f32.mrf.mxu0
      %v9129 = vadd.f32 0.0, %v9128
      %v9130 = vpop.f32.mrf.mxu0
      %v9131 = vpop.f32.mrf.mxu0
      %v9132 = vadd.f32 0.0, %v9131
      %v9133 = vpop.f32.mrf.mxu0
      %9134 = vmatprep.mubr.bf16.mxu0 0
      %9135 = vmatmul.mubr.bf16.gmra.mxu0 %v7194
      %v9136 = vpop.f32.mrf.mxu0
      %v9137 = vadd.f32 0.0, %v9136
      %v9138 = vpop.f32.mrf.mxu0
      %v9139 = vpop.f32.mrf.mxu0
      %v9140 = vadd.f32 0.0, %v9139
      %v9141 = vpop.f32.mrf.mxu0
      %9142 = vmatprep.mubr.bf16.mxu0 0
      %9143 = vmatmul.mubr.bf16.gmra.mxu0 %v7197
      %v9144 = vpop.f32.mrf.mxu0
      %v9145 = vadd.f32 0.0, %v9144
      %v9146 = vpop.f32.mrf.mxu0
      %v9147 = vpop.f32.mrf.mxu0
      %v9148 = vadd.f32 0.0, %v9147
      %v9149 = vpop.f32.mrf.mxu0
      %9150 = vmatprep.mubr.bf16.mxu0 0
      %9151 = vmatmul.mubr.bf16.gmra.mxu0 %v7200
      %v9152 = vpop.f32.mrf.mxu0
      %v9153 = vadd.f32 0.0, %v9152
      %v9154 = vpop.f32.mrf.mxu0
      %v9155 = vpop.f32.mrf.mxu0
      %v9156 = vadd.f32 0.0, %v9155
      %v9157 = vpop.f32.mrf.mxu0
      %9158 = vmatprep.mubr.bf16.mxu0 0
      %9159 = vmatmul.mubr.bf16.gmra.mxu0 %v7203
      %v9160 = vpop.f32.mrf.mxu0
      %v9161 = vadd.f32 0.0, %v9160
      %v9162 = vpop.f32.mrf.mxu0
      %v9163 = vpop.f32.mrf.mxu0
      %v9164 = vadd.f32 0.0, %v9163
      %v9165 = vpop.f32.mrf.mxu0
      %9166 = vmatprep.mubr.bf16.mxu0 0
      %9167 = vmatmul.mubr.bf16.gmra.mxu0 %v7206
      %v9168 = vpop.f32.mrf.mxu0
      %v9169 = vadd.f32 0.0, %v9168
      %v9170 = vpop.f32.mrf.mxu0
      %v9171 = vpop.f32.mrf.mxu0
      %v9172 = vadd.f32 0.0, %v9171
      %v9173 = vpop.f32.mrf.mxu0
      %9174 = vmatprep.mubr.bf16.mxu0 0
      %9175 = vmatmul.mubr.bf16.gmra.mxu0 %v7209
      %v9176 = vpop.f32.mrf.mxu0
      %v9177 = vadd.f32 0.0, %v9176
      %v9178 = vpop.f32.mrf.mxu0
      %v9179 = vpop.f32.mrf.mxu0
      %v9180 = vadd.f32 0.0, %v9179
      %v9181 = vpop.f32.mrf.mxu0
      %9182 = vmatprep.mubr.bf16.mxu0 0
      %9183 = vmatmul.mubr.bf16.gmra.mxu0 %v7212
      %v9184 = vpop.f32.mrf.mxu0
      %v9185 = vadd.f32 0.0, %v9184
      %v9186 = vpop.f32.mrf.mxu0
      %v9187 = vpop.f32.mrf.mxu0
      %v9188 = vadd.f32 0.0, %v9187
      %v9189 = vpop.f32.mrf.mxu0
      %9190 = vmatprep.mubr.bf16.mxu0 0
      %9191 = vmatmul.mubr.bf16.gmra.mxu0 %v7215
      %v9192 = vpop.f32.mrf.mxu0
      %v9193 = vadd.f32 0.0, %v9192
      %v9194 = vpop.f32.mrf.mxu0
      %v9195 = vpop.f32.mrf.mxu0
      %v9196 = vadd.f32 0.0, %v9195
      %v9197 = vpop.f32.mrf.mxu0
      %9198 = vmatprep.mubr.bf16.mxu0 0
      %9199 = vmatmul.mubr.bf16.gmra.mxu0 %v8399
      %v9200 = vpop.f32.mrf.mxu0
      %v9201 = vadd.f32 0.0, %v9200
      %v9202 = vpop.f32.mrf.mxu0
      %v9203 = vpop.f32.mrf.mxu0
      %v9204 = vadd.f32 0.0, %v9203
      %v9205 = vpop.f32.mrf.mxu0
      %9206 = vmatprep.mubr.bf16.mxu0 0
      %9207 = vmatmul.mubr.bf16.gmra.mxu0 %v9052
      %v9208 = vpop.f32.mrf.mxu0
      %v9209 = vadd.f32 0.0, %v9208
      %v9210 = vpop.f32.mrf.mxu0
      %v9211 = vpop.f32.mrf.mxu0
      %v9212 = vadd.f32 0.0, %v9211
      %v9213 = vpop.f32.mrf.mxu0
      %9214 = vdwg.mxu0
      %v9215 = vadd.f32 %v9008, %v9089
      %v9216 = vadd.f32 %v9009, %v9092
      %v9217 = vadd.f32 %v9010, %v9097
      %v9218 = vadd.f32 %v9011, %v9100
      %v9219 = vadd.f32 %v9012, %v9105
      %v9220 = vadd.f32 %v9013, %v9108
      %v9221 = vadd.f32 %v9014, %v9113
      %v9222 = vadd.f32 %v9015, %v9116
      %v9223 = vadd.f32 %v9016, %v9121
      %v9224 = vadd.f32 %v9017, %v9124
      %v9225 = vadd.f32 %v9018, %v9129
      %v9226 = vadd.f32 %v9019, %v9132
      %v9227 = vadd.f32 %v9020, %v9137
      %v9228 = vadd.f32 %v9021, %v9140
      %v9229 = vadd.f32 %v9022, %v9145
      %v9230 = vadd.f32 %v9023, %v9148
      %v9231 = vadd.f32 %v9024, %v9153
      %v9232 = vadd.f32 %v9025, %v9156
      %v9233 = vadd.f32 %v9026, %v9161
      %v9234 = vadd.f32 %v9027, %v9164
      %v9235 = vadd.f32 %v9028, %v9169
      %v9236 = vadd.f32 %v9029, %v9172
      %v9237 = vadd.f32 %v9030, %v9177
      %v9238 = vadd.f32 %v9031, %v9180
      %v9239 = vadd.f32 %v9032, %v9185
      %v9240 = vadd.f32 %v9033, %v9188
      %v9241 = vadd.f32 %v9034, %v9193
      %v9242 = vadd.f32 %v9035, %v9196
      %v9243 = vadd.f32 %v9036, %v9201
      %v9244 = vadd.f32 %v9037, %v9204
      %v9245 = vadd.f32 %v9038, %v9209
      %v9246 = vadd.f32 %v9039, %v9212
      %v9247 = vrot.slane %v8819, 4
      %v9248 = vrot.slane %v8822, 5
      %v9249 = vor.u32 %v9247, %v9248
      %v9250 = vrot.slane %v9249, 4
      %v9251 = vrot.slane %v8831, 5
      %v9252 = vsel %vm1273, %v9250, %v9251
      %v9253 = vrot.slane %v8828, 4
      %v9254 = vor.u32 %v9253, %v9251
      %v9255 = vrot.slane %v9254, 4
      %v9257 = vshll.u32 %v6711, 16
      %v9259 = vrot.slane %v9257, 5
      %v9260 = vsel %vm1273, %v9255, %v9259
      %v9261 = vunpack.c.l.b16 %v9252
      %v9262 = vunpack.c.l.b16 %v9260
      %v9263 = vpack.c.b16 %v9262, %v9261
      %v9266 = vunpack.c.l.b16 %v6728
      %v9267 = vunpack.c.l.b16 %v6729
      %v9268 = vpack.c.b16 %v9267, %v9266
      %v9271 = vsel %vm3975, %v9263, 0
      %9273 = vmatprep.subr.bf16.mxu0 0
      %9274 = vmatpush1.bf16.msra.mxu0 0
      %9275 = vmatprep.subr.bf16.mxu0 0
      %9276 = vmatpush1.bf16.msra.mxu0 0
      %9277 = vmatprep.subr.bf16.mxu0 0
      %9278 = vmatpush1.bf16.msra.mxu0 0
      %9279 = vmatprep.subr.bf16.mxu0 0
      %9280 = vmatpush1.bf16.msra.mxu0 0
      %9281 = vmatprep.subr.bf16.mxu0 0
      %9282 = vmatpush1.bf16.msra.mxu0 0
      %9283 = vmatprep.subr.bf16.mxu0 0
      %9284 = vmatpush1.bf16.msra.mxu0 0
      %9285 = vmatprep.subr.bf16.mxu0 0
      %9286 = vmatpush1.bf16.msra.mxu0 0
      %9287 = vmatprep.subr.bf16.mxu0 0
      %9288 = vmatpush1.bf16.msra.mxu0 %v9268
      %9289 = vmatprep.subr.bf16.mxu0 0
      %9290 = vmatpush2.bf16.msra.mxu0 0
      %9291 = vmatprep.subr.bf16.mxu0 0
      %9292 = vmatpush2.bf16.msra.mxu0 0
      %9293 = vmatprep.subr.bf16.mxu0 0
      %9294 = vmatpush2.bf16.msra.mxu0 0
      %9295 = vmatprep.subr.bf16.mxu0 0
      %9296 = vmatpush2.bf16.msra.mxu0 0
      %9297 = vmatprep.subr.bf16.mxu0 0
      %9298 = vmatpush2.bf16.msra.mxu0 0
      %9299 = vmatprep.subr.bf16.mxu0 0
      %9300 = vmatpush2.bf16.msra.mxu0 0
      %9301 = vmatprep.subr.bf16.mxu0 0
      %9302 = vmatpush2.bf16.msra.mxu0 0
      %9303 = vmatprep.subr.bf16.mxu0 0
      %9304 = vmatpush2.bf16.msra.mxu0 0
      %9305 = vmatprep.mubr.bf16.mxu0 0
      %9306 = vmatmul.mubr.bf16.gmra.mxu0 %v7926
      %v9307 = vpop.f32.mrf.mxu0
      %v9308 = vadd.f32 0.0, %v9307
      %v9309 = vpop.f32.mrf.mxu0
      %v9310 = vpop.f32.mrf.mxu0
      %v9311 = vadd.f32 0.0, %v9310
      %v9312 = vpop.f32.mrf.mxu0
      %9313 = vmatprep.mubr.bf16.mxu0 0
      %9314 = vmatmul.mubr.bf16.gmra.mxu0 %v7929
      %v9315 = vpop.f32.mrf.mxu0
      %v9316 = vadd.f32 0.0, %v9315
      %v9317 = vpop.f32.mrf.mxu0
      %v9318 = vpop.f32.mrf.mxu0
      %v9319 = vadd.f32 0.0, %v9318
      %v9320 = vpop.f32.mrf.mxu0
      %9321 = vmatprep.mubr.bf16.mxu0 0
      %9322 = vmatmul.mubr.bf16.gmra.mxu0 %v7932
      %v9323 = vpop.f32.mrf.mxu0
      %v9324 = vadd.f32 0.0, %v9323
      %v9325 = vpop.f32.mrf.mxu0
      %v9326 = vpop.f32.mrf.mxu0
      %v9327 = vadd.f32 0.0, %v9326
      %v9328 = vpop.f32.mrf.mxu0
      %9329 = vmatprep.mubr.bf16.mxu0 0
      %9330 = vmatmul.mubr.bf16.gmra.mxu0 %v7935
      %v9331 = vpop.f32.mrf.mxu0
      %v9332 = vadd.f32 0.0, %v9331
      %v9333 = vpop.f32.mrf.mxu0
      %v9334 = vpop.f32.mrf.mxu0
      %v9335 = vadd.f32 0.0, %v9334
      %v9336 = vpop.f32.mrf.mxu0
      %9337 = vmatprep.mubr.bf16.mxu0 0
      %9338 = vmatmul.mubr.bf16.gmra.mxu0 %v7938
      %v9339 = vpop.f32.mrf.mxu0
      %v9340 = vadd.f32 0.0, %v9339
      %v9341 = vpop.f32.mrf.mxu0
      %v9342 = vpop.f32.mrf.mxu0
      %v9343 = vadd.f32 0.0, %v9342
      %v9344 = vpop.f32.mrf.mxu0
      %9345 = vmatprep.mubr.bf16.mxu0 0
      %9346 = vmatmul.mubr.bf16.gmra.mxu0 %v7941
      %v9347 = vpop.f32.mrf.mxu0
      %v9348 = vadd.f32 0.0, %v9347
      %v9349 = vpop.f32.mrf.mxu0
      %v9350 = vpop.f32.mrf.mxu0
      %v9351 = vadd.f32 0.0, %v9350
      %v9352 = vpop.f32.mrf.mxu0
      %9353 = vmatprep.mubr.bf16.mxu0 0
      %9354 = vmatmul.mubr.bf16.gmra.mxu0 %v7944
      %v9355 = vpop.f32.mrf.mxu0
      %v9356 = vadd.f32 0.0, %v9355
      %v9357 = vpop.f32.mrf.mxu0
      %v9358 = vpop.f32.mrf.mxu0
      %v9359 = vadd.f32 0.0, %v9358
      %v9360 = vpop.f32.mrf.mxu0
      %9361 = vmatprep.mubr.bf16.mxu0 0
      %9362 = vmatmul.mubr.bf16.gmra.mxu0 %v7947
      %v9363 = vpop.f32.mrf.mxu0
      %v9364 = vadd.f32 0.0, %v9363
      %v9365 = vpop.f32.mrf.mxu0
      %v9366 = vpop.f32.mrf.mxu0
      %v9367 = vadd.f32 0.0, %v9366
      %v9368 = vpop.f32.mrf.mxu0
      %9369 = vmatprep.mubr.bf16.mxu0 0
      %9370 = vmatmul.mubr.bf16.gmra.mxu0 %v7950
      %v9371 = vpop.f32.mrf.mxu0
      %v9372 = vadd.f32 0.0, %v9371
      %v9373 = vpop.f32.mrf.mxu0
      %v9374 = vpop.f32.mrf.mxu0
      %v9375 = vadd.f32 0.0, %v9374
      %v9376 = vpop.f32.mrf.mxu0
      %9377 = vmatprep.mubr.bf16.mxu0 0
      %9378 = vmatmul.mubr.bf16.gmra.mxu0 %v7953
      %v9379 = vpop.f32.mrf.mxu0
      %v9380 = vadd.f32 0.0, %v9379
      %v9381 = vpop.f32.mrf.mxu0
      %v9382 = vpop.f32.mrf.mxu0
      %v9383 = vadd.f32 0.0, %v9382
      %v9384 = vpop.f32.mrf.mxu0
      %9385 = vmatprep.mubr.bf16.mxu0 0
      %9386 = vmatmul.mubr.bf16.gmra.mxu0 %v7956
      %v9387 = vpop.f32.mrf.mxu0
      %v9388 = vadd.f32 0.0, %v9387
      %v9389 = vpop.f32.mrf.mxu0
      %v9390 = vpop.f32.mrf.mxu0
      %v9391 = vadd.f32 0.0, %v9390
      %v9392 = vpop.f32.mrf.mxu0
      %9393 = vmatprep.mubr.bf16.mxu0 0
      %9394 = vmatmul.mubr.bf16.gmra.mxu0 %v7959
      %v9395 = vpop.f32.mrf.mxu0
      %v9396 = vadd.f32 0.0, %v9395
      %v9397 = vpop.f32.mrf.mxu0
      %v9398 = vpop.f32.mrf.mxu0
      %v9399 = vadd.f32 0.0, %v9398
      %v9400 = vpop.f32.mrf.mxu0
      %9401 = vmatprep.mubr.bf16.mxu0 0
      %9402 = vmatmul.mubr.bf16.gmra.mxu0 %v7962
      %v9403 = vpop.f32.mrf.mxu0
      %v9404 = vadd.f32 0.0, %v9403
      %v9405 = vpop.f32.mrf.mxu0
      %v9406 = vpop.f32.mrf.mxu0
      %v9407 = vadd.f32 0.0, %v9406
      %v9408 = vpop.f32.mrf.mxu0
      %9409 = vmatprep.mubr.bf16.mxu0 0
      %9410 = vmatmul.mubr.bf16.gmra.mxu0 %v7965
      %v9411 = vpop.f32.mrf.mxu0
      %v9412 = vadd.f32 0.0, %v9411
      %v9413 = vpop.f32.mrf.mxu0
      %v9414 = vpop.f32.mrf.mxu0
      %v9415 = vadd.f32 0.0, %v9414
      %v9416 = vpop.f32.mrf.mxu0
      %9417 = vmatprep.mubr.bf16.mxu0 0
      %9418 = vmatmul.mubr.bf16.gmra.mxu0 %v8618
      %v9419 = vpop.f32.mrf.mxu0
      %v9420 = vadd.f32 0.0, %v9419
      %v9421 = vpop.f32.mrf.mxu0
      %v9422 = vpop.f32.mrf.mxu0
      %v9423 = vadd.f32 0.0, %v9422
      %v9424 = vpop.f32.mrf.mxu0
      %9425 = vmatprep.mubr.bf16.mxu0 0
      %9426 = vmatmul.mubr.bf16.gmra.mxu0 %v9271
      %v9427 = vpop.f32.mrf.mxu0
      %v9428 = vadd.f32 0.0, %v9427
      %v9429 = vpop.f32.mrf.mxu0
      %v9430 = vpop.f32.mrf.mxu0
      %v9431 = vadd.f32 0.0, %v9430
      %v9432 = vpop.f32.mrf.mxu0
      %9433 = vdwg.mxu0
      %v9434 = vadd.f32 %v9215, %v9308
      %v9435 = vadd.f32 %v9216, %v9311
      %v9436 = vadd.f32 %v9217, %v9316
      %v9437 = vadd.f32 %v9218, %v9319
      %v9438 = vadd.f32 %v9219, %v9324
      %v9439 = vadd.f32 %v9220, %v9327
      %v9440 = vadd.f32 %v9221, %v9332
      %v9441 = vadd.f32 %v9222, %v9335
      %v9442 = vadd.f32 %v9223, %v9340
      %v9443 = vadd.f32 %v9224, %v9343
      %v9444 = vadd.f32 %v9225, %v9348
      %v9445 = vadd.f32 %v9226, %v9351
      %v9446 = vadd.f32 %v9227, %v9356
      %v9447 = vadd.f32 %v9228, %v9359
      %v9448 = vadd.f32 %v9229, %v9364
      %v9449 = vadd.f32 %v9230, %v9367
      %v9450 = vadd.f32 %v9231, %v9372
      %v9451 = vadd.f32 %v9232, %v9375
      %v9452 = vadd.f32 %v9233, %v9380
      %v9453 = vadd.f32 %v9234, %v9383
      %v9454 = vadd.f32 %v9235, %v9388
      %v9455 = vadd.f32 %v9236, %v9391
      %v9456 = vadd.f32 %v9237, %v9396
      %v9457 = vadd.f32 %v9238, %v9399
      %v9458 = vadd.f32 %v9239, %v9404
      %v9459 = vadd.f32 %v9240, %v9407
      %v9460 = vadd.f32 %v9241, %v9412
      %v9461 = vadd.f32 %v9242, %v9415
      %v9462 = vadd.f32 %v9243, %v9420
      %v9463 = vadd.f32 %v9244, %v9423
      %v9464 = vadd.f32 %v9245, %v9428
      %v9465 = vadd.f32 %v9246, %v9431
      %v9467 = vlaneseq
      %v9468 = vshrl.u32 %v9467, 7
      %v9469 = vsub.s32 0, %v9468
      %v9470 = vrot.slane %v6730, %v9469
      %v9472 = vadd.f32 %v9434, %v9470
      %v9473 = vadd.f32 %v9435, %v9470
      %v9474 = vadd.f32 %v9436, %v9470
      %v9475 = vadd.f32 %v9437, %v9470
      %v9476 = vadd.f32 %v9438, %v9470
      %v9477 = vadd.f32 %v9439, %v9470
      %v9478 = vadd.f32 %v9440, %v9470
      %v9479 = vadd.f32 %v9441, %v9470
      %v9480 = vadd.f32 %v9442, %v9470
      %v9481 = vadd.f32 %v9443, %v9470
      %v9482 = vadd.f32 %v9444, %v9470
      %v9483 = vadd.f32 %v9445, %v9470
      %v9484 = vadd.f32 %v9446, %v9470
      %v9485 = vadd.f32 %v9447, %v9470
      %v9486 = vadd.f32 %v9448, %v9470
      %v9487 = vadd.f32 %v9449, %v9470
      %v9488 = vadd.f32 %v9450, %v9470
      %v9489 = vadd.f32 %v9451, %v9470
      %v9490 = vadd.f32 %v9452, %v9470
      %v9491 = vadd.f32 %v9453, %v9470
      %v9492 = vadd.f32 %v9454, %v9470
      %v9493 = vadd.f32 %v9455, %v9470
      %v9494 = vadd.f32 %v9456, %v9470
      %v9495 = vadd.f32 %v9457, %v9470
      %v9496 = vadd.f32 %v9458, %v9470
      %v9497 = vadd.f32 %v9459, %v9470
      %v9498 = vadd.f32 %v9460, %v9470
      %v9499 = vadd.f32 %v9461, %v9470
      %v9500 = vadd.f32 %v9462, %v9470
      %v9501 = vadd.f32 %v9463, %v9470
      %v9502 = vadd.f32 %v9464, %v9470
      %v9503 = vadd.f32 %v9465, %v9470
      %9504 = vst.msk [vmem:[%s278] sm:$0xff] %vm797, %v9472
      %9505 = vst.msk [vmem:[%s278 + $0x8] sm:$0xff] %vm797, %v9473
      %9506 = vst.msk [vmem:[%s278 + $0x10] sm:$0xff] %vm797, %v9474
      %9507 = vst.msk [vmem:[%s278 + $0x18] sm:$0xff] %vm797, %v9475
      %9508 = vst.msk [vmem:[%s278 + $0x20] sm:$0xff] %vm797, %v9476
      %9509 = vst.msk [vmem:[%s278 + $0x28] sm:$0xff] %vm797, %v9477
      %9510 = vst.msk [vmem:[%s278 + $0x30] sm:$0xff] %vm797, %v9478
      %9511 = vst.msk [vmem:[%s278 + $0x38] sm:$0xff] %vm797, %v9479
      %9512 = vst.msk [vmem:[%s278 + $0x40] sm:$0xff] %vm797, %v9480
      %9513 = vst.msk [vmem:[%s278 + $0x48] sm:$0xff] %vm797, %v9481
      %9514 = vst.msk [vmem:[%s278 + $0x50] sm:$0xff] %vm797, %v9482
      %9515 = vst.msk [vmem:[%s278 + $0x58] sm:$0xff] %vm797, %v9483
      %9516 = vst.msk [vmem:[%s278 + $0x60] sm:$0xff] %vm797, %v9484
      %9517 = vst.msk [vmem:[%s278 + $0x68] sm:$0xff] %vm797, %v9485
      %9518 = vst.msk [vmem:[%s278 + $0x70] sm:$0xff] %vm797, %v9486
      %9519 = vst.msk [vmem:[%s278 + $0x78] sm:$0xff] %vm797, %v9487
      %9520 = vst.msk [vmem:[%s278 + $0x80] sm:$0xff] %vm797, %v9488
      %9521 = vst.msk [vmem:[%s278 + $0x88] sm:$0xff] %vm797, %v9489
      %9522 = vst.msk [vmem:[%s278 + $0x90] sm:$0xff] %vm797, %v9490
      %9523 = vst.msk [vmem:[%s278 + $0x98] sm:$0xff] %vm797, %v9491
      %9524 = vst.msk [vmem:[%s278 + $0xa0] sm:$0xff] %vm797, %v9492
      %9525 = vst.msk [vmem:[%s278 + $0xa8] sm:$0xff] %vm797, %v9493
      %9526 = vst.msk [vmem:[%s278 + $0xb0] sm:$0xff] %vm797, %v9494
      %9527 = vst.msk [vmem:[%s278 + $0xb8] sm:$0xff] %vm797, %v9495
      %9528 = vst.msk [vmem:[%s278 + $0xc0] sm:$0xff] %vm797, %v9496
      %9529 = vst.msk [vmem:[%s278 + $0xc8] sm:$0xff] %vm797, %v9497
      %9530 = vst.msk [vmem:[%s278 + $0xd0] sm:$0xff] %vm797, %v9498
      %9531 = vst.msk [vmem:[%s278 + $0xd8] sm:$0xff] %vm797, %v9499
      %9532 = vst.msk [vmem:[%s278 + $0xe0] sm:$0xff] %vm797, %v9500
      %9533 = vst.msk [vmem:[%s278 + $0xe8] sm:$0xff] %vm797, %v9501
      %9534 = vst.msk [vmem:[%s278 + $0xf0] sm:$0xff] %vm797, %v9502
      %9535 = vst.msk [vmem:[%s278 + $0xf8] sm:$0xff] %vm797, %v9503
      %p9536 = scmp.lt.s32.totalorder %s18, 1
      %s9537 = scalar_select %p9536, %s18, 1
      %s9538 = smul.addr %s9537, 32
      %s9539 = smul.addr %s9538, 8
      %s9540 = scalar_lea.vmem %s7, %s9539
      // Predicated region
      $region49: #{simple_regnet_forward.4} parent=47 // pred_check
        %p9541 = pneg %p188
      $region50: #{simple_regnet_forward.4} parent=47 // pred_check_branch
        %9543 = sbr.rel (%p9541) target = $region52
      $region51: #{simple_regnet_forward.4} parent=47 // pred_region
        _
      $region52: #{simple_regnet_forward.4} parent=47 // pred_fallthru
        _
    $region48: #{simple_regnet_forward.4} parent=5 // pred_fallthru
      _
    %p9544 = scmp.le.s32.totalorder 2, %s13
    // Predicated region
    $region53: #{simple_regnet_forward.4} parent=5 // pred_check
      %p9545 = pneg %p9544
    $region54: #{simple_regnet_forward.4} parent=5 // pred_check_branch
      %9547 = sbr.rel (%p9545) target = $region56
    $region55: #{simple_regnet_forward.4} parent=5 // pred_region
      %s9548 = ssub.s32 %s13, 2
      // Predicated region
      $region57: #{simple_regnet_forward.4} parent=55 // pred_check
        %p9549 = pneg %p194
      $region58: #{simple_regnet_forward.4} parent=55 // pred_check_branch
        %9551 = sbr.rel (%p9549) target = $region60
      $region59: #{simple_regnet_forward.4} parent=55 // pred_region
        %p9552 = scmp.lt.s32.totalorder %s19, 1
        %s9553 = scalar_select %p9552, %s19, 1
        %s9554 = smul.addr %s9553, 32
        %s9555 = smul.addr %s9554, 8
        %s9556 = scalar_lea.vmem %s7, %s9555
      $region60: #{simple_regnet_forward.4} parent=55 // pred_fallthru
        _
    $region56: #{simple_regnet_forward.4} parent=5 // pred_fallthru
      _
  $region6: #{simple_regnet_forward.4} parent=0 // loop_footer
    %s17 = sadd.s32 1, %s13
  $region7: #{simple_regnet_forward.4} parent=0 // loop_footer_branch
    %12 = sbr.rel target = $region3
  $region8: #{simple_regnet_forward.4} parent=0 // loop_exit
    _

</llo_original>
